<compile_context>
chip_gen: v7x
topology: tpu7x:2x2x1
jax: 0.10.0
libtpu: 0.0.40
codegen_flags: <defaults>
</compile_context>

<pallas_src>
import functools

import jax
import jax.numpy as jnp
from jax import lax
from jax.experimental import pallas as pl
from jax.experimental.pallas import tpu as pltpu

BN_EPS = 1e-5
LANE = 128
# 48 MiB fits v7x's 64 MiB/TC with headroom; v5e/v6e (128 MiB) could go higher
# but the per-step working set of this design never needs it.
VMEM_LIMIT = 48 * 1024 * 1024


def _round_up(x, m):
    return (x + m - 1) // m * m


def _compiler_params():
    return pltpu.CompilerParams(
        dimension_semantics=("parallel",),      # batch grid -> megacore sharding
        vmem_limit_bytes=VMEM_LIMIT,
    )


# ---------------------------------------------------------------------------
# Pallas kernels
# ---------------------------------------------------------------------------
def _conv_stats_kernel(*refs, taps, ho, wo, n_planes, has_shortcut):
    """Phase 1: direct 3x3 conv for one batch element + per-element BN stats.

    taps: tuple of (plane_idx, row_off, col_off) for the 9 kernel taps.
    Optionally also computes the projection-shortcut 1x1 conv statistics
    (without materializing its output).
    """
    idx = 0
    xplane_refs = refs[idx:idx + n_planes]
    idx += n_planes
    w_ref = refs[idx]
    idx += 1
    if has_shortcut:
        xs_ref = refs[idx]
        ws_ref = refs[idx + 1]
        idx += 2
    y_ref = refs[idx]
    sum_ref = refs[idx + 1]
    sq_ref = refs[idx + 2]
    idx += 3
    if has_shortcut:
        ssum_ref = refs[idx]
        ssq_ref = refs[idx + 1]
        idx += 2
    acc_ref = refs[idx]

    hw = ho * wo
    cin = w_ref.shape[1]
    coutp = w_ref.shape[2]

    # 9 shifted MXU matmuls, accumulated in an f32 VMEM scratch.
    for t, (p, ro, co) in enumerate(taps):
        xt = xplane_refs[p][0, ro:ro + ho, co:co + wo, :].reshape(hw, cin)
        contrib = jnp.dot(xt, w_ref[t], preferred_element_type=jnp.float32)
        if t == 0:
            acc_ref[...] = contrib
        else:
            acc_ref[...] += contrib

    y = acc_ref[...]                                     # (hw, coutp) f32
    y_ref[...] = y.reshape(1, ho, wo, coutp).astype(y_ref.dtype)   # bf16 store

    # Per-batch-element partial stats (combined across the batch in the
    # wrapper).  One-pass E[x^2]-E[x]^2 in f32 is adequate at WRN scale.
    # TODO(synk): move these reductions onto the MXU (ones-row matmul) if the
    # XLU/VPU slots bind for small-K conv1 layers.
    sum_ref[...] = jnp.sum(y, axis=0, keepdims=True).reshape(1, 1, coutp)
    sq_ref[...] = jnp.sum(y * y, axis=0, keepdims=True).reshape(1, 1, coutp)

    if has_shortcut:
        cin_s = ws_ref.shape[0]
        ys = jnp.dot(xs_ref[...].reshape(hw, cin_s), ws_ref[...],
                     preferred_element_type=jnp.float32)
        ssum_ref[...] = jnp.sum(ys, axis=0, keepdims=True).reshape(1, 1, coutp)
        ssq_ref[...] = jnp.sum(ys * ys, axis=0, keepdims=True).reshape(1, 1, coutp)


def _bn_relu_pad_kernel(y_ref, sc_ref, bi_ref, o_ref, *, ho, wo):
    """Phase 2a: folded BN FMA + ReLU, written into conv2's padded layout."""
    sc = sc_ref[...].reshape(1, 1, 1, -1)
    bi = bi_ref[...].reshape(1, 1, 1, -1)
    z = jnp.maximum(y_ref[...].astype(jnp.float32) * sc + bi, 0.0)
    o_ref[...] = jnp.zeros_like(o_ref)                 # zero spatial halo
    o_ref[0, 1:ho + 1, 1:wo + 1, :] = z[0].astype(o_ref.dtype)


def _bn_res_relu_kernel(y_ref, sc_ref, bi_ref, xs_ref, ws_ref,
                        rsc_ref, rbi_ref, o_ref, *, ho, wo):
    """Phase 2b: folded BN FMA + recomputed shortcut (matmul) + ReLU."""
    hw = ho * wo
    cin = ws_ref.shape[0]
    coutp = ws_ref.shape[1]
    # Shortcut is recomputed per tile instead of being materialized in HBM.
    # Identity shortcuts use an eye() weight with r_scale=1, r_bias=0.
    r = jnp.dot(xs_ref[...].reshape(hw, cin), ws_ref[...],
                preferred_element_type=jnp.float32).reshape(1, ho, wo, coutp)
    sc = sc_ref[...].reshape(1, 1, 1, -1)
    bi = bi_ref[...].reshape(1, 1, 1, -1)
    rsc = rsc_ref[...].reshape(1, 1, 1, -1)
    rbi = rbi_ref[...].reshape(1, 1, 1, -1)
    z = y_ref[...].astype(jnp.float32) * sc + bi + r * rsc + rbi
    o_ref[...] = jnp.maximum(z, 0.0).astype(o_ref.dtype)


# ---------------------------------------------------------------------------
# pallas_call wrappers
# ---------------------------------------------------------------------------
def _conv3x3_bn_stats(xplanes, taps, w_taps, ho, wo, *,
                      shortcut_x=None, shortcut_w=None):
    """Direct 3x3 conv + batch-stat partial sums, grid over batch."""
    n = xplanes[0].shape[0]
    coutp = w_taps.shape[2]
    hw = ho * wo
    has_shortcut = shortcut_x is not None

    in_specs, args = [], []
    for xpl in xplanes:
        in_specs.append(pl.BlockSpec((1,) + tuple(xpl.shape[1:]),
                                     lambda b: (b, 0, 0, 0)))
        args.append(xpl)
    in_specs.append(pl.BlockSpec(tuple(w_taps.shape), lambda b: (0, 0, 0)))
    args.append(w_taps)
    if has_shortcut:
        in_specs.append(pl.BlockSpec((1, ho, wo, shortcut_x.shape[-1]),
                                     lambda b: (b, 0, 0, 0)))
        args.append(shortcut_x)
        in_specs.append(pl.BlockSpec(tuple(shortcut_w.shape), lambda b: (0, 0)))
        args.append(shortcut_w)

    stat_spec = pl.BlockSpec((1, 1, coutp), lambda b: (b, 0, 0))
    stat_shape = jax.ShapeDtypeStruct((n, 1, coutp), jnp.float32)
    out_specs = [pl.BlockSpec((1, ho, wo, coutp), lambda b: (b, 0, 0, 0)),
                 stat_spec, stat_spec]
    out_shape = [jax.ShapeDtypeStruct((n, ho, wo, coutp), jnp.bfloat16),
                 stat_shape, stat_shape]
    if has_shortcut:
        out_specs += [stat_spec, stat_spec]
        out_shape += [stat_shape, stat_shape]

    kernel = functools.partial(_conv_stats_kernel, taps=taps, ho=ho, wo=wo,
                               n_planes=len(xplanes), has_shortcut=has_shortcut)
    return pl.pallas_call(
        kernel,
        grid=(n,),
        in_specs=in_specs,
        out_specs=tuple(out_specs),
        out_shape=tuple(out_shape),
        scratch_shapes=[pltpu.VMEM((hw, coutp), jnp.float32)],
        compiler_params=_compiler_params(),
    )(*args)


def _bn_relu_pad(y, scale, bias, ho, wo):
    n = y.shape[0]
    coutp = y.shape[-1]
    return pl.pallas_call(
        functools.partial(_bn_relu_pad_kernel, ho=ho, wo=wo),
        grid=(n,),
        in_specs=[pl.BlockSpec((1, ho, wo, coutp), lambda b: (b, 0, 0, 0)),
                  pl.BlockSpec((1, coutp), lambda b: (0, 0)),
                  pl.BlockSpec((1, coutp), lambda b: (0, 0))],
        out_specs=pl.BlockSpec((1, ho + 2, wo + 2, coutp), lambda b: (b, 0, 0, 0)),
        out_shape=jax.ShapeDtypeStruct((n, ho + 2, wo + 2, coutp), jnp.bfloat16),
        compiler_params=_compiler_params(),
    )(y, scale, bias)


def _bn_res_relu(y, scale, bias, xs, ws, r_scale, r_bias, ho, wo):
    n = y.shape[0]
    coutp = y.shape[-1]
    cin = xs.shape[-1]
    vec = pl.BlockSpec((1, coutp), lambda b: (0, 0))
    return pl.pallas_call(
        functools.partial(_bn_res_relu_kernel, ho=ho, wo=wo),
        grid=(n,),
        in_specs=[pl.BlockSpec((1, ho, wo, coutp), lambda b: (b, 0, 0, 0)),
                  vec, vec,
                  pl.BlockSpec((1, ho, wo, cin), lambda b: (b, 0, 0, 0)),
                  pl.BlockSpec((cin, coutp), lambda b: (0, 0)),
                  vec, vec],
        out_specs=pl.BlockSpec((1, ho, wo, coutp), lambda b: (b, 0, 0, 0)),
        out_shape=jax.ShapeDtypeStruct((n, ho, wo, coutp), jnp.bfloat16),
        compiler_params=_compiler_params(),
    )(y, scale, bias, xs, ws, r_scale, r_bias)


# ---------------------------------------------------------------------------
# Glue: plane decomposition, weight/param padding (plain JAX, O(input) bytes)
# ---------------------------------------------------------------------------
def _make_planes(xp, stride):
    """Decompose the spatially padded input so every 3x3 tap is a contiguous
    (unstrided) slice inside the kernel.  Returns (plane list, taps)."""
    if stride == 1:
        return [xp], tuple((0, dh, dw) for dh in range(3) for dw in range(3))
    na = min(stride, 3)
    plist = [xp[:, a::stride, b::stride, :]
             for a in range(na) for b in range(na)]
    taps = tuple(((dh % stride) * na + (dw % stride), dh // stride, dw // stride)
                 for dh in range(3) for dw in range(3))
    return plist, taps


def _conv_w_taps(w_oihw, cinp, coutp):
    """PyTorch (Cout,Cin,3,3) -> (9, cinp, coutp), zero padded, bf16."""
    cout, cin, kh, kw = w_oihw.shape
    t = jnp.transpose(w_oihw, (2, 3, 1, 0))            # (kh, kw, cin, cout)
    t = jnp.pad(t, ((0, 0), (0, 0), (0, cinp - cin), (0, coutp - cout)))
    return t.reshape(kh * kw, cinp, coutp).astype(jnp.bfloat16)


def _conv_w_1x1(w_oihw, coutp):
    """PyTorch (Cout,Cin,1,1) -> (Cin, coutp), zero padded, bf16."""
    cout, cin = w_oihw.shape[0], w_oihw.shape[1]
    t = jnp.transpose(w_oihw.reshape(cout, cin), (1, 0))   # (cin, cout)
    return jnp.pad(t, ((0, 0), (0, coutp - cout))).astype(jnp.bfloat16)


def _pad_vec(v, coutp):
    return jnp.pad(v, (0, coutp - v.shape[0])).reshape(1, coutp).astype(jnp.float32)


def _bn_scale_bias(s, q, m_true, gamma_p, beta_p):
    """Fold BN into one FMA: scale = g*rsqrt(var+eps), bias = b - mean*scale."""
    mean = s / m_true
    var = jnp.maximum(q / m_true - mean * mean, 0.0)
    scale = gamma_p * jax.lax.rsqrt(var + BN_EPS)
    bias = beta_p - mean * scale
    return scale, bias


# ---------------------------------------------------------------------------
# Block forward
# ---------------------------------------------------------------------------
def block_forward(x_nchw, params, stride):
    """Forward pass of the WRN Block. x_nchw: (N, Cin, H, W) float32."""
    in_planes = x_nchw.shape[1]
    planes = params["w1"].shape[0]
    has_projection = (stride != 1) or (in_planes != planes)
    coutp = _round_up(planes, LANE)                    # lane-dense channels

    x = jnp.transpose(x_nchw, (0, 2, 3, 1))            # NHWC
    n, h, w, _ = x.shape
    x_bf = x.astype(jnp.bfloat16)
    ho = (h - 1) // stride + 1
    wo = (w - 1) // stride + 1
    m_true = n * ho * wo                               # real rows for BN mean

    # ---- conv1 (3x3, stride) phase 1: direct conv + batch stats ------------
    xp = jnp.pad(x_bf, ((0, 0), (1, 1), (1, 1), (0, 0)))
    xplanes, taps1 = _make_planes(xp, stride)
    w1t = _conv_w_taps(params["w1"], in_planes, coutp)

    # Shortcut source (strided input); also drives the final residual add.
    xs = x_bf if stride == 1 else x_bf[:, ::stride, ::stride, :]
    if has_projection:
        wsm = _conv_w_1x1(params["ws"], coutp)
        y1, s1, q1, ss, qs = _conv3x3_bn_stats(
            xplanes, taps1, w1t, ho, wo, shortcut_x=xs, shortcut_w=wsm)
        r_scale, r_bias = _bn_scale_bias(
            jnp.sum(ss, axis=0), jnp.sum(qs, axis=0), m_true,
            _pad_vec(params["gs"], coutp), _pad_vec(params["bs"], coutp))
    else:
        wsm = jnp.eye(in_planes, coutp, dtype=jnp.bfloat16)    # identity shortcut
        y1, s1, q1 = _conv3x3_bn_stats(xplanes, taps1, w1t, ho, wo)
        r_scale = jnp.ones((1, coutp), jnp.float32)
        r_bias = jnp.zeros((1, coutp), jnp.float32)

    sc1, bi1 = _bn_scale_bias(jnp.sum(s1, axis=0), jnp.sum(q1, axis=0), m_true,
                              _pad_vec(params["g1"], coutp),
                              _pad_vec(params["b1"], coutp))

    # ---- phase 2a: bn1 + relu, written in conv2's padded spatial layout ----
    a1p = _bn_relu_pad(y1, sc1, bi1, ho, wo)           # (N, ho+2, wo+2, coutp)

    # ---- conv2 (3x3, stride 1) phase 1 --------------------------------------
    taps2 = tuple((0, dh, dw) for dh in range(3) for dw in range(3))
    w2t = _conv_w_taps(params["w2"], coutp, coutp)
    y2, s2, q2 = _conv3x3_bn_stats([a1p], taps2, w2t, ho, wo)
    sc2, bi2 = _bn_scale_bias(jnp.sum(s2, axis=0), jnp.sum(q2, axis=0), m_true,
                              _pad_vec(params["g2"], coutp),
                              _pad_vec(params["b2"], coutp))

    # ---- phase 2b: bn2 + recomputed shortcut + relu (bf16 writeback) --------
    out = _bn_res_relu(y2, sc2, bi2, xs, wsm, r_scale, r_bias, ho, wo)

    out = out[..., :planes].astype(jnp.float32)
    return jnp.transpose(out, (0, 3, 1, 2))            # back to NCHW


# ---------------------------------------------------------------------------
# Pure-JAX reference (XLA conv) for in-script correctness check
# ---------------------------------------------------------------------------
def reference_block(x_nchw, params, stride):
    x = jnp.transpose(x_nchw, (0, 2, 3, 1))

    def conv(inp, w_oihw, strides, pad):
        w = jnp.transpose(w_oihw, (2, 3, 1, 0))        # HWIO
        return lax.conv_general_dilated(
            inp, w, strides, pad, dimension_numbers=("NHWC", "HWIO", "NHWC"))

    def bn(y, g, b):
        mean = jnp.mean(y, axis=(0, 1, 2), keepdims=True)
        var = jnp.mean(jnp.square(y - mean), axis=(0, 1, 2), keepdims=True)
        return (y - mean) * jax.lax.rsqrt(var + BN_EPS) * g + b

    out = jax.nn.relu(bn(conv(x, params["w1"], (stride, stride),
                              [(1, 1), (1, 1)]), params["g1"], params["b1"]))
    out = bn(conv(out, params["w2"], (1, 1), [(1, 1), (1, 1)]),
             params["g2"], params["b2"])
    if "ws" in params:
        sc = bn(conv(x, params["ws"], (stride, stride), [(0, 0), (0, 0)]),
                params["gs"], params["bs"])
    else:
        sc = x
    out = jax.nn.relu(out + sc)
    return jnp.transpose(out, (0, 3, 1, 2))


# ---------------------------------------------------------------------------
# Deterministic parameter init (shapes mirror the PyTorch __init__)
# ---------------------------------------------------------------------------
def init_params(key, in_planes, planes, stride):
    ks = jax.random.split(key, 8)
    params = {
        "w1": 0.1 * jax.random.normal(ks[0], (planes, in_planes, 3, 3), jnp.float32),
        "g1": 1.0 + 0.1 * jax.random.normal(ks[1], (planes,), jnp.float32),
        "b1": 0.05 * jax.random.normal(ks[2], (planes,), jnp.float32),
        "w2": 0.1 * jax.random.normal(ks[3], (planes, planes, 3, 3), jnp.float32),
        "g2": 1.0 + 0.1 * jax.random.normal(ks[4], (planes,), jnp.float32),
        "b2": 0.05 * jax.random.normal(ks[5], (planes,), jnp.float32),
    }
    if stride != 1 or in_planes != planes:
        params["ws"] = 0.1 * jax.random.normal(
            ks[6], (planes, in_planes, 1, 1), jnp.float32)
        params["gs"] = 1.0 + 0.1 * jax.random.normal(ks[7], (planes,), jnp.float32)
        params["bs"] = jnp.zeros((planes,), jnp.float32)
    return params


if __name__ == "__main__":
    key = jax.random.PRNGKey(0)
    k_x1, k_p1, k_x2, k_p2 = jax.random.split(key, 4)

    # Case 1: projection shortcut (stride=2, 4 -> 8 channels).
    in_planes, planes, stride = 4, 8, 2
    x1 = jax.random.normal(k_x1, (2, in_planes, 16, 16), jnp.float32)
    params1 = init_params(k_p1, in_planes, planes, stride)
    fwd1 = jax.jit(functools.partial(block_forward, stride=stride))
    out1 = jax.block_until_ready(fwd1(x1, params1))
    ref1 = reference_block(x1, params1, stride)
    assert out1.shape == (2, planes, 8, 8), out1.shape
    assert bool(jnp.all(out1 >= 0.0))                       # final ReLU
    assert float(jnp.max(jnp.abs(out1 - ref1))) < 0.2       # bf16 tolerance

    # Case 2: identity shortcut (stride=1, same width).
    in_planes2, planes2, stride2 = 8, 8, 1
    x2 = jax.random.normal(k_x2, (2, in_planes2, 16, 16), jnp.float32)
    params2 = init_params(k_p2, in_planes2, planes2, stride2)
    fwd2 = jax.jit(functools.partial(block_forward, stride=stride2))
    out2 = jax.block_until_ready(fwd2(x2, params2))
    ref2 = reference_block(x2, params2, stride2)
    assert out2.shape == (2, planes2, 16, 16), out2.shape
    assert bool(jnp.all(out2 >= 0.0))
    assert float(jnp.max(jnp.abs(out2 - ref2))) < 0.2

    print("KERNEL_OK")
</pallas_src>

<mosaic_0001>
module attributes {stable_mosaic.version = 11 : i64} {
  func.func @_conv_stats_kernel(%arg0: i32, %arg1: memref<1x9x9x4xbf16, #tpu.memory_space<vmem>>, %arg2: memref<1x9x9x4xbf16, #tpu.memory_space<vmem>>, %arg3: memref<1x9x9x4xbf16, #tpu.memory_space<vmem>>, %arg4: memref<1x9x9x4xbf16, #tpu.memory_space<vmem>>, %arg5: memref<9x4x128xbf16, #tpu.memory_space<vmem>>, %arg6: memref<1x8x8x4xbf16, #tpu.memory_space<vmem>>, %arg7: memref<4x128xbf16, #tpu.memory_space<vmem>>, %arg8: memref<1x8x8x128xbf16, #tpu.memory_space<vmem>>, %arg9: memref<1x1x128xf32, #tpu.memory_space<vmem>>, %arg10: memref<1x1x128xf32, #tpu.memory_space<vmem>>, %arg11: memref<1x1x128xf32, #tpu.memory_space<vmem>>, %arg12: memref<1x1x128xf32, #tpu.memory_space<vmem>>, %arg13: memref<64x128xf32, #tpu.memory_space<vmem>>) attributes {dimension_semantics = [#tpu.dimension_semantics<parallel>], iteration_bounds = array<i64: 2>, scalar_prefetch = 0 : i64, scratch_operands = 1 : i64, tpu.core_type = #tpu.core_type<tc>, window_params = [{transform_indices = @transform_0, window_bounds = array<i64: 1, 9, 9, 4>}, {transform_indices = @transform_1, window_bounds = array<i64: 1, 9, 9, 4>}, {transform_indices = @transform_2, window_bounds = array<i64: 1, 9, 9, 4>}, {transform_indices = @transform_3, window_bounds = array<i64: 1, 9, 9, 4>}, {pipeline_mode = #tpu.pipeline_mode<synchronous>, transform_indices = @transform_4, window_bounds = array<i64: 9, 4, 128>}, {transform_indices = @transform_5, window_bounds = array<i64: 1, 8, 8, 4>}, {pipeline_mode = #tpu.pipeline_mode<synchronous>, transform_indices = @transform_6, window_bounds = array<i64: 4, 128>}, {transform_indices = @transform_7, window_bounds = array<i64: 1, 8, 8, 128>}, {transform_indices = @transform_8, window_bounds = array<i64: 1, 1, 128>}, {transform_indices = @transform_9, window_bounds = array<i64: 1, 1, 128>}, {transform_indices = @transform_10, window_bounds = array<i64: 1, 1, 128>}, {transform_indices = @transform_11, window_bounds = array<i64: 1, 1, 128>}]} {
    %c0 = arith.constant 0 : index
    %c0_0 = arith.constant 0 : index
    %c0_1 = arith.constant 0 : index
    %c0_2 = arith.constant 0 : index
    %0 = vector.load %arg1[%c0, %c0_0, %c0_1, %c0_2] : memref<1x9x9x4xbf16, #tpu.memory_space<vmem>>, vector<1x8x8x4xbf16>
    %1 = vector.shape_cast %0 : vector<1x8x8x4xbf16> to vector<8x8x4xbf16>
    %2 = vector.shape_cast %1 : vector<8x8x4xbf16> to vector<64x4xbf16>
    %c0_3 = arith.constant 0 : index
    %c0_4 = arith.constant 0 : index
    %c0_5 = arith.constant 0 : index
    %3 = vector.load %arg5[%c0_3, %c0_4, %c0_5] : memref<9x4x128xbf16, #tpu.memory_space<vmem>>, vector<1x4x128xbf16>
    %4 = vector.shape_cast %3 : vector<1x4x128xbf16> to vector<4x128xbf16>
    %cst = arith.constant dense<0.000000e+00> : vector<64x128xf32>
    %5 = tpu.matmul %2, %4, %cst {dimension_numbers = #tpu.dot_dimension_numbers<[1], [0], [0], [1], [0, 0, 1, 1], [], []>} : vector<64x4xbf16>, vector<4x128xbf16>, vector<64x128xf32> -> vector<64x128xf32>
    %c0_6 = arith.constant 0 : index
    %c0_7 = arith.constant 0 : index
    %6 = vector.load %arg13[%c0_6, %c0_7] : memref<64x128xf32, #tpu.memory_space<vmem>>, vector<64x128xf32>
    tpu.vector_store %arg13[%c0_6, %c0_7], %5 {strides = array<i32>} : memref<64x128xf32, #tpu.memory_space<vmem>>, vector<64x128xf32>,
    %c0_8 = arith.constant 0 : index
    %c0_9 = arith.constant 0 : index
    %c0_10 = arith.constant 0 : index
    %c0_11 = arith.constant 0 : index
    %7 = vector.load %arg2[%c0_8, %c0_9, %c0_10, %c0_11] : memref<1x9x9x4xbf16, #tpu.memory_space<vmem>>, vector<1x8x8x4xbf16>
    %8 = vector.shape_cast %7 : vector<1x8x8x4xbf16> to vector<8x8x4xbf16>
    %9 = vector.shape_cast %8 : vector<8x8x4xbf16> to vector<64x4xbf16>
    %c1 = arith.constant 1 : index
    %c0_12 = arith.constant 0 : index
    %c0_13 = arith.constant 0 : index
    %10 = vector.load %arg5[%c1, %c0_12, %c0_13] : memref<9x4x128xbf16, #tpu.memory_space<vmem>>, vector<1x4x128xbf16>
    %11 = vector.shape_cast %10 : vector<1x4x128xbf16> to vector<4x128xbf16>
    %cst_14 = arith.constant dense<0.000000e+00> : vector<64x128xf32>
    %12 = tpu.matmul %9, %11, %cst_14 {dimension_numbers = #tpu.dot_dimension_numbers<[1], [0], [0], [1], [0, 0, 1, 1], [], []>} : vector<64x4xbf16>, vector<4x128xbf16>, vector<64x128xf32> -> vector<64x128xf32>
    %c0_15 = arith.constant 0 : index
    %c0_16 = arith.constant 0 : index
    %13 = vector.load %arg13[%c0_15, %c0_16] : memref<64x128xf32, #tpu.memory_space<vmem>>, vector<64x128xf32>
    %14 = arith.addf %13, %12 : vector<64x128xf32>
    %c0_17 = arith.constant 0 : index
    %c0_18 = arith.constant 0 : index
    %15 = vector.load %arg13[%c0_17, %c0_18] : memref<64x128xf32, #tpu.memory_space<vmem>>, vector<64x128xf32>
    tpu.vector_store %arg13[%c0_17, %c0_18], %14 {strides = array<i32>} : memref<64x128xf32, #tpu.memory_space<vmem>>, vector<64x128xf32>,
    %c0_19 = arith.constant 0 : index
    %c0_20 = arith.constant 0 : index
    %c1_21 = arith.constant 1 : index
    %c0_22 = arith.constant 0 : index
    %16 = vector.load %arg1[%c0_19, %c0_20, %c1_21, %c0_22] : memref<1x9x9x4xbf16, #tpu.memory_space<vmem>>, vector<1x8x8x4xbf16>
    %17 = vector.shape_cast %16 : vector<1x8x8x4xbf16> to vector<8x8x4xbf16>
    %18 = vector.shape_cast %17 : vector<8x8x4xbf16> to vector<64x4xbf16>
    %c2 = arith.constant 2 : index
    %c0_23 = arith.constant 0 : index
    %c0_24 = arith.constant 0 : index
    %19 = vector.load %arg5[%c2, %c0_23, %c0_24] : memref<9x4x128xbf16, #tpu.memory_space<vmem>>, vector<1x4x128xbf16>
    %20 = vector.shape_cast %19 : vector<1x4x128xbf16> to vector<4x128xbf16>
    %cst_25 = arith.constant dense<0.000000e+00> : vector<64x128xf32>
    %21 = tpu.matmul %18, %20, %cst_25 {dimension_numbers = #tpu.dot_dimension_numbers<[1], [0], [0], [1], [0, 0, 1, 1], [], []>} : vector<64x4xbf16>, vector<4x128xbf16>, vector<64x128xf32> -> vector<64x128xf32>
    %c0_26 = arith.constant 0 : index
    %c0_27 = arith.constant 0 : index
    %22 = vector.load %arg13[%c0_26, %c0_27] : memref<64x128xf32, #tpu.memory_space<vmem>>, vector<64x128xf32>
    %23 = arith.addf %22, %21 : vector<64x128xf32>
    %c0_28 = arith.constant 0 : index
    %c0_29 = arith.constant 0 : index
    %24 = vector.load %arg13[%c0_28, %c0_29] : memref<64x128xf32, #tpu.memory_space<vmem>>, vector<64x128xf32>
    tpu.vector_store %arg13[%c0_28, %c0_29], %23 {strides = array<i32>} : memref<64x128xf32, #tpu.memory_space<vmem>>, vector<64x128xf32>,
    %c0_30 = arith.constant 0 : index
    %c0_31 = arith.constant 0 : index
    %c0_32 = arith.constant 0 : index
    %c0_33 = arith.constant 0 : index
    %25 = vector.load %arg3[%c0_30, %c0_31, %c0_32, %c0_33] : memref<1x9x9x4xbf16, #tpu.memory_space<vmem>>, vector<1x8x8x4xbf16>
    %26 = vector.shape_cast %25 : vector<1x8x8x4xbf16> to vector<8x8x4xbf16>
    %27 = vector.shape_cast %26 : vector<8x8x4xbf16> to vector<64x4xbf16>
    %c3 = arith.constant 3 : index
    %c0_34 = arith.constant 0 : index
    %c0_35 = arith.constant 0 : index
    %28 = vector.load %arg5[%c3, %c0_34, %c0_35] : memref<9x4x128xbf16, #tpu.memory_space<vmem>>, vector<1x4x128xbf16>
    %29 = vector.shape_cast %28 : vector<1x4x128xbf16> to vector<4x128xbf16>
    %cst_36 = arith.constant dense<0.000000e+00> : vector<64x128xf32>
    %30 = tpu.matmul %27, %29, %cst_36 {dimension_numbers = #tpu.dot_dimension_numbers<[1], [0], [0], [1], [0, 0, 1, 1], [], []>} : vector<64x4xbf16>, vector<4x128xbf16>, vector<64x128xf32> -> vector<64x128xf32>
    %c0_37 = arith.constant 0 : index
    %c0_38 = arith.constant 0 : index
    %31 = vector.load %arg13[%c0_37, %c0_38] : memref<64x128xf32, #tpu.memory_space<vmem>>, vector<64x128xf32>
    %32 = arith.addf %31, %30 : vector<64x128xf32>
    %c0_39 = arith.constant 0 : index
    %c0_40 = arith.constant 0 : index
    %33 = vector.load %arg13[%c0_39, %c0_40] : memref<64x128xf32, #tpu.memory_space<vmem>>, vector<64x128xf32>
    tpu.vector_store %arg13[%c0_39, %c0_40], %32 {strides = array<i32>} : memref<64x128xf32, #tpu.memory_space<vmem>>, vector<64x128xf32>,
    %c0_41 = arith.constant 0 : index
    %c0_42 = arith.constant 0 : index
    %c0_43 = arith.constant 0 : index
    %c0_44 = arith.constant 0 : index
    %34 = vector.load %arg4[%c0_41, %c0_42, %c0_43, %c0_44] : memref<1x9x9x4xbf16, #tpu.memory_space<vmem>>, vector<1x8x8x4xbf16>
    %35 = vector.shape_cast %34 : vector<1x8x8x4xbf16> to vector<8x8x4xbf16>
    %36 = vector.shape_cast %35 : vector<8x8x4xbf16> to vector<64x4xbf16>
    %c4 = arith.constant 4 : index
    %c0_45 = arith.constant 0 : index
    %c0_46 = arith.constant 0 : index
    %37 = vector.load %arg5[%c4, %c0_45, %c0_46] : memref<9x4x128xbf16, #tpu.memory_space<vmem>>, vector<1x4x128xbf16>
    %38 = vector.shape_cast %37 : vector<1x4x128xbf16> to vector<4x128xbf16>
    %cst_47 = arith.constant dense<0.000000e+00> : vector<64x128xf32>
    %39 = tpu.matmul %36, %38, %cst_47 {dimension_numbers = #tpu.dot_dimension_numbers<[1], [0], [0], [1], [0, 0, 1, 1], [], []>} : vector<64x4xbf16>, vector<4x128xbf16>, vector<64x128xf32> -> vector<64x128xf32>
    %c0_48 = arith.constant 0 : index
    %c0_49 = arith.constant 0 : index
    %40 = vector.load %arg13[%c0_48, %c0_49] : memref<64x128xf32, #tpu.memory_space<vmem>>, vector<64x128xf32>
    %41 = arith.addf %40, %39 : vector<64x128xf32>
    %c0_50 = arith.constant 0 : index
    %c0_51 = arith.constant 0 : index
    %42 = vector.load %arg13[%c0_50, %c0_51] : memref<64x128xf32, #tpu.memory_space<vmem>>, vector<64x128xf32>
    tpu.vector_store %arg13[%c0_50, %c0_51], %41 {strides = array<i32>} : memref<64x128xf32, #tpu.memory_space<vmem>>, vector<64x128xf32>,
    %c0_52 = arith.constant 0 : index
    %c0_53 = arith.constant 0 : index
    %c1_54 = arith.constant 1 : index
    %c0_55 = arith.constant 0 : index
    %43 = vector.load %arg3[%c0_52, %c0_53, %c1_54, %c0_55] : memref<1x9x9x4xbf16, #tpu.memory_space<vmem>>, vector<1x8x8x4xbf16>
    %44 = vector.shape_cast %43 : vector<1x8x8x4xbf16> to vector<8x8x4xbf16>
    %45 = vector.shape_cast %44 : vector<8x8x4xbf16> to vector<64x4xbf16>
    %c5 = arith.constant 5 : index
    %c0_56 = arith.constant 0 : index
    %c0_57 = arith.constant 0 : index
    %46 = vector.load %arg5[%c5, %c0_56, %c0_57] : memref<9x4x128xbf16, #tpu.memory_space<vmem>>, vector<1x4x128xbf16>
    %47 = vector.shape_cast %46 : vector<1x4x128xbf16> to vector<4x128xbf16>
    %cst_58 = arith.constant dense<0.000000e+00> : vector<64x128xf32>
    %48 = tpu.matmul %45, %47, %cst_58 {dimension_numbers = #tpu.dot_dimension_numbers<[1], [0], [0], [1], [0, 0, 1, 1], [], []>} : vector<64x4xbf16>, vector<4x128xbf16>, vector<64x128xf32> -> vector<64x128xf32>
    %c0_59 = arith.constant 0 : index
    %c0_60 = arith.constant 0 : index
    %49 = vector.load %arg13[%c0_59, %c0_60] : memref<64x128xf32, #tpu.memory_space<vmem>>, vector<64x128xf32>
    %50 = arith.addf %49, %48 : vector<64x128xf32>
    %c0_61 = arith.constant 0 : index
    %c0_62 = arith.constant 0 : index
    %51 = vector.load %arg13[%c0_61, %c0_62] : memref<64x128xf32, #tpu.memory_space<vmem>>, vector<64x128xf32>
    tpu.vector_store %arg13[%c0_61, %c0_62], %50 {strides = array<i32>} : memref<64x128xf32, #tpu.memory_space<vmem>>, vector<64x128xf32>,
    %c0_63 = arith.constant 0 : index
    %c1_64 = arith.constant 1 : index
    %c0_65 = arith.constant 0 : index
    %c0_66 = arith.constant 0 : index
    %52 = vector.load %arg1[%c0_63, %c1_64, %c0_65, %c0_66] : memref<1x9x9x4xbf16, #tpu.memory_space<vmem>>, vector<1x8x8x4xbf16>
    %53 = vector.shape_cast %52 : vector<1x8x8x4xbf16> to vector<8x8x4xbf16>
    %54 = vector.shape_cast %53 : vector<8x8x4xbf16> to vector<64x4xbf16>
    %c6 = arith.constant 6 : index
    %c0_67 = arith.constant 0 : index
    %c0_68 = arith.constant 0 : index
    %55 = vector.load %arg5[%c6, %c0_67, %c0_68] : memref<9x4x128xbf16, #tpu.memory_space<vmem>>, vector<1x4x128xbf16>
    %56 = vector.shape_cast %55 : vector<1x4x128xbf16> to vector<4x128xbf16>
    %cst_69 = arith.constant dense<0.000000e+00> : vector<64x128xf32>
    %57 = tpu.matmul %54, %56, %cst_69 {dimension_numbers = #tpu.dot_dimension_numbers<[1], [0], [0], [1], [0, 0, 1, 1], [], []>} : vector<64x4xbf16>, vector<4x128xbf16>, vector<64x128xf32> -> vector<64x128xf32>
    %c0_70 = arith.constant 0 : index
    %c0_71 = arith.constant 0 : index
    %58 = vector.load %arg13[%c0_70, %c0_71] : memref<64x128xf32, #tpu.memory_space<vmem>>, vector<64x128xf32>
    %59 = arith.addf %58, %57 : vector<64x128xf32>
    %c0_72 = arith.constant 0 : index
    %c0_73 = arith.constant 0 : index
    %60 = vector.load %arg13[%c0_72, %c0_73] : memref<64x128xf32, #tpu.memory_space<vmem>>, vector<64x128xf32>
    tpu.vector_store %arg13[%c0_72, %c0_73], %59 {strides = array<i32>} : memref<64x128xf32, #tpu.memory_space<vmem>>, vector<64x128xf32>,
    %c0_74 = arith.constant 0 : index
    %c1_75 = arith.constant 1 : index
    %c0_76 = arith.constant 0 : index
    %c0_77 = arith.constant 0 : index
    %61 = vector.load %arg2[%c0_74, %c1_75, %c0_76, %c0_77] : memref<1x9x9x4xbf16, #tpu.memory_space<vmem>>, vector<1x8x8x4xbf16>
    %62 = vector.shape_cast %61 : vector<1x8x8x4xbf16> to vector<8x8x4xbf16>
    %63 = vector.shape_cast %62 : vector<8x8x4xbf16> to vector<64x4xbf16>
    %c7 = arith.constant 7 : index
    %c0_78 = arith.constant 0 : index
    %c0_79 = arith.constant 0 : index
    %64 = vector.load %arg5[%c7, %c0_78, %c0_79] : memref<9x4x128xbf16, #tpu.memory_space<vmem>>, vector<1x4x128xbf16>
    %65 = vector.shape_cast %64 : vector<1x4x128xbf16> to vector<4x128xbf16>
    %cst_80 = arith.constant dense<0.000000e+00> : vector<64x128xf32>
    %66 = tpu.matmul %63, %65, %cst_80 {dimension_numbers = #tpu.dot_dimension_numbers<[1], [0], [0], [1], [0, 0, 1, 1], [], []>} : vector<64x4xbf16>, vector<4x128xbf16>, vector<64x128xf32> -> vector<64x128xf32>
    %c0_81 = arith.constant 0 : index
    %c0_82 = arith.constant 0 : index
    %67 = vector.load %arg13[%c0_81, %c0_82] : memref<64x128xf32, #tpu.memory_space<vmem>>, vector<64x128xf32>
    %68 = arith.addf %67, %66 : vector<64x128xf32>
    %c0_83 = arith.constant 0 : index
    %c0_84 = arith.constant 0 : index
    %69 = vector.load %arg13[%c0_83, %c0_84] : memref<64x128xf32, #tpu.memory_space<vmem>>, vector<64x128xf32>
    tpu.vector_store %arg13[%c0_83, %c0_84], %68 {strides = array<i32>} : memref<64x128xf32, #tpu.memory_space<vmem>>, vector<64x128xf32>,
    %c0_85 = arith.constant 0 : index
    %c1_86 = arith.constant 1 : index
    %c1_87 = arith.constant 1 : index
    %c0_88 = arith.constant 0 : index
    %70 = vector.load %arg1[%c0_85, %c1_86, %c1_87, %c0_88] : memref<1x9x9x4xbf16, #tpu.memory_space<vmem>>, vector<1x8x8x4xbf16>
    %71 = vector.shape_cast %70 : vector<1x8x8x4xbf16> to vector<8x8x4xbf16>
    %72 = vector.shape_cast %71 : vector<8x8x4xbf16> to vector<64x4xbf16>
    %c8 = arith.constant 8 : index
    %c0_89 = arith.constant 0 : index
    %c0_90 = arith.constant 0 : index
    %73 = vector.load %arg5[%c8, %c0_89, %c0_90] : memref<9x4x128xbf16, #tpu.memory_space<vmem>>, vector<1x4x128xbf16>
    %74 = vector.shape_cast %73 : vector<1x4x128xbf16> to vector<4x128xbf16>
    %cst_91 = arith.constant dense<0.000000e+00> : vector<64x128xf32>
    %75 = tpu.matmul %72, %74, %cst_91 {dimension_numbers = #tpu.dot_dimension_numbers<[1], [0], [0], [1], [0, 0, 1, 1], [], []>} : vector<64x4xbf16>, vector<4x128xbf16>, vector<64x128xf32> -> vector<64x128xf32>
    %c0_92 = arith.constant 0 : index
    %c0_93 = arith.constant 0 : index
    %76 = vector.load %arg13[%c0_92, %c0_93] : memref<64x128xf32, #tpu.memory_space<vmem>>, vector<64x128xf32>
    %77 = arith.addf %76, %75 : vector<64x128xf32>
    %c0_94 = arith.constant 0 : index
    %c0_95 = arith.constant 0 : index
    %78 = vector.load %arg13[%c0_94, %c0_95] : memref<64x128xf32, #tpu.memory_space<vmem>>, vector<64x128xf32>
    tpu.vector_store %arg13[%c0_94, %c0_95], %77 {strides = array<i32>} : memref<64x128xf32, #tpu.memory_space<vmem>>, vector<64x128xf32>,
    %c0_96 = arith.constant 0 : index
    %c0_97 = arith.constant 0 : index
    %79 = vector.load %arg13[%c0_96, %c0_97] : memref<64x128xf32, #tpu.memory_space<vmem>>, vector<64x128xf32>
    %80 = vector.shape_cast %79 : vector<64x128xf32> to vector<1x8x8x128xf32>
    %81 = arith.truncf %80 : vector<1x8x8x128xf32> to vector<1x8x8x128xbf16>
    %c0_98 = arith.constant 0 : index
    %c0_99 = arith.constant 0 : index
    %c0_100 = arith.constant 0 : index
    %c0_101 = arith.constant 0 : index
    %82 = vector.load %arg8[%c0_98, %c0_99, %c0_100, %c0_101] : memref<1x8x8x128xbf16, #tpu.memory_space<vmem>>, vector<1x8x8x128xbf16>
    tpu.vector_store %arg8[%c0_98, %c0_99, %c0_100, %c0_101], %81 {strides = array<i32>} : memref<1x8x8x128xbf16, #tpu.memory_space<vmem>>, vector<1x8x8x128xbf16>,
    %cst_102 = arith.constant dense<0.000000e+00> : vector<128xf32>
    %83 = vector.multi_reduction <add>, %79, %cst_102 [0] : vector<64x128xf32> to vector<128xf32>
    %84 = vector.shape_cast %83 : vector<128xf32> to vector<1x128xf32>
    %85 = vector.shape_cast %84 : vector<1x128xf32> to vector<1x1x128xf32>
    %c0_103 = arith.constant 0 : index
    %c0_104 = arith.constant 0 : index
    %c0_105 = arith.constant 0 : index
    %86 = vector.load %arg9[%c0_103, %c0_104, %c0_105] : memref<1x1x128xf32, #tpu.memory_space<vmem>>, vector<1x1x128xf32>
    tpu.vector_store %arg9[%c0_103, %c0_104, %c0_105], %85 {strides = array<i32>} : memref<1x1x128xf32, #tpu.memory_space<vmem>>, vector<1x1x128xf32>,
    %87 = arith.mulf %79, %79 : vector<64x128xf32>
    %cst_106 = arith.constant dense<0.000000e+00> : vector<128xf32>
    %88 = vector.multi_reduction <add>, %87, %cst_106 [0] : vector<64x128xf32> to vector<128xf32>
    %89 = vector.shape_cast %88 : vector<128xf32> to vector<1x128xf32>
    %90 = vector.shape_cast %89 : vector<1x128xf32> to vector<1x1x128xf32>
    %c0_107 = arith.constant 0 : index
    %c0_108 = arith.constant 0 : index
    %c0_109 = arith.constant 0 : index
    %91 = vector.load %arg10[%c0_107, %c0_108, %c0_109] : memref<1x1x128xf32, #tpu.memory_space<vmem>>, vector<1x1x128xf32>
    tpu.vector_store %arg10[%c0_107, %c0_108, %c0_109], %90 {strides = array<i32>} : memref<1x1x128xf32, #tpu.memory_space<vmem>>, vector<1x1x128xf32>,
    %c0_110 = arith.constant 0 : index
    %c0_111 = arith.constant 0 : index
    %c0_112 = arith.constant 0 : index
    %c0_113 = arith.constant 0 : index
    %92 = vector.load %arg6[%c0_110, %c0_111, %c0_112, %c0_113] : memref<1x8x8x4xbf16, #tpu.memory_space<vmem>>, vector<1x8x8x4xbf16>
    %93 = vector.shape_cast %92 : vector<1x8x8x4xbf16> to vector<64x4xbf16>
    %c0_114 = arith.constant 0 : index
    %c0_115 = arith.constant 0 : index
    %94 = vector.load %arg7[%c0_114, %c0_115] : memref<4x128xbf16, #tpu.memory_space<vmem>>, vector<4x128xbf16>
    %cst_116 = arith.constant dense<0.000000e+00> : vector<64x128xf32>
    %95 = tpu.matmul %93, %94, %cst_116 {dimension_numbers = #tpu.dot_dimension_numbers<[1], [0], [0], [1], [0, 0, 1, 1], [], []>} : vector<64x4xbf16>, vector<4x128xbf16>, vector<64x128xf32> -> vector<64x128xf32>
    %cst_117 = arith.constant dense<0.000000e+00> : vector<128xf32>
    %96 = vector.multi_reduction <add>, %95, %cst_117 [0] : vector<64x128xf32> to vector<128xf32>
    %97 = vector.shape_cast %96 : vector<128xf32> to vector<1x128xf32>
    %98 = vector.shape_cast %97 : vector<1x128xf32> to vector<1x1x128xf32>
    %c0_118 = arith.constant 0 : index
    %c0_119 = arith.constant 0 : index
    %c0_120 = arith.constant 0 : index
    %99 = vector.load %arg11[%c0_118, %c0_119, %c0_120] : memref<1x1x128xf32, #tpu.memory_space<vmem>>, vector<1x1x128xf32>
    tpu.vector_store %arg11[%c0_118, %c0_119, %c0_120], %98 {strides = array<i32>} : memref<1x1x128xf32, #tpu.memory_space<vmem>>, vector<1x1x128xf32>,
    %100 = arith.mulf %95, %95 : vector<64x128xf32>
    %cst_121 = arith.constant dense<0.000000e+00> : vector<128xf32>
    %101 = vector.multi_reduction <add>, %100, %cst_121 [0] : vector<64x128xf32> to vector<128xf32>
    %102 = vector.shape_cast %101 : vector<128xf32> to vector<1x128xf32>
    %103 = vector.shape_cast %102 : vector<1x128xf32> to vector<1x1x128xf32>
    %c0_122 = arith.constant 0 : index
    %c0_123 = arith.constant 0 : index
    %c0_124 = arith.constant 0 : index
    %104 = vector.load %arg12[%c0_122, %c0_123, %c0_124] : memref<1x1x128xf32, #tpu.memory_space<vmem>>, vector<1x1x128xf32>
    tpu.vector_store %arg12[%c0_122, %c0_123, %c0_124], %103 {strides = array<i32>} : memref<1x1x128xf32, #tpu.memory_space<vmem>>, vector<1x1x128xf32>,
    return
  }
  func.func @transform_0(%arg0: i32) -> (i32, i32, i32, i32) {
    %c0_i32 = arith.constant 0 : i32
    %c0_i32_0 = arith.constant 0 : i32
    %c0_i32_1 = arith.constant 0 : i32
    %c0_i32_2 = arith.constant 0 : i32
    return %arg0, %c0_i32, %c0_i32_0, %c0_i32_1 : i32, i32, i32, i32
  }
  func.func @transform_1(%arg0: i32) -> (i32, i32, i32, i32) {
    %c0_i32 = arith.constant 0 : i32
    %c0_i32_0 = arith.constant 0 : i32
    %c0_i32_1 = arith.constant 0 : i32
    %c0_i32_2 = arith.constant 0 : i32
    return %arg0, %c0_i32, %c0_i32_0, %c0_i32_1 : i32, i32, i32, i32
  }
  func.func @transform_2(%arg0: i32) -> (i32, i32, i32, i32) {
    %c0_i32 = arith.constant 0 : i32
    %c0_i32_0 = arith.constant 0 : i32
    %c0_i32_1 = arith.constant 0 : i32
    %c0_i32_2 = arith.constant 0 : i32
    return %arg0, %c0_i32, %c0_i32_0, %c0_i32_1 : i32, i32, i32, i32
  }
  func.func @transform_3(%arg0: i32) -> (i32, i32, i32, i32) {
    %c0_i32 = arith.constant 0 : i32
    %c0_i32_0 = arith.constant 0 : i32
    %c0_i32_1 = arith.constant 0 : i32
    %c0_i32_2 = arith.constant 0 : i32
    return %arg0, %c0_i32, %c0_i32_0, %c0_i32_1 : i32, i32, i32, i32
  }
  func.func @transform_4(%arg0: i32) -> (i32, i32, i32) {
    %c0_i32 = arith.constant 0 : i32
    %c0_i32_0 = arith.constant 0 : i32
    %c0_i32_1 = arith.constant 0 : i32
    %c0_i32_2 = arith.constant 0 : i32
    return %c0_i32, %c0_i32_0, %c0_i32_1 : i32, i32, i32
  }
  func.func @transform_5(%arg0: i32) -> (i32, i32, i32, i32) {
    %c0_i32 = arith.constant 0 : i32
    %c0_i32_0 = arith.constant 0 : i32
    %c0_i32_1 = arith.constant 0 : i32
    %c0_i32_2 = arith.constant 0 : i32
    return %arg0, %c0_i32, %c0_i32_0, %c0_i32_1 : i32, i32, i32, i32
  }
  func.func @transform_6(%arg0: i32) -> (i32, i32) {
    %c0_i32 = arith.constant 0 : i32
    %c0_i32_0 = arith.constant 0 : i32
    %c0_i32_1 = arith.constant 0 : i32
    return %c0_i32, %c0_i32_0 : i32, i32
  }
  func.func @transform_7(%arg0: i32) -> (i32, i32, i32, i32) {
    %c0_i32 = arith.constant 0 : i32
    %c0_i32_0 = arith.constant 0 : i32
    %c0_i32_1 = arith.constant 0 : i32
    %c0_i32_2 = arith.constant 0 : i32
    return %arg0, %c0_i32, %c0_i32_0, %c0_i32_1 : i32, i32, i32, i32
  }
  func.func @transform_8(%arg0: i32) -> (i32, i32, i32) {
    %c0_i32 = arith.constant 0 : i32
    %c0_i32_0 = arith.constant 0 : i32
    %c0_i32_1 = arith.constant 0 : i32
    return %arg0, %c0_i32, %c0_i32_0 : i32, i32, i32
  }
  func.func @transform_9(%arg0: i32) -> (i32, i32, i32) {
    %c0_i32 = arith.constant 0 : i32
    %c0_i32_0 = arith.constant 0 : i32
    %c0_i32_1 = arith.constant 0 : i32
    return %arg0, %c0_i32, %c0_i32_0 : i32, i32, i32
  }
  func.func @transform_10(%arg0: i32) -> (i32, i32, i32) {
    %c0_i32 = arith.constant 0 : i32
    %c0_i32_0 = arith.constant 0 : i32
    %c0_i32_1 = arith.constant 0 : i32
    return %arg0, %c0_i32, %c0_i32_0 : i32, i32, i32
  }
  func.func @transform_11(%arg0: i32) -> (i32, i32, i32) {
    %c0_i32 = arith.constant 0 : i32
    %c0_i32_0 = arith.constant 0 : i32
    %c0_i32_1 = arith.constant 0 : i32
    return %arg0, %c0_i32, %c0_i32_0 : i32, i32, i32
  }
}

module attributes {stable_mosaic.version = 11 : i64} {
  func.func @_bn_relu_pad_kernel(%arg0: i32, %arg1: memref<1x8x8x128xbf16, #tpu.memory_space<vmem>>, %arg2: memref<1x128xf32, #tpu.memory_space<vmem>>, %arg3: memref<1x128xf32, #tpu.memory_space<vmem>>, %arg4: memref<1x10x10x128xbf16, #tpu.memory_space<vmem>>) attributes {dimension_semantics = [#tpu.dimension_semantics<parallel>], iteration_bounds = array<i64: 2>, scalar_prefetch = 0 : i64, scratch_operands = 0 : i64, tpu.core_type = #tpu.core_type<tc>, window_params = [{transform_indices = @transform_0, window_bounds = array<i64: 1, 8, 8, 128>}, {pipeline_mode = #tpu.pipeline_mode<synchronous>, transform_indices = @transform_1, window_bounds = array<i64: 1, 128>}, {pipeline_mode = #tpu.pipeline_mode<synchronous>, transform_indices = @transform_2, window_bounds = array<i64: 1, 128>}, {transform_indices = @transform_3, window_bounds = array<i64: 1, 10, 10, 128>}]} {
    %c0 = arith.constant 0 : index
    %c0_0 = arith.constant 0 : index
    %0 = vector.load %arg2[%c0, %c0_0] : memref<1x128xf32, #tpu.memory_space<vmem>>, vector<1x128xf32>
    %1 = vector.shape_cast %0 : vector<1x128xf32> to vector<1x1x1x128xf32>
    %c0_1 = arith.constant 0 : index
    %c0_2 = arith.constant 0 : index
    %2 = vector.load %arg3[%c0_1, %c0_2] : memref<1x128xf32, #tpu.memory_space<vmem>>, vector<1x128xf32>
    %3 = vector.shape_cast %2 : vector<1x128xf32> to vector<1x1x1x128xf32>
    %c0_3 = arith.constant 0 : index
    %c0_4 = arith.constant 0 : index
    %c0_5 = arith.constant 0 : index
    %c0_6 = arith.constant 0 : index
    %4 = vector.load %arg1[%c0_3, %c0_4, %c0_5, %c0_6] : memref<1x8x8x128xbf16, #tpu.memory_space<vmem>>, vector<1x8x8x128xbf16>
    %5 = arith.extf %4 : vector<1x8x8x128xbf16> to vector<1x8x8x128xf32>
    %6 = vector.broadcast %1 : vector<1x1x1x128xf32> to vector<1x8x8x128xf32>
    %7 = arith.mulf %5, %6 : vector<1x8x8x128xf32>
    %8 = vector.broadcast %3 : vector<1x1x1x128xf32> to vector<1x8x8x128xf32>
    %9 = arith.addf %7, %8 : vector<1x8x8x128xf32>
    %cst = arith.constant 0.000000e+00 : f32
    %10 = vector.broadcast %cst : f32 to vector<1x8x8x128xf32>
    %11 = arith.maximumf %9, %10 : vector<1x8x8x128xf32>
    %cst_7 = arith.constant 0.000000e+00 : bf16
    %12 = vector.broadcast %cst_7 : bf16 to vector<1x10x10x128xbf16>
    %c0_8 = arith.constant 0 : index
    %c0_9 = arith.constant 0 : index
    %c0_10 = arith.constant 0 : index
    %c0_11 = arith.constant 0 : index
    %13 = vector.load %arg4[%c0_8, %c0_9, %c0_10, %c0_11] : memref<1x10x10x128xbf16, #tpu.memory_space<vmem>>, vector<1x10x10x128xbf16>
    tpu.vector_store %arg4[%c0_8, %c0_9, %c0_10, %c0_11], %12 {strides = array<i32>} : memref<1x10x10x128xbf16, #tpu.memory_space<vmem>>, vector<1x10x10x128xbf16>,
    %14 = vector.shape_cast %11 : vector<1x8x8x128xf32> to vector<8x8x128xf32>
    %15 = arith.truncf %14 : vector<8x8x128xf32> to vector<8x8x128xbf16>
    %c0_12 = arith.constant 0 : index
    %c1 = arith.constant 1 : index
    %c1_13 = arith.constant 1 : index
    %c0_14 = arith.constant 0 : index
    %16 = vector.load %arg4[%c0_12, %c1, %c1_13, %c0_14] : memref<1x10x10x128xbf16, #tpu.memory_space<vmem>>, vector<1x8x8x128xbf16>
    %17 = vector.shape_cast %16 : vector<1x8x8x128xbf16> to vector<8x8x128xbf16>
    %18 = vector.shape_cast %15 : vector<8x8x128xbf16> to vector<1x8x8x128xbf16>
    tpu.vector_store %arg4[%c0_12, %c1, %c1_13, %c0_14], %18 {strides = array<i32>} : memref<1x10x10x128xbf16, #tpu.memory_space<vmem>>, vector<1x8x8x128xbf16>,
    return
  }
  func.func @transform_0(%arg0: i32) -> (i32, i32, i32, i32) {
    %c0_i32 = arith.constant 0 : i32
    %c0_i32_0 = arith.constant 0 : i32
    %c0_i32_1 = arith.constant 0 : i32
    %c0_i32_2 = arith.constant 0 : i32
    return %arg0, %c0_i32, %c0_i32_0, %c0_i32_1 : i32, i32, i32, i32
  }
  func.func @transform_1(%arg0: i32) -> (i32, i32) {
    %c0_i32 = arith.constant 0 : i32
    %c0_i32_0 = arith.constant 0 : i32
    %c0_i32_1 = arith.constant 0 : i32
    return %c0_i32, %c0_i32_0 : i32, i32
  }
  func.func @transform_2(%arg0: i32) -> (i32, i32) {
    %c0_i32 = arith.constant 0 : i32
    %c0_i32_0 = arith.constant 0 : i32
    %c0_i32_1 = arith.constant 0 : i32
    return %c0_i32, %c0_i32_0 : i32, i32
  }
  func.func @transform_3(%arg0: i32) -> (i32, i32, i32, i32) {
    %c0_i32 = arith.constant 0 : i32
    %c0_i32_0 = arith.constant 0 : i32
    %c0_i32_1 = arith.constant 0 : i32
    %c0_i32_2 = arith.constant 0 : i32
    return %arg0, %c0_i32, %c0_i32_0, %c0_i32_1 : i32, i32, i32, i32
  }
}

module attributes {stable_mosaic.version = 11 : i64} {
  func.func @_conv_stats_kernel(%arg0: i32, %arg1: memref<1x10x10x128xbf16, #tpu.memory_space<vmem>>, %arg2: memref<9x128x128xbf16, #tpu.memory_space<vmem>>, %arg3: memref<1x8x8x128xbf16, #tpu.memory_space<vmem>>, %arg4: memref<1x1x128xf32, #tpu.memory_space<vmem>>, %arg5: memref<1x1x128xf32, #tpu.memory_space<vmem>>, %arg6: memref<64x128xf32, #tpu.memory_space<vmem>>) attributes {dimension_semantics = [#tpu.dimension_semantics<parallel>], iteration_bounds = array<i64: 2>, scalar_prefetch = 0 : i64, scratch_operands = 1 : i64, tpu.core_type = #tpu.core_type<tc>, window_params = [{transform_indices = @transform_0, window_bounds = array<i64: 1, 10, 10, 128>}, {pipeline_mode = #tpu.pipeline_mode<synchronous>, transform_indices = @transform_1, window_bounds = array<i64: 9, 128, 128>}, {transform_indices = @transform_2, window_bounds = array<i64: 1, 8, 8, 128>}, {transform_indices = @transform_3, window_bounds = array<i64: 1, 1, 128>}, {transform_indices = @transform_4, window_bounds = array<i64: 1, 1, 128>}]} {
    %c0 = arith.constant 0 : index
    %c0_0 = arith.constant 0 : index
    %c0_1 = arith.constant 0 : index
    %c0_2 = arith.constant 0 : index
    %0 = vector.load %arg1[%c0, %c0_0, %c0_1, %c0_2] : memref<1x10x10x128xbf16, #tpu.memory_space<vmem>>, vector<1x8x8x128xbf16>
    %1 = vector.shape_cast %0 : vector<1x8x8x128xbf16> to vector<8x8x128xbf16>
    %2 = vector.shape_cast %1 : vector<8x8x128xbf16> to vector<64x128xbf16>
    %c0_3 = arith.constant 0 : index
    %c0_4 = arith.constant 0 : index
    %c0_5 = arith.constant 0 : index
    %3 = vector.load %arg2[%c0_3, %c0_4, %c0_5] : memref<9x128x128xbf16, #tpu.memory_space<vmem>>, vector<1x128x128xbf16>
    %4 = vector.shape_cast %3 : vector<1x128x128xbf16> to vector<128x128xbf16>
    %cst = arith.constant dense<0.000000e+00> : vector<64x128xf32>
    %5 = tpu.matmul %2, %4, %cst {dimension_numbers = #tpu.dot_dimension_numbers<[1], [0], [0], [1], [0, 0, 1, 1], [], []>} : vector<64x128xbf16>, vector<128x128xbf16>, vector<64x128xf32> -> vector<64x128xf32>
    %c0_6 = arith.constant 0 : index
    %c0_7 = arith.constant 0 : index
    %6 = vector.load %arg6[%c0_6, %c0_7] : memref<64x128xf32, #tpu.memory_space<vmem>>, vector<64x128xf32>
    tpu.vector_store %arg6[%c0_6, %c0_7], %5 {strides = array<i32>} : memref<64x128xf32, #tpu.memory_space<vmem>>, vector<64x128xf32>,
    %c0_8 = arith.constant 0 : index
    %c0_9 = arith.constant 0 : index
    %c1 = arith.constant 1 : index
    %c0_10 = arith.constant 0 : index
    %7 = vector.load %arg1[%c0_8, %c0_9, %c1, %c0_10] : memref<1x10x10x128xbf16, #tpu.memory_space<vmem>>, vector<1x8x8x128xbf16>
    %8 = vector.shape_cast %7 : vector<1x8x8x128xbf16> to vector<8x8x128xbf16>
    %9 = vector.shape_cast %8 : vector<8x8x128xbf16> to vector<64x128xbf16>
    %c1_11 = arith.constant 1 : index
    %c0_12 = arith.constant 0 : index
    %c0_13 = arith.constant 0 : index
    %10 = vector.load %arg2[%c1_11, %c0_12, %c0_13] : memref<9x128x128xbf16, #tpu.memory_space<vmem>>, vector<1x128x128xbf16>
    %11 = vector.shape_cast %10 : vector<1x128x128xbf16> to vector<128x128xbf16>
    %cst_14 = arith.constant dense<0.000000e+00> : vector<64x128xf32>
    %12 = tpu.matmul %9, %11, %cst_14 {dimension_numbers = #tpu.dot_dimension_numbers<[1], [0], [0], [1], [0, 0, 1, 1], [], []>} : vector<64x128xbf16>, vector<128x128xbf16>, vector<64x128xf32> -> vector<64x128xf32>
    %c0_15 = arith.constant 0 : index
    %c0_16 = arith.constant 0 : index
    %13 = vector.load %arg6[%c0_15, %c0_16] : memref<64x128xf32, #tpu.memory_space<vmem>>, vector<64x128xf32>
    %14 = arith.addf %13, %12 : vector<64x128xf32>
    %c0_17 = arith.constant 0 : index
    %c0_18 = arith.constant 0 : index
    %15 = vector.load %arg6[%c0_17, %c0_18] : memref<64x128xf32, #tpu.memory_space<vmem>>, vector<64x128xf32>
    tpu.vector_store %arg6[%c0_17, %c0_18], %14 {strides = array<i32>} : memref<64x128xf32, #tpu.memory_space<vmem>>, vector<64x128xf32>,
    %c0_19 = arith.constant 0 : index
    %c0_20 = arith.constant 0 : index
    %c2 = arith.constant 2 : index
    %c0_21 = arith.constant 0 : index
    %16 = vector.load %arg1[%c0_19, %c0_20, %c2, %c0_21] : memref<1x10x10x128xbf16, #tpu.memory_space<vmem>>, vector<1x8x8x128xbf16>
    %17 = vector.shape_cast %16 : vector<1x8x8x128xbf16> to vector<8x8x128xbf16>
    %18 = vector.shape_cast %17 : vector<8x8x128xbf16> to vector<64x128xbf16>
    %c2_22 = arith.constant 2 : index
    %c0_23 = arith.constant 0 : index
    %c0_24 = arith.constant 0 : index
    %19 = vector.load %arg2[%c2_22, %c0_23, %c0_24] : memref<9x128x128xbf16, #tpu.memory_space<vmem>>, vector<1x128x128xbf16>
    %20 = vector.shape_cast %19 : vector<1x128x128xbf16> to vector<128x128xbf16>
    %cst_25 = arith.constant dense<0.000000e+00> : vector<64x128xf32>
    %21 = tpu.matmul %18, %20, %cst_25 {dimension_numbers = #tpu.dot_dimension_numbers<[1], [0], [0], [1], [0, 0, 1, 1], [], []>} : vector<64x128xbf16>, vector<128x128xbf16>, vector<64x128xf32> -> vector<64x128xf32>
    %c0_26 = arith.constant 0 : index
    %c0_27 = arith.constant 0 : index
    %22 = vector.load %arg6[%c0_26, %c0_27] : memref<64x128xf32, #tpu.memory_space<vmem>>, vector<64x128xf32>
    %23 = arith.addf %22, %21 : vector<64x128xf32>
    %c0_28 = arith.constant 0 : index
    %c0_29 = arith.constant 0 : index
    %24 = vector.load %arg6[%c0_28, %c0_29] : memref<64x128xf32, #tpu.memory_space<vmem>>, vector<64x128xf32>
    tpu.vector_store %arg6[%c0_28, %c0_29], %23 {strides = array<i32>} : memref<64x128xf32, #tpu.memory_space<vmem>>, vector<64x128xf32>,
    %c0_30 = arith.constant 0 : index
    %c1_31 = arith.constant 1 : index
    %c0_32 = arith.constant 0 : index
    %c0_33 = arith.constant 0 : index
    %25 = vector.load %arg1[%c0_30, %c1_31, %c0_32, %c0_33] : memref<1x10x10x128xbf16, #tpu.memory_space<vmem>>, vector<1x8x8x128xbf16>
    %26 = vector.shape_cast %25 : vector<1x8x8x128xbf16> to vector<8x8x128xbf16>
    %27 = vector.shape_cast %26 : vector<8x8x128xbf16> to vector<64x128xbf16>
    %c3 = arith.constant 3 : index
    %c0_34 = arith.constant 0 : index
    %c0_35 = arith.constant 0 : index
    %28 = vector.load %arg2[%c3, %c0_34, %c0_35] : memref<9x128x128xbf16, #tpu.memory_space<vmem>>, vector<1x128x128xbf16>
    %29 = vector.shape_cast %28 : vector<1x128x128xbf16> to vector<128x128xbf16>
    %cst_36 = arith.constant dense<0.000000e+00> : vector<64x128xf32>
    %30 = tpu.matmul %27, %29, %cst_36 {dimension_numbers = #tpu.dot_dimension_numbers<[1], [0], [0], [1], [0, 0, 1, 1], [], []>} : vector<64x128xbf16>, vector<128x128xbf16>, vector<64x128xf32> -> vector<64x128xf32>
    %c0_37 = arith.constant 0 : index
    %c0_38 = arith.constant 0 : index
    %31 = vector.load %arg6[%c0_37, %c0_38] : memref<64x128xf32, #tpu.memory_space<vmem>>, vector<64x128xf32>
    %32 = arith.addf %31, %30 : vector<64x128xf32>
    %c0_39 = arith.constant 0 : index
    %c0_40 = arith.constant 0 : index
    %33 = vector.load %arg6[%c0_39, %c0_40] : memref<64x128xf32, #tpu.memory_space<vmem>>, vector<64x128xf32>
    tpu.vector_store %arg6[%c0_39, %c0_40], %32 {strides = array<i32>} : memref<64x128xf32, #tpu.memory_space<vmem>>, vector<64x128xf32>,
    %c0_41 = arith.constant 0 : index
    %c1_42 = arith.constant 1 : index
    %c1_43 = arith.constant 1 : index
    %c0_44 = arith.constant 0 : index
    %34 = vector.load %arg1[%c0_41, %c1_42, %c1_43, %c0_44] : memref<1x10x10x128xbf16, #tpu.memory_space<vmem>>, vector<1x8x8x128xbf16>
    %35 = vector.shape_cast %34 : vector<1x8x8x128xbf16> to vector<8x8x128xbf16>
    %36 = vector.shape_cast %35 : vector<8x8x128xbf16> to vector<64x128xbf16>
    %c4 = arith.constant 4 : index
    %c0_45 = arith.constant 0 : index
    %c0_46 = arith.constant 0 : index
    %37 = vector.load %arg2[%c4, %c0_45, %c0_46] : memref<9x128x128xbf16, #tpu.memory_space<vmem>>, vector<1x128x128xbf16>
    %38 = vector.shape_cast %37 : vector<1x128x128xbf16> to vector<128x128xbf16>
    %cst_47 = arith.constant dense<0.000000e+00> : vector<64x128xf32>
    %39 = tpu.matmul %36, %38, %cst_47 {dimension_numbers = #tpu.dot_dimension_numbers<[1], [0], [0], [1], [0, 0, 1, 1], [], []>} : vector<64x128xbf16>, vector<128x128xbf16>, vector<64x128xf32> -> vector<64x128xf32>
    %c0_48 = arith.constant 0 : index
    %c0_49 = arith.constant 0 : index
    %40 = vector.load %arg6[%c0_48, %c0_49] : memref<64x128xf32, #tpu.memory_space<vmem>>, vector<64x128xf32>
    %41 = arith.addf %40, %39 : vector<64x128xf32>
    %c0_50 = arith.constant 0 : index
    %c0_51 = arith.constant 0 : index
    %42 = vector.load %arg6[%c0_50, %c0_51] : memref<64x128xf32, #tpu.memory_space<vmem>>, vector<64x128xf32>
    tpu.vector_store %arg6[%c0_50, %c0_51], %41 {strides = array<i32>} : memref<64x128xf32, #tpu.memory_space<vmem>>, vector<64x128xf32>,
    %c0_52 = arith.constant 0 : index
    %c1_53 = arith.constant 1 : index
    %c2_54 = arith.constant 2 : index
    %c0_55 = arith.constant 0 : index
    %43 = vector.load %arg1[%c0_52, %c1_53, %c2_54, %c0_55] : memref<1x10x10x128xbf16, #tpu.memory_space<vmem>>, vector<1x8x8x128xbf16>
    %44 = vector.shape_cast %43 : vector<1x8x8x128xbf16> to vector<8x8x128xbf16>
    %45 = vector.shape_cast %44 : vector<8x8x128xbf16> to vector<64x128xbf16>
    %c5 = arith.constant 5 : index
    %c0_56 = arith.constant 0 : index
    %c0_57 = arith.constant 0 : index
    %46 = vector.load %arg2[%c5, %c0_56, %c0_57] : memref<9x128x128xbf16, #tpu.memory_space<vmem>>, vector<1x128x128xbf16>
    %47 = vector.shape_cast %46 : vector<1x128x128xbf16> to vector<128x128xbf16>
    %cst_58 = arith.constant dense<0.000000e+00> : vector<64x128xf32>
    %48 = tpu.matmul %45, %47, %cst_58 {dimension_numbers = #tpu.dot_dimension_numbers<[1], [0], [0], [1], [0, 0, 1, 1], [], []>} : vector<64x128xbf16>, vector<128x128xbf16>, vector<64x128xf32> -> vector<64x128xf32>
    %c0_59 = arith.constant 0 : index
    %c0_60 = arith.constant 0 : index
    %49 = vector.load %arg6[%c0_59, %c0_60] : memref<64x128xf32, #tpu.memory_space<vmem>>, vector<64x128xf32>
    %50 = arith.addf %49, %48 : vector<64x128xf32>
    %c0_61 = arith.constant 0 : index
    %c0_62 = arith.constant 0 : index
    %51 = vector.load %arg6[%c0_61, %c0_62] : memref<64x128xf32, #tpu.memory_space<vmem>>, vector<64x128xf32>
    tpu.vector_store %arg6[%c0_61, %c0_62], %50 {strides = array<i32>} : memref<64x128xf32, #tpu.memory_space<vmem>>, vector<64x128xf32>,
    %c0_63 = arith.constant 0 : index
    %c2_64 = arith.constant 2 : index
    %c0_65 = arith.constant 0 : index
    %c0_66 = arith.constant 0 : index
    %52 = vector.load %arg1[%c0_63, %c2_64, %c0_65, %c0_66] : memref<1x10x10x128xbf16, #tpu.memory_space<vmem>>, vector<1x8x8x128xbf16>
    %53 = vector.shape_cast %52 : vector<1x8x8x128xbf16> to vector<8x8x128xbf16>
    %54 = vector.shape_cast %53 : vector<8x8x128xbf16> to vector<64x128xbf16>
    %c6 = arith.constant 6 : index
    %c0_67 = arith.constant 0 : index
    %c0_68 = arith.constant 0 : index
    %55 = vector.load %arg2[%c6, %c0_67, %c0_68] : memref<9x128x128xbf16, #tpu.memory_space<vmem>>, vector<1x128x128xbf16>
    %56 = vector.shape_cast %55 : vector<1x128x128xbf16> to vector<128x128xbf16>
    %cst_69 = arith.constant dense<0.000000e+00> : vector<64x128xf32>
    %57 = tpu.matmul %54, %56, %cst_69 {dimension_numbers = #tpu.dot_dimension_numbers<[1], [0], [0], [1], [0, 0, 1, 1], [], []>} : vector<64x128xbf16>, vector<128x128xbf16>, vector<64x128xf32> -> vector<64x128xf32>
    %c0_70 = arith.constant 0 : index
    %c0_71 = arith.constant 0 : index
    %58 = vector.load %arg6[%c0_70, %c0_71] : memref<64x128xf32, #tpu.memory_space<vmem>>, vector<64x128xf32>
    %59 = arith.addf %58, %57 : vector<64x128xf32>
    %c0_72 = arith.constant 0 : index
    %c0_73 = arith.constant 0 : index
    %60 = vector.load %arg6[%c0_72, %c0_73] : memref<64x128xf32, #tpu.memory_space<vmem>>, vector<64x128xf32>
    tpu.vector_store %arg6[%c0_72, %c0_73], %59 {strides = array<i32>} : memref<64x128xf32, #tpu.memory_space<vmem>>, vector<64x128xf32>,
    %c0_74 = arith.constant 0 : index
    %c2_75 = arith.constant 2 : index
    %c1_76 = arith.constant 1 : index
    %c0_77 = arith.constant 0 : index
    %61 = vector.load %arg1[%c0_74, %c2_75, %c1_76, %c0_77] : memref<1x10x10x128xbf16, #tpu.memory_space<vmem>>, vector<1x8x8x128xbf16>
    %62 = vector.shape_cast %61 : vector<1x8x8x128xbf16> to vector<8x8x128xbf16>
    %63 = vector.shape_cast %62 : vector<8x8x128xbf16> to vector<64x128xbf16>
    %c7 = arith.constant 7 : index
    %c0_78 = arith.constant 0 : index
    %c0_79 = arith.constant 0 : index
    %64 = vector.load %arg2[%c7, %c0_78, %c0_79] : memref<9x128x128xbf16, #tpu.memory_space<vmem>>, vector<1x128x128xbf16>
    %65 = vector.shape_cast %64 : vector<1x128x128xbf16> to vector<128x128xbf16>
    %cst_80 = arith.constant dense<0.000000e+00> : vector<64x128xf32>
    %66 = tpu.matmul %63, %65, %cst_80 {dimension_numbers = #tpu.dot_dimension_numbers<[1], [0], [0], [1], [0, 0, 1, 1], [], []>} : vector<64x128xbf16>, vector<128x128xbf16>, vector<64x128xf32> -> vector<64x128xf32>
    %c0_81 = arith.constant 0 : index
    %c0_82 = arith.constant 0 : index
    %67 = vector.load %arg6[%c0_81, %c0_82] : memref<64x128xf32, #tpu.memory_space<vmem>>, vector<64x128xf32>
    %68 = arith.addf %67, %66 : vector<64x128xf32>
    %c0_83 = arith.constant 0 : index
    %c0_84 = arith.constant 0 : index
    %69 = vector.load %arg6[%c0_83, %c0_84] : memref<64x128xf32, #tpu.memory_space<vmem>>, vector<64x128xf32>
    tpu.vector_store %arg6[%c0_83, %c0_84], %68 {strides = array<i32>} : memref<64x128xf32, #tpu.memory_space<vmem>>, vector<64x128xf32>,
    %c0_85 = arith.constant 0 : index
    %c2_86 = arith.constant 2 : index
    %c2_87 = arith.constant 2 : index
    %c0_88 = arith.constant 0 : index
    %70 = vector.load %arg1[%c0_85, %c2_86, %c2_87, %c0_88] : memref<1x10x10x128xbf16, #tpu.memory_space<vmem>>, vector<1x8x8x128xbf16>
    %71 = vector.shape_cast %70 : vector<1x8x8x128xbf16> to vector<8x8x128xbf16>
    %72 = vector.shape_cast %71 : vector<8x8x128xbf16> to vector<64x128xbf16>
    %c8 = arith.constant 8 : index
    %c0_89 = arith.constant 0 : index
    %c0_90 = arith.constant 0 : index
    %73 = vector.load %arg2[%c8, %c0_89, %c0_90] : memref<9x128x128xbf16, #tpu.memory_space<vmem>>, vector<1x128x128xbf16>
    %74 = vector.shape_cast %73 : vector<1x128x128xbf16> to vector<128x128xbf16>
    %cst_91 = arith.constant dense<0.000000e+00> : vector<64x128xf32>
    %75 = tpu.matmul %72, %74, %cst_91 {dimension_numbers = #tpu.dot_dimension_numbers<[1], [0], [0], [1], [0, 0, 1, 1], [], []>} : vector<64x128xbf16>, vector<128x128xbf16>, vector<64x128xf32> -> vector<64x128xf32>
    %c0_92 = arith.constant 0 : index
    %c0_93 = arith.constant 0 : index
    %76 = vector.load %arg6[%c0_92, %c0_93] : memref<64x128xf32, #tpu.memory_space<vmem>>, vector<64x128xf32>
    %77 = arith.addf %76, %75 : vector<64x128xf32>
    %c0_94 = arith.constant 0 : index
    %c0_95 = arith.constant 0 : index
    %78 = vector.load %arg6[%c0_94, %c0_95] : memref<64x128xf32, #tpu.memory_space<vmem>>, vector<64x128xf32>
    tpu.vector_store %arg6[%c0_94, %c0_95], %77 {strides = array<i32>} : memref<64x128xf32, #tpu.memory_space<vmem>>, vector<64x128xf32>,
    %c0_96 = arith.constant 0 : index
    %c0_97 = arith.constant 0 : index
    %79 = vector.load %arg6[%c0_96, %c0_97] : memref<64x128xf32, #tpu.memory_space<vmem>>, vector<64x128xf32>
    %80 = vector.shape_cast %79 : vector<64x128xf32> to vector<1x8x8x128xf32>
    %81 = arith.truncf %80 : vector<1x8x8x128xf32> to vector<1x8x8x128xbf16>
    %c0_98 = arith.constant 0 : index
    %c0_99 = arith.constant 0 : index
    %c0_100 = arith.constant 0 : index
    %c0_101 = arith.constant 0 : index
    %82 = vector.load %arg3[%c0_98, %c0_99, %c0_100, %c0_101] : memref<1x8x8x128xbf16, #tpu.memory_space<vmem>>, vector<1x8x8x128xbf16>
    tpu.vector_store %arg3[%c0_98, %c0_99, %c0_100, %c0_101], %81 {strides = array<i32>} : memref<1x8x8x128xbf16, #tpu.memory_space<vmem>>, vector<1x8x8x128xbf16>,
    %cst_102 = arith.constant dense<0.000000e+00> : vector<128xf32>
    %83 = vector.multi_reduction <add>, %79, %cst_102 [0] : vector<64x128xf32> to vector<128xf32>
    %84 = vector.shape_cast %83 : vector<128xf32> to vector<1x128xf32>
    %85 = vector.shape_cast %84 : vector<1x128xf32> to vector<1x1x128xf32>
    %c0_103 = arith.constant 0 : index
    %c0_104 = arith.constant 0 : index
    %c0_105 = arith.constant 0 : index
    %86 = vector.load %arg4[%c0_103, %c0_104, %c0_105] : memref<1x1x128xf32, #tpu.memory_space<vmem>>, vector<1x1x128xf32>
    tpu.vector_store %arg4[%c0_103, %c0_104, %c0_105], %85 {strides = array<i32>} : memref<1x1x128xf32, #tpu.memory_space<vmem>>, vector<1x1x128xf32>,
    %87 = arith.mulf %79, %79 : vector<64x128xf32>
    %cst_106 = arith.constant dense<0.000000e+00> : vector<128xf32>
    %88 = vector.multi_reduction <add>, %87, %cst_106 [0] : vector<64x128xf32> to vector<128xf32>
    %89 = vector.shape_cast %88 : vector<128xf32> to vector<1x128xf32>
    %90 = vector.shape_cast %89 : vector<1x128xf32> to vector<1x1x128xf32>
    %c0_107 = arith.constant 0 : index
    %c0_108 = arith.constant 0 : index
    %c0_109 = arith.constant 0 : index
    %91 = vector.load %arg5[%c0_107, %c0_108, %c0_109] : memref<1x1x128xf32, #tpu.memory_space<vmem>>, vector<1x1x128xf32>
    tpu.vector_store %arg5[%c0_107, %c0_108, %c0_109], %90 {strides = array<i32>} : memref<1x1x128xf32, #tpu.memory_space<vmem>>, vector<1x1x128xf32>,
    return
  }
  func.func @transform_0(%arg0: i32) -> (i32, i32, i32, i32) {
    %c0_i32 = arith.constant 0 : i32
    %c0_i32_0 = arith.constant 0 : i32
    %c0_i32_1 = arith.constant 0 : i32
    %c0_i32_2 = arith.constant 0 : i32
    return %arg0, %c0_i32, %c0_i32_0, %c0_i32_1 : i32, i32, i32, i32
  }
  func.func @transform_1(%arg0: i32) -> (i32, i32, i32) {
    %c0_i32 = arith.constant 0 : i32
    %c0_i32_0 = arith.constant 0 : i32
    %c0_i32_1 = arith.constant 0 : i32
    %c0_i32_2 = arith.constant 0 : i32
    return %c0_i32, %c0_i32_0, %c0_i32_1 : i32, i32, i32
  }
  func.func @transform_2(%arg0: i32) -> (i32, i32, i32, i32) {
    %c0_i32 = arith.constant 0 : i32
    %c0_i32_0 = arith.constant 0 : i32
    %c0_i32_1 = arith.constant 0 : i32
    %c0_i32_2 = arith.constant 0 : i32
    return %arg0, %c0_i32, %c0_i32_0, %c0_i32_1 : i32, i32, i32, i32
  }
  func.func @transform_3(%arg0: i32) -> (i32, i32, i32) {
    %c0_i32 = arith.constant 0 : i32
    %c0_i32_0 = arith.constant 0 : i32
    %c0_i32_1 = arith.constant 0 : i32
    return %arg0, %c0_i32, %c0_i32_0 : i32, i32, i32
  }
  func.func @transform_4(%arg0: i32) -> (i32, i32, i32) {
    %c0_i32 = arith.constant 0 : i32
    %c0_i32_0 = arith.constant 0 : i32
    %c0_i32_1 = arith.constant 0 : i32
    return %arg0, %c0_i32, %c0_i32_0 : i32, i32, i32
  }
}

module attributes {stable_mosaic.version = 11 : i64} {
  func.func @_bn_res_relu_kernel(%arg0: i32, %arg1: memref<1x8x8x128xbf16, #tpu.memory_space<vmem>>, %arg2: memref<1x128xf32, #tpu.memory_space<vmem>>, %arg3: memref<1x128xf32, #tpu.memory_space<vmem>>, %arg4: memref<1x8x8x4xbf16, #tpu.memory_space<vmem>>, %arg5: memref<4x128xbf16, #tpu.memory_space<vmem>>, %arg6: memref<1x128xf32, #tpu.memory_space<vmem>>, %arg7: memref<1x128xf32, #tpu.memory_space<vmem>>, %arg8: memref<1x8x8x128xbf16, #tpu.memory_space<vmem>>) attributes {dimension_semantics = [#tpu.dimension_semantics<parallel>], iteration_bounds = array<i64: 2>, scalar_prefetch = 0 : i64, scratch_operands = 0 : i64, tpu.core_type = #tpu.core_type<tc>, window_params = [{transform_indices = @transform_0, window_bounds = array<i64: 1, 8, 8, 128>}, {pipeline_mode = #tpu.pipeline_mode<synchronous>, transform_indices = @transform_1, window_bounds = array<i64: 1, 128>}, {pipeline_mode = #tpu.pipeline_mode<synchronous>, transform_indices = @transform_2, window_bounds = array<i64: 1, 128>}, {transform_indices = @transform_3, window_bounds = array<i64: 1, 8, 8, 4>}, {pipeline_mode = #tpu.pipeline_mode<synchronous>, transform_indices = @transform_4, window_bounds = array<i64: 4, 128>}, {pipeline_mode = #tpu.pipeline_mode<synchronous>, transform_indices = @transform_5, window_bounds = array<i64: 1, 128>}, {pipeline_mode = #tpu.pipeline_mode<synchronous>, transform_indices = @transform_6, window_bounds = array<i64: 1, 128>}, {transform_indices = @transform_7, window_bounds = array<i64: 1, 8, 8, 128>}]} {
    %c0 = arith.constant 0 : index
    %c0_0 = arith.constant 0 : index
    %c0_1 = arith.constant 0 : index
    %c0_2 = arith.constant 0 : index
    %0 = vector.load %arg4[%c0, %c0_0, %c0_1, %c0_2] : memref<1x8x8x4xbf16, #tpu.memory_space<vmem>>, vector<1x8x8x4xbf16>
    %1 = vector.shape_cast %0 : vector<1x8x8x4xbf16> to vector<64x4xbf16>
    %c0_3 = arith.constant 0 : index
    %c0_4 = arith.constant 0 : index
    %2 = vector.load %arg5[%c0_3, %c0_4] : memref<4x128xbf16, #tpu.memory_space<vmem>>, vector<4x128xbf16>
    %cst = arith.constant dense<0.000000e+00> : vector<64x128xf32>
    %3 = tpu.matmul %1, %2, %cst {dimension_numbers = #tpu.dot_dimension_numbers<[1], [0], [0], [1], [0, 0, 1, 1], [], []>} : vector<64x4xbf16>, vector<4x128xbf16>, vector<64x128xf32> -> vector<64x128xf32>
    %4 = vector.shape_cast %3 : vector<64x128xf32> to vector<1x8x8x128xf32>
    %c0_5 = arith.constant 0 : index
    %c0_6 = arith.constant 0 : index
    %5 = vector.load %arg2[%c0_5, %c0_6] : memref<1x128xf32, #tpu.memory_space<vmem>>, vector<1x128xf32>
    %6 = vector.shape_cast %5 : vector<1x128xf32> to vector<1x1x1x128xf32>
    %c0_7 = arith.constant 0 : index
    %c0_8 = arith.constant 0 : index
    %7 = vector.load %arg3[%c0_7, %c0_8] : memref<1x128xf32, #tpu.memory_space<vmem>>, vector<1x128xf32>
    %8 = vector.shape_cast %7 : vector<1x128xf32> to vector<1x1x1x128xf32>
    %c0_9 = arith.constant 0 : index
    %c0_10 = arith.constant 0 : index
    %9 = vector.load %arg6[%c0_9, %c0_10] : memref<1x128xf32, #tpu.memory_space<vmem>>, vector<1x128xf32>
    %10 = vector.shape_cast %9 : vector<1x128xf32> to vector<1x1x1x128xf32>
    %c0_11 = arith.constant 0 : index
    %c0_12 = arith.constant 0 : index
    %11 = vector.load %arg7[%c0_11, %c0_12] : memref<1x128xf32, #tpu.memory_space<vmem>>, vector<1x128xf32>
    %12 = vector.shape_cast %11 : vector<1x128xf32> to vector<1x1x1x128xf32>
    %c0_13 = arith.constant 0 : index
    %c0_14 = arith.constant 0 : index
    %c0_15 = arith.constant 0 : index
    %c0_16 = arith.constant 0 : index
    %13 = vector.load %arg1[%c0_13, %c0_14, %c0_15, %c0_16] : memref<1x8x8x128xbf16, #tpu.memory_space<vmem>>, vector<1x8x8x128xbf16>
    %14 = arith.extf %13 : vector<1x8x8x128xbf16> to vector<1x8x8x128xf32>
    %15 = vector.broadcast %6 : vector<1x1x1x128xf32> to vector<1x8x8x128xf32>
    %16 = arith.mulf %14, %15 : vector<1x8x8x128xf32>
    %17 = vector.broadcast %8 : vector<1x1x1x128xf32> to vector<1x8x8x128xf32>
    %18 = arith.addf %16, %17 : vector<1x8x8x128xf32>
    %19 = vector.broadcast %10 : vector<1x1x1x128xf32> to vector<1x8x8x128xf32>
    %20 = arith.mulf %4, %19 : vector<1x8x8x128xf32>
    %21 = arith.addf %18, %20 : vector<1x8x8x128xf32>
    %22 = vector.broadcast %12 : vector<1x1x1x128xf32> to vector<1x8x8x128xf32>
    %23 = arith.addf %21, %22 : vector<1x8x8x128xf32>
    %cst_17 = arith.constant 0.000000e+00 : f32
    %24 = vector.broadcast %cst_17 : f32 to vector<1x8x8x128xf32>
    %25 = arith.maximumf %23, %24 : vector<1x8x8x128xf32>
    %26 = arith.truncf %25 : vector<1x8x8x128xf32> to vector<1x8x8x128xbf16>
    %c0_18 = arith.constant 0 : index
    %c0_19 = arith.constant 0 : index
    %c0_20 = arith.constant 0 : index
    %c0_21 = arith.constant 0 : index
    %27 = vector.load %arg8[%c0_18, %c0_19, %c0_20, %c0_21] : memref<1x8x8x128xbf16, #tpu.memory_space<vmem>>, vector<1x8x8x128xbf16>
    tpu.vector_store %arg8[%c0_18, %c0_19, %c0_20, %c0_21], %26 {strides = array<i32>} : memref<1x8x8x128xbf16, #tpu.memory_space<vmem>>, vector<1x8x8x128xbf16>,
    return
  }
  func.func @transform_0(%arg0: i32) -> (i32, i32, i32, i32) {
    %c0_i32 = arith.constant 0 : i32
    %c0_i32_0 = arith.constant 0 : i32
    %c0_i32_1 = arith.constant 0 : i32
    %c0_i32_2 = arith.constant 0 : i32
    return %arg0, %c0_i32, %c0_i32_0, %c0_i32_1 : i32, i32, i32, i32
  }
  func.func @transform_1(%arg0: i32) -> (i32, i32) {
    %c0_i32 = arith.constant 0 : i32
    %c0_i32_0 = arith.constant 0 : i32
    %c0_i32_1 = arith.constant 0 : i32
    return %c0_i32, %c0_i32_0 : i32, i32
  }
  func.func @transform_2(%arg0: i32) -> (i32, i32) {
    %c0_i32 = arith.constant 0 : i32
    %c0_i32_0 = arith.constant 0 : i32
    %c0_i32_1 = arith.constant 0 : i32
    return %c0_i32, %c0_i32_0 : i32, i32
  }
  func.func @transform_3(%arg0: i32) -> (i32, i32, i32, i32) {
    %c0_i32 = arith.constant 0 : i32
    %c0_i32_0 = arith.constant 0 : i32
    %c0_i32_1 = arith.constant 0 : i32
    %c0_i32_2 = arith.constant 0 : i32
    return %arg0, %c0_i32, %c0_i32_0, %c0_i32_1 : i32, i32, i32, i32
  }
  func.func @transform_4(%arg0: i32) -> (i32, i32) {
    %c0_i32 = arith.constant 0 : i32
    %c0_i32_0 = arith.constant 0 : i32
    %c0_i32_1 = arith.constant 0 : i32
    return %c0_i32, %c0_i32_0 : i32, i32
  }
  func.func @transform_5(%arg0: i32) -> (i32, i32) {
    %c0_i32 = arith.constant 0 : i32
    %c0_i32_0 = arith.constant 0 : i32
    %c0_i32_1 = arith.constant 0 : i32
    return %c0_i32, %c0_i32_0 : i32, i32
  }
  func.func @transform_6(%arg0: i32) -> (i32, i32) {
    %c0_i32 = arith.constant 0 : i32
    %c0_i32_0 = arith.constant 0 : i32
    %c0_i32_1 = arith.constant 0 : i32
    return %c0_i32, %c0_i32_0 : i32, i32
  }
  func.func @transform_7(%arg0: i32) -> (i32, i32, i32, i32) {
    %c0_i32 = arith.constant 0 : i32
    %c0_i32_0 = arith.constant 0 : i32
    %c0_i32_1 = arith.constant 0 : i32
    %c0_i32_2 = arith.constant 0 : i32
    return %arg0, %c0_i32, %c0_i32_0, %c0_i32_1 : i32, i32, i32, i32
  }
}

</mosaic_0001>

<llo_original>
// kernel: block_forward.5
$region0: #{block_forward.5}
  #allocation0 [shape = 'u32[]', space=smem, size = 0x4, offset = 0x4, fixed_abs, tag = 'smem constant byte address 0x4 - core index']
  #allocation1 [shape = 'u32[144,128]{1,0:T(1,128)}', space=vmem, size = 0x12000, scoped, tag = 'internal scratch']
  %s0 = inlined_call_operand.vmem [shape: bf16[2,8,8,128], index: 0, kind: input, shape index: {}]
  %s1 = inlined_call_operand.vmem [shape: f32[1,128], index: 1, kind: input, shape index: {}]
  %s2 = inlined_call_operand.vmem [shape: f32[1,128], index: 2, kind: input, shape index: {}]
  %s3 = inlined_call_operand.vmem [shape: bf16[2,10,10,128], index: 3, kind: output, shape index: {}]
  %s4 = sld [smem:[#allocation0]]
  $region45: #{block_forward.5} parent=0
    _
  %s6 = ssub.s32 1, %s4
  %s7 = scalar_select 0, %s6, %s4
  loop: start=0, step=1, limit=4
  $region2: #{block_forward.5} parent=0 // loop_pre_header
    _
  $region3: #{block_forward.5} parent=0 // loop_header
    %s9 = sphi 0, %s13
    %p10 = scmp.ge.s32.totalorder %s9, 4
    %s19 = sphi 0, %s21
    %s22 = sphi 0, %s19
    %s23 = sphi 0, %s22
    %s39 = sphi 0, %s23
    %s43 = sphi 0, %s43
    %s45 = sphi 0, %s43
    %s46 = sphi 0, %s45
    %s60 = sphi 0, %s46
    %s64 = sphi 0, %s64
    %s66 = sphi 0, %s64
    %s67 = sphi 0, %s66
    %s81 = sphi 0, %s67
    %s87 = sphi 0, %s89
    %s90 = sphi 0, %s87
    %s91 = sphi 0, %s90
    %s107 = sphi 0, %s91
  $region4: #{block_forward.5} parent=0 // loop_header_branch
    %12 = sbr.rel (%p10) target = $region8
  $region5: #{block_forward.5} parent=0 // loop_body
    %s14 = ssub.s32 %s9, 1
    %s15 = ssub.s32 %s9, 2
    %s16 = sadd.s32 %s9, 1
    %s17 = ssub.s32 %s9, %s16
    %p18 = scmp.eq.s32.totalorder %s17, 0
    %s20 = sadd.s32 %s19, 1
    %s21 = scalar_select %p18, %s19, %s20
    %p24 = pneg %p18
    %p25 = scmp.eq.s32.totalorder %s9, 1
    %p26 = por %p24, %p25
    %p27 = scmp.ne.s32.totalorder %s19, %s22
    %p28 = scmp.eq.s32.totalorder %s9, 0
    %p29 = por %p27, %p28
    %p30 = scmp.ne.s32.totalorder %s19, %s22
    %p31 = scmp.eq.s32.totalorder %s14, 1
    %p32 = por %p30, %p31
    %p33 = scmp.ne.s32.totalorder %s22, %s23
    %p34 = scmp.eq.s32.totalorder %s14, 0
    %p35 = por %p33, %p34
    %p36 = scmp.ne.s32.totalorder %s22, %s23
    %p37 = scmp.eq.s32.totalorder %s15, 1
    %p38 = por %p36, %p37
    %p40 = scmp.ne.s32.totalorder %s23, %s39
    %p41 = scmp.eq.s32.totalorder %s15, 0
    %p42 = por %p40, %p41
    %s44 = sadd.s32 %s43, 1
    %p47 = scmp.eq.s32.totalorder %s9, 1
    %p48 = scmp.ne.s32.totalorder %s43, %s45
    %p49 = scmp.eq.s32.totalorder %s9, 0
    %p50 = por %p48, %p49
    %p51 = scmp.ne.s32.totalorder %s43, %s45
    %p52 = scmp.eq.s32.totalorder %s14, 1
    %p53 = por %p51, %p52
    %p54 = scmp.ne.s32.totalorder %s45, %s46
    %p55 = scmp.eq.s32.totalorder %s14, 0
    %p56 = por %p54, %p55
    %p57 = scmp.ne.s32.totalorder %s45, %s46
    %p58 = scmp.eq.s32.totalorder %s15, 1
    %p59 = por %p57, %p58
    %p61 = scmp.ne.s32.totalorder %s46, %s60
    %p62 = scmp.eq.s32.totalorder %s15, 0
    %p63 = por %p61, %p62
    %s65 = sadd.s32 %s64, 1
    %p68 = scmp.eq.s32.totalorder %s9, 1
    %p69 = scmp.ne.s32.totalorder %s64, %s66
    %p70 = scmp.eq.s32.totalorder %s9, 0
    %p71 = por %p69, %p70
    %p72 = scmp.ne.s32.totalorder %s64, %s66
    %p73 = scmp.eq.s32.totalorder %s14, 1
    %p74 = por %p72, %p73
    %p75 = scmp.ne.s32.totalorder %s66, %s67
    %p76 = scmp.eq.s32.totalorder %s14, 0
    %p77 = por %p75, %p76
    %p78 = scmp.ne.s32.totalorder %s66, %s67
    %p79 = scmp.eq.s32.totalorder %s15, 1
    %p80 = por %p78, %p79
    %p82 = scmp.ne.s32.totalorder %s67, %s81
    %p83 = scmp.eq.s32.totalorder %s15, 0
    %p84 = por %p82, %p83
    %s85 = ssub.s32 %s9, %s16
    %p86 = scmp.eq.s32.totalorder %s85, 0
    %s88 = sadd.s32 %s87, 1
    %s89 = scalar_select %p86, %s87, %s88
    %p92 = pneg %p86
    %p93 = scmp.eq.s32.totalorder %s9, 1
    %p94 = por %p92, %p93
    %p95 = scmp.ne.s32.totalorder %s87, %s90
    %p96 = scmp.eq.s32.totalorder %s9, 0
    %p97 = por %p95, %p96
    %p98 = scmp.ne.s32.totalorder %s87, %s90
    %p99 = scmp.eq.s32.totalorder %s14, 1
    %p100 = por %p98, %p99
    %p101 = scmp.ne.s32.totalorder %s90, %s91
    %p102 = scmp.eq.s32.totalorder %s14, 0
    %p103 = por %p101, %p102
    %p104 = scmp.ne.s32.totalorder %s90, %s91
    %p105 = scmp.eq.s32.totalorder %s15, 1
    %p106 = por %p104, %p105
    %p108 = scmp.ne.s32.totalorder %s91, %s107
    %p109 = scmp.eq.s32.totalorder %s15, 0
    %p110 = por %p108, %p109
    %p111 = scmp.le.s32.totalorder 1, %s9
    %p112 = scmp.lt.s32.totalorder %s9, 3
    %p113 = pnand %p111, %p112
    %p114 = pneg %p113
    // Predicated region
    $region9: #{block_forward.5} parent=5 // pred_check
      _
    $region10: #{block_forward.5} parent=5 // pred_check_branch
      %116 = sbr.rel (%p113) target = $region12
    $region11: #{block_forward.5} parent=5 // pred_region
      %s117 = ssub.s32 %s9, 1
      // Predicated region
      $region13: #{block_forward.5} parent=11 // pred_check
        %p118 = pneg %p56
      $region14: #{block_forward.5} parent=11 // pred_check_branch
        %120 = sbr.rel (%p118) target = $region16
      $region15: #{block_forward.5} parent=11 // pred_region
        _
      $region16: #{block_forward.5} parent=11 // pred_fallthru
        _
      // Predicated region
      $region17: #{block_forward.5} parent=11 // pred_check
        %p121 = pneg %p77
      $region18: #{block_forward.5} parent=11 // pred_check_branch
        %123 = sbr.rel (%p121) target = $region20
      $region19: #{block_forward.5} parent=11 // pred_region
        _
      $region20: #{block_forward.5} parent=11 // pred_fallthru
        _
    $region12: #{block_forward.5} parent=5 // pred_fallthru
      _
    %p124 = scmp.lt.s32.totalorder %s9, 2
    // Predicated region
    $region21: #{block_forward.5} parent=5 // pred_check
      %p125 = pneg %p124
    $region22: #{block_forward.5} parent=5 // pred_check_branch
      %127 = sbr.rel (%p125) target = $region24
    $region23: #{block_forward.5} parent=5 // pred_region
      // Predicated region
      $region25: #{block_forward.5} parent=23 // pred_check
        %p128 = pneg %p29
      $region26: #{block_forward.5} parent=23 // pred_check_branch
        %130 = sbr.rel (%p128) target = $region28
      $region27: #{block_forward.5} parent=23 // pred_region
        %p131 = scmp.lt.s32.totalorder %s9, 1
        %s132 = scalar_select %p131, %s9, 1
        %s133 = smul.addr %s132, 8
        %s134 = smul.addr %s133, 4
        %s135 = scalar_lea.vmem %s0, %s134
      $region28: #{block_forward.5} parent=23 // pred_fallthru
        _
    $region24: #{block_forward.5} parent=5 // pred_fallthru
      _
    %p136 = scmp.le.s32.totalorder 1, %s9
    %p137 = scmp.lt.s32.totalorder %s9, 3
    %p138 = pnand %p136, %p137
    %p139 = pneg %p138
    // Predicated region
    $region29: #{block_forward.5} parent=5 // pred_check
      _
    $region30: #{block_forward.5} parent=5 // pred_check_branch
      %141 = sbr.rel (%p138) target = $region32
    $region31: #{block_forward.5} parent=5 // pred_region
      %s142 = ssub.s32 %s9, 1
      %p143 = scmp.lt.s32.totalorder %s14, 1
      %s144 = scalar_select %p143, %s14, 1
      %s145 = smul.addr %s144, 8
      %s146 = smul.addr %s145, 4
      %s147 = scalar_lea.vmem %s0, %s146
      %p148 = pneg %p35
      %p149 = pneg %p32
      %p150 = pneg %p56
      %p151 = pneg %p53
      %p152 = pneg %p77
      %p153 = pneg %p74
      %p154 = pneg %p103
      %p155 = pneg %p100
      %p156 = scmp.lt.s32.totalorder %s14, 1
      %s157 = scalar_select %p156, %s14, 1
      %s158 = smul.addr %s157, 20
      %s159 = smul.addr %s158, 4
      %s160 = scalar_lea.vmem %s3, %s159
      %p161 = scmp.lt.s32.totalorder %s14, 1
      %s162 = scalar_select %p161, %s14, 1
      %s163 = smul.addr %s162, 8
      %s164 = smul.addr %s163, 4
      %s165 = scalar_lea.vmem %s0, %s164
      %p166 = scmp.lt.s32.totalorder %s14, 1
      %s167 = scalar_select %p166, %s14, 1
      %s168 = smul.addr %s167, 20
      %s169 = smul.addr %s168, 4
      %s170 = scalar_lea.vmem %s3, %s169
      %v172 = vld [vmem:[%s1] sm:$0x1]
      %v173 = vld [vmem:[%s2] sm:$0x1]
      %v174 = vld [vmem:[%s165] sm:$0xf]
      %v175 = vld [vmem:[%s165 + $0x4] sm:$0xf]
      %v176 = vld [vmem:[%s165 + $0x8] sm:$0xf]
      %v177 = vld [vmem:[%s165 + $0xc] sm:$0xf]
      %v178 = vld [vmem:[%s165 + $0x10] sm:$0xf]
      %v179 = vld [vmem:[%s165 + $0x14] sm:$0xf]
      %v180 = vld [vmem:[%s165 + $0x18] sm:$0xf]
      %v181 = vld [vmem:[%s165 + $0x1c] sm:$0xf]
      %v182 = vunpack.c.l.bf16 %v174
      %v183 = vunpack.c.l.bf16 %v175
      %v184 = vunpack.c.l.bf16 %v176
      %v185 = vunpack.c.l.bf16 %v177
      %v186 = vunpack.c.l.bf16 %v178
      %v187 = vunpack.c.l.bf16 %v179
      %v188 = vunpack.c.l.bf16 %v180
      %v189 = vunpack.c.l.bf16 %v181
      %v191 = vlaneseq
      %v192 = vshrl.u32 %v191, 7
      %v193 = vsub.s32 0, %v192
      %v194 = vrot.slane %v172, %v193
      %v196 = vmul.f32 %v182, %v194
      %v197 = vmul.f32 %v183, %v194
      %v198 = vmul.f32 %v184, %v194
      %v199 = vmul.f32 %v185, %v194
      %v200 = vmul.f32 %v186, %v194
      %v201 = vmul.f32 %v187, %v194
      %v202 = vmul.f32 %v188, %v194
      %v203 = vmul.f32 %v189, %v194
      %v205 = vlaneseq
      %v206 = vshrl.u32 %v205, 7
      %v207 = vsub.s32 0, %v206
      %v208 = vrot.slane %v173, %v207
      %v210 = vadd.f32 %v196, %v208
      %v211 = vadd.f32 %v197, %v208
      %v212 = vadd.f32 %v198, %v208
      %v213 = vadd.f32 %v199, %v208
      %v214 = vadd.f32 %v200, %v208
      %v215 = vadd.f32 %v201, %v208
      %v216 = vadd.f32 %v202, %v208
      %v217 = vadd.f32 %v203, %v208
      %v218 = vmax.f32 %v210, 0.0
      %v219 = vmax.f32 %v211, 0.0
      %v220 = vmax.f32 %v212, 0.0
      %v221 = vmax.f32 %v213, 0.0
      %v222 = vmax.f32 %v214, 0.0
      %v223 = vmax.f32 %v215, 0.0
      %v224 = vmax.f32 %v216, 0.0
      %v225 = vmax.f32 %v217, 0.0
      %226 = vst [vmem:[%s170] sm:$0xf] 0
      %227 = vst [vmem:[%s170 + $0x4] sm:$0x1] 0
      %228 = vst [vmem:[%s170 + $0x8] sm:$0xf] 0
      %229 = vst [vmem:[%s170 + $0xc] sm:$0x1] 0
      %230 = vst [vmem:[%s170 + $0x10] sm:$0xf] 0
      %231 = vst [vmem:[%s170 + $0x14] sm:$0x1] 0
      %232 = vst [vmem:[%s170 + $0x18] sm:$0xf] 0
      %233 = vst [vmem:[%s170 + $0x1c] sm:$0x1] 0
      %234 = vst [vmem:[%s170 + $0x20] sm:$0xf] 0
      %235 = vst [vmem:[%s170 + $0x24] sm:$0x1] 0
      %236 = vst [vmem:[%s170 + $0x28] sm:$0xf] 0
      %237 = vst [vmem:[%s170 + $0x2c] sm:$0x1] 0
      %238 = vst [vmem:[%s170 + $0x30] sm:$0xf] 0
      %239 = vst [vmem:[%s170 + $0x34] sm:$0x1] 0
      %240 = vst [vmem:[%s170 + $0x38] sm:$0xf] 0
      %241 = vst [vmem:[%s170 + $0x3c] sm:$0x1] 0
      %242 = vst [vmem:[%s170 + $0x40] sm:$0xf] 0
      %243 = vst [vmem:[%s170 + $0x44] sm:$0x1] 0
      %244 = vst [vmem:[%s170 + $0x48] sm:$0xf] 0
      %245 = vst [vmem:[%s170 + $0x4c] sm:$0x1] 0
      %v246 = vpack.c.bf16 %v218, %v218
      %v247 = vpack.c.bf16 %v219, %v219
      %v248 = vpack.c.bf16 %v220, %v220
      %v249 = vpack.c.bf16 %v221, %v221
      %v250 = vpack.c.bf16 %v222, %v222
      %v251 = vpack.c.bf16 %v223, %v223
      %v252 = vpack.c.bf16 %v224, %v224
      %v253 = vpack.c.bf16 %v225, %v225
      %v262 = vunpack.c.l.b16 %v246
      %v263 = vunpack.c.l.b16 %v247
      %v264 = vunpack.c.l.b16 %v248
      %v265 = vunpack.c.l.b16 %v249
      %v266 = vunpack.c.l.b16 %v250
      %v267 = vunpack.c.l.b16 %v251
      %v268 = vunpack.c.l.b16 %v252
      %v269 = vunpack.c.l.b16 %v253
      %v270 = vpack.c.b16 %v262, %v262
      %v271 = vpack.c.b16 %v263, %v263
      %v272 = vpack.c.b16 %v264, %v264
      %v273 = vpack.c.b16 %v265, %v265
      %v274 = vpack.c.b16 %v266, %v266
      %v275 = vpack.c.b16 %v267, %v267
      %v276 = vpack.c.b16 %v268, %v268
      %v277 = vpack.c.b16 %v269, %v269
      %v279 = vshrl.u32 %v270, 16
      %v281 = vrot.slane %v279, 7
      %v282 = vshll.u32 %v270, 16
      %v284 = vor.u32 %v281, %v282
      %v285 = vrot.slane %v281, 4
      %v287 = vshrl.u32 %v271, 16
      %v289 = vrot.slane %v287, 7
      %v290 = vshll.u32 %v271, 16
      %v292 = vor.u32 %v289, %v290
      %v293 = vrot.slane %v289, 4
      %v295 = vshrl.u32 %v272, 16
      %v297 = vrot.slane %v295, 7
      %v298 = vshll.u32 %v272, 16
      %v300 = vor.u32 %v297, %v298
      %v301 = vrot.slane %v297, 4
      %v303 = vshrl.u32 %v273, 16
      %v305 = vrot.slane %v303, 7
      %v306 = vshll.u32 %v273, 16
      %v308 = vor.u32 %v305, %v306
      %v309 = vrot.slane %v305, 4
      %v311 = vshrl.u32 %v274, 16
      %v313 = vrot.slane %v311, 7
      %v314 = vshll.u32 %v274, 16
      %v316 = vor.u32 %v313, %v314
      %v317 = vrot.slane %v313, 4
      %v319 = vshrl.u32 %v275, 16
      %v321 = vrot.slane %v319, 7
      %v322 = vshll.u32 %v275, 16
      %v324 = vor.u32 %v321, %v322
      %v325 = vrot.slane %v321, 4
      %v327 = vshrl.u32 %v276, 16
      %v329 = vrot.slane %v327, 7
      %v330 = vshll.u32 %v276, 16
      %v332 = vor.u32 %v329, %v330
      %v333 = vrot.slane %v329, 4
      %v335 = vshrl.u32 %v277, 16
      %v337 = vrot.slane %v335, 7
      %v338 = vshll.u32 %v277, 16
      %v340 = vor.u32 %v337, %v338
      %v341 = vrot.slane %v337, 4
      %s358 = scalar_lea.vmem %s170, 8
      %vm359 = vcmask 1043456
      %vm360 = vsmask.f32 7938
      %vm361 = vmand %vm359, %vm360
      %v362 = vld [vmem:[%s358] sm:$0xf]
      %v363 = vsel %vm361, %v284, %v362
      %364 = vst [vmem:[%s358] sm:$0xf] %v363
      %vm365 = vcmask 1040384
      %vm366 = vsmask.f32 256
      %vm367 = vmand %vm365, %vm366
      %v368 = vld [vmem:[%s358 + $0x4] sm:$0x1]
      %v369 = vsel %vm367, %v285, %v368
      %370 = vst [vmem:[%s358 + $0x4] sm:$0x1] %v369
      %v371 = vld [vmem:[%s358 + $0x8] sm:$0xf]
      %v372 = vsel %vm361, %v292, %v371
      %373 = vst [vmem:[%s358 + $0x8] sm:$0xf] %v372
      %v374 = vld [vmem:[%s358 + $0xc] sm:$0x1]
      %v375 = vsel %vm367, %v293, %v374
      %376 = vst [vmem:[%s358 + $0xc] sm:$0x1] %v375
      %v377 = vld [vmem:[%s358 + $0x10] sm:$0xf]
      %v378 = vsel %vm361, %v300, %v377
      %379 = vst [vmem:[%s358 + $0x10] sm:$0xf] %v378
      %v380 = vld [vmem:[%s358 + $0x14] sm:$0x1]
      %v381 = vsel %vm367, %v301, %v380
      %382 = vst [vmem:[%s358 + $0x14] sm:$0x1] %v381
      %v383 = vld [vmem:[%s358 + $0x18] sm:$0xf]
      %v384 = vsel %vm361, %v308, %v383
      %385 = vst [vmem:[%s358 + $0x18] sm:$0xf] %v384
      %v386 = vld [vmem:[%s358 + $0x1c] sm:$0x1]
      %v387 = vsel %vm367, %v309, %v386
      %388 = vst [vmem:[%s358 + $0x1c] sm:$0x1] %v387
      %v389 = vld [vmem:[%s358 + $0x20] sm:$0xf]
      %v390 = vsel %vm361, %v316, %v389
      %391 = vst [vmem:[%s358 + $0x20] sm:$0xf] %v390
      %v392 = vld [vmem:[%s358 + $0x24] sm:$0x1]
      %v393 = vsel %vm367, %v317, %v392
      %394 = vst [vmem:[%s358 + $0x24] sm:$0x1] %v393
      %v395 = vld [vmem:[%s358 + $0x28] sm:$0xf]
      %v396 = vsel %vm361, %v324, %v395
      %397 = vst [vmem:[%s358 + $0x28] sm:$0xf] %v396
      %v398 = vld [vmem:[%s358 + $0x2c] sm:$0x1]
      %v399 = vsel %vm367, %v325, %v398
      %400 = vst [vmem:[%s358 + $0x2c] sm:$0x1] %v399
      %v401 = vld [vmem:[%s358 + $0x30] sm:$0xf]
      %v402 = vsel %vm361, %v332, %v401
      %403 = vst [vmem:[%s358 + $0x30] sm:$0xf] %v402
      %v404 = vld [vmem:[%s358 + $0x34] sm:$0x1]
      %v405 = vsel %vm367, %v333, %v404
      %406 = vst [vmem:[%s358 + $0x34] sm:$0x1] %v405
      %v407 = vld [vmem:[%s358 + $0x38] sm:$0xf]
      %v408 = vsel %vm361, %v340, %v407
      %409 = vst [vmem:[%s358 + $0x38] sm:$0xf] %v408
      %v410 = vld [vmem:[%s358 + $0x3c] sm:$0x1]
      %v411 = vsel %vm367, %v341, %v410
      %412 = vst [vmem:[%s358 + $0x3c] sm:$0x1] %v411
      %p413 = scmp.lt.s32.totalorder %s14, 1
      %s414 = scalar_select %p413, %s14, 1
      %s415 = smul.addr %s414, 20
      %s416 = smul.addr %s415, 4
      %s417 = scalar_lea.vmem %s3, %s416
      // Predicated region
      $region33: #{block_forward.5} parent=31 // pred_check
        %p418 = pneg %p100
      $region34: #{block_forward.5} parent=31 // pred_check_branch
        %420 = sbr.rel (%p418) target = $region36
      $region35: #{block_forward.5} parent=31 // pred_region
        _
      $region36: #{block_forward.5} parent=31 // pred_fallthru
        _
    $region32: #{block_forward.5} parent=5 // pred_fallthru
      _
    %p421 = scmp.le.s32.totalorder 2, %s9
    // Predicated region
    $region37: #{block_forward.5} parent=5 // pred_check
      %p422 = pneg %p421
    $region38: #{block_forward.5} parent=5 // pred_check_branch
      %424 = sbr.rel (%p422) target = $region40
    $region39: #{block_forward.5} parent=5 // pred_region
      %s425 = ssub.s32 %s9, 2
      // Predicated region
      $region41: #{block_forward.5} parent=39 // pred_check
        %p426 = pneg %p106
      $region42: #{block_forward.5} parent=39 // pred_check_branch
        %428 = sbr.rel (%p426) target = $region44
      $region43: #{block_forward.5} parent=39 // pred_region
        %p429 = scmp.lt.s32.totalorder %s15, 1
        %s430 = scalar_select %p429, %s15, 1
        %s431 = smul.addr %s430, 20
        %s432 = smul.addr %s431, 4
        %s433 = scalar_lea.vmem %s3, %s432
      $region44: #{block_forward.5} parent=39 // pred_fallthru
        _
    $region40: #{block_forward.5} parent=5 // pred_fallthru
      _
  $region6: #{block_forward.5} parent=0 // loop_footer
    %s13 = sadd.s32 1, %s9
  $region7: #{block_forward.5} parent=0 // loop_footer_branch
    %8 = sbr.rel target = $region3
  $region8: #{block_forward.5} parent=0 // loop_exit
    _

// kernel: block_forward.7
$region0: #{block_forward.7}
  #allocation0 [shape = 'u32[]', space=smem, size = 0x4, offset = 0x4, fixed_abs, tag = 'smem constant byte address 0x4 - core index']
  #allocation1 [shape = 'u32[144,128]{1,0:T(1,128)}', space=vmem, size = 0x12000, scoped, tag = 'internal scratch']
  %s0 = inlined_call_operand.vmem [shape: bf16[2,8,8,128], index: 0, kind: input, shape index: {}]
  %s1 = inlined_call_operand.vmem [shape: f32[1,128], index: 1, kind: input, shape index: {}]
  %s2 = inlined_call_operand.vmem [shape: f32[1,128], index: 2, kind: input, shape index: {}]
  %s3 = inlined_call_operand.vmem [shape: bf16[2,8,8,4], index: 3, kind: input, shape index: {}]
  %s4 = inlined_call_operand.vmem [shape: bf16[4,128], index: 4, kind: input, shape index: {}]
  %s5 = inlined_call_operand.vmem [shape: f32[1,128], index: 5, kind: input, shape index: {}]
  %s6 = inlined_call_operand.vmem [shape: f32[1,128], index: 6, kind: input, shape index: {}]
  %s7 = inlined_call_operand.vmem [shape: bf16[2,8,8,128], index: 7, kind: output, shape index: {}]
  %s8 = sld [smem:[#allocation0]]
  $region61: #{block_forward.7} parent=0
    _
  %s10 = ssub.s32 1, %s8
  %s11 = scalar_select 0, %s10, %s8
  loop: start=0, step=1, limit=4
  $region2: #{block_forward.7} parent=0 // loop_pre_header
    _
  $region3: #{block_forward.7} parent=0 // loop_header
    %s13 = sphi 0, %s17
    %p14 = scmp.ge.s32.totalorder %s13, 4
    %s23 = sphi 0, %s25
    %s26 = sphi 0, %s23
    %s27 = sphi 0, %s26
    %s43 = sphi 0, %s27
    %s47 = sphi 0, %s47
    %s49 = sphi 0, %s47
    %s50 = sphi 0, %s49
    %s64 = sphi 0, %s50
    %s68 = sphi 0, %s68
    %s70 = sphi 0, %s68
    %s71 = sphi 0, %s70
    %s85 = sphi 0, %s71
    %s91 = sphi 0, %s93
    %s94 = sphi 0, %s91
    %s95 = sphi 0, %s94
    %s111 = sphi 0, %s95
    %s115 = sphi 0, %s115
    %s117 = sphi 0, %s115
    %s118 = sphi 0, %s117
    %s132 = sphi 0, %s118
    %s136 = sphi 0, %s136
    %s138 = sphi 0, %s136
    %s139 = sphi 0, %s138
    %s153 = sphi 0, %s139
    %s157 = sphi 0, %s157
    %s159 = sphi 0, %s157
    %s160 = sphi 0, %s159
    %s174 = sphi 0, %s160
    %s180 = sphi 0, %s182
    %s183 = sphi 0, %s180
    %s184 = sphi 0, %s183
    %s200 = sphi 0, %s184
  $region4: #{block_forward.7} parent=0 // loop_header_branch
    %16 = sbr.rel (%p14) target = $region8
  $region5: #{block_forward.7} parent=0 // loop_body
    %s18 = ssub.s32 %s13, 1
    %s19 = ssub.s32 %s13, 2
    %s20 = sadd.s32 %s13, 1
    %s21 = ssub.s32 %s13, %s20
    %p22 = scmp.eq.s32.totalorder %s21, 0
    %s24 = sadd.s32 %s23, 1
    %s25 = scalar_select %p22, %s23, %s24
    %p28 = pneg %p22
    %p29 = scmp.eq.s32.totalorder %s13, 1
    %p30 = por %p28, %p29
    %p31 = scmp.ne.s32.totalorder %s23, %s26
    %p32 = scmp.eq.s32.totalorder %s13, 0
    %p33 = por %p31, %p32
    %p34 = scmp.ne.s32.totalorder %s23, %s26
    %p35 = scmp.eq.s32.totalorder %s18, 1
    %p36 = por %p34, %p35
    %p37 = scmp.ne.s32.totalorder %s26, %s27
    %p38 = scmp.eq.s32.totalorder %s18, 0
    %p39 = por %p37, %p38
    %p40 = scmp.ne.s32.totalorder %s26, %s27
    %p41 = scmp.eq.s32.totalorder %s19, 1
    %p42 = por %p40, %p41
    %p44 = scmp.ne.s32.totalorder %s27, %s43
    %p45 = scmp.eq.s32.totalorder %s19, 0
    %p46 = por %p44, %p45
    %s48 = sadd.s32 %s47, 1
    %p51 = scmp.eq.s32.totalorder %s13, 1
    %p52 = scmp.ne.s32.totalorder %s47, %s49
    %p53 = scmp.eq.s32.totalorder %s13, 0
    %p54 = por %p52, %p53
    %p55 = scmp.ne.s32.totalorder %s47, %s49
    %p56 = scmp.eq.s32.totalorder %s18, 1
    %p57 = por %p55, %p56
    %p58 = scmp.ne.s32.totalorder %s49, %s50
    %p59 = scmp.eq.s32.totalorder %s18, 0
    %p60 = por %p58, %p59
    %p61 = scmp.ne.s32.totalorder %s49, %s50
    %p62 = scmp.eq.s32.totalorder %s19, 1
    %p63 = por %p61, %p62
    %p65 = scmp.ne.s32.totalorder %s50, %s64
    %p66 = scmp.eq.s32.totalorder %s19, 0
    %p67 = por %p65, %p66
    %s69 = sadd.s32 %s68, 1
    %p72 = scmp.eq.s32.totalorder %s13, 1
    %p73 = scmp.ne.s32.totalorder %s68, %s70
    %p74 = scmp.eq.s32.totalorder %s13, 0
    %p75 = por %p73, %p74
    %p76 = scmp.ne.s32.totalorder %s68, %s70
    %p77 = scmp.eq.s32.totalorder %s18, 1
    %p78 = por %p76, %p77
    %p79 = scmp.ne.s32.totalorder %s70, %s71
    %p80 = scmp.eq.s32.totalorder %s18, 0
    %p81 = por %p79, %p80
    %p82 = scmp.ne.s32.totalorder %s70, %s71
    %p83 = scmp.eq.s32.totalorder %s19, 1
    %p84 = por %p82, %p83
    %p86 = scmp.ne.s32.totalorder %s71, %s85
    %p87 = scmp.eq.s32.totalorder %s19, 0
    %p88 = por %p86, %p87
    %s89 = ssub.s32 %s13, %s20
    %p90 = scmp.eq.s32.totalorder %s89, 0
    %s92 = sadd.s32 %s91, 1
    %s93 = scalar_select %p90, %s91, %s92
    %p96 = pneg %p90
    %p97 = scmp.eq.s32.totalorder %s13, 1
    %p98 = por %p96, %p97
    %p99 = scmp.ne.s32.totalorder %s91, %s94
    %p100 = scmp.eq.s32.totalorder %s13, 0
    %p101 = por %p99, %p100
    %p102 = scmp.ne.s32.totalorder %s91, %s94
    %p103 = scmp.eq.s32.totalorder %s18, 1
    %p104 = por %p102, %p103
    %p105 = scmp.ne.s32.totalorder %s94, %s95
    %p106 = scmp.eq.s32.totalorder %s18, 0
    %p107 = por %p105, %p106
    %p108 = scmp.ne.s32.totalorder %s94, %s95
    %p109 = scmp.eq.s32.totalorder %s19, 1
    %p110 = por %p108, %p109
    %p112 = scmp.ne.s32.totalorder %s95, %s111
    %p113 = scmp.eq.s32.totalorder %s19, 0
    %p114 = por %p112, %p113
    %s116 = sadd.s32 %s115, 1
    %p119 = scmp.eq.s32.totalorder %s13, 1
    %p120 = scmp.ne.s32.totalorder %s115, %s117
    %p121 = scmp.eq.s32.totalorder %s13, 0
    %p122 = por %p120, %p121
    %p123 = scmp.ne.s32.totalorder %s115, %s117
    %p124 = scmp.eq.s32.totalorder %s18, 1
    %p125 = por %p123, %p124
    %p126 = scmp.ne.s32.totalorder %s117, %s118
    %p127 = scmp.eq.s32.totalorder %s18, 0
    %p128 = por %p126, %p127
    %p129 = scmp.ne.s32.totalorder %s117, %s118
    %p130 = scmp.eq.s32.totalorder %s19, 1
    %p131 = por %p129, %p130
    %p133 = scmp.ne.s32.totalorder %s118, %s132
    %p134 = scmp.eq.s32.totalorder %s19, 0
    %p135 = por %p133, %p134
    %s137 = sadd.s32 %s136, 1
    %p140 = scmp.eq.s32.totalorder %s13, 1
    %p141 = scmp.ne.s32.totalorder %s136, %s138
    %p142 = scmp.eq.s32.totalorder %s13, 0
    %p143 = por %p141, %p142
    %p144 = scmp.ne.s32.totalorder %s136, %s138
    %p145 = scmp.eq.s32.totalorder %s18, 1
    %p146 = por %p144, %p145
    %p147 = scmp.ne.s32.totalorder %s138, %s139
    %p148 = scmp.eq.s32.totalorder %s18, 0
    %p149 = por %p147, %p148
    %p150 = scmp.ne.s32.totalorder %s138, %s139
    %p151 = scmp.eq.s32.totalorder %s19, 1
    %p152 = por %p150, %p151
    %p154 = scmp.ne.s32.totalorder %s139, %s153
    %p155 = scmp.eq.s32.totalorder %s19, 0
    %p156 = por %p154, %p155
    %s158 = sadd.s32 %s157, 1
    %p161 = scmp.eq.s32.totalorder %s13, 1
    %p162 = scmp.ne.s32.totalorder %s157, %s159
    %p163 = scmp.eq.s32.totalorder %s13, 0
    %p164 = por %p162, %p163
    %p165 = scmp.ne.s32.totalorder %s157, %s159
    %p166 = scmp.eq.s32.totalorder %s18, 1
    %p167 = por %p165, %p166
    %p168 = scmp.ne.s32.totalorder %s159, %s160
    %p169 = scmp.eq.s32.totalorder %s18, 0
    %p170 = por %p168, %p169
    %p171 = scmp.ne.s32.totalorder %s159, %s160
    %p172 = scmp.eq.s32.totalorder %s19, 1
    %p173 = por %p171, %p172
    %p175 = scmp.ne.s32.totalorder %s160, %s174
    %p176 = scmp.eq.s32.totalorder %s19, 0
    %p177 = por %p175, %p176
    %s178 = ssub.s32 %s13, %s20
    %p179 = scmp.eq.s32.totalorder %s178, 0
    %s181 = sadd.s32 %s180, 1
    %s182 = scalar_select %p179, %s180, %s181
    %p185 = pneg %p179
    %p186 = scmp.eq.s32.totalorder %s13, 1
    %p187 = por %p185, %p186
    %p188 = scmp.ne.s32.totalorder %s180, %s183
    %p189 = scmp.eq.s32.totalorder %s13, 0
    %p190 = por %p188, %p189
    %p191 = scmp.ne.s32.totalorder %s180, %s183
    %p192 = scmp.eq.s32.totalorder %s18, 1
    %p193 = por %p191, %p192
    %p194 = scmp.ne.s32.totalorder %s183, %s184
    %p195 = scmp.eq.s32.totalorder %s18, 0
    %p196 = por %p194, %p195
    %p197 = scmp.ne.s32.totalorder %s183, %s184
    %p198 = scmp.eq.s32.totalorder %s19, 1
    %p199 = por %p197, %p198
    %p201 = scmp.ne.s32.totalorder %s184, %s200
    %p202 = scmp.eq.s32.totalorder %s19, 0
    %p203 = por %p201, %p202
    %p204 = scmp.le.s32.totalorder 1, %s13
    %p205 = scmp.lt.s32.totalorder %s13, 3
    %p206 = pnand %p204, %p205
    %p207 = pneg %p206
    // Predicated region
    $region9: #{block_forward.7} parent=5 // pred_check
      _
    $region10: #{block_forward.7} parent=5 // pred_check_branch
      %209 = sbr.rel (%p206) target = $region12
    $region11: #{block_forward.7} parent=5 // pred_region
      %s210 = ssub.s32 %s13, 1
      // Predicated region
      $region13: #{block_forward.7} parent=11 // pred_check
        %p211 = pneg %p60
      $region14: #{block_forward.7} parent=11 // pred_check_branch
        %213 = sbr.rel (%p211) target = $region16
      $region15: #{block_forward.7} parent=11 // pred_region
        _
      $region16: #{block_forward.7} parent=11 // pred_fallthru
        _
      // Predicated region
      $region17: #{block_forward.7} parent=11 // pred_check
        %p214 = pneg %p81
      $region18: #{block_forward.7} parent=11 // pred_check_branch
        %216 = sbr.rel (%p214) target = $region20
      $region19: #{block_forward.7} parent=11 // pred_region
        _
      $region20: #{block_forward.7} parent=11 // pred_fallthru
        _
      // Predicated region
      $region21: #{block_forward.7} parent=11 // pred_check
        %p217 = pneg %p128
      $region22: #{block_forward.7} parent=11 // pred_check_branch
        %219 = sbr.rel (%p217) target = $region24
      $region23: #{block_forward.7} parent=11 // pred_region
        _
      $region24: #{block_forward.7} parent=11 // pred_fallthru
        _
      // Predicated region
      $region25: #{block_forward.7} parent=11 // pred_check
        %p220 = pneg %p149
      $region26: #{block_forward.7} parent=11 // pred_check_branch
        %222 = sbr.rel (%p220) target = $region28
      $region27: #{block_forward.7} parent=11 // pred_region
        _
      $region28: #{block_forward.7} parent=11 // pred_fallthru
        _
      // Predicated region
      $region29: #{block_forward.7} parent=11 // pred_check
        %p223 = pneg %p170
      $region30: #{block_forward.7} parent=11 // pred_check_branch
        %225 = sbr.rel (%p223) target = $region32
      $region31: #{block_forward.7} parent=11 // pred_region
        _
      $region32: #{block_forward.7} parent=11 // pred_fallthru
        _
    $region12: #{block_forward.7} parent=5 // pred_fallthru
      _
    %p226 = scmp.lt.s32.totalorder %s13, 2
    // Predicated region
    $region33: #{block_forward.7} parent=5 // pred_check
      %p227 = pneg %p226
    $region34: #{block_forward.7} parent=5 // pred_check_branch
      %229 = sbr.rel (%p227) target = $region36
    $region35: #{block_forward.7} parent=5 // pred_region
      // Predicated region
      $region37: #{block_forward.7} parent=35 // pred_check
        %p230 = pneg %p33
      $region38: #{block_forward.7} parent=35 // pred_check_branch
        %232 = sbr.rel (%p230) target = $region40
      $region39: #{block_forward.7} parent=35 // pred_region
        %p233 = scmp.lt.s32.totalorder %s13, 1
        %s234 = scalar_select %p233, %s13, 1
        %s235 = smul.addr %s234, 8
        %s236 = smul.addr %s235, 4
        %s237 = scalar_lea.vmem %s0, %s236
      $region40: #{block_forward.7} parent=35 // pred_fallthru
        _
      // Predicated region
      $region41: #{block_forward.7} parent=35 // pred_check
        %p238 = pneg %p101
      $region42: #{block_forward.7} parent=35 // pred_check_branch
        %240 = sbr.rel (%p238) target = $region44
      $region43: #{block_forward.7} parent=35 // pred_region
        %p241 = scmp.lt.s32.totalorder %s13, 1
        %s242 = scalar_select %p241, %s13, 1
        %s243 = smul.addr %s242, 8
        %s244 = smul.addr %s243, 4
        %s245 = scalar_lea.vmem %s3, %s244
      $region44: #{block_forward.7} parent=35 // pred_fallthru
        _
    $region36: #{block_forward.7} parent=5 // pred_fallthru
      _
    %p246 = scmp.le.s32.totalorder 1, %s13
    %p247 = scmp.lt.s32.totalorder %s13, 3
    %p248 = pnand %p246, %p247
    %p249 = pneg %p248
    // Predicated region
    $region45: #{block_forward.7} parent=5 // pred_check
      _
    $region46: #{block_forward.7} parent=5 // pred_check_branch
      %251 = sbr.rel (%p248) target = $region48
    $region47: #{block_forward.7} parent=5 // pred_region
      %s252 = ssub.s32 %s13, 1
      %p253 = scmp.lt.s32.totalorder %s18, 1
      %s254 = scalar_select %p253, %s18, 1
      %s255 = smul.addr %s254, 8
      %s256 = smul.addr %s255, 4
      %s257 = scalar_lea.vmem %s0, %s256
      %p258 = pneg %p39
      %p259 = pneg %p36
      %p260 = pneg %p60
      %p261 = pneg %p57
      %p262 = pneg %p81
      %p263 = pneg %p78
      %p264 = scmp.lt.s32.totalorder %s18, 1
      %s265 = scalar_select %p264, %s18, 1
      %s266 = smul.addr %s265, 8
      %s267 = smul.addr %s266, 4
      %s268 = scalar_lea.vmem %s3, %s267
      %p269 = pneg %p107
      %p270 = pneg %p104
      %p271 = pneg %p128
      %p272 = pneg %p125
      %p273 = pneg %p149
      %p274 = pneg %p146
      %p275 = pneg %p170
      %p276 = pneg %p167
      %p277 = pneg %p196
      %p278 = pneg %p193
      %p279 = scmp.lt.s32.totalorder %s18, 1
      %s280 = scalar_select %p279, %s18, 1
      %s281 = smul.addr %s280, 8
      %s282 = smul.addr %s281, 4
      %s283 = scalar_lea.vmem %s7, %s282
      %p284 = scmp.lt.s32.totalorder %s18, 1
      %s285 = scalar_select %p284, %s18, 1
      %s286 = smul.addr %s285, 8
      %s287 = smul.addr %s286, 4
      %s288 = scalar_lea.vmem %s0, %s287
      %p289 = scmp.lt.s32.totalorder %s18, 1
      %s290 = scalar_select %p289, %s18, 1
      %s291 = smul.addr %s290, 8
      %s292 = smul.addr %s291, 4
      %s293 = scalar_lea.vmem %s3, %s292
      %p294 = scmp.lt.s32.totalorder %s18, 1
      %s295 = scalar_select %p294, %s18, 1
      %s296 = smul.addr %s295, 8
      %s297 = smul.addr %s296, 4
      %s298 = scalar_lea.vmem %s7, %s297
      %v300 = vld [vmem:[%s293] sm:$0xf]
      %v301 = vld [vmem:[%s293 + $0x4] sm:$0xf]
      %v302 = vld [vmem:[%s293 + $0x8] sm:$0xf]
      %v303 = vld [vmem:[%s293 + $0xc] sm:$0xf]
      %v304 = vld [vmem:[%s293 + $0x10] sm:$0xf]
      %v305 = vld [vmem:[%s293 + $0x14] sm:$0xf]
      %v306 = vld [vmem:[%s293 + $0x18] sm:$0xf]
      %v307 = vld [vmem:[%s293 + $0x1c] sm:$0xf]
      %v308 = vld [vmem:[%s4] sm:$0x3]
      %v317 = vunpack.c.l.b16 %v300
      %v318 = vunpack.c.l.b16 %v301
      %v319 = vunpack.c.l.b16 %v302
      %v320 = vunpack.c.l.b16 %v303
      %v321 = vunpack.c.l.b16 %v304
      %v322 = vunpack.c.l.b16 %v305
      %v323 = vunpack.c.l.b16 %v306
      %v324 = vunpack.c.l.b16 %v307
      %v325 = vpack.c.b16 %v318, %v317
      %v326 = vpack.c.b16 %v320, %v319
      %v327 = vpack.c.b16 %v322, %v321
      %v328 = vpack.c.b16 %v324, %v323
      %vm329 = vcmask 31744
      %v331 = vsel %vm329, %v325, 0
      %v334 = vsel %vm329, %v326, 0
      %v337 = vsel %vm329, %v327, 0
      %v340 = vsel %vm329, %v328, 0
      %vm342 = vcmask 1041408
      %v344 = vsel %vm342, %v308, 0
      %346 = vmatprep.subr.bf16.mxu0 0
      %347 = vmatpush1.bf16.msra.mxu0 %v344
      %348 = vmatprep.subr.bf16.mxu0 0
      %349 = vmatpush1.bf16.msra.mxu0 0
      %350 = vmatprep.subr.bf16.mxu0 0
      %351 = vmatpush1.bf16.msra.mxu0 0
      %352 = vmatprep.subr.bf16.mxu0 0
      %353 = vmatpush1.bf16.msra.mxu0 0
      %354 = vmatprep.subr.bf16.mxu0 0
      %355 = vmatpush1.bf16.msra.mxu0 0
      %356 = vmatprep.subr.bf16.mxu0 0
      %357 = vmatpush1.bf16.msra.mxu0 0
      %358 = vmatprep.subr.bf16.mxu0 0
      %359 = vmatpush1.bf16.msra.mxu0 0
      %360 = vmatprep.subr.bf16.mxu0 0
      %361 = vmatpush1.bf16.msra.mxu0 0
      %362 = vmatprep.subr.bf16.mxu0 0
      %363 = vmatpush1.bf16.msra.mxu0 0
      %364 = vmatprep.subr.bf16.mxu0 0
      %365 = vmatpush1.bf16.msra.mxu0 0
      %366 = vmatprep.subr.bf16.mxu0 0
      %367 = vmatpush1.bf16.msra.mxu0 0
      %368 = vmatprep.subr.bf16.mxu0 0
      %369 = vmatpush1.bf16.msra.mxu0 0
      %370 = vmatprep.subr.bf16.mxu0 0
      %371 = vmatpush1.bf16.msra.mxu0 0
      %372 = vmatprep.subr.bf16.mxu0 0
      %373 = vmatpush1.bf16.msra.mxu0 0
      %374 = vmatprep.subr.bf16.mxu0 0
      %375 = vmatpush1.bf16.msra.mxu0 0
      %376 = vmatprep.subr.bf16.mxu0 0
      %377 = vmatpush1.bf16.msra.mxu0 0
      %378 = vmatprep.mubr.bf16.mxu0 0
      %379 = vmatmul.mubr.bf16.gmra.mrb[0].mxu0 %v331
      %v380 = vpop.f32.mrb[0].mxu0
      %v381 = vadd.f32 0.0, %v380
      %v382 = vpop.f32.mrb[0].mxu0
      %v383 = vpop.f32.mrb[0].mxu0
      %v384 = vadd.f32 0.0, %v383
      %v385 = vpop.f32.mrb[0].mxu0
      %386 = vmatprep.mubr.bf16.mxu0 0
      %387 = vmatmul.mubr.bf16.gmra.mrb[0].mxu0 %v334
      %v388 = vpop.f32.mrb[0].mxu0
      %v389 = vadd.f32 0.0, %v388
      %v390 = vpop.f32.mrb[0].mxu0
      %v391 = vpop.f32.mrb[0].mxu0
      %v392 = vadd.f32 0.0, %v391
      %v393 = vpop.f32.mrb[0].mxu0
      %394 = vmatprep.mubr.bf16.mxu0 0
      %395 = vmatmul.mubr.bf16.gmra.mrb[0].mxu0 %v337
      %v396 = vpop.f32.mrb[0].mxu0
      %v397 = vadd.f32 0.0, %v396
      %v398 = vpop.f32.mrb[0].mxu0
      %v399 = vpop.f32.mrb[0].mxu0
      %v400 = vadd.f32 0.0, %v399
      %v401 = vpop.f32.mrb[0].mxu0
      %402 = vmatprep.mubr.bf16.mxu0 0
      %403 = vmatmul.mubr.bf16.gmra.mrb[0].mxu0 %v340
      %v404 = vpop.f32.mrb[0].mxu0
      %v405 = vadd.f32 0.0, %v404
      %v406 = vpop.f32.mrb[0].mxu0
      %v407 = vpop.f32.mrb[0].mxu0
      %v408 = vadd.f32 0.0, %v407
      %v409 = vpop.f32.mrb[0].mxu0
      %410 = vdwg.mxu0
      %v411 = vld [vmem:[%s1] sm:$0x1]
      %v412 = vld [vmem:[%s2] sm:$0x1]
      %v413 = vld [vmem:[%s5] sm:$0x1]
      %v414 = vld [vmem:[%s6] sm:$0x1]
      %v415 = vld [vmem:[%s288] sm:$0xf]
      %v416 = vld [vmem:[%s288 + $0x4] sm:$0xf]
      %v417 = vld [vmem:[%s288 + $0x8] sm:$0xf]
      %v418 = vld [vmem:[%s288 + $0xc] sm:$0xf]
      %v419 = vld [vmem:[%s288 + $0x10] sm:$0xf]
      %v420 = vld [vmem:[%s288 + $0x14] sm:$0xf]
      %v421 = vld [vmem:[%s288 + $0x18] sm:$0xf]
      %v422 = vld [vmem:[%s288 + $0x1c] sm:$0xf]
      %v423 = vunpack.c.l.bf16 %v415
      %v424 = vunpack.c.l.bf16 %v416
      %v425 = vunpack.c.l.bf16 %v417
      %v426 = vunpack.c.l.bf16 %v418
      %v427 = vunpack.c.l.bf16 %v419
      %v428 = vunpack.c.l.bf16 %v420
      %v429 = vunpack.c.l.bf16 %v421
      %v430 = vunpack.c.l.bf16 %v422
      %v432 = vlaneseq
      %v433 = vshrl.u32 %v432, 7
      %v434 = vsub.s32 0, %v433
      %v435 = vrot.slane %v411, %v434
      %v437 = vmul.f32 %v423, %v435
      %v438 = vmul.f32 %v424, %v435
      %v439 = vmul.f32 %v425, %v435
      %v440 = vmul.f32 %v426, %v435
      %v441 = vmul.f32 %v427, %v435
      %v442 = vmul.f32 %v428, %v435
      %v443 = vmul.f32 %v429, %v435
      %v444 = vmul.f32 %v430, %v435
      %v446 = vlaneseq
      %v447 = vshrl.u32 %v446, 7
      %v448 = vsub.s32 0, %v447
      %v449 = vrot.slane %v412, %v448
      %v451 = vadd.f32 %v437, %v449
      %v452 = vadd.f32 %v438, %v449
      %v453 = vadd.f32 %v439, %v449
      %v454 = vadd.f32 %v440, %v449
      %v455 = vadd.f32 %v441, %v449
      %v456 = vadd.f32 %v442, %v449
      %v457 = vadd.f32 %v443, %v449
      %v458 = vadd.f32 %v444, %v449
      %v460 = vlaneseq
      %v461 = vshrl.u32 %v460, 7
      %v462 = vsub.s32 0, %v461
      %v463 = vrot.slane %v413, %v462
      %v465 = vmul.f32 %v381, %v463
      %v466 = vmul.f32 %v384, %v463
      %v467 = vmul.f32 %v389, %v463
      %v468 = vmul.f32 %v392, %v463
      %v469 = vmul.f32 %v397, %v463
      %v470 = vmul.f32 %v400, %v463
      %v471 = vmul.f32 %v405, %v463
      %v472 = vmul.f32 %v408, %v463
      %v473 = vadd.f32 %v451, %v465
      %v474 = vadd.f32 %v452, %v466
      %v475 = vadd.f32 %v453, %v467
      %v476 = vadd.f32 %v454, %v468
      %v477 = vadd.f32 %v455, %v469
      %v478 = vadd.f32 %v456, %v470
      %v479 = vadd.f32 %v457, %v471
      %v480 = vadd.f32 %v458, %v472
      %v482 = vlaneseq
      %v483 = vshrl.u32 %v482, 7
      %v484 = vsub.s32 0, %v483
      %v485 = vrot.slane %v414, %v484
      %v487 = vadd.f32 %v473, %v485
      %v488 = vadd.f32 %v474, %v485
      %v489 = vadd.f32 %v475, %v485
      %v490 = vadd.f32 %v476, %v485
      %v491 = vadd.f32 %v477, %v485
      %v492 = vadd.f32 %v478, %v485
      %v493 = vadd.f32 %v479, %v485
      %v494 = vadd.f32 %v480, %v485
      %v495 = vmax.f32 %v487, 0.0
      %v496 = vmax.f32 %v488, 0.0
      %v497 = vmax.f32 %v489, 0.0
      %v498 = vmax.f32 %v490, 0.0
      %v499 = vmax.f32 %v491, 0.0
      %v500 = vmax.f32 %v492, 0.0
      %v501 = vmax.f32 %v493, 0.0
      %v502 = vmax.f32 %v494, 0.0
      %v503 = vpack.c.bf16 %v495, %v495
      %v504 = vpack.c.bf16 %v496, %v496
      %v505 = vpack.c.bf16 %v497, %v497
      %v506 = vpack.c.bf16 %v498, %v498
      %v507 = vpack.c.bf16 %v499, %v499
      %v508 = vpack.c.bf16 %v500, %v500
      %v509 = vpack.c.bf16 %v501, %v501
      %v510 = vpack.c.bf16 %v502, %v502
      %511 = vst [vmem:[%s298] sm:$0xf] %v503
      %512 = vst [vmem:[%s298 + $0x4] sm:$0xf] %v504
      %513 = vst [vmem:[%s298 + $0x8] sm:$0xf] %v505
      %514 = vst [vmem:[%s298 + $0xc] sm:$0xf] %v506
      %515 = vst [vmem:[%s298 + $0x10] sm:$0xf] %v507
      %516 = vst [vmem:[%s298 + $0x14] sm:$0xf] %v508
      %517 = vst [vmem:[%s298 + $0x18] sm:$0xf] %v509
      %518 = vst [vmem:[%s298 + $0x1c] sm:$0xf] %v510
      %p519 = scmp.lt.s32.totalorder %s18, 1
      %s520 = scalar_select %p519, %s18, 1
      %s521 = smul.addr %s520, 8
      %s522 = smul.addr %s521, 4
      %s523 = scalar_lea.vmem %s7, %s522
      // Predicated region
      $region49: #{block_forward.7} parent=47 // pred_check
        %p524 = pneg %p193
      $region50: #{block_forward.7} parent=47 // pred_check_branch
        %526 = sbr.rel (%p524) target = $region52
      $region51: #{block_forward.7} parent=47 // pred_region
        _
      $region52: #{block_forward.7} parent=47 // pred_fallthru
        _
    $region48: #{block_forward.7} parent=5 // pred_fallthru
      _
    %p527 = scmp.le.s32.totalorder 2, %s13
    // Predicated region
    $region53: #{block_forward.7} parent=5 // pred_check
      %p528 = pneg %p527
    $region54: #{block_forward.7} parent=5 // pred_check_branch
      %530 = sbr.rel (%p528) target = $region56
    $region55: #{block_forward.7} parent=5 // pred_region
      %s531 = ssub.s32 %s13, 2
      // Predicated region
      $region57: #{block_forward.7} parent=55 // pred_check
        %p532 = pneg %p199
      $region58: #{block_forward.7} parent=55 // pred_check_branch
        %534 = sbr.rel (%p532) target = $region60
      $region59: #{block_forward.7} parent=55 // pred_region
        %p535 = scmp.lt.s32.totalorder %s19, 1
        %s536 = scalar_select %p535, %s19, 1
        %s537 = smul.addr %s536, 8
        %s538 = smul.addr %s537, 4
        %s539 = scalar_lea.vmem %s7, %s538
      $region60: #{block_forward.7} parent=55 // pred_fallthru
        _
    $region56: #{block_forward.7} parent=5 // pred_fallthru
      _
  $region6: #{block_forward.7} parent=0 // loop_footer
    %s17 = sadd.s32 1, %s13
  $region7: #{block_forward.7} parent=0 // loop_footer_branch
    %12 = sbr.rel target = $region3
  $region8: #{block_forward.7} parent=0 // loop_exit
    _

// kernel: block_forward.4
$region0: #{block_forward.4}
  #allocation0 [shape = 'u32[]', space=smem, size = 0x4, offset = 0x4, fixed_abs, tag = 'smem constant byte address 0x4 - core index']
  #allocation1 [shape = 'u32[144,128]{1,0:T(1,128)}', space=vmem, size = 0x12000, scoped, tag = 'internal scratch']
  #allocation2 [shape = 'f32[64,128]{1,0:T(8,128)}', space=vmem, size = 0x8000, scoped, tag = 'scratch operand']
  %s0 = inlined_call_operand.vmem [shape: bf16[2,9,9,4], index: 0, kind: input, shape index: {}]
  %s1 = inlined_call_operand.vmem [shape: bf16[2,9,9,4], index: 1, kind: input, shape index: {}]
  %s2 = inlined_call_operand.vmem [shape: bf16[2,9,9,4], index: 2, kind: input, shape index: {}]
  %s3 = inlined_call_operand.vmem [shape: bf16[2,9,9,4], index: 3, kind: input, shape index: {}]
  %s4 = inlined_call_operand.vmem [shape: bf16[9,4,128], index: 4, kind: input, shape index: {}]
  %s5 = inlined_call_operand.vmem [shape: bf16[2,8,8,4], index: 5, kind: input, shape index: {}]
  %s6 = inlined_call_operand.vmem [shape: bf16[4,128], index: 6, kind: input, shape index: {}]
  %s7 = inlined_call_operand.vmem [shape: bf16[2,8,8,128], index: 7, kind: output, shape index: {0}]
  %s8 = inlined_call_operand.vmem [shape: f32[2,1,128], index: 8, kind: output, shape index: {1}]
  %s9 = inlined_call_operand.vmem [shape: f32[2,1,128], index: 9, kind: output, shape index: {2}]
  %s10 = inlined_call_operand.vmem [shape: f32[2,1,128], index: 10, kind: output, shape index: {3}]
  %s11 = inlined_call_operand.vmem [shape: f32[2,1,128], index: 11, kind: output, shape index: {4}]
  %12 = xla_tuple %s7, %s8, %s9, %s10, %s11
  %s13 = sld [smem:[#allocation0]]
  $region93: #{block_forward.4} parent=0
    _
  %s15 = ssub.s32 1, %s13
  %s16 = scalar_select 0, %s15, %s13
  loop: start=0, step=1, limit=4
  $region2: #{block_forward.4} parent=0 // loop_pre_header
    _
  $region3: #{block_forward.4} parent=0 // loop_header
    %s18 = sphi 0, %s22
    %p19 = scmp.ge.s32.totalorder %s18, 4
    %s28 = sphi 0, %s30
    %s31 = sphi 0, %s28
    %s32 = sphi 0, %s31
    %s48 = sphi 0, %s32
    %s54 = sphi 0, %s56
    %s57 = sphi 0, %s54
    %s58 = sphi 0, %s57
    %s74 = sphi 0, %s58
    %s80 = sphi 0, %s82
    %s83 = sphi 0, %s80
    %s84 = sphi 0, %s83
    %s100 = sphi 0, %s84
    %s106 = sphi 0, %s108
    %s109 = sphi 0, %s106
    %s110 = sphi 0, %s109
    %s126 = sphi 0, %s110
    %s130 = sphi 0, %s130
    %s132 = sphi 0, %s130
    %s133 = sphi 0, %s132
    %s147 = sphi 0, %s133
    %s153 = sphi 0, %s155
    %s156 = sphi 0, %s153
    %s157 = sphi 0, %s156
    %s173 = sphi 0, %s157
    %s177 = sphi 0, %s177
    %s179 = sphi 0, %s177
    %s180 = sphi 0, %s179
    %s194 = sphi 0, %s180
    %s200 = sphi 0, %s202
    %s203 = sphi 0, %s200
    %s204 = sphi 0, %s203
    %s220 = sphi 0, %s204
    %s226 = sphi 0, %s228
    %s229 = sphi 0, %s226
    %s230 = sphi 0, %s229
    %s246 = sphi 0, %s230
    %s252 = sphi 0, %s254
    %s255 = sphi 0, %s252
    %s256 = sphi 0, %s255
    %s272 = sphi 0, %s256
    %s278 = sphi 0, %s280
    %s281 = sphi 0, %s278
    %s282 = sphi 0, %s281
    %s298 = sphi 0, %s282
    %s304 = sphi 0, %s306
    %s307 = sphi 0, %s304
    %s308 = sphi 0, %s307
    %s324 = sphi 0, %s308
  $region4: #{block_forward.4} parent=0 // loop_header_branch
    %21 = sbr.rel (%p19) target = $region8
  $region5: #{block_forward.4} parent=0 // loop_body
    %s23 = ssub.s32 %s18, 1
    %s24 = ssub.s32 %s18, 2
    %s25 = sadd.s32 %s18, 1
    %s26 = ssub.s32 %s18, %s25
    %p27 = scmp.eq.s32.totalorder %s26, 0
    %s29 = sadd.s32 %s28, 1
    %s30 = scalar_select %p27, %s28, %s29
    %p33 = pneg %p27
    %p34 = scmp.eq.s32.totalorder %s18, 1
    %p35 = por %p33, %p34
    %p36 = scmp.ne.s32.totalorder %s28, %s31
    %p37 = scmp.eq.s32.totalorder %s18, 0
    %p38 = por %p36, %p37
    %p39 = scmp.ne.s32.totalorder %s28, %s31
    %p40 = scmp.eq.s32.totalorder %s23, 1
    %p41 = por %p39, %p40
    %p42 = scmp.ne.s32.totalorder %s31, %s32
    %p43 = scmp.eq.s32.totalorder %s23, 0
    %p44 = por %p42, %p43
    %p45 = scmp.ne.s32.totalorder %s31, %s32
    %p46 = scmp.eq.s32.totalorder %s24, 1
    %p47 = por %p45, %p46
    %p49 = scmp.ne.s32.totalorder %s32, %s48
    %p50 = scmp.eq.s32.totalorder %s24, 0
    %p51 = por %p49, %p50
    %s52 = ssub.s32 %s18, %s25
    %p53 = scmp.eq.s32.totalorder %s52, 0
    %s55 = sadd.s32 %s54, 1
    %s56 = scalar_select %p53, %s54, %s55
    %p59 = pneg %p53
    %p60 = scmp.eq.s32.totalorder %s18, 1
    %p61 = por %p59, %p60
    %p62 = scmp.ne.s32.totalorder %s54, %s57
    %p63 = scmp.eq.s32.totalorder %s18, 0
    %p64 = por %p62, %p63
    %p65 = scmp.ne.s32.totalorder %s54, %s57
    %p66 = scmp.eq.s32.totalorder %s23, 1
    %p67 = por %p65, %p66
    %p68 = scmp.ne.s32.totalorder %s57, %s58
    %p69 = scmp.eq.s32.totalorder %s23, 0
    %p70 = por %p68, %p69
    %p71 = scmp.ne.s32.totalorder %s57, %s58
    %p72 = scmp.eq.s32.totalorder %s24, 1
    %p73 = por %p71, %p72
    %p75 = scmp.ne.s32.totalorder %s58, %s74
    %p76 = scmp.eq.s32.totalorder %s24, 0
    %p77 = por %p75, %p76
    %s78 = ssub.s32 %s18, %s25
    %p79 = scmp.eq.s32.totalorder %s78, 0
    %s81 = sadd.s32 %s80, 1
    %s82 = scalar_select %p79, %s80, %s81
    %p85 = pneg %p79
    %p86 = scmp.eq.s32.totalorder %s18, 1
    %p87 = por %p85, %p86
    %p88 = scmp.ne.s32.totalorder %s80, %s83
    %p89 = scmp.eq.s32.totalorder %s18, 0
    %p90 = por %p88, %p89
    %p91 = scmp.ne.s32.totalorder %s80, %s83
    %p92 = scmp.eq.s32.totalorder %s23, 1
    %p93 = por %p91, %p92
    %p94 = scmp.ne.s32.totalorder %s83, %s84
    %p95 = scmp.eq.s32.totalorder %s23, 0
    %p96 = por %p94, %p95
    %p97 = scmp.ne.s32.totalorder %s83, %s84
    %p98 = scmp.eq.s32.totalorder %s24, 1
    %p99 = por %p97, %p98
    %p101 = scmp.ne.s32.totalorder %s84, %s100
    %p102 = scmp.eq.s32.totalorder %s24, 0
    %p103 = por %p101, %p102
    %s104 = ssub.s32 %s18, %s25
    %p105 = scmp.eq.s32.totalorder %s104, 0
    %s107 = sadd.s32 %s106, 1
    %s108 = scalar_select %p105, %s106, %s107
    %p111 = pneg %p105
    %p112 = scmp.eq.s32.totalorder %s18, 1
    %p113 = por %p111, %p112
    %p114 = scmp.ne.s32.totalorder %s106, %s109
    %p115 = scmp.eq.s32.totalorder %s18, 0
    %p116 = por %p114, %p115
    %p117 = scmp.ne.s32.totalorder %s106, %s109
    %p118 = scmp.eq.s32.totalorder %s23, 1
    %p119 = por %p117, %p118
    %p120 = scmp.ne.s32.totalorder %s109, %s110
    %p121 = scmp.eq.s32.totalorder %s23, 0
    %p122 = por %p120, %p121
    %p123 = scmp.ne.s32.totalorder %s109, %s110
    %p124 = scmp.eq.s32.totalorder %s24, 1
    %p125 = por %p123, %p124
    %p127 = scmp.ne.s32.totalorder %s110, %s126
    %p128 = scmp.eq.s32.totalorder %s24, 0
    %p129 = por %p127, %p128
    %s131 = sadd.s32 %s130, 1
    %p134 = scmp.eq.s32.totalorder %s18, 1
    %p135 = scmp.ne.s32.totalorder %s130, %s132
    %p136 = scmp.eq.s32.totalorder %s18, 0
    %p137 = por %p135, %p136
    %p138 = scmp.ne.s32.totalorder %s130, %s132
    %p139 = scmp.eq.s32.totalorder %s23, 1
    %p140 = por %p138, %p139
    %p141 = scmp.ne.s32.totalorder %s132, %s133
    %p142 = scmp.eq.s32.totalorder %s23, 0
    %p143 = por %p141, %p142
    %p144 = scmp.ne.s32.totalorder %s132, %s133
    %p145 = scmp.eq.s32.totalorder %s24, 1
    %p146 = por %p144, %p145
    %p148 = scmp.ne.s32.totalorder %s133, %s147
    %p149 = scmp.eq.s32.totalorder %s24, 0
    %p150 = por %p148, %p149
    %s151 = ssub.s32 %s18, %s25
    %p152 = scmp.eq.s32.totalorder %s151, 0
    %s154 = sadd.s32 %s153, 1
    %s155 = scalar_select %p152, %s153, %s154
    %p158 = pneg %p152
    %p159 = scmp.eq.s32.totalorder %s18, 1
    %p160 = por %p158, %p159
    %p161 = scmp.ne.s32.totalorder %s153, %s156
    %p162 = scmp.eq.s32.totalorder %s18, 0
    %p163 = por %p161, %p162
    %p164 = scmp.ne.s32.totalorder %s153, %s156
    %p165 = scmp.eq.s32.totalorder %s23, 1
    %p166 = por %p164, %p165
    %p167 = scmp.ne.s32.totalorder %s156, %s157
    %p168 = scmp.eq.s32.totalorder %s23, 0
    %p169 = por %p167, %p168
    %p170 = scmp.ne.s32.totalorder %s156, %s157
    %p171 = scmp.eq.s32.totalorder %s24, 1
    %p172 = por %p170, %p171
    %p174 = scmp.ne.s32.totalorder %s157, %s173
    %p175 = scmp.eq.s32.totalorder %s24, 0
    %p176 = por %p174, %p175
    %s178 = sadd.s32 %s177, 1
    %p181 = scmp.eq.s32.totalorder %s18, 1
    %p182 = scmp.ne.s32.totalorder %s177, %s179
    %p183 = scmp.eq.s32.totalorder %s18, 0
    %p184 = por %p182, %p183
    %p185 = scmp.ne.s32.totalorder %s177, %s179
    %p186 = scmp.eq.s32.totalorder %s23, 1
    %p187 = por %p185, %p186
    %p188 = scmp.ne.s32.totalorder %s179, %s180
    %p189 = scmp.eq.s32.totalorder %s23, 0
    %p190 = por %p188, %p189
    %p191 = scmp.ne.s32.totalorder %s179, %s180
    %p192 = scmp.eq.s32.totalorder %s24, 1
    %p193 = por %p191, %p192
    %p195 = scmp.ne.s32.totalorder %s180, %s194
    %p196 = scmp.eq.s32.totalorder %s24, 0
    %p197 = por %p195, %p196
    %s198 = ssub.s32 %s18, %s25
    %p199 = scmp.eq.s32.totalorder %s198, 0
    %s201 = sadd.s32 %s200, 1
    %s202 = scalar_select %p199, %s200, %s201
    %p205 = pneg %p199
    %p206 = scmp.eq.s32.totalorder %s18, 1
    %p207 = por %p205, %p206
    %p208 = scmp.ne.s32.totalorder %s200, %s203
    %p209 = scmp.eq.s32.totalorder %s18, 0
    %p210 = por %p208, %p209
    %p211 = scmp.ne.s32.totalorder %s200, %s203
    %p212 = scmp.eq.s32.totalorder %s23, 1
    %p213 = por %p211, %p212
    %p214 = scmp.ne.s32.totalorder %s203, %s204
    %p215 = scmp.eq.s32.totalorder %s23, 0
    %p216 = por %p214, %p215
    %p217 = scmp.ne.s32.totalorder %s203, %s204
    %p218 = scmp.eq.s32.totalorder %s24, 1
    %p219 = por %p217, %p218
    %p221 = scmp.ne.s32.totalorder %s204, %s220
    %p222 = scmp.eq.s32.totalorder %s24, 0
    %p223 = por %p221, %p222
    %s224 = ssub.s32 %s18, %s25
    %p225 = scmp.eq.s32.totalorder %s224, 0
    %s227 = sadd.s32 %s226, 1
    %s228 = scalar_select %p225, %s226, %s227
    %p231 = pneg %p225
    %p232 = scmp.eq.s32.totalorder %s18, 1
    %p233 = por %p231, %p232
    %p234 = scmp.ne.s32.totalorder %s226, %s229
    %p235 = scmp.eq.s32.totalorder %s18, 0
    %p236 = por %p234, %p235
    %p237 = scmp.ne.s32.totalorder %s226, %s229
    %p238 = scmp.eq.s32.totalorder %s23, 1
    %p239 = por %p237, %p238
    %p240 = scmp.ne.s32.totalorder %s229, %s230
    %p241 = scmp.eq.s32.totalorder %s23, 0
    %p242 = por %p240, %p241
    %p243 = scmp.ne.s32.totalorder %s229, %s230
    %p244 = scmp.eq.s32.totalorder %s24, 1
    %p245 = por %p243, %p244
    %p247 = scmp.ne.s32.totalorder %s230, %s246
    %p248 = scmp.eq.s32.totalorder %s24, 0
    %p249 = por %p247, %p248
    %s250 = ssub.s32 %s18, %s25
    %p251 = scmp.eq.s32.totalorder %s250, 0
    %s253 = sadd.s32 %s252, 1
    %s254 = scalar_select %p251, %s252, %s253
    %p257 = pneg %p251
    %p258 = scmp.eq.s32.totalorder %s18, 1
    %p259 = por %p257, %p258
    %p260 = scmp.ne.s32.totalorder %s252, %s255
    %p261 = scmp.eq.s32.totalorder %s18, 0
    %p262 = por %p260, %p261
    %p263 = scmp.ne.s32.totalorder %s252, %s255
    %p264 = scmp.eq.s32.totalorder %s23, 1
    %p265 = por %p263, %p264
    %p266 = scmp.ne.s32.totalorder %s255, %s256
    %p267 = scmp.eq.s32.totalorder %s23, 0
    %p268 = por %p266, %p267
    %p269 = scmp.ne.s32.totalorder %s255, %s256
    %p270 = scmp.eq.s32.totalorder %s24, 1
    %p271 = por %p269, %p270
    %p273 = scmp.ne.s32.totalorder %s256, %s272
    %p274 = scmp.eq.s32.totalorder %s24, 0
    %p275 = por %p273, %p274
    %s276 = ssub.s32 %s18, %s25
    %p277 = scmp.eq.s32.totalorder %s276, 0
    %s279 = sadd.s32 %s278, 1
    %s280 = scalar_select %p277, %s278, %s279
    %p283 = pneg %p277
    %p284 = scmp.eq.s32.totalorder %s18, 1
    %p285 = por %p283, %p284
    %p286 = scmp.ne.s32.totalorder %s278, %s281
    %p287 = scmp.eq.s32.totalorder %s18, 0
    %p288 = por %p286, %p287
    %p289 = scmp.ne.s32.totalorder %s278, %s281
    %p290 = scmp.eq.s32.totalorder %s23, 1
    %p291 = por %p289, %p290
    %p292 = scmp.ne.s32.totalorder %s281, %s282
    %p293 = scmp.eq.s32.totalorder %s23, 0
    %p294 = por %p292, %p293
    %p295 = scmp.ne.s32.totalorder %s281, %s282
    %p296 = scmp.eq.s32.totalorder %s24, 1
    %p297 = por %p295, %p296
    %p299 = scmp.ne.s32.totalorder %s282, %s298
    %p300 = scmp.eq.s32.totalorder %s24, 0
    %p301 = por %p299, %p300
    %s302 = ssub.s32 %s18, %s25
    %p303 = scmp.eq.s32.totalorder %s302, 0
    %s305 = sadd.s32 %s304, 1
    %s306 = scalar_select %p303, %s304, %s305
    %p309 = pneg %p303
    %p310 = scmp.eq.s32.totalorder %s18, 1
    %p311 = por %p309, %p310
    %p312 = scmp.ne.s32.totalorder %s304, %s307
    %p313 = scmp.eq.s32.totalorder %s18, 0
    %p314 = por %p312, %p313
    %p315 = scmp.ne.s32.totalorder %s304, %s307
    %p316 = scmp.eq.s32.totalorder %s23, 1
    %p317 = por %p315, %p316
    %p318 = scmp.ne.s32.totalorder %s307, %s308
    %p319 = scmp.eq.s32.totalorder %s23, 0
    %p320 = por %p318, %p319
    %p321 = scmp.ne.s32.totalorder %s307, %s308
    %p322 = scmp.eq.s32.totalorder %s24, 1
    %p323 = por %p321, %p322
    %p325 = scmp.ne.s32.totalorder %s308, %s324
    %p326 = scmp.eq.s32.totalorder %s24, 0
    %p327 = por %p325, %p326
    %p328 = scmp.le.s32.totalorder 1, %s18
    %p329 = scmp.lt.s32.totalorder %s18, 3
    %p330 = pnand %p328, %p329
    %p331 = pneg %p330
    // Predicated region
    $region9: #{block_forward.4} parent=5 // pred_check
      _
    $region10: #{block_forward.4} parent=5 // pred_check_branch
      %333 = sbr.rel (%p330) target = $region12
    $region11: #{block_forward.4} parent=5 // pred_region
      %s334 = ssub.s32 %s18, 1
      // Predicated region
      $region13: #{block_forward.4} parent=11 // pred_check
        %p335 = pneg %p143
      $region14: #{block_forward.4} parent=11 // pred_check_branch
        %337 = sbr.rel (%p335) target = $region16
      $region15: #{block_forward.4} parent=11 // pred_region
        _
      $region16: #{block_forward.4} parent=11 // pred_fallthru
        _
      // Predicated region
      $region17: #{block_forward.4} parent=11 // pred_check
        %p338 = pneg %p190
      $region18: #{block_forward.4} parent=11 // pred_check_branch
        %340 = sbr.rel (%p338) target = $region20
      $region19: #{block_forward.4} parent=11 // pred_region
        _
      $region20: #{block_forward.4} parent=11 // pred_fallthru
        _
    $region12: #{block_forward.4} parent=5 // pred_fallthru
      _
    %p341 = scmp.lt.s32.totalorder %s18, 2
    // Predicated region
    $region21: #{block_forward.4} parent=5 // pred_check
      %p342 = pneg %p341
    $region22: #{block_forward.4} parent=5 // pred_check_branch
      %344 = sbr.rel (%p342) target = $region24
    $region23: #{block_forward.4} parent=5 // pred_region
      // Predicated region
      $region25: #{block_forward.4} parent=23 // pred_check
        %p345 = pneg %p38
      $region26: #{block_forward.4} parent=23 // pred_check_branch
        %347 = sbr.rel (%p345) target = $region28
      $region27: #{block_forward.4} parent=23 // pred_region
        %p348 = scmp.lt.s32.totalorder %s18, 1
        %s349 = scalar_select %p348, %s18, 1
        %s350 = smul.addr %s349, 18
        %s351 = smul.addr %s350, 4
        %s352 = scalar_lea.vmem %s0, %s351
      $region28: #{block_forward.4} parent=23 // pred_fallthru
        _
      // Predicated region
      $region29: #{block_forward.4} parent=23 // pred_check
        %p353 = pneg %p64
      $region30: #{block_forward.4} parent=23 // pred_check_branch
        %355 = sbr.rel (%p353) target = $region32
      $region31: #{block_forward.4} parent=23 // pred_region
        %p356 = scmp.lt.s32.totalorder %s18, 1
        %s357 = scalar_select %p356, %s18, 1
        %s358 = smul.addr %s357, 18
        %s359 = smul.addr %s358, 4
        %s360 = scalar_lea.vmem %s1, %s359
      $region32: #{block_forward.4} parent=23 // pred_fallthru
        _
      // Predicated region
      $region33: #{block_forward.4} parent=23 // pred_check
        %p361 = pneg %p90
      $region34: #{block_forward.4} parent=23 // pred_check_branch
        %363 = sbr.rel (%p361) target = $region36
      $region35: #{block_forward.4} parent=23 // pred_region
        %p364 = scmp.lt.s32.totalorder %s18, 1
        %s365 = scalar_select %p364, %s18, 1
        %s366 = smul.addr %s365, 18
        %s367 = smul.addr %s366, 4
        %s368 = scalar_lea.vmem %s2, %s367
      $region36: #{block_forward.4} parent=23 // pred_fallthru
        _
      // Predicated region
      $region37: #{block_forward.4} parent=23 // pred_check
        %p369 = pneg %p116
      $region38: #{block_forward.4} parent=23 // pred_check_branch
        %371 = sbr.rel (%p369) target = $region40
      $region39: #{block_forward.4} parent=23 // pred_region
        %p372 = scmp.lt.s32.totalorder %s18, 1
        %s373 = scalar_select %p372, %s18, 1
        %s374 = smul.addr %s373, 18
        %s375 = smul.addr %s374, 4
        %s376 = scalar_lea.vmem %s3, %s375
      $region40: #{block_forward.4} parent=23 // pred_fallthru
        _
      // Predicated region
      $region41: #{block_forward.4} parent=23 // pred_check
        %p377 = pneg %p163
      $region42: #{block_forward.4} parent=23 // pred_check_branch
        %379 = sbr.rel (%p377) target = $region44
      $region43: #{block_forward.4} parent=23 // pred_region
        %p380 = scmp.lt.s32.totalorder %s18, 1
        %s381 = scalar_select %p380, %s18, 1
        %s382 = smul.addr %s381, 8
        %s383 = smul.addr %s382, 4
        %s384 = scalar_lea.vmem %s5, %s383
      $region44: #{block_forward.4} parent=23 // pred_fallthru
        _
    $region24: #{block_forward.4} parent=5 // pred_fallthru
      _
    %p385 = scmp.le.s32.totalorder 1, %s18
    %p386 = scmp.lt.s32.totalorder %s18, 3
    %p387 = pnand %p385, %p386
    %p388 = pneg %p387
    // Predicated region
    $region45: #{block_forward.4} parent=5 // pred_check
      _
    $region46: #{block_forward.4} parent=5 // pred_check_branch
      %390 = sbr.rel (%p387) target = $region48
    $region47: #{block_forward.4} parent=5 // pred_region
      %s391 = ssub.s32 %s18, 1
      %p392 = scmp.lt.s32.totalorder %s23, 1
      %s393 = scalar_select %p392, %s23, 1
      %s394 = smul.addr %s393, 18
      %s395 = smul.addr %s394, 4
      %s396 = scalar_lea.vmem %s0, %s395
      %p397 = pneg %p44
      %p398 = pneg %p41
      %p399 = scmp.lt.s32.totalorder %s23, 1
      %s400 = scalar_select %p399, %s23, 1
      %s401 = smul.addr %s400, 18
      %s402 = smul.addr %s401, 4
      %s403 = scalar_lea.vmem %s1, %s402
      %p404 = pneg %p70
      %p405 = pneg %p67
      %p406 = scmp.lt.s32.totalorder %s23, 1
      %s407 = scalar_select %p406, %s23, 1
      %s408 = smul.addr %s407, 18
      %s409 = smul.addr %s408, 4
      %s410 = scalar_lea.vmem %s2, %s409
      %p411 = pneg %p96
      %p412 = pneg %p93
      %p413 = scmp.lt.s32.totalorder %s23, 1
      %s414 = scalar_select %p413, %s23, 1
      %s415 = smul.addr %s414, 18
      %s416 = smul.addr %s415, 4
      %s417 = scalar_lea.vmem %s3, %s416
      %p418 = pneg %p122
      %p419 = pneg %p119
      %p420 = pneg %p143
      %p421 = pneg %p140
      %p422 = scmp.lt.s32.totalorder %s23, 1
      %s423 = scalar_select %p422, %s23, 1
      %s424 = smul.addr %s423, 8
      %s425 = smul.addr %s424, 4
      %s426 = scalar_lea.vmem %s5, %s425
      %p427 = pneg %p169
      %p428 = pneg %p166
      %p429 = pneg %p190
      %p430 = pneg %p187
      %p431 = pneg %p216
      %p432 = pneg %p213
      %p433 = scmp.lt.s32.totalorder %s23, 1
      %s434 = scalar_select %p433, %s23, 1
      %s435 = smul.addr %s434, 8
      %s436 = smul.addr %s435, 4
      %s437 = scalar_lea.vmem %s7, %s436
      %p438 = pneg %p242
      %p439 = pneg %p239
      %p440 = scmp.lt.s32.totalorder %s23, 1
      %s441 = scalar_select %p440, %s23, 1
      %s442 = scalar_lea.vmem %s8, %s441
      %p443 = pneg %p268
      %p444 = pneg %p265
      %p445 = scmp.lt.s32.totalorder %s23, 1
      %s446 = scalar_select %p445, %s23, 1
      %s447 = scalar_lea.vmem %s9, %s446
      %p448 = pneg %p294
      %p449 = pneg %p291
      %p450 = scmp.lt.s32.totalorder %s23, 1
      %s451 = scalar_select %p450, %s23, 1
      %s452 = scalar_lea.vmem %s10, %s451
      %p453 = pneg %p320
      %p454 = pneg %p317
      %p455 = scmp.lt.s32.totalorder %s23, 1
      %s456 = scalar_select %p455, %s23, 1
      %s457 = scalar_lea.vmem %s11, %s456
      %p458 = scmp.lt.s32.totalorder %s23, 1
      %s459 = scalar_select %p458, %s23, 1
      %s460 = smul.addr %s459, 18
      %s461 = smul.addr %s460, 4
      %s462 = scalar_lea.vmem %s0, %s461
      %p463 = scmp.lt.s32.totalorder %s23, 1
      %s464 = scalar_select %p463, %s23, 1
      %s465 = smul.addr %s464, 18
      %s466 = smul.addr %s465, 4
      %s467 = scalar_lea.vmem %s1, %s466
      %p468 = scmp.lt.s32.totalorder %s23, 1
      %s469 = scalar_select %p468, %s23, 1
      %s470 = smul.addr %s469, 18
      %s471 = smul.addr %s470, 4
      %s472 = scalar_lea.vmem %s2, %s471
      %p473 = scmp.lt.s32.totalorder %s23, 1
      %s474 = scalar_select %p473, %s23, 1
      %s475 = smul.addr %s474, 18
      %s476 = smul.addr %s475, 4
      %s477 = scalar_lea.vmem %s3, %s476
      %p478 = scmp.lt.s32.totalorder %s23, 1
      %s479 = scalar_select %p478, %s23, 1
      %s480 = smul.addr %s479, 8
      %s481 = smul.addr %s480, 4
      %s482 = scalar_lea.vmem %s5, %s481
      %p483 = scmp.lt.s32.totalorder %s23, 1
      %s484 = scalar_select %p483, %s23, 1
      %s485 = smul.addr %s484, 8
      %s486 = smul.addr %s485, 4
      %s487 = scalar_lea.vmem %s7, %s486
      %p488 = scmp.lt.s32.totalorder %s23, 1
      %s489 = scalar_select %p488, %s23, 1
      %s490 = scalar_lea.vmem %s8, %s489
      %p491 = scmp.lt.s32.totalorder %s23, 1
      %s492 = scalar_select %p491, %s23, 1
      %s493 = scalar_lea.vmem %s9, %s492
      %p494 = scmp.lt.s32.totalorder %s23, 1
      %s495 = scalar_select %p494, %s23, 1
      %s496 = scalar_lea.vmem %s10, %s495
      %p497 = scmp.lt.s32.totalorder %s23, 1
      %s498 = scalar_select %p497, %s23, 1
      %s499 = scalar_lea.vmem %s11, %s498
      %v501 = vld [vmem:[%s462] sm:$0xf]
      %v502 = vld [vmem:[%s462 + $0x8] sm:$0xf]
      %v503 = vld [vmem:[%s462 + $0x10] sm:$0xf]
      %v504 = vld [vmem:[%s462 + $0x18] sm:$0xf]
      %v505 = vld [vmem:[%s462 + $0x20] sm:$0xf]
      %v506 = vld [vmem:[%s462 + $0x28] sm:$0xf]
      %v507 = vld [vmem:[%s462 + $0x30] sm:$0xf]
      %v508 = vld [vmem:[%s462 + $0x38] sm:$0xf]
      %v509 = vld [vmem:[%s4] sm:$0x3]
      %v518 = vunpack.c.l.b16 %v501
      %v519 = vunpack.c.l.b16 %v502
      %v520 = vunpack.c.l.b16 %v503
      %v521 = vunpack.c.l.b16 %v504
      %v522 = vunpack.c.l.b16 %v505
      %v523 = vunpack.c.l.b16 %v506
      %v524 = vunpack.c.l.b16 %v507
      %v525 = vunpack.c.l.b16 %v508
      %v526 = vpack.c.b16 %v519, %v518
      %v527 = vpack.c.b16 %v521, %v520
      %v528 = vpack.c.b16 %v523, %v522
      %v529 = vpack.c.b16 %v525, %v524
      %vm530 = vcmask 31744
      %v532 = vsel %vm530, %v526, 0
      %v535 = vsel %vm530, %v527, 0
      %v538 = vsel %vm530, %v528, 0
      %v541 = vsel %vm530, %v529, 0
      %vm543 = vcmask 1041408
      %v545 = vsel %vm543, %v509, 0
      %547 = vmatprep.subr.bf16.mxu0 0
      %548 = vmatpush1.bf16.msra.mxu0 %v545
      %549 = vmatprep.subr.bf16.mxu0 0
      %550 = vmatpush1.bf16.msra.mxu0 0
      %551 = vmatprep.subr.bf16.mxu0 0
      %552 = vmatpush1.bf16.msra.mxu0 0
      %553 = vmatprep.subr.bf16.mxu0 0
      %554 = vmatpush1.bf16.msra.mxu0 0
      %555 = vmatprep.subr.bf16.mxu0 0
      %556 = vmatpush1.bf16.msra.mxu0 0
      %557 = vmatprep.subr.bf16.mxu0 0
      %558 = vmatpush1.bf16.msra.mxu0 0
      %559 = vmatprep.subr.bf16.mxu0 0
      %560 = vmatpush1.bf16.msra.mxu0 0
      %561 = vmatprep.subr.bf16.mxu0 0
      %562 = vmatpush1.bf16.msra.mxu0 0
      %563 = vmatprep.subr.bf16.mxu0 0
      %564 = vmatpush1.bf16.msra.mxu0 0
      %565 = vmatprep.subr.bf16.mxu0 0
      %566 = vmatpush1.bf16.msra.mxu0 0
      %567 = vmatprep.subr.bf16.mxu0 0
      %568 = vmatpush1.bf16.msra.mxu0 0
      %569 = vmatprep.subr.bf16.mxu0 0
      %570 = vmatpush1.bf16.msra.mxu0 0
      %571 = vmatprep.subr.bf16.mxu0 0
      %572 = vmatpush1.bf16.msra.mxu0 0
      %573 = vmatprep.subr.bf16.mxu0 0
      %574 = vmatpush1.bf16.msra.mxu0 0
      %575 = vmatprep.subr.bf16.mxu0 0
      %576 = vmatpush1.bf16.msra.mxu0 0
      %577 = vmatprep.subr.bf16.mxu0 0
      %578 = vmatpush1.bf16.msra.mxu0 0
      %579 = vmatprep.mubr.bf16.mxu0 0
      %580 = vmatmul.mubr.bf16.gmra.mrb[0].mxu0 %v532
      %v581 = vpop.f32.mrb[0].mxu0
      %v582 = vadd.f32 0.0, %v581
      %v583 = vpop.f32.mrb[0].mxu0
      %v584 = vpop.f32.mrb[0].mxu0
      %v585 = vadd.f32 0.0, %v584
      %v586 = vpop.f32.mrb[0].mxu0
      %587 = vmatprep.mubr.bf16.mxu0 0
      %588 = vmatmul.mubr.bf16.gmra.mrb[0].mxu0 %v535
      %v589 = vpop.f32.mrb[0].mxu0
      %v590 = vadd.f32 0.0, %v589
      %v591 = vpop.f32.mrb[0].mxu0
      %v592 = vpop.f32.mrb[0].mxu0
      %v593 = vadd.f32 0.0, %v592
      %v594 = vpop.f32.mrb[0].mxu0
      %595 = vmatprep.mubr.bf16.mxu0 0
      %596 = vmatmul.mubr.bf16.gmra.mrb[0].mxu0 %v538
      %v597 = vpop.f32.mrb[0].mxu0
      %v598 = vadd.f32 0.0, %v597
      %v599 = vpop.f32.mrb[0].mxu0
      %v600 = vpop.f32.mrb[0].mxu0
      %v601 = vadd.f32 0.0, %v600
      %v602 = vpop.f32.mrb[0].mxu0
      %603 = vmatprep.mubr.bf16.mxu0 0
      %604 = vmatmul.mubr.bf16.gmra.mrb[0].mxu0 %v541
      %v605 = vpop.f32.mrb[0].mxu0
      %v606 = vadd.f32 0.0, %v605
      %v607 = vpop.f32.mrb[0].mxu0
      %v608 = vpop.f32.mrb[0].mxu0
      %v609 = vadd.f32 0.0, %v608
      %v610 = vpop.f32.mrb[0].mxu0
      %611 = vdwg.mxu0
      %612 = vst [vmem:[#allocation2] sm:$0xff] %v582
      %613 = vst [vmem:[#allocation2 + $0x8] sm:$0xff] %v585
      %614 = vst [vmem:[#allocation2 + $0x10] sm:$0xff] %v590
      %615 = vst [vmem:[#allocation2 + $0x18] sm:$0xff] %v593
      %616 = vst [vmem:[#allocation2 + $0x20] sm:$0xff] %v598
      %617 = vst [vmem:[#allocation2 + $0x28] sm:$0xff] %v601
      %618 = vst [vmem:[#allocation2 + $0x30] sm:$0xff] %v606
      %619 = vst [vmem:[#allocation2 + $0x38] sm:$0xff] %v609
      %v620 = vld [vmem:[%s467] sm:$0xf]
      %v621 = vld [vmem:[%s467 + $0x8] sm:$0xf]
      %v622 = vld [vmem:[%s467 + $0x10] sm:$0xf]
      %v623 = vld [vmem:[%s467 + $0x18] sm:$0xf]
      %v624 = vld [vmem:[%s467 + $0x20] sm:$0xf]
      %v625 = vld [vmem:[%s467 + $0x28] sm:$0xf]
      %v626 = vld [vmem:[%s467 + $0x30] sm:$0xf]
      %v627 = vld [vmem:[%s467 + $0x38] sm:$0xf]
      %s628 = scalar_lea.vmem %s4, 2
      %v629 = vld [vmem:[%s628] sm:$0x3]
      %v638 = vunpack.c.l.b16 %v620
      %v639 = vunpack.c.l.b16 %v621
      %v640 = vunpack.c.l.b16 %v622
      %v641 = vunpack.c.l.b16 %v623
      %v642 = vunpack.c.l.b16 %v624
      %v643 = vunpack.c.l.b16 %v625
      %v644 = vunpack.c.l.b16 %v626
      %v645 = vunpack.c.l.b16 %v627
      %v646 = vpack.c.b16 %v639, %v638
      %v647 = vpack.c.b16 %v641, %v640
      %v648 = vpack.c.b16 %v643, %v642
      %v649 = vpack.c.b16 %v645, %v644
      %v651 = vsel %vm530, %v646, 0
      %v654 = vsel %vm530, %v647, 0
      %v657 = vsel %vm530, %v648, 0
      %v660 = vsel %vm530, %v649, 0
      %v663 = vsel %vm543, %v629, 0
      %665 = vmatprep.subr.bf16.mxu0 0
      %666 = vmatpush1.bf16.msra.mxu0 %v663
      %667 = vmatprep.subr.bf16.mxu0 0
      %668 = vmatpush1.bf16.msra.mxu0 0
      %669 = vmatprep.subr.bf16.mxu0 0
      %670 = vmatpush1.bf16.msra.mxu0 0
      %671 = vmatprep.subr.bf16.mxu0 0
      %672 = vmatpush1.bf16.msra.mxu0 0
      %673 = vmatprep.subr.bf16.mxu0 0
      %674 = vmatpush1.bf16.msra.mxu0 0
      %675 = vmatprep.subr.bf16.mxu0 0
      %676 = vmatpush1.bf16.msra.mxu0 0
      %677 = vmatprep.subr.bf16.mxu0 0
      %678 = vmatpush1.bf16.msra.mxu0 0
      %679 = vmatprep.subr.bf16.mxu0 0
      %680 = vmatpush1.bf16.msra.mxu0 0
      %681 = vmatprep.subr.bf16.mxu0 0
      %682 = vmatpush1.bf16.msra.mxu0 0
      %683 = vmatprep.subr.bf16.mxu0 0
      %684 = vmatpush1.bf16.msra.mxu0 0
      %685 = vmatprep.subr.bf16.mxu0 0
      %686 = vmatpush1.bf16.msra.mxu0 0
      %687 = vmatprep.subr.bf16.mxu0 0
      %688 = vmatpush1.bf16.msra.mxu0 0
      %689 = vmatprep.subr.bf16.mxu0 0
      %690 = vmatpush1.bf16.msra.mxu0 0
      %691 = vmatprep.subr.bf16.mxu0 0
      %692 = vmatpush1.bf16.msra.mxu0 0
      %693 = vmatprep.subr.bf16.mxu0 0
      %694 = vmatpush1.bf16.msra.mxu0 0
      %695 = vmatprep.subr.bf16.mxu0 0
      %696 = vmatpush1.bf16.msra.mxu0 0
      %697 = vmatprep.mubr.bf16.mxu0 0
      %698 = vmatmul.mubr.bf16.gmra.mrb[0].mxu0 %v651
      %v699 = vpop.f32.mrb[0].mxu0
      %v700 = vadd.f32 0.0, %v699
      %v701 = vpop.f32.mrb[0].mxu0
      %v702 = vpop.f32.mrb[0].mxu0
      %v703 = vadd.f32 0.0, %v702
      %v704 = vpop.f32.mrb[0].mxu0
      %705 = vmatprep.mubr.bf16.mxu0 0
      %706 = vmatmul.mubr.bf16.gmra.mrb[0].mxu0 %v654
      %v707 = vpop.f32.mrb[0].mxu0
      %v708 = vadd.f32 0.0, %v707
      %v709 = vpop.f32.mrb[0].mxu0
      %v710 = vpop.f32.mrb[0].mxu0
      %v711 = vadd.f32 0.0, %v710
      %v712 = vpop.f32.mrb[0].mxu0
      %713 = vmatprep.mubr.bf16.mxu0 0
      %714 = vmatmul.mubr.bf16.gmra.mrb[0].mxu0 %v657
      %v715 = vpop.f32.mrb[0].mxu0
      %v716 = vadd.f32 0.0, %v715
      %v717 = vpop.f32.mrb[0].mxu0
      %v718 = vpop.f32.mrb[0].mxu0
      %v719 = vadd.f32 0.0, %v718
      %v720 = vpop.f32.mrb[0].mxu0
      %721 = vmatprep.mubr.bf16.mxu0 0
      %722 = vmatmul.mubr.bf16.gmra.mrb[0].mxu0 %v660
      %v723 = vpop.f32.mrb[0].mxu0
      %v724 = vadd.f32 0.0, %v723
      %v725 = vpop.f32.mrb[0].mxu0
      %v726 = vpop.f32.mrb[0].mxu0
      %v727 = vadd.f32 0.0, %v726
      %v728 = vpop.f32.mrb[0].mxu0
      %729 = vdwg.mxu0
      %v730 = vld [vmem:[#allocation2] sm:$0xff]
      %v731 = vld [vmem:[#allocation2 + $0x8] sm:$0xff]
      %v732 = vld [vmem:[#allocation2 + $0x10] sm:$0xff]
      %v733 = vld [vmem:[#allocation2 + $0x18] sm:$0xff]
      %v734 = vld [vmem:[#allocation2 + $0x20] sm:$0xff]
      %v735 = vld [vmem:[#allocation2 + $0x28] sm:$0xff]
      %v736 = vld [vmem:[#allocation2 + $0x30] sm:$0xff]
      %v737 = vld [vmem:[#allocation2 + $0x38] sm:$0xff]
      %v738 = vadd.f32 %v730, %v700
      %v739 = vadd.f32 %v731, %v703
      %v740 = vadd.f32 %v732, %v708
      %v741 = vadd.f32 %v733, %v711
      %v742 = vadd.f32 %v734, %v716
      %v743 = vadd.f32 %v735, %v719
      %v744 = vadd.f32 %v736, %v724
      %v745 = vadd.f32 %v737, %v727
      %746 = vst [vmem:[#allocation2] sm:$0xff] %v738
      %747 = vst [vmem:[#allocation2 + $0x8] sm:$0xff] %v739
      %748 = vst [vmem:[#allocation2 + $0x10] sm:$0xff] %v740
      %749 = vst [vmem:[#allocation2 + $0x18] sm:$0xff] %v741
      %750 = vst [vmem:[#allocation2 + $0x20] sm:$0xff] %v742
      %751 = vst [vmem:[#allocation2 + $0x28] sm:$0xff] %v743
      %752 = vst [vmem:[#allocation2 + $0x30] sm:$0xff] %v744
      %753 = vst [vmem:[#allocation2 + $0x38] sm:$0xff] %v745
      %v754 = vld [vmem:[%s462] sm:$0xf]
      %v755 = vld [vmem:[%s462 + $0x4] sm:$0x1]
      %v756 = vld [vmem:[%s462 + $0x8] sm:$0xf]
      %v757 = vld [vmem:[%s462 + $0xc] sm:$0x1]
      %v758 = vld [vmem:[%s462 + $0x10] sm:$0xf]
      %v759 = vld [vmem:[%s462 + $0x14] sm:$0x1]
      %v760 = vld [vmem:[%s462 + $0x18] sm:$0xf]
      %v761 = vld [vmem:[%s462 + $0x1c] sm:$0x1]
      %v762 = vld [vmem:[%s462 + $0x20] sm:$0xf]
      %v763 = vld [vmem:[%s462 + $0x24] sm:$0x1]
      %v764 = vld [vmem:[%s462 + $0x28] sm:$0xf]
      %v765 = vld [vmem:[%s462 + $0x2c] sm:$0x1]
      %v766 = vld [vmem:[%s462 + $0x30] sm:$0xf]
      %v767 = vld [vmem:[%s462 + $0x34] sm:$0x1]
      %v768 = vld [vmem:[%s462 + $0x38] sm:$0xf]
      %v769 = vld [vmem:[%s462 + $0x3c] sm:$0x1]
      %vm770 = vsmask.f32 3328
      %vm771 = vsmask.f32 7440
      %vm772 = vmor %vm770, %vm771
      %v774 = vshrl.u32 %v754, 16
      %v776 = vrot.slane %v774, 4
      %v777 = vshll.u32 %v754, 16
      %v779 = vrot.slane %v777, 5
      %v780 = vor.u32 %v776, %v779
      %v781 = vrot.slane %v780, 4
      %v783 = vshll.u32 %v755, 16
      %v785 = vrot.slane %v783, 5
      %v786 = vsel %vm772, %v781, %v785
      %v788 = vshrl.u32 %v756, 16
      %v790 = vrot.slane %v788, 4
      %v791 = vshll.u32 %v756, 16
      %v793 = vrot.slane %v791, 5
      %v794 = vor.u32 %v790, %v793
      %v795 = vrot.slane %v794, 4
      %v797 = vshll.u32 %v757, 16
      %v799 = vrot.slane %v797, 5
      %v800 = vsel %vm772, %v795, %v799
      %v802 = vshrl.u32 %v758, 16
      %v804 = vrot.slane %v802, 4
      %v805 = vshll.u32 %v758, 16
      %v807 = vrot.slane %v805, 5
      %v808 = vor.u32 %v804, %v807
      %v809 = vrot.slane %v808, 4
      %v811 = vshll.u32 %v759, 16
      %v813 = vrot.slane %v811, 5
      %v814 = vsel %vm772, %v809, %v813
      %v816 = vshrl.u32 %v760, 16
      %v818 = vrot.slane %v816, 4
      %v819 = vshll.u32 %v760, 16
      %v821 = vrot.slane %v819, 5
      %v822 = vor.u32 %v818, %v821
      %v823 = vrot.slane %v822, 4
      %v825 = vshll.u32 %v761, 16
      %v827 = vrot.slane %v825, 5
      %v828 = vsel %vm772, %v823, %v827
      %v830 = vshrl.u32 %v762, 16
      %v832 = vrot.slane %v830, 4
      %v833 = vshll.u32 %v762, 16
      %v835 = vrot.slane %v833, 5
      %v836 = vor.u32 %v832, %v835
      %v837 = vrot.slane %v836, 4
      %v839 = vshll.u32 %v763, 16
      %v841 = vrot.slane %v839, 5
      %v842 = vsel %vm772, %v837, %v841
      %v844 = vshrl.u32 %v764, 16
      %v846 = vrot.slane %v844, 4
      %v847 = vshll.u32 %v764, 16
      %v849 = vrot.slane %v847, 5
      %v850 = vor.u32 %v846, %v849
      %v851 = vrot.slane %v850, 4
      %v853 = vshll.u32 %v765, 16
      %v855 = vrot.slane %v853, 5
      %v856 = vsel %vm772, %v851, %v855
      %v858 = vshrl.u32 %v766, 16
      %v860 = vrot.slane %v858, 4
      %v861 = vshll.u32 %v766, 16
      %v863 = vrot.slane %v861, 5
      %v864 = vor.u32 %v860, %v863
      %v865 = vrot.slane %v864, 4
      %v867 = vshll.u32 %v767, 16
      %v869 = vrot.slane %v867, 5
      %v870 = vsel %vm772, %v865, %v869
      %v872 = vshrl.u32 %v768, 16
      %v874 = vrot.slane %v872, 4
      %v875 = vshll.u32 %v768, 16
      %v877 = vrot.slane %v875, 5
      %v878 = vor.u32 %v874, %v877
      %v879 = vrot.slane %v878, 4
      %v881 = vshll.u32 %v769, 16
      %v883 = vrot.slane %v881, 5
      %v884 = vsel %vm772, %v879, %v883
      %s885 = scalar_lea.vmem %s4, 4
      %v886 = vld [vmem:[%s885] sm:$0x3]
      %v887 = vunpack.c.l.b16 %v786
      %v888 = vunpack.c.l.b16 %v800
      %v889 = vunpack.c.l.b16 %v814
      %v890 = vunpack.c.l.b16 %v828
      %v891 = vunpack.c.l.b16 %v842
      %v892 = vunpack.c.l.b16 %v856
      %v893 = vunpack.c.l.b16 %v870
      %v894 = vunpack.c.l.b16 %v884
      %v895 = vpack.c.b16 %v888, %v887
      %v896 = vpack.c.b16 %v890, %v889
      %v897 = vpack.c.b16 %v892, %v891
      %v898 = vpack.c.b16 %v894, %v893
      %v900 = vsel %vm530, %v895, 0
      %v903 = vsel %vm530, %v896, 0
      %v906 = vsel %vm530, %v897, 0
      %v909 = vsel %vm530, %v898, 0
      %v912 = vsel %vm543, %v886, 0
      %914 = vmatprep.subr.bf16.mxu0 0
      %915 = vmatpush1.bf16.msra.mxu0 %v912
      %916 = vmatprep.subr.bf16.mxu0 0
      %917 = vmatpush1.bf16.msra.mxu0 0
      %918 = vmatprep.subr.bf16.mxu0 0
      %919 = vmatpush1.bf16.msra.mxu0 0
      %920 = vmatprep.subr.bf16.mxu0 0
      %921 = vmatpush1.bf16.msra.mxu0 0
      %922 = vmatprep.subr.bf16.mxu0 0
      %923 = vmatpush1.bf16.msra.mxu0 0
      %924 = vmatprep.subr.bf16.mxu0 0
      %925 = vmatpush1.bf16.msra.mxu0 0
      %926 = vmatprep.subr.bf16.mxu0 0
      %927 = vmatpush1.bf16.msra.mxu0 0
      %928 = vmatprep.subr.bf16.mxu0 0
      %929 = vmatpush1.bf16.msra.mxu0 0
      %930 = vmatprep.subr.bf16.mxu0 0
      %931 = vmatpush1.bf16.msra.mxu0 0
      %932 = vmatprep.subr.bf16.mxu0 0
      %933 = vmatpush1.bf16.msra.mxu0 0
      %934 = vmatprep.subr.bf16.mxu0 0
      %935 = vmatpush1.bf16.msra.mxu0 0
      %936 = vmatprep.subr.bf16.mxu0 0
      %937 = vmatpush1.bf16.msra.mxu0 0
      %938 = vmatprep.subr.bf16.mxu0 0
      %939 = vmatpush1.bf16.msra.mxu0 0
      %940 = vmatprep.subr.bf16.mxu0 0
      %941 = vmatpush1.bf16.msra.mxu0 0
      %942 = vmatprep.subr.bf16.mxu0 0
      %943 = vmatpush1.bf16.msra.mxu0 0
      %944 = vmatprep.subr.bf16.mxu0 0
      %945 = vmatpush1.bf16.msra.mxu0 0
      %946 = vmatprep.mubr.bf16.mxu0 0
      %947 = vmatmul.mubr.bf16.gmra.mrb[0].mxu0 %v900
      %v948 = vpop.f32.mrb[0].mxu0
      %v949 = vadd.f32 0.0, %v948
      %v950 = vpop.f32.mrb[0].mxu0
      %v951 = vpop.f32.mrb[0].mxu0
      %v952 = vadd.f32 0.0, %v951
      %v953 = vpop.f32.mrb[0].mxu0
      %954 = vmatprep.mubr.bf16.mxu0 0
      %955 = vmatmul.mubr.bf16.gmra.mrb[0].mxu0 %v903
      %v956 = vpop.f32.mrb[0].mxu0
      %v957 = vadd.f32 0.0, %v956
      %v958 = vpop.f32.mrb[0].mxu0
      %v959 = vpop.f32.mrb[0].mxu0
      %v960 = vadd.f32 0.0, %v959
      %v961 = vpop.f32.mrb[0].mxu0
      %962 = vmatprep.mubr.bf16.mxu0 0
      %963 = vmatmul.mubr.bf16.gmra.mrb[0].mxu0 %v906
      %v964 = vpop.f32.mrb[0].mxu0
      %v965 = vadd.f32 0.0, %v964
      %v966 = vpop.f32.mrb[0].mxu0
      %v967 = vpop.f32.mrb[0].mxu0
      %v968 = vadd.f32 0.0, %v967
      %v969 = vpop.f32.mrb[0].mxu0
      %970 = vmatprep.mubr.bf16.mxu0 0
      %971 = vmatmul.mubr.bf16.gmra.mrb[0].mxu0 %v909
      %v972 = vpop.f32.mrb[0].mxu0
      %v973 = vadd.f32 0.0, %v972
      %v974 = vpop.f32.mrb[0].mxu0
      %v975 = vpop.f32.mrb[0].mxu0
      %v976 = vadd.f32 0.0, %v975
      %v977 = vpop.f32.mrb[0].mxu0
      %978 = vdwg.mxu0
      %v979 = vld [vmem:[#allocation2] sm:$0xff]
      %v980 = vld [vmem:[#allocation2 + $0x8] sm:$0xff]
      %v981 = vld [vmem:[#allocation2 + $0x10] sm:$0xff]
      %v982 = vld [vmem:[#allocation2 + $0x18] sm:$0xff]
      %v983 = vld [vmem:[#allocation2 + $0x20] sm:$0xff]
      %v984 = vld [vmem:[#allocation2 + $0x28] sm:$0xff]
      %v985 = vld [vmem:[#allocation2 + $0x30] sm:$0xff]
      %v986 = vld [vmem:[#allocation2 + $0x38] sm:$0xff]
      %v987 = vadd.f32 %v979, %v949
      %v988 = vadd.f32 %v980, %v952
      %v989 = vadd.f32 %v981, %v957
      %v990 = vadd.f32 %v982, %v960
      %v991 = vadd.f32 %v983, %v965
      %v992 = vadd.f32 %v984, %v968
      %v993 = vadd.f32 %v985, %v973
      %v994 = vadd.f32 %v986, %v976
      %995 = vst [vmem:[#allocation2] sm:$0xff] %v987
      %996 = vst [vmem:[#allocation2 + $0x8] sm:$0xff] %v988
      %997 = vst [vmem:[#allocation2 + $0x10] sm:$0xff] %v989
      %998 = vst [vmem:[#allocation2 + $0x18] sm:$0xff] %v990
      %999 = vst [vmem:[#allocation2 + $0x20] sm:$0xff] %v991
      %1000 = vst [vmem:[#allocation2 + $0x28] sm:$0xff] %v992
      %1001 = vst [vmem:[#allocation2 + $0x30] sm:$0xff] %v993
      %1002 = vst [vmem:[#allocation2 + $0x38] sm:$0xff] %v994
      %v1003 = vld [vmem:[%s472] sm:$0xf]
      %v1004 = vld [vmem:[%s472 + $0x8] sm:$0xf]
      %v1005 = vld [vmem:[%s472 + $0x10] sm:$0xf]
      %v1006 = vld [vmem:[%s472 + $0x18] sm:$0xf]
      %v1007 = vld [vmem:[%s472 + $0x20] sm:$0xf]
      %v1008 = vld [vmem:[%s472 + $0x28] sm:$0xf]
      %v1009 = vld [vmem:[%s472 + $0x30] sm:$0xf]
      %v1010 = vld [vmem:[%s472 + $0x38] sm:$0xf]
      %s1011 = scalar_lea.vmem %s4, 6
      %v1012 = vld [vmem:[%s1011] sm:$0x3]
      %v1021 = vunpack.c.l.b16 %v1003
      %v1022 = vunpack.c.l.b16 %v1004
      %v1023 = vunpack.c.l.b16 %v1005
      %v1024 = vunpack.c.l.b16 %v1006
      %v1025 = vunpack.c.l.b16 %v1007
      %v1026 = vunpack.c.l.b16 %v1008
      %v1027 = vunpack.c.l.b16 %v1009
      %v1028 = vunpack.c.l.b16 %v1010
      %v1029 = vpack.c.b16 %v1022, %v1021
      %v1030 = vpack.c.b16 %v1024, %v1023
      %v1031 = vpack.c.b16 %v1026, %v1025
      %v1032 = vpack.c.b16 %v1028, %v1027
      %v1034 = vsel %vm530, %v1029, 0
      %v1037 = vsel %vm530, %v1030, 0
      %v1040 = vsel %vm530, %v1031, 0
      %v1043 = vsel %vm530, %v1032, 0
      %v1046 = vsel %vm543, %v1012, 0
      %1048 = vmatprep.subr.bf16.mxu0 0
      %1049 = vmatpush1.bf16.msra.mxu0 %v1046
      %1050 = vmatprep.subr.bf16.mxu0 0
      %1051 = vmatpush1.bf16.msra.mxu0 0
      %1052 = vmatprep.subr.bf16.mxu0 0
      %1053 = vmatpush1.bf16.msra.mxu0 0
      %1054 = vmatprep.subr.bf16.mxu0 0
      %1055 = vmatpush1.bf16.msra.mxu0 0
      %1056 = vmatprep.subr.bf16.mxu0 0
      %1057 = vmatpush1.bf16.msra.mxu0 0
      %1058 = vmatprep.subr.bf16.mxu0 0
      %1059 = vmatpush1.bf16.msra.mxu0 0
      %1060 = vmatprep.subr.bf16.mxu0 0
      %1061 = vmatpush1.bf16.msra.mxu0 0
      %1062 = vmatprep.subr.bf16.mxu0 0
      %1063 = vmatpush1.bf16.msra.mxu0 0
      %1064 = vmatprep.subr.bf16.mxu0 0
      %1065 = vmatpush1.bf16.msra.mxu0 0
      %1066 = vmatprep.subr.bf16.mxu0 0
      %1067 = vmatpush1.bf16.msra.mxu0 0
      %1068 = vmatprep.subr.bf16.mxu0 0
      %1069 = vmatpush1.bf16.msra.mxu0 0
      %1070 = vmatprep.subr.bf16.mxu0 0
      %1071 = vmatpush1.bf16.msra.mxu0 0
      %1072 = vmatprep.subr.bf16.mxu0 0
      %1073 = vmatpush1.bf16.msra.mxu0 0
      %1074 = vmatprep.subr.bf16.mxu0 0
      %1075 = vmatpush1.bf16.msra.mxu0 0
      %1076 = vmatprep.subr.bf16.mxu0 0
      %1077 = vmatpush1.bf16.msra.mxu0 0
      %1078 = vmatprep.subr.bf16.mxu0 0
      %1079 = vmatpush1.bf16.msra.mxu0 0
      %1080 = vmatprep.mubr.bf16.mxu0 0
      %1081 = vmatmul.mubr.bf16.gmra.mrb[0].mxu0 %v1034
      %v1082 = vpop.f32.mrb[0].mxu0
      %v1083 = vadd.f32 0.0, %v1082
      %v1084 = vpop.f32.mrb[0].mxu0
      %v1085 = vpop.f32.mrb[0].mxu0
      %v1086 = vadd.f32 0.0, %v1085
      %v1087 = vpop.f32.mrb[0].mxu0
      %1088 = vmatprep.mubr.bf16.mxu0 0
      %1089 = vmatmul.mubr.bf16.gmra.mrb[0].mxu0 %v1037
      %v1090 = vpop.f32.mrb[0].mxu0
      %v1091 = vadd.f32 0.0, %v1090
      %v1092 = vpop.f32.mrb[0].mxu0
      %v1093 = vpop.f32.mrb[0].mxu0
      %v1094 = vadd.f32 0.0, %v1093
      %v1095 = vpop.f32.mrb[0].mxu0
      %1096 = vmatprep.mubr.bf16.mxu0 0
      %1097 = vmatmul.mubr.bf16.gmra.mrb[0].mxu0 %v1040
      %v1098 = vpop.f32.mrb[0].mxu0
      %v1099 = vadd.f32 0.0, %v1098
      %v1100 = vpop.f32.mrb[0].mxu0
      %v1101 = vpop.f32.mrb[0].mxu0
      %v1102 = vadd.f32 0.0, %v1101
      %v1103 = vpop.f32.mrb[0].mxu0
      %1104 = vmatprep.mubr.bf16.mxu0 0
      %1105 = vmatmul.mubr.bf16.gmra.mrb[0].mxu0 %v1043
      %v1106 = vpop.f32.mrb[0].mxu0
      %v1107 = vadd.f32 0.0, %v1106
      %v1108 = vpop.f32.mrb[0].mxu0
      %v1109 = vpop.f32.mrb[0].mxu0
      %v1110 = vadd.f32 0.0, %v1109
      %v1111 = vpop.f32.mrb[0].mxu0
      %1112 = vdwg.mxu0
      %v1113 = vld [vmem:[#allocation2] sm:$0xff]
      %v1114 = vld [vmem:[#allocation2 + $0x8] sm:$0xff]
      %v1115 = vld [vmem:[#allocation2 + $0x10] sm:$0xff]
      %v1116 = vld [vmem:[#allocation2 + $0x18] sm:$0xff]
      %v1117 = vld [vmem:[#allocation2 + $0x20] sm:$0xff]
      %v1118 = vld [vmem:[#allocation2 + $0x28] sm:$0xff]
      %v1119 = vld [vmem:[#allocation2 + $0x30] sm:$0xff]
      %v1120 = vld [vmem:[#allocation2 + $0x38] sm:$0xff]
      %v1121 = vadd.f32 %v1113, %v1083
      %v1122 = vadd.f32 %v1114, %v1086
      %v1123 = vadd.f32 %v1115, %v1091
      %v1124 = vadd.f32 %v1116, %v1094
      %v1125 = vadd.f32 %v1117, %v1099
      %v1126 = vadd.f32 %v1118, %v1102
      %v1127 = vadd.f32 %v1119, %v1107
      %v1128 = vadd.f32 %v1120, %v1110
      %1129 = vst [vmem:[#allocation2] sm:$0xff] %v1121
      %1130 = vst [vmem:[#allocation2 + $0x8] sm:$0xff] %v1122
      %1131 = vst [vmem:[#allocation2 + $0x10] sm:$0xff] %v1123
      %1132 = vst [vmem:[#allocation2 + $0x18] sm:$0xff] %v1124
      %1133 = vst [vmem:[#allocation2 + $0x20] sm:$0xff] %v1125
      %1134 = vst [vmem:[#allocation2 + $0x28] sm:$0xff] %v1126
      %1135 = vst [vmem:[#allocation2 + $0x30] sm:$0xff] %v1127
      %1136 = vst [vmem:[#allocation2 + $0x38] sm:$0xff] %v1128
      %v1137 = vld [vmem:[%s477] sm:$0xf]
      %v1138 = vld [vmem:[%s477 + $0x8] sm:$0xf]
      %v1139 = vld [vmem:[%s477 + $0x10] sm:$0xf]
      %v1140 = vld [vmem:[%s477 + $0x18] sm:$0xf]
      %v1141 = vld [vmem:[%s477 + $0x20] sm:$0xf]
      %v1142 = vld [vmem:[%s477 + $0x28] sm:$0xf]
      %v1143 = vld [vmem:[%s477 + $0x30] sm:$0xf]
      %v1144 = vld [vmem:[%s477 + $0x38] sm:$0xf]
      %s1145 = scalar_lea.vmem %s4, 8
      %v1146 = vld [vmem:[%s1145] sm:$0x3]
      %v1155 = vunpack.c.l.b16 %v1137
      %v1156 = vunpack.c.l.b16 %v1138
      %v1157 = vunpack.c.l.b16 %v1139
      %v1158 = vunpack.c.l.b16 %v1140
      %v1159 = vunpack.c.l.b16 %v1141
      %v1160 = vunpack.c.l.b16 %v1142
      %v1161 = vunpack.c.l.b16 %v1143
      %v1162 = vunpack.c.l.b16 %v1144
      %v1163 = vpack.c.b16 %v1156, %v1155
      %v1164 = vpack.c.b16 %v1158, %v1157
      %v1165 = vpack.c.b16 %v1160, %v1159
      %v1166 = vpack.c.b16 %v1162, %v1161
      %v1168 = vsel %vm530, %v1163, 0
      %v1171 = vsel %vm530, %v1164, 0
      %v1174 = vsel %vm530, %v1165, 0
      %v1177 = vsel %vm530, %v1166, 0
      %v1180 = vsel %vm543, %v1146, 0
      %1182 = vmatprep.subr.bf16.mxu0 0
      %1183 = vmatpush1.bf16.msra.mxu0 %v1180
      %1184 = vmatprep.subr.bf16.mxu0 0
      %1185 = vmatpush1.bf16.msra.mxu0 0
      %1186 = vmatprep.subr.bf16.mxu0 0
      %1187 = vmatpush1.bf16.msra.mxu0 0
      %1188 = vmatprep.subr.bf16.mxu0 0
      %1189 = vmatpush1.bf16.msra.mxu0 0
      %1190 = vmatprep.subr.bf16.mxu0 0
      %1191 = vmatpush1.bf16.msra.mxu0 0
      %1192 = vmatprep.subr.bf16.mxu0 0
      %1193 = vmatpush1.bf16.msra.mxu0 0
      %1194 = vmatprep.subr.bf16.mxu0 0
      %1195 = vmatpush1.bf16.msra.mxu0 0
      %1196 = vmatprep.subr.bf16.mxu0 0
      %1197 = vmatpush1.bf16.msra.mxu0 0
      %1198 = vmatprep.subr.bf16.mxu0 0
      %1199 = vmatpush1.bf16.msra.mxu0 0
      %1200 = vmatprep.subr.bf16.mxu0 0
      %1201 = vmatpush1.bf16.msra.mxu0 0
      %1202 = vmatprep.subr.bf16.mxu0 0
      %1203 = vmatpush1.bf16.msra.mxu0 0
      %1204 = vmatprep.subr.bf16.mxu0 0
      %1205 = vmatpush1.bf16.msra.mxu0 0
      %1206 = vmatprep.subr.bf16.mxu0 0
      %1207 = vmatpush1.bf16.msra.mxu0 0
      %1208 = vmatprep.subr.bf16.mxu0 0
      %1209 = vmatpush1.bf16.msra.mxu0 0
      %1210 = vmatprep.subr.bf16.mxu0 0
      %1211 = vmatpush1.bf16.msra.mxu0 0
      %1212 = vmatprep.subr.bf16.mxu0 0
      %1213 = vmatpush1.bf16.msra.mxu0 0
      %1214 = vmatprep.mubr.bf16.mxu0 0
      %1215 = vmatmul.mubr.bf16.gmra.mrb[0].mxu0 %v1168
      %v1216 = vpop.f32.mrb[0].mxu0
      %v1217 = vadd.f32 0.0, %v1216
      %v1218 = vpop.f32.mrb[0].mxu0
      %v1219 = vpop.f32.mrb[0].mxu0
      %v1220 = vadd.f32 0.0, %v1219
      %v1221 = vpop.f32.mrb[0].mxu0
      %1222 = vmatprep.mubr.bf16.mxu0 0
      %1223 = vmatmul.mubr.bf16.gmra.mrb[0].mxu0 %v1171
      %v1224 = vpop.f32.mrb[0].mxu0
      %v1225 = vadd.f32 0.0, %v1224
      %v1226 = vpop.f32.mrb[0].mxu0
      %v1227 = vpop.f32.mrb[0].mxu0
      %v1228 = vadd.f32 0.0, %v1227
      %v1229 = vpop.f32.mrb[0].mxu0
      %1230 = vmatprep.mubr.bf16.mxu0 0
      %1231 = vmatmul.mubr.bf16.gmra.mrb[0].mxu0 %v1174
      %v1232 = vpop.f32.mrb[0].mxu0
      %v1233 = vadd.f32 0.0, %v1232
      %v1234 = vpop.f32.mrb[0].mxu0
      %v1235 = vpop.f32.mrb[0].mxu0
      %v1236 = vadd.f32 0.0, %v1235
      %v1237 = vpop.f32.mrb[0].mxu0
      %1238 = vmatprep.mubr.bf16.mxu0 0
      %1239 = vmatmul.mubr.bf16.gmra.mrb[0].mxu0 %v1177
      %v1240 = vpop.f32.mrb[0].mxu0
      %v1241 = vadd.f32 0.0, %v1240
      %v1242 = vpop.f32.mrb[0].mxu0
      %v1243 = vpop.f32.mrb[0].mxu0
      %v1244 = vadd.f32 0.0, %v1243
      %v1245 = vpop.f32.mrb[0].mxu0
      %1246 = vdwg.mxu0
      %v1247 = vld [vmem:[#allocation2] sm:$0xff]
      %v1248 = vld [vmem:[#allocation2 + $0x8] sm:$0xff]
      %v1249 = vld [vmem:[#allocation2 + $0x10] sm:$0xff]
      %v1250 = vld [vmem:[#allocation2 + $0x18] sm:$0xff]
      %v1251 = vld [vmem:[#allocation2 + $0x20] sm:$0xff]
      %v1252 = vld [vmem:[#allocation2 + $0x28] sm:$0xff]
      %v1253 = vld [vmem:[#allocation2 + $0x30] sm:$0xff]
      %v1254 = vld [vmem:[#allocation2 + $0x38] sm:$0xff]
      %v1255 = vadd.f32 %v1247, %v1217
      %v1256 = vadd.f32 %v1248, %v1220
      %v1257 = vadd.f32 %v1249, %v1225
      %v1258 = vadd.f32 %v1250, %v1228
      %v1259 = vadd.f32 %v1251, %v1233
      %v1260 = vadd.f32 %v1252, %v1236
      %v1261 = vadd.f32 %v1253, %v1241
      %v1262 = vadd.f32 %v1254, %v1244
      %1263 = vst [vmem:[#allocation2] sm:$0xff] %v1255
      %1264 = vst [vmem:[#allocation2 + $0x8] sm:$0xff] %v1256
      %1265 = vst [vmem:[#allocation2 + $0x10] sm:$0xff] %v1257
      %1266 = vst [vmem:[#allocation2 + $0x18] sm:$0xff] %v1258
      %1267 = vst [vmem:[#allocation2 + $0x20] sm:$0xff] %v1259
      %1268 = vst [vmem:[#allocation2 + $0x28] sm:$0xff] %v1260
      %1269 = vst [vmem:[#allocation2 + $0x30] sm:$0xff] %v1261
      %1270 = vst [vmem:[#allocation2 + $0x38] sm:$0xff] %v1262
      %v1271 = vld [vmem:[%s472] sm:$0xf]
      %v1272 = vld [vmem:[%s472 + $0x4] sm:$0x1]
      %v1273 = vld [vmem:[%s472 + $0x8] sm:$0xf]
      %v1274 = vld [vmem:[%s472 + $0xc] sm:$0x1]
      %v1275 = vld [vmem:[%s472 + $0x10] sm:$0xf]
      %v1276 = vld [vmem:[%s472 + $0x14] sm:$0x1]
      %v1277 = vld [vmem:[%s472 + $0x18] sm:$0xf]
      %v1278 = vld [vmem:[%s472 + $0x1c] sm:$0x1]
      %v1279 = vld [vmem:[%s472 + $0x20] sm:$0xf]
      %v1280 = vld [vmem:[%s472 + $0x24] sm:$0x1]
      %v1281 = vld [vmem:[%s472 + $0x28] sm:$0xf]
      %v1282 = vld [vmem:[%s472 + $0x2c] sm:$0x1]
      %v1283 = vld [vmem:[%s472 + $0x30] sm:$0xf]
      %v1284 = vld [vmem:[%s472 + $0x34] sm:$0x1]
      %v1285 = vld [vmem:[%s472 + $0x38] sm:$0xf]
      %v1286 = vld [vmem:[%s472 + $0x3c] sm:$0x1]
      %v1288 = vshrl.u32 %v1271, 16
      %v1290 = vrot.slane %v1288, 4
      %v1291 = vshll.u32 %v1271, 16
      %v1293 = vrot.slane %v1291, 5
      %v1294 = vor.u32 %v1290, %v1293
      %v1295 = vrot.slane %v1294, 4
      %v1297 = vshll.u32 %v1272, 16
      %v1299 = vrot.slane %v1297, 5
      %v1300 = vsel %vm772, %v1295, %v1299
      %v1302 = vshrl.u32 %v1273, 16
      %v1304 = vrot.slane %v1302, 4
      %v1305 = vshll.u32 %v1273, 16
      %v1307 = vrot.slane %v1305, 5
      %v1308 = vor.u32 %v1304, %v1307
      %v1309 = vrot.slane %v1308, 4
      %v1311 = vshll.u32 %v1274, 16
      %v1313 = vrot.slane %v1311, 5
      %v1314 = vsel %vm772, %v1309, %v1313
      %v1316 = vshrl.u32 %v1275, 16
      %v1318 = vrot.slane %v1316, 4
      %v1319 = vshll.u32 %v1275, 16
      %v1321 = vrot.slane %v1319, 5
      %v1322 = vor.u32 %v1318, %v1321
      %v1323 = vrot.slane %v1322, 4
      %v1325 = vshll.u32 %v1276, 16
      %v1327 = vrot.slane %v1325, 5
      %v1328 = vsel %vm772, %v1323, %v1327
      %v1330 = vshrl.u32 %v1277, 16
      %v1332 = vrot.slane %v1330, 4
      %v1333 = vshll.u32 %v1277, 16
      %v1335 = vrot.slane %v1333, 5
      %v1336 = vor.u32 %v1332, %v1335
      %v1337 = vrot.slane %v1336, 4
      %v1339 = vshll.u32 %v1278, 16
      %v1341 = vrot.slane %v1339, 5
      %v1342 = vsel %vm772, %v1337, %v1341
      %v1344 = vshrl.u32 %v1279, 16
      %v1346 = vrot.slane %v1344, 4
      %v1347 = vshll.u32 %v1279, 16
      %v1349 = vrot.slane %v1347, 5
      %v1350 = vor.u32 %v1346, %v1349
      %v1351 = vrot.slane %v1350, 4
      %v1353 = vshll.u32 %v1280, 16
      %v1355 = vrot.slane %v1353, 5
      %v1356 = vsel %vm772, %v1351, %v1355
      %v1358 = vshrl.u32 %v1281, 16
      %v1360 = vrot.slane %v1358, 4
      %v1361 = vshll.u32 %v1281, 16
      %v1363 = vrot.slane %v1361, 5
      %v1364 = vor.u32 %v1360, %v1363
      %v1365 = vrot.slane %v1364, 4
      %v1367 = vshll.u32 %v1282, 16
      %v1369 = vrot.slane %v1367, 5
      %v1370 = vsel %vm772, %v1365, %v1369
      %v1372 = vshrl.u32 %v1283, 16
      %v1374 = vrot.slane %v1372, 4
      %v1375 = vshll.u32 %v1283, 16
      %v1377 = vrot.slane %v1375, 5
      %v1378 = vor.u32 %v1374, %v1377
      %v1379 = vrot.slane %v1378, 4
      %v1381 = vshll.u32 %v1284, 16
      %v1383 = vrot.slane %v1381, 5
      %v1384 = vsel %vm772, %v1379, %v1383
      %v1386 = vshrl.u32 %v1285, 16
      %v1388 = vrot.slane %v1386, 4
      %v1389 = vshll.u32 %v1285, 16
      %v1391 = vrot.slane %v1389, 5
      %v1392 = vor.u32 %v1388, %v1391
      %v1393 = vrot.slane %v1392, 4
      %v1395 = vshll.u32 %v1286, 16
      %v1397 = vrot.slane %v1395, 5
      %v1398 = vsel %vm772, %v1393, %v1397
      %s1399 = scalar_lea.vmem %s4, 10
      %v1400 = vld [vmem:[%s1399] sm:$0x3]
      %v1401 = vunpack.c.l.b16 %v1300
      %v1402 = vunpack.c.l.b16 %v1314
      %v1403 = vunpack.c.l.b16 %v1328
      %v1404 = vunpack.c.l.b16 %v1342
      %v1405 = vunpack.c.l.b16 %v1356
      %v1406 = vunpack.c.l.b16 %v1370
      %v1407 = vunpack.c.l.b16 %v1384
      %v1408 = vunpack.c.l.b16 %v1398
      %v1409 = vpack.c.b16 %v1402, %v1401
      %v1410 = vpack.c.b16 %v1404, %v1403
      %v1411 = vpack.c.b16 %v1406, %v1405
      %v1412 = vpack.c.b16 %v1408, %v1407
      %v1414 = vsel %vm530, %v1409, 0
      %v1417 = vsel %vm530, %v1410, 0
      %v1420 = vsel %vm530, %v1411, 0
      %v1423 = vsel %vm530, %v1412, 0
      %v1426 = vsel %vm543, %v1400, 0
      %1428 = vmatprep.subr.bf16.mxu0 0
      %1429 = vmatpush1.bf16.msra.mxu0 %v1426
      %1430 = vmatprep.subr.bf16.mxu0 0
      %1431 = vmatpush1.bf16.msra.mxu0 0
      %1432 = vmatprep.subr.bf16.mxu0 0
      %1433 = vmatpush1.bf16.msra.mxu0 0
      %1434 = vmatprep.subr.bf16.mxu0 0
      %1435 = vmatpush1.bf16.msra.mxu0 0
      %1436 = vmatprep.subr.bf16.mxu0 0
      %1437 = vmatpush1.bf16.msra.mxu0 0
      %1438 = vmatprep.subr.bf16.mxu0 0
      %1439 = vmatpush1.bf16.msra.mxu0 0
      %1440 = vmatprep.subr.bf16.mxu0 0
      %1441 = vmatpush1.bf16.msra.mxu0 0
      %1442 = vmatprep.subr.bf16.mxu0 0
      %1443 = vmatpush1.bf16.msra.mxu0 0
      %1444 = vmatprep.subr.bf16.mxu0 0
      %1445 = vmatpush1.bf16.msra.mxu0 0
      %1446 = vmatprep.subr.bf16.mxu0 0
      %1447 = vmatpush1.bf16.msra.mxu0 0
      %1448 = vmatprep.subr.bf16.mxu0 0
      %1449 = vmatpush1.bf16.msra.mxu0 0
      %1450 = vmatprep.subr.bf16.mxu0 0
      %1451 = vmatpush1.bf16.msra.mxu0 0
      %1452 = vmatprep.subr.bf16.mxu0 0
      %1453 = vmatpush1.bf16.msra.mxu0 0
      %1454 = vmatprep.subr.bf16.mxu0 0
      %1455 = vmatpush1.bf16.msra.mxu0 0
      %1456 = vmatprep.subr.bf16.mxu0 0
      %1457 = vmatpush1.bf16.msra.mxu0 0
      %1458 = vmatprep.subr.bf16.mxu0 0
      %1459 = vmatpush1.bf16.msra.mxu0 0
      %1460 = vmatprep.mubr.bf16.mxu0 0
      %1461 = vmatmul.mubr.bf16.gmra.mrb[0].mxu0 %v1414
      %v1462 = vpop.f32.mrb[0].mxu0
      %v1463 = vadd.f32 0.0, %v1462
      %v1464 = vpop.f32.mrb[0].mxu0
      %v1465 = vpop.f32.mrb[0].mxu0
      %v1466 = vadd.f32 0.0, %v1465
      %v1467 = vpop.f32.mrb[0].mxu0
      %1468 = vmatprep.mubr.bf16.mxu0 0
      %1469 = vmatmul.mubr.bf16.gmra.mrb[0].mxu0 %v1417
      %v1470 = vpop.f32.mrb[0].mxu0
      %v1471 = vadd.f32 0.0, %v1470
      %v1472 = vpop.f32.mrb[0].mxu0
      %v1473 = vpop.f32.mrb[0].mxu0
      %v1474 = vadd.f32 0.0, %v1473
      %v1475 = vpop.f32.mrb[0].mxu0
      %1476 = vmatprep.mubr.bf16.mxu0 0
      %1477 = vmatmul.mubr.bf16.gmra.mrb[0].mxu0 %v1420
      %v1478 = vpop.f32.mrb[0].mxu0
      %v1479 = vadd.f32 0.0, %v1478
      %v1480 = vpop.f32.mrb[0].mxu0
      %v1481 = vpop.f32.mrb[0].mxu0
      %v1482 = vadd.f32 0.0, %v1481
      %v1483 = vpop.f32.mrb[0].mxu0
      %1484 = vmatprep.mubr.bf16.mxu0 0
      %1485 = vmatmul.mubr.bf16.gmra.mrb[0].mxu0 %v1423
      %v1486 = vpop.f32.mrb[0].mxu0
      %v1487 = vadd.f32 0.0, %v1486
      %v1488 = vpop.f32.mrb[0].mxu0
      %v1489 = vpop.f32.mrb[0].mxu0
      %v1490 = vadd.f32 0.0, %v1489
      %v1491 = vpop.f32.mrb[0].mxu0
      %1492 = vdwg.mxu0
      %v1493 = vld [vmem:[#allocation2] sm:$0xff]
      %v1494 = vld [vmem:[#allocation2 + $0x8] sm:$0xff]
      %v1495 = vld [vmem:[#allocation2 + $0x10] sm:$0xff]
      %v1496 = vld [vmem:[#allocation2 + $0x18] sm:$0xff]
      %v1497 = vld [vmem:[#allocation2 + $0x20] sm:$0xff]
      %v1498 = vld [vmem:[#allocation2 + $0x28] sm:$0xff]
      %v1499 = vld [vmem:[#allocation2 + $0x30] sm:$0xff]
      %v1500 = vld [vmem:[#allocation2 + $0x38] sm:$0xff]
      %v1501 = vadd.f32 %v1493, %v1463
      %v1502 = vadd.f32 %v1494, %v1466
      %v1503 = vadd.f32 %v1495, %v1471
      %v1504 = vadd.f32 %v1496, %v1474
      %v1505 = vadd.f32 %v1497, %v1479
      %v1506 = vadd.f32 %v1498, %v1482
      %v1507 = vadd.f32 %v1499, %v1487
      %v1508 = vadd.f32 %v1500, %v1490
      %1509 = vst [vmem:[#allocation2] sm:$0xff] %v1501
      %1510 = vst [vmem:[#allocation2 + $0x8] sm:$0xff] %v1502
      %1511 = vst [vmem:[#allocation2 + $0x10] sm:$0xff] %v1503
      %1512 = vst [vmem:[#allocation2 + $0x18] sm:$0xff] %v1504
      %1513 = vst [vmem:[#allocation2 + $0x20] sm:$0xff] %v1505
      %1514 = vst [vmem:[#allocation2 + $0x28] sm:$0xff] %v1506
      %1515 = vst [vmem:[#allocation2 + $0x30] sm:$0xff] %v1507
      %1516 = vst [vmem:[#allocation2 + $0x38] sm:$0xff] %v1508
      %s1517 = scalar_lea.vmem %s462, 8
      %v1518 = vld [vmem:[%s1517] sm:$0xf]
      %v1519 = vld [vmem:[%s1517 + $0x8] sm:$0xf]
      %v1520 = vld [vmem:[%s1517 + $0x10] sm:$0xf]
      %v1521 = vld [vmem:[%s1517 + $0x18] sm:$0xf]
      %v1522 = vld [vmem:[%s1517 + $0x20] sm:$0xf]
      %v1523 = vld [vmem:[%s1517 + $0x28] sm:$0xf]
      %v1524 = vld [vmem:[%s1517 + $0x30] sm:$0xf]
      %v1525 = vld [vmem:[%s1517 + $0x38] sm:$0xf]
      %s1526 = scalar_lea.vmem %s4, 12
      %v1527 = vld [vmem:[%s1526] sm:$0x3]
      %v1536 = vunpack.c.l.b16 %v1518
      %v1537 = vunpack.c.l.b16 %v1519
      %v1538 = vunpack.c.l.b16 %v1520
      %v1539 = vunpack.c.l.b16 %v1521
      %v1540 = vunpack.c.l.b16 %v1522
      %v1541 = vunpack.c.l.b16 %v1523
      %v1542 = vunpack.c.l.b16 %v1524
      %v1543 = vunpack.c.l.b16 %v1525
      %v1544 = vpack.c.b16 %v1537, %v1536
      %v1545 = vpack.c.b16 %v1539, %v1538
      %v1546 = vpack.c.b16 %v1541, %v1540
      %v1547 = vpack.c.b16 %v1543, %v1542
      %v1549 = vsel %vm530, %v1544, 0
      %v1552 = vsel %vm530, %v1545, 0
      %v1555 = vsel %vm530, %v1546, 0
      %v1558 = vsel %vm530, %v1547, 0
      %v1561 = vsel %vm543, %v1527, 0
      %1563 = vmatprep.subr.bf16.mxu0 0
      %1564 = vmatpush1.bf16.msra.mxu0 %v1561
      %1565 = vmatprep.subr.bf16.mxu0 0
      %1566 = vmatpush1.bf16.msra.mxu0 0
      %1567 = vmatprep.subr.bf16.mxu0 0
      %1568 = vmatpush1.bf16.msra.mxu0 0
      %1569 = vmatprep.subr.bf16.mxu0 0
      %1570 = vmatpush1.bf16.msra.mxu0 0
      %1571 = vmatprep.subr.bf16.mxu0 0
      %1572 = vmatpush1.bf16.msra.mxu0 0
      %1573 = vmatprep.subr.bf16.mxu0 0
      %1574 = vmatpush1.bf16.msra.mxu0 0
      %1575 = vmatprep.subr.bf16.mxu0 0
      %1576 = vmatpush1.bf16.msra.mxu0 0
      %1577 = vmatprep.subr.bf16.mxu0 0
      %1578 = vmatpush1.bf16.msra.mxu0 0
      %1579 = vmatprep.subr.bf16.mxu0 0
      %1580 = vmatpush1.bf16.msra.mxu0 0
      %1581 = vmatprep.subr.bf16.mxu0 0
      %1582 = vmatpush1.bf16.msra.mxu0 0
      %1583 = vmatprep.subr.bf16.mxu0 0
      %1584 = vmatpush1.bf16.msra.mxu0 0
      %1585 = vmatprep.subr.bf16.mxu0 0
      %1586 = vmatpush1.bf16.msra.mxu0 0
      %1587 = vmatprep.subr.bf16.mxu0 0
      %1588 = vmatpush1.bf16.msra.mxu0 0
      %1589 = vmatprep.subr.bf16.mxu0 0
      %1590 = vmatpush1.bf16.msra.mxu0 0
      %1591 = vmatprep.subr.bf16.mxu0 0
      %1592 = vmatpush1.bf16.msra.mxu0 0
      %1593 = vmatprep.subr.bf16.mxu0 0
      %1594 = vmatpush1.bf16.msra.mxu0 0
      %1595 = vmatprep.mubr.bf16.mxu0 0
      %1596 = vmatmul.mubr.bf16.gmra.mrb[0].mxu0 %v1549
      %v1597 = vpop.f32.mrb[0].mxu0
      %v1598 = vadd.f32 0.0, %v1597
      %v1599 = vpop.f32.mrb[0].mxu0
      %v1600 = vpop.f32.mrb[0].mxu0
      %v1601 = vadd.f32 0.0, %v1600
      %v1602 = vpop.f32.mrb[0].mxu0
      %1603 = vmatprep.mubr.bf16.mxu0 0
      %1604 = vmatmul.mubr.bf16.gmra.mrb[0].mxu0 %v1552
      %v1605 = vpop.f32.mrb[0].mxu0
      %v1606 = vadd.f32 0.0, %v1605
      %v1607 = vpop.f32.mrb[0].mxu0
      %v1608 = vpop.f32.mrb[0].mxu0
      %v1609 = vadd.f32 0.0, %v1608
      %v1610 = vpop.f32.mrb[0].mxu0
      %1611 = vmatprep.mubr.bf16.mxu0 0
      %1612 = vmatmul.mubr.bf16.gmra.mrb[0].mxu0 %v1555
      %v1613 = vpop.f32.mrb[0].mxu0
      %v1614 = vadd.f32 0.0, %v1613
      %v1615 = vpop.f32.mrb[0].mxu0
      %v1616 = vpop.f32.mrb[0].mxu0
      %v1617 = vadd.f32 0.0, %v1616
      %v1618 = vpop.f32.mrb[0].mxu0
      %1619 = vmatprep.mubr.bf16.mxu0 0
      %1620 = vmatmul.mubr.bf16.gmra.mrb[0].mxu0 %v1558
      %v1621 = vpop.f32.mrb[0].mxu0
      %v1622 = vadd.f32 0.0, %v1621
      %v1623 = vpop.f32.mrb[0].mxu0
      %v1624 = vpop.f32.mrb[0].mxu0
      %v1625 = vadd.f32 0.0, %v1624
      %v1626 = vpop.f32.mrb[0].mxu0
      %1627 = vdwg.mxu0
      %v1628 = vld [vmem:[#allocation2] sm:$0xff]
      %v1629 = vld [vmem:[#allocation2 + $0x8] sm:$0xff]
      %v1630 = vld [vmem:[#allocation2 + $0x10] sm:$0xff]
      %v1631 = vld [vmem:[#allocation2 + $0x18] sm:$0xff]
      %v1632 = vld [vmem:[#allocation2 + $0x20] sm:$0xff]
      %v1633 = vld [vmem:[#allocation2 + $0x28] sm:$0xff]
      %v1634 = vld [vmem:[#allocation2 + $0x30] sm:$0xff]
      %v1635 = vld [vmem:[#allocation2 + $0x38] sm:$0xff]
      %v1636 = vadd.f32 %v1628, %v1598
      %v1637 = vadd.f32 %v1629, %v1601
      %v1638 = vadd.f32 %v1630, %v1606
      %v1639 = vadd.f32 %v1631, %v1609
      %v1640 = vadd.f32 %v1632, %v1614
      %v1641 = vadd.f32 %v1633, %v1617
      %v1642 = vadd.f32 %v1634, %v1622
      %v1643 = vadd.f32 %v1635, %v1625
      %1644 = vst [vmem:[#allocation2] sm:$0xff] %v1636
      %1645 = vst [vmem:[#allocation2 + $0x8] sm:$0xff] %v1637
      %1646 = vst [vmem:[#allocation2 + $0x10] sm:$0xff] %v1638
      %1647 = vst [vmem:[#allocation2 + $0x18] sm:$0xff] %v1639
      %1648 = vst [vmem:[#allocation2 + $0x20] sm:$0xff] %v1640
      %1649 = vst [vmem:[#allocation2 + $0x28] sm:$0xff] %v1641
      %1650 = vst [vmem:[#allocation2 + $0x30] sm:$0xff] %v1642
      %1651 = vst [vmem:[#allocation2 + $0x38] sm:$0xff] %v1643
      %s1652 = scalar_lea.vmem %s467, 8
      %v1653 = vld [vmem:[%s1652] sm:$0xf]
      %v1654 = vld [vmem:[%s1652 + $0x8] sm:$0xf]
      %v1655 = vld [vmem:[%s1652 + $0x10] sm:$0xf]
      %v1656 = vld [vmem:[%s1652 + $0x18] sm:$0xf]
      %v1657 = vld [vmem:[%s1652 + $0x20] sm:$0xf]
      %v1658 = vld [vmem:[%s1652 + $0x28] sm:$0xf]
      %v1659 = vld [vmem:[%s1652 + $0x30] sm:$0xf]
      %v1660 = vld [vmem:[%s1652 + $0x38] sm:$0xf]
      %s1661 = scalar_lea.vmem %s4, 14
      %v1662 = vld [vmem:[%s1661] sm:$0x3]
      %v1671 = vunpack.c.l.b16 %v1653
      %v1672 = vunpack.c.l.b16 %v1654
      %v1673 = vunpack.c.l.b16 %v1655
      %v1674 = vunpack.c.l.b16 %v1656
      %v1675 = vunpack.c.l.b16 %v1657
      %v1676 = vunpack.c.l.b16 %v1658
      %v1677 = vunpack.c.l.b16 %v1659
      %v1678 = vunpack.c.l.b16 %v1660
      %v1679 = vpack.c.b16 %v1672, %v1671
      %v1680 = vpack.c.b16 %v1674, %v1673
      %v1681 = vpack.c.b16 %v1676, %v1675
      %v1682 = vpack.c.b16 %v1678, %v1677
      %v1684 = vsel %vm530, %v1679, 0
      %v1687 = vsel %vm530, %v1680, 0
      %v1690 = vsel %vm530, %v1681, 0
      %v1693 = vsel %vm530, %v1682, 0
      %v1696 = vsel %vm543, %v1662, 0
      %1698 = vmatprep.subr.bf16.mxu0 0
      %1699 = vmatpush1.bf16.msra.mxu0 %v1696
      %1700 = vmatprep.subr.bf16.mxu0 0
      %1701 = vmatpush1.bf16.msra.mxu0 0
      %1702 = vmatprep.subr.bf16.mxu0 0
      %1703 = vmatpush1.bf16.msra.mxu0 0
      %1704 = vmatprep.subr.bf16.mxu0 0
      %1705 = vmatpush1.bf16.msra.mxu0 0
      %1706 = vmatprep.subr.bf16.mxu0 0
      %1707 = vmatpush1.bf16.msra.mxu0 0
      %1708 = vmatprep.subr.bf16.mxu0 0
      %1709 = vmatpush1.bf16.msra.mxu0 0
      %1710 = vmatprep.subr.bf16.mxu0 0
      %1711 = vmatpush1.bf16.msra.mxu0 0
      %1712 = vmatprep.subr.bf16.mxu0 0
      %1713 = vmatpush1.bf16.msra.mxu0 0
      %1714 = vmatprep.subr.bf16.mxu0 0
      %1715 = vmatpush1.bf16.msra.mxu0 0
      %1716 = vmatprep.subr.bf16.mxu0 0
      %1717 = vmatpush1.bf16.msra.mxu0 0
      %1718 = vmatprep.subr.bf16.mxu0 0
      %1719 = vmatpush1.bf16.msra.mxu0 0
      %1720 = vmatprep.subr.bf16.mxu0 0
      %1721 = vmatpush1.bf16.msra.mxu0 0
      %1722 = vmatprep.subr.bf16.mxu0 0
      %1723 = vmatpush1.bf16.msra.mxu0 0
      %1724 = vmatprep.subr.bf16.mxu0 0
      %1725 = vmatpush1.bf16.msra.mxu0 0
      %1726 = vmatprep.subr.bf16.mxu0 0
      %1727 = vmatpush1.bf16.msra.mxu0 0
      %1728 = vmatprep.subr.bf16.mxu0 0
      %1729 = vmatpush1.bf16.msra.mxu0 0
      %1730 = vmatprep.mubr.bf16.mxu0 0
      %1731 = vmatmul.mubr.bf16.gmra.mrb[0].mxu0 %v1684
      %v1732 = vpop.f32.mrb[0].mxu0
      %v1733 = vadd.f32 0.0, %v1732
      %v1734 = vpop.f32.mrb[0].mxu0
      %v1735 = vpop.f32.mrb[0].mxu0
      %v1736 = vadd.f32 0.0, %v1735
      %v1737 = vpop.f32.mrb[0].mxu0
      %1738 = vmatprep.mubr.bf16.mxu0 0
      %1739 = vmatmul.mubr.bf16.gmra.mrb[0].mxu0 %v1687
      %v1740 = vpop.f32.mrb[0].mxu0
      %v1741 = vadd.f32 0.0, %v1740
      %v1742 = vpop.f32.mrb[0].mxu0
      %v1743 = vpop.f32.mrb[0].mxu0
      %v1744 = vadd.f32 0.0, %v1743
      %v1745 = vpop.f32.mrb[0].mxu0
      %1746 = vmatprep.mubr.bf16.mxu0 0
      %1747 = vmatmul.mubr.bf16.gmra.mrb[0].mxu0 %v1690
      %v1748 = vpop.f32.mrb[0].mxu0
      %v1749 = vadd.f32 0.0, %v1748
      %v1750 = vpop.f32.mrb[0].mxu0
      %v1751 = vpop.f32.mrb[0].mxu0
      %v1752 = vadd.f32 0.0, %v1751
      %v1753 = vpop.f32.mrb[0].mxu0
      %1754 = vmatprep.mubr.bf16.mxu0 0
      %1755 = vmatmul.mubr.bf16.gmra.mrb[0].mxu0 %v1693
      %v1756 = vpop.f32.mrb[0].mxu0
      %v1757 = vadd.f32 0.0, %v1756
      %v1758 = vpop.f32.mrb[0].mxu0
      %v1759 = vpop.f32.mrb[0].mxu0
      %v1760 = vadd.f32 0.0, %v1759
      %v1761 = vpop.f32.mrb[0].mxu0
      %1762 = vdwg.mxu0
      %v1763 = vld [vmem:[#allocation2] sm:$0xff]
      %v1764 = vld [vmem:[#allocation2 + $0x8] sm:$0xff]
      %v1765 = vld [vmem:[#allocation2 + $0x10] sm:$0xff]
      %v1766 = vld [vmem:[#allocation2 + $0x18] sm:$0xff]
      %v1767 = vld [vmem:[#allocation2 + $0x20] sm:$0xff]
      %v1768 = vld [vmem:[#allocation2 + $0x28] sm:$0xff]
      %v1769 = vld [vmem:[#allocation2 + $0x30] sm:$0xff]
      %v1770 = vld [vmem:[#allocation2 + $0x38] sm:$0xff]
      %v1771 = vadd.f32 %v1763, %v1733
      %v1772 = vadd.f32 %v1764, %v1736
      %v1773 = vadd.f32 %v1765, %v1741
      %v1774 = vadd.f32 %v1766, %v1744
      %v1775 = vadd.f32 %v1767, %v1749
      %v1776 = vadd.f32 %v1768, %v1752
      %v1777 = vadd.f32 %v1769, %v1757
      %v1778 = vadd.f32 %v1770, %v1760
      %1779 = vst [vmem:[#allocation2] sm:$0xff] %v1771
      %1780 = vst [vmem:[#allocation2 + $0x8] sm:$0xff] %v1772
      %1781 = vst [vmem:[#allocation2 + $0x10] sm:$0xff] %v1773
      %1782 = vst [vmem:[#allocation2 + $0x18] sm:$0xff] %v1774
      %1783 = vst [vmem:[#allocation2 + $0x20] sm:$0xff] %v1775
      %1784 = vst [vmem:[#allocation2 + $0x28] sm:$0xff] %v1776
      %1785 = vst [vmem:[#allocation2 + $0x30] sm:$0xff] %v1777
      %1786 = vst [vmem:[#allocation2 + $0x38] sm:$0xff] %v1778
      %v1787 = vld [vmem:[%s1517] sm:$0xf]
      %v1788 = vld [vmem:[%s1517 + $0x4] sm:$0x1]
      %v1789 = vld [vmem:[%s1517 + $0x8] sm:$0xf]
      %v1790 = vld [vmem:[%s1517 + $0xc] sm:$0x1]
      %v1791 = vld [vmem:[%s1517 + $0x10] sm:$0xf]
      %v1792 = vld [vmem:[%s1517 + $0x14] sm:$0x1]
      %v1793 = vld [vmem:[%s1517 + $0x18] sm:$0xf]
      %v1794 = vld [vmem:[%s1517 + $0x1c] sm:$0x1]
      %v1795 = vld [vmem:[%s1517 + $0x20] sm:$0xf]
      %v1796 = vld [vmem:[%s1517 + $0x24] sm:$0x1]
      %v1797 = vld [vmem:[%s1517 + $0x28] sm:$0xf]
      %v1798 = vld [vmem:[%s1517 + $0x2c] sm:$0x1]
      %v1799 = vld [vmem:[%s1517 + $0x30] sm:$0xf]
      %v1800 = vld [vmem:[%s1517 + $0x34] sm:$0x1]
      %v1801 = vld [vmem:[%s1517 + $0x38] sm:$0xf]
      %v1802 = vld [vmem:[%s1517 + $0x3c] sm:$0x1]
      %v1804 = vshrl.u32 %v1787, 16
      %v1806 = vrot.slane %v1804, 4
      %v1807 = vshll.u32 %v1787, 16
      %v1809 = vrot.slane %v1807, 5
      %v1810 = vor.u32 %v1806, %v1809
      %v1811 = vrot.slane %v1810, 4
      %v1813 = vshll.u32 %v1788, 16
      %v1815 = vrot.slane %v1813, 5
      %v1816 = vsel %vm772, %v1811, %v1815
      %v1818 = vshrl.u32 %v1789, 16
      %v1820 = vrot.slane %v1818, 4
      %v1821 = vshll.u32 %v1789, 16
      %v1823 = vrot.slane %v1821, 5
      %v1824 = vor.u32 %v1820, %v1823
      %v1825 = vrot.slane %v1824, 4
      %v1827 = vshll.u32 %v1790, 16
      %v1829 = vrot.slane %v1827, 5
      %v1830 = vsel %vm772, %v1825, %v1829
      %v1832 = vshrl.u32 %v1791, 16
      %v1834 = vrot.slane %v1832, 4
      %v1835 = vshll.u32 %v1791, 16
      %v1837 = vrot.slane %v1835, 5
      %v1838 = vor.u32 %v1834, %v1837
      %v1839 = vrot.slane %v1838, 4
      %v1841 = vshll.u32 %v1792, 16
      %v1843 = vrot.slane %v1841, 5
      %v1844 = vsel %vm772, %v1839, %v1843
      %v1846 = vshrl.u32 %v1793, 16
      %v1848 = vrot.slane %v1846, 4
      %v1849 = vshll.u32 %v1793, 16
      %v1851 = vrot.slane %v1849, 5
      %v1852 = vor.u32 %v1848, %v1851
      %v1853 = vrot.slane %v1852, 4
      %v1855 = vshll.u32 %v1794, 16
      %v1857 = vrot.slane %v1855, 5
      %v1858 = vsel %vm772, %v1853, %v1857
      %v1860 = vshrl.u32 %v1795, 16
      %v1862 = vrot.slane %v1860, 4
      %v1863 = vshll.u32 %v1795, 16
      %v1865 = vrot.slane %v1863, 5
      %v1866 = vor.u32 %v1862, %v1865
      %v1867 = vrot.slane %v1866, 4
      %v1869 = vshll.u32 %v1796, 16
      %v1871 = vrot.slane %v1869, 5
      %v1872 = vsel %vm772, %v1867, %v1871
      %v1874 = vshrl.u32 %v1797, 16
      %v1876 = vrot.slane %v1874, 4
      %v1877 = vshll.u32 %v1797, 16
      %v1879 = vrot.slane %v1877, 5
      %v1880 = vor.u32 %v1876, %v1879
      %v1881 = vrot.slane %v1880, 4
      %v1883 = vshll.u32 %v1798, 16
      %v1885 = vrot.slane %v1883, 5
      %v1886 = vsel %vm772, %v1881, %v1885
      %v1888 = vshrl.u32 %v1799, 16
      %v1890 = vrot.slane %v1888, 4
      %v1891 = vshll.u32 %v1799, 16
      %v1893 = vrot.slane %v1891, 5
      %v1894 = vor.u32 %v1890, %v1893
      %v1895 = vrot.slane %v1894, 4
      %v1897 = vshll.u32 %v1800, 16
      %v1899 = vrot.slane %v1897, 5
      %v1900 = vsel %vm772, %v1895, %v1899
      %v1902 = vshrl.u32 %v1801, 16
      %v1904 = vrot.slane %v1902, 4
      %v1905 = vshll.u32 %v1801, 16
      %v1907 = vrot.slane %v1905, 5
      %v1908 = vor.u32 %v1904, %v1907
      %v1909 = vrot.slane %v1908, 4
      %v1911 = vshll.u32 %v1802, 16
      %v1913 = vrot.slane %v1911, 5
      %v1914 = vsel %vm772, %v1909, %v1913
      %s1915 = scalar_lea.vmem %s4, 16
      %v1916 = vld [vmem:[%s1915] sm:$0x3]
      %v1917 = vunpack.c.l.b16 %v1816
      %v1918 = vunpack.c.l.b16 %v1830
      %v1919 = vunpack.c.l.b16 %v1844
      %v1920 = vunpack.c.l.b16 %v1858
      %v1921 = vunpack.c.l.b16 %v1872
      %v1922 = vunpack.c.l.b16 %v1886
      %v1923 = vunpack.c.l.b16 %v1900
      %v1924 = vunpack.c.l.b16 %v1914
      %v1925 = vpack.c.b16 %v1918, %v1917
      %v1926 = vpack.c.b16 %v1920, %v1919
      %v1927 = vpack.c.b16 %v1922, %v1921
      %v1928 = vpack.c.b16 %v1924, %v1923
      %v1930 = vsel %vm530, %v1925, 0
      %v1933 = vsel %vm530, %v1926, 0
      %v1936 = vsel %vm530, %v1927, 0
      %v1939 = vsel %vm530, %v1928, 0
      %v1942 = vsel %vm543, %v1916, 0
      %1944 = vmatprep.subr.bf16.mxu0 0
      %1945 = vmatpush1.bf16.msra.mxu0 %v1942
      %1946 = vmatprep.subr.bf16.mxu0 0
      %1947 = vmatpush1.bf16.msra.mxu0 0
      %1948 = vmatprep.subr.bf16.mxu0 0
      %1949 = vmatpush1.bf16.msra.mxu0 0
      %1950 = vmatprep.subr.bf16.mxu0 0
      %1951 = vmatpush1.bf16.msra.mxu0 0
      %1952 = vmatprep.subr.bf16.mxu0 0
      %1953 = vmatpush1.bf16.msra.mxu0 0
      %1954 = vmatprep.subr.bf16.mxu0 0
      %1955 = vmatpush1.bf16.msra.mxu0 0
      %1956 = vmatprep.subr.bf16.mxu0 0
      %1957 = vmatpush1.bf16.msra.mxu0 0
      %1958 = vmatprep.subr.bf16.mxu0 0
      %1959 = vmatpush1.bf16.msra.mxu0 0
      %1960 = vmatprep.subr.bf16.mxu0 0
      %1961 = vmatpush1.bf16.msra.mxu0 0
      %1962 = vmatprep.subr.bf16.mxu0 0
      %1963 = vmatpush1.bf16.msra.mxu0 0
      %1964 = vmatprep.subr.bf16.mxu0 0
      %1965 = vmatpush1.bf16.msra.mxu0 0
      %1966 = vmatprep.subr.bf16.mxu0 0
      %1967 = vmatpush1.bf16.msra.mxu0 0
      %1968 = vmatprep.subr.bf16.mxu0 0
      %1969 = vmatpush1.bf16.msra.mxu0 0
      %1970 = vmatprep.subr.bf16.mxu0 0
      %1971 = vmatpush1.bf16.msra.mxu0 0
      %1972 = vmatprep.subr.bf16.mxu0 0
      %1973 = vmatpush1.bf16.msra.mxu0 0
      %1974 = vmatprep.subr.bf16.mxu0 0
      %1975 = vmatpush1.bf16.msra.mxu0 0
      %1976 = vmatprep.mubr.bf16.mxu0 0
      %1977 = vmatmul.mubr.bf16.gmra.mrb[0].mxu0 %v1930
      %v1978 = vpop.f32.mrb[0].mxu0
      %v1979 = vadd.f32 0.0, %v1978
      %v1980 = vpop.f32.mrb[0].mxu0
      %v1981 = vpop.f32.mrb[0].mxu0
      %v1982 = vadd.f32 0.0, %v1981
      %v1983 = vpop.f32.mrb[0].mxu0
      %1984 = vmatprep.mubr.bf16.mxu0 0
      %1985 = vmatmul.mubr.bf16.gmra.mrb[0].mxu0 %v1933
      %v1986 = vpop.f32.mrb[0].mxu0
      %v1987 = vadd.f32 0.0, %v1986
      %v1988 = vpop.f32.mrb[0].mxu0
      %v1989 = vpop.f32.mrb[0].mxu0
      %v1990 = vadd.f32 0.0, %v1989
      %v1991 = vpop.f32.mrb[0].mxu0
      %1992 = vmatprep.mubr.bf16.mxu0 0
      %1993 = vmatmul.mubr.bf16.gmra.mrb[0].mxu0 %v1936
      %v1994 = vpop.f32.mrb[0].mxu0
      %v1995 = vadd.f32 0.0, %v1994
      %v1996 = vpop.f32.mrb[0].mxu0
      %v1997 = vpop.f32.mrb[0].mxu0
      %v1998 = vadd.f32 0.0, %v1997
      %v1999 = vpop.f32.mrb[0].mxu0
      %2000 = vmatprep.mubr.bf16.mxu0 0
      %2001 = vmatmul.mubr.bf16.gmra.mrb[0].mxu0 %v1939
      %v2002 = vpop.f32.mrb[0].mxu0
      %v2003 = vadd.f32 0.0, %v2002
      %v2004 = vpop.f32.mrb[0].mxu0
      %v2005 = vpop.f32.mrb[0].mxu0
      %v2006 = vadd.f32 0.0, %v2005
      %v2007 = vpop.f32.mrb[0].mxu0
      %2008 = vdwg.mxu0
      %v2009 = vld [vmem:[#allocation2] sm:$0xff]
      %v2010 = vld [vmem:[#allocation2 + $0x8] sm:$0xff]
      %v2011 = vld [vmem:[#allocation2 + $0x10] sm:$0xff]
      %v2012 = vld [vmem:[#allocation2 + $0x18] sm:$0xff]
      %v2013 = vld [vmem:[#allocation2 + $0x20] sm:$0xff]
      %v2014 = vld [vmem:[#allocation2 + $0x28] sm:$0xff]
      %v2015 = vld [vmem:[#allocation2 + $0x30] sm:$0xff]
      %v2016 = vld [vmem:[#allocation2 + $0x38] sm:$0xff]
      %v2017 = vadd.f32 %v2009, %v1979
      %v2018 = vadd.f32 %v2010, %v1982
      %v2019 = vadd.f32 %v2011, %v1987
      %v2020 = vadd.f32 %v2012, %v1990
      %v2021 = vadd.f32 %v2013, %v1995
      %v2022 = vadd.f32 %v2014, %v1998
      %v2023 = vadd.f32 %v2015, %v2003
      %v2024 = vadd.f32 %v2016, %v2006
      %2025 = vst [vmem:[#allocation2] sm:$0xff] %v2017
      %2026 = vst [vmem:[#allocation2 + $0x8] sm:$0xff] %v2018
      %2027 = vst [vmem:[#allocation2 + $0x10] sm:$0xff] %v2019
      %2028 = vst [vmem:[#allocation2 + $0x18] sm:$0xff] %v2020
      %2029 = vst [vmem:[#allocation2 + $0x20] sm:$0xff] %v2021
      %2030 = vst [vmem:[#allocation2 + $0x28] sm:$0xff] %v2022
      %2031 = vst [vmem:[#allocation2 + $0x30] sm:$0xff] %v2023
      %2032 = vst [vmem:[#allocation2 + $0x38] sm:$0xff] %v2024
      %v2033 = vld [vmem:[#allocation2] sm:$0xff]
      %v2034 = vld [vmem:[#allocation2 + $0x8] sm:$0xff]
      %v2035 = vld [vmem:[#allocation2 + $0x10] sm:$0xff]
      %v2036 = vld [vmem:[#allocation2 + $0x18] sm:$0xff]
      %v2037 = vld [vmem:[#allocation2 + $0x20] sm:$0xff]
      %v2038 = vld [vmem:[#allocation2 + $0x28] sm:$0xff]
      %v2039 = vld [vmem:[#allocation2 + $0x30] sm:$0xff]
      %v2040 = vld [vmem:[#allocation2 + $0x38] sm:$0xff]
      %v2041 = vpack.c.bf16 %v2033, %v2033
      %v2042 = vpack.c.bf16 %v2034, %v2034
      %v2043 = vpack.c.bf16 %v2035, %v2035
      %v2044 = vpack.c.bf16 %v2036, %v2036
      %v2045 = vpack.c.bf16 %v2037, %v2037
      %v2046 = vpack.c.bf16 %v2038, %v2038
      %v2047 = vpack.c.bf16 %v2039, %v2039
      %v2048 = vpack.c.bf16 %v2040, %v2040
      %2049 = vst [vmem:[%s487] sm:$0xf] %v2041
      %2050 = vst [vmem:[%s487 + $0x4] sm:$0xf] %v2042
      %2051 = vst [vmem:[%s487 + $0x8] sm:$0xf] %v2043
      %2052 = vst [vmem:[%s487 + $0xc] sm:$0xf] %v2044
      %2053 = vst [vmem:[%s487 + $0x10] sm:$0xf] %v2045
      %2054 = vst [vmem:[%s487 + $0x14] sm:$0xf] %v2046
      %2055 = vst [vmem:[%s487 + $0x18] sm:$0xf] %v2047
      %2056 = vst [vmem:[%s487 + $0x1c] sm:$0xf] %v2048
      %v2057 = vadd.f32 %v2033, %v2034
      %v2058 = vadd.f32 %v2057, %v2035
      %v2059 = vadd.f32 %v2058, %v2036
      %v2060 = vadd.f32 %v2059, %v2037
      %v2061 = vadd.f32 %v2060, %v2038
      %v2062 = vadd.f32 %v2061, %v2039
      %v2063 = vadd.f32 %v2062, %v2040
      %v2064 = vrot.slane %v2063, 4
      %v2065 = vadd.f32 %v2063, %v2064
      %v2066 = vrot.slane %v2065, 2
      %v2067 = vadd.f32 %v2065, %v2066
      %v2068 = vrot.slane %v2067, 1
      %v2069 = vadd.f32 %v2067, %v2068
      %2070 = vst [vmem:[%s490] sm:$0x1] %v2069
      %v2071 = vmul.f32 %v2033, %v2033
      %v2072 = vmul.f32 %v2034, %v2034
      %v2073 = vmul.f32 %v2035, %v2035
      %v2074 = vmul.f32 %v2036, %v2036
      %v2075 = vmul.f32 %v2037, %v2037
      %v2076 = vmul.f32 %v2038, %v2038
      %v2077 = vmul.f32 %v2039, %v2039
      %v2078 = vmul.f32 %v2040, %v2040
      %v2079 = vadd.f32 %v2071, %v2072
      %v2080 = vadd.f32 %v2079, %v2073
      %v2081 = vadd.f32 %v2080, %v2074
      %v2082 = vadd.f32 %v2081, %v2075
      %v2083 = vadd.f32 %v2082, %v2076
      %v2084 = vadd.f32 %v2083, %v2077
      %v2085 = vadd.f32 %v2084, %v2078
      %v2086 = vrot.slane %v2085, 4
      %v2087 = vadd.f32 %v2085, %v2086
      %v2088 = vrot.slane %v2087, 2
      %v2089 = vadd.f32 %v2087, %v2088
      %v2090 = vrot.slane %v2089, 1
      %v2091 = vadd.f32 %v2089, %v2090
      %2092 = vst [vmem:[%s493] sm:$0x1] %v2091
      %v2093 = vld [vmem:[%s482] sm:$0xf]
      %v2094 = vld [vmem:[%s482 + $0x4] sm:$0xf]
      %v2095 = vld [vmem:[%s482 + $0x8] sm:$0xf]
      %v2096 = vld [vmem:[%s482 + $0xc] sm:$0xf]
      %v2097 = vld [vmem:[%s482 + $0x10] sm:$0xf]
      %v2098 = vld [vmem:[%s482 + $0x14] sm:$0xf]
      %v2099 = vld [vmem:[%s482 + $0x18] sm:$0xf]
      %v2100 = vld [vmem:[%s482 + $0x1c] sm:$0xf]
      %v2101 = vld [vmem:[%s6] sm:$0x3]
      %v2110 = vunpack.c.l.b16 %v2093
      %v2111 = vunpack.c.l.b16 %v2094
      %v2112 = vunpack.c.l.b16 %v2095
      %v2113 = vunpack.c.l.b16 %v2096
      %v2114 = vunpack.c.l.b16 %v2097
      %v2115 = vunpack.c.l.b16 %v2098
      %v2116 = vunpack.c.l.b16 %v2099
      %v2117 = vunpack.c.l.b16 %v2100
      %v2118 = vpack.c.b16 %v2111, %v2110
      %v2119 = vpack.c.b16 %v2113, %v2112
      %v2120 = vpack.c.b16 %v2115, %v2114
      %v2121 = vpack.c.b16 %v2117, %v2116
      %v2123 = vsel %vm530, %v2118, 0
      %v2126 = vsel %vm530, %v2119, 0
      %v2129 = vsel %vm530, %v2120, 0
      %v2132 = vsel %vm530, %v2121, 0
      %v2135 = vsel %vm543, %v2101, 0
      %2137 = vmatprep.subr.bf16.mxu0 0
      %2138 = vmatpush1.bf16.msra.mxu0 %v2135
      %2139 = vmatprep.subr.bf16.mxu0 0
      %2140 = vmatpush1.bf16.msra.mxu0 0
      %2141 = vmatprep.subr.bf16.mxu0 0
      %2142 = vmatpush1.bf16.msra.mxu0 0
      %2143 = vmatprep.subr.bf16.mxu0 0
      %2144 = vmatpush1.bf16.msra.mxu0 0
      %2145 = vmatprep.subr.bf16.mxu0 0
      %2146 = vmatpush1.bf16.msra.mxu0 0
      %2147 = vmatprep.subr.bf16.mxu0 0
      %2148 = vmatpush1.bf16.msra.mxu0 0
      %2149 = vmatprep.subr.bf16.mxu0 0
      %2150 = vmatpush1.bf16.msra.mxu0 0
      %2151 = vmatprep.subr.bf16.mxu0 0
      %2152 = vmatpush1.bf16.msra.mxu0 0
      %2153 = vmatprep.subr.bf16.mxu0 0
      %2154 = vmatpush1.bf16.msra.mxu0 0
      %2155 = vmatprep.subr.bf16.mxu0 0
      %2156 = vmatpush1.bf16.msra.mxu0 0
      %2157 = vmatprep.subr.bf16.mxu0 0
      %2158 = vmatpush1.bf16.msra.mxu0 0
      %2159 = vmatprep.subr.bf16.mxu0 0
      %2160 = vmatpush1.bf16.msra.mxu0 0
      %2161 = vmatprep.subr.bf16.mxu0 0
      %2162 = vmatpush1.bf16.msra.mxu0 0
      %2163 = vmatprep.subr.bf16.mxu0 0
      %2164 = vmatpush1.bf16.msra.mxu0 0
      %2165 = vmatprep.subr.bf16.mxu0 0
      %2166 = vmatpush1.bf16.msra.mxu0 0
      %2167 = vmatprep.subr.bf16.mxu0 0
      %2168 = vmatpush1.bf16.msra.mxu0 0
      %2169 = vmatprep.mubr.bf16.mxu0 0
      %2170 = vmatmul.mubr.bf16.gmra.mrb[0].mxu0 %v2123
      %v2171 = vpop.f32.mrb[0].mxu0
      %v2172 = vadd.f32 0.0, %v2171
      %v2173 = vpop.f32.mrb[0].mxu0
      %v2174 = vpop.f32.mrb[0].mxu0
      %v2175 = vadd.f32 0.0, %v2174
      %v2176 = vpop.f32.mrb[0].mxu0
      %2177 = vmatprep.mubr.bf16.mxu0 0
      %2178 = vmatmul.mubr.bf16.gmra.mrb[0].mxu0 %v2126
      %v2179 = vpop.f32.mrb[0].mxu0
      %v2180 = vadd.f32 0.0, %v2179
      %v2181 = vpop.f32.mrb[0].mxu0
      %v2182 = vpop.f32.mrb[0].mxu0
      %v2183 = vadd.f32 0.0, %v2182
      %v2184 = vpop.f32.mrb[0].mxu0
      %2185 = vmatprep.mubr.bf16.mxu0 0
      %2186 = vmatmul.mubr.bf16.gmra.mrb[0].mxu0 %v2129
      %v2187 = vpop.f32.mrb[0].mxu0
      %v2188 = vadd.f32 0.0, %v2187
      %v2189 = vpop.f32.mrb[0].mxu0
      %v2190 = vpop.f32.mrb[0].mxu0
      %v2191 = vadd.f32 0.0, %v2190
      %v2192 = vpop.f32.mrb[0].mxu0
      %2193 = vmatprep.mubr.bf16.mxu0 0
      %2194 = vmatmul.mubr.bf16.gmra.mrb[0].mxu0 %v2132
      %v2195 = vpop.f32.mrb[0].mxu0
      %v2196 = vadd.f32 0.0, %v2195
      %v2197 = vpop.f32.mrb[0].mxu0
      %v2198 = vpop.f32.mrb[0].mxu0
      %v2199 = vadd.f32 0.0, %v2198
      %v2200 = vpop.f32.mrb[0].mxu0
      %2201 = vdwg.mxu0
      %v2202 = vadd.f32 %v2172, %v2175
      %v2203 = vadd.f32 %v2202, %v2180
      %v2204 = vadd.f32 %v2203, %v2183
      %v2205 = vadd.f32 %v2204, %v2188
      %v2206 = vadd.f32 %v2205, %v2191
      %v2207 = vadd.f32 %v2206, %v2196
      %v2208 = vadd.f32 %v2207, %v2199
      %v2209 = vrot.slane %v2208, 4
      %v2210 = vadd.f32 %v2208, %v2209
      %v2211 = vrot.slane %v2210, 2
      %v2212 = vadd.f32 %v2210, %v2211
      %v2213 = vrot.slane %v2212, 1
      %v2214 = vadd.f32 %v2212, %v2213
      %2215 = vst [vmem:[%s496] sm:$0x1] %v2214
      %v2216 = vmul.f32 %v2172, %v2172
      %v2217 = vmul.f32 %v2175, %v2175
      %v2218 = vmul.f32 %v2180, %v2180
      %v2219 = vmul.f32 %v2183, %v2183
      %v2220 = vmul.f32 %v2188, %v2188
      %v2221 = vmul.f32 %v2191, %v2191
      %v2222 = vmul.f32 %v2196, %v2196
      %v2223 = vmul.f32 %v2199, %v2199
      %v2224 = vadd.f32 %v2216, %v2217
      %v2225 = vadd.f32 %v2224, %v2218
      %v2226 = vadd.f32 %v2225, %v2219
      %v2227 = vadd.f32 %v2226, %v2220
      %v2228 = vadd.f32 %v2227, %v2221
      %v2229 = vadd.f32 %v2228, %v2222
      %v2230 = vadd.f32 %v2229, %v2223
      %v2231 = vrot.slane %v2230, 4
      %v2232 = vadd.f32 %v2230, %v2231
      %v2233 = vrot.slane %v2232, 2
      %v2234 = vadd.f32 %v2232, %v2233
      %v2235 = vrot.slane %v2234, 1
      %v2236 = vadd.f32 %v2234, %v2235
      %2237 = vst [vmem:[%s499] sm:$0x1] %v2236
      %p2238 = scmp.lt.s32.totalorder %s23, 1
      %s2239 = scalar_select %p2238, %s23, 1
      %s2240 = smul.addr %s2239, 8
      %s2241 = smul.addr %s2240, 4
      %s2242 = scalar_lea.vmem %s7, %s2241
      %p2243 = scmp.lt.s32.totalorder %s23, 1
      %s2244 = scalar_select %p2243, %s23, 1
      %s2245 = scalar_lea.vmem %s8, %s2244
      %p2246 = scmp.lt.s32.totalorder %s23, 1
      %s2247 = scalar_select %p2246, %s23, 1
      %s2248 = scalar_lea.vmem %s9, %s2247
      %p2249 = scmp.lt.s32.totalorder %s23, 1
      %s2250 = scalar_select %p2249, %s23, 1
      %s2251 = scalar_lea.vmem %s10, %s2250
      %p2252 = scmp.lt.s32.totalorder %s23, 1
      %s2253 = scalar_select %p2252, %s23, 1
      %s2254 = scalar_lea.vmem %s11, %s2253
      // Predicated region
      $region49: #{block_forward.4} parent=47 // pred_check
        %p2255 = pneg %p213
      $region50: #{block_forward.4} parent=47 // pred_check_branch
        %2257 = sbr.rel (%p2255) target = $region52
      $region51: #{block_forward.4} parent=47 // pred_region
        _
      $region52: #{block_forward.4} parent=47 // pred_fallthru
        _
      // Predicated region
      $region53: #{block_forward.4} parent=47 // pred_check
        %p2258 = pneg %p239
      $region54: #{block_forward.4} parent=47 // pred_check_branch
        %2260 = sbr.rel (%p2258) target = $region56
      $region55: #{block_forward.4} parent=47 // pred_region
        _
      $region56: #{block_forward.4} parent=47 // pred_fallthru
        _
      // Predicated region
      $region57: #{block_forward.4} parent=47 // pred_check
        %p2261 = pneg %p265
      $region58: #{block_forward.4} parent=47 // pred_check_branch
        %2263 = sbr.rel (%p2261) target = $region60
      $region59: #{block_forward.4} parent=47 // pred_region
        _
      $region60: #{block_forward.4} parent=47 // pred_fallthru
        _
      // Predicated region
      $region61: #{block_forward.4} parent=47 // pred_check
        %p2264 = pneg %p291
      $region62: #{block_forward.4} parent=47 // pred_check_branch
        %2266 = sbr.rel (%p2264) target = $region64
      $region63: #{block_forward.4} parent=47 // pred_region
        _
      $region64: #{block_forward.4} parent=47 // pred_fallthru
        _
      // Predicated region
      $region65: #{block_forward.4} parent=47 // pred_check
        %p2267 = pneg %p317
      $region66: #{block_forward.4} parent=47 // pred_check_branch
        %2269 = sbr.rel (%p2267) target = $region68
      $region67: #{block_forward.4} parent=47 // pred_region
        _
      $region68: #{block_forward.4} parent=47 // pred_fallthru
        _
    $region48: #{block_forward.4} parent=5 // pred_fallthru
      _
    %p2270 = scmp.le.s32.totalorder 2, %s18
    // Predicated region
    $region69: #{block_forward.4} parent=5 // pred_check
      %p2271 = pneg %p2270
    $region70: #{block_forward.4} parent=5 // pred_check_branch
      %2273 = sbr.rel (%p2271) target = $region72
    $region71: #{block_forward.4} parent=5 // pred_region
      %s2274 = ssub.s32 %s18, 2
      // Predicated region
      $region73: #{block_forward.4} parent=71 // pred_check
        %p2275 = pneg %p219
      $region74: #{block_forward.4} parent=71 // pred_check_branch
        %2277 = sbr.rel (%p2275) target = $region76
      $region75: #{block_forward.4} parent=71 // pred_region
        %p2278 = scmp.lt.s32.totalorder %s24, 1
        %s2279 = scalar_select %p2278, %s24, 1
        %s2280 = smul.addr %s2279, 8
        %s2281 = smul.addr %s2280, 4
        %s2282 = scalar_lea.vmem %s7, %s2281
      $region76: #{block_forward.4} parent=71 // pred_fallthru
        _
      // Predicated region
      $region77: #{block_forward.4} parent=71 // pred_check
        %p2283 = pneg %p245
      $region78: #{block_forward.4} parent=71 // pred_check_branch
        %2285 = sbr.rel (%p2283) target = $region80
      $region79: #{block_forward.4} parent=71 // pred_region
        %p2286 = scmp.lt.s32.totalorder %s24, 1
        %s2287 = scalar_select %p2286, %s24, 1
        %s2288 = scalar_lea.vmem %s8, %s2287
      $region80: #{block_forward.4} parent=71 // pred_fallthru
        _
      // Predicated region
      $region81: #{block_forward.4} parent=71 // pred_check
        %p2289 = pneg %p271
      $region82: #{block_forward.4} parent=71 // pred_check_branch
        %2291 = sbr.rel (%p2289) target = $region84
      $region83: #{block_forward.4} parent=71 // pred_region
        %p2292 = scmp.lt.s32.totalorder %s24, 1
        %s2293 = scalar_select %p2292, %s24, 1
        %s2294 = scalar_lea.vmem %s9, %s2293
      $region84: #{block_forward.4} parent=71 // pred_fallthru
        _
      // Predicated region
      $region85: #{block_forward.4} parent=71 // pred_check
        %p2295 = pneg %p297
      $region86: #{block_forward.4} parent=71 // pred_check_branch
        %2297 = sbr.rel (%p2295) target = $region88
      $region87: #{block_forward.4} parent=71 // pred_region
        %p2298 = scmp.lt.s32.totalorder %s24, 1
        %s2299 = scalar_select %p2298, %s24, 1
        %s2300 = scalar_lea.vmem %s10, %s2299
      $region88: #{block_forward.4} parent=71 // pred_fallthru
        _
      // Predicated region
      $region89: #{block_forward.4} parent=71 // pred_check
        %p2301 = pneg %p323
      $region90: #{block_forward.4} parent=71 // pred_check_branch
        %2303 = sbr.rel (%p2301) target = $region92
      $region91: #{block_forward.4} parent=71 // pred_region
        %p2304 = scmp.lt.s32.totalorder %s24, 1
        %s2305 = scalar_select %p2304, %s24, 1
        %s2306 = scalar_lea.vmem %s11, %s2305
      $region92: #{block_forward.4} parent=71 // pred_fallthru
        _
    $region72: #{block_forward.4} parent=5 // pred_fallthru
      _
  $region6: #{block_forward.4} parent=0 // loop_footer
    %s22 = sadd.s32 1, %s18
  $region7: #{block_forward.4} parent=0 // loop_footer_branch
    %17 = sbr.rel target = $region3
  $region8: #{block_forward.4} parent=0 // loop_exit
    _

// kernel: block_forward.6
$region0: #{block_forward.6}
  #allocation0 [shape = 'u32[]', space=smem, size = 0x4, offset = 0x4, fixed_abs, tag = 'smem constant byte address 0x4 - core index']
  #allocation1 [shape = 'u32[144,128]{1,0:T(1,128)}', space=vmem, size = 0x12000, scoped, tag = 'internal scratch']
  #allocation2 [shape = 'f32[64,128]{1,0:T(8,128)}', space=vmem, size = 0x8000, scoped, tag = 'scratch operand']
  %s0 = inlined_call_operand.vmem [shape: bf16[2,10,10,128], index: 0, kind: input, shape index: {}]
  %s1 = inlined_call_operand.vmem [shape: bf16[9,128,128], index: 1, kind: input, shape index: {}]
  %s2 = inlined_call_operand.vmem [shape: bf16[2,8,8,128], index: 2, kind: output, shape index: {0}]
  %s3 = inlined_call_operand.vmem [shape: f32[2,1,128], index: 3, kind: output, shape index: {1}]
  %s4 = inlined_call_operand.vmem [shape: f32[2,1,128], index: 4, kind: output, shape index: {2}]
  %5 = xla_tuple %s2, %s3, %s4
  %s6 = sld [smem:[#allocation0]]
  $region57: #{block_forward.6} parent=0
    _
  %s8 = ssub.s32 1, %s6
  %s9 = scalar_select 0, %s8, %s6
  loop: start=0, step=1, limit=4
  $region2: #{block_forward.6} parent=0 // loop_pre_header
    _
  $region3: #{block_forward.6} parent=0 // loop_header
    %s11 = sphi 0, %s15
    %p12 = scmp.ge.s32.totalorder %s11, 4
    %s21 = sphi 0, %s23
    %s24 = sphi 0, %s21
    %s25 = sphi 0, %s24
    %s41 = sphi 0, %s25
    %s45 = sphi 0, %s45
    %s47 = sphi 0, %s45
    %s48 = sphi 0, %s47
    %s62 = sphi 0, %s48
    %s68 = sphi 0, %s70
    %s71 = sphi 0, %s68
    %s72 = sphi 0, %s71
    %s88 = sphi 0, %s72
    %s94 = sphi 0, %s96
    %s97 = sphi 0, %s94
    %s98 = sphi 0, %s97
    %s114 = sphi 0, %s98
    %s120 = sphi 0, %s122
    %s123 = sphi 0, %s120
    %s124 = sphi 0, %s123
    %s140 = sphi 0, %s124
  $region4: #{block_forward.6} parent=0 // loop_header_branch
    %14 = sbr.rel (%p12) target = $region8
  $region5: #{block_forward.6} parent=0 // loop_body
    %s16 = ssub.s32 %s11, 1
    %s17 = ssub.s32 %s11, 2
    %s18 = sadd.s32 %s11, 1
    %s19 = ssub.s32 %s11, %s18
    %p20 = scmp.eq.s32.totalorder %s19, 0
    %s22 = sadd.s32 %s21, 1
    %s23 = scalar_select %p20, %s21, %s22
    %p26 = pneg %p20
    %p27 = scmp.eq.s32.totalorder %s11, 1
    %p28 = por %p26, %p27
    %p29 = scmp.ne.s32.totalorder %s21, %s24
    %p30 = scmp.eq.s32.totalorder %s11, 0
    %p31 = por %p29, %p30
    %p32 = scmp.ne.s32.totalorder %s21, %s24
    %p33 = scmp.eq.s32.totalorder %s16, 1
    %p34 = por %p32, %p33
    %p35 = scmp.ne.s32.totalorder %s24, %s25
    %p36 = scmp.eq.s32.totalorder %s16, 0
    %p37 = por %p35, %p36
    %p38 = scmp.ne.s32.totalorder %s24, %s25
    %p39 = scmp.eq.s32.totalorder %s17, 1
    %p40 = por %p38, %p39
    %p42 = scmp.ne.s32.totalorder %s25, %s41
    %p43 = scmp.eq.s32.totalorder %s17, 0
    %p44 = por %p42, %p43
    %s46 = sadd.s32 %s45, 1
    %p49 = scmp.eq.s32.totalorder %s11, 1
    %p50 = scmp.ne.s32.totalorder %s45, %s47
    %p51 = scmp.eq.s32.totalorder %s11, 0
    %p52 = por %p50, %p51
    %p53 = scmp.ne.s32.totalorder %s45, %s47
    %p54 = scmp.eq.s32.totalorder %s16, 1
    %p55 = por %p53, %p54
    %p56 = scmp.ne.s32.totalorder %s47, %s48
    %p57 = scmp.eq.s32.totalorder %s16, 0
    %p58 = por %p56, %p57
    %p59 = scmp.ne.s32.totalorder %s47, %s48
    %p60 = scmp.eq.s32.totalorder %s17, 1
    %p61 = por %p59, %p60
    %p63 = scmp.ne.s32.totalorder %s48, %s62
    %p64 = scmp.eq.s32.totalorder %s17, 0
    %p65 = por %p63, %p64
    %s66 = ssub.s32 %s11, %s18
    %p67 = scmp.eq.s32.totalorder %s66, 0
    %s69 = sadd.s32 %s68, 1
    %s70 = scalar_select %p67, %s68, %s69
    %p73 = pneg %p67
    %p74 = scmp.eq.s32.totalorder %s11, 1
    %p75 = por %p73, %p74
    %p76 = scmp.ne.s32.totalorder %s68, %s71
    %p77 = scmp.eq.s32.totalorder %s11, 0
    %p78 = por %p76, %p77
    %p79 = scmp.ne.s32.totalorder %s68, %s71
    %p80 = scmp.eq.s32.totalorder %s16, 1
    %p81 = por %p79, %p80
    %p82 = scmp.ne.s32.totalorder %s71, %s72
    %p83 = scmp.eq.s32.totalorder %s16, 0
    %p84 = por %p82, %p83
    %p85 = scmp.ne.s32.totalorder %s71, %s72
    %p86 = scmp.eq.s32.totalorder %s17, 1
    %p87 = por %p85, %p86
    %p89 = scmp.ne.s32.totalorder %s72, %s88
    %p90 = scmp.eq.s32.totalorder %s17, 0
    %p91 = por %p89, %p90
    %s92 = ssub.s32 %s11, %s18
    %p93 = scmp.eq.s32.totalorder %s92, 0
    %s95 = sadd.s32 %s94, 1
    %s96 = scalar_select %p93, %s94, %s95
    %p99 = pneg %p93
    %p100 = scmp.eq.s32.totalorder %s11, 1
    %p101 = por %p99, %p100
    %p102 = scmp.ne.s32.totalorder %s94, %s97
    %p103 = scmp.eq.s32.totalorder %s11, 0
    %p104 = por %p102, %p103
    %p105 = scmp.ne.s32.totalorder %s94, %s97
    %p106 = scmp.eq.s32.totalorder %s16, 1
    %p107 = por %p105, %p106
    %p108 = scmp.ne.s32.totalorder %s97, %s98
    %p109 = scmp.eq.s32.totalorder %s16, 0
    %p110 = por %p108, %p109
    %p111 = scmp.ne.s32.totalorder %s97, %s98
    %p112 = scmp.eq.s32.totalorder %s17, 1
    %p113 = por %p111, %p112
    %p115 = scmp.ne.s32.totalorder %s98, %s114
    %p116 = scmp.eq.s32.totalorder %s17, 0
    %p117 = por %p115, %p116
    %s118 = ssub.s32 %s11, %s18
    %p119 = scmp.eq.s32.totalorder %s118, 0
    %s121 = sadd.s32 %s120, 1
    %s122 = scalar_select %p119, %s120, %s121
    %p125 = pneg %p119
    %p126 = scmp.eq.s32.totalorder %s11, 1
    %p127 = por %p125, %p126
    %p128 = scmp.ne.s32.totalorder %s120, %s123
    %p129 = scmp.eq.s32.totalorder %s11, 0
    %p130 = por %p128, %p129
    %p131 = scmp.ne.s32.totalorder %s120, %s123
    %p132 = scmp.eq.s32.totalorder %s16, 1
    %p133 = por %p131, %p132
    %p134 = scmp.ne.s32.totalorder %s123, %s124
    %p135 = scmp.eq.s32.totalorder %s16, 0
    %p136 = por %p134, %p135
    %p137 = scmp.ne.s32.totalorder %s123, %s124
    %p138 = scmp.eq.s32.totalorder %s17, 1
    %p139 = por %p137, %p138
    %p141 = scmp.ne.s32.totalorder %s124, %s140
    %p142 = scmp.eq.s32.totalorder %s17, 0
    %p143 = por %p141, %p142
    %p144 = scmp.le.s32.totalorder 1, %s11
    %p145 = scmp.lt.s32.totalorder %s11, 3
    %p146 = pnand %p144, %p145
    %p147 = pneg %p146
    // Predicated region
    $region9: #{block_forward.6} parent=5 // pred_check
      _
    $region10: #{block_forward.6} parent=5 // pred_check_branch
      %149 = sbr.rel (%p146) target = $region12
    $region11: #{block_forward.6} parent=5 // pred_region
      %s150 = ssub.s32 %s11, 1
      // Predicated region
      $region13: #{block_forward.6} parent=11 // pred_check
        %p151 = pneg %p58
      $region14: #{block_forward.6} parent=11 // pred_check_branch
        %153 = sbr.rel (%p151) target = $region16
      $region15: #{block_forward.6} parent=11 // pred_region
        _
      $region16: #{block_forward.6} parent=11 // pred_fallthru
        _
    $region12: #{block_forward.6} parent=5 // pred_fallthru
      _
    %p154 = scmp.lt.s32.totalorder %s11, 2
    // Predicated region
    $region17: #{block_forward.6} parent=5 // pred_check
      %p155 = pneg %p154
    $region18: #{block_forward.6} parent=5 // pred_check_branch
      %157 = sbr.rel (%p155) target = $region20
    $region19: #{block_forward.6} parent=5 // pred_region
      // Predicated region
      $region21: #{block_forward.6} parent=19 // pred_check
        %p158 = pneg %p31
      $region22: #{block_forward.6} parent=19 // pred_check_branch
        %160 = sbr.rel (%p158) target = $region24
      $region23: #{block_forward.6} parent=19 // pred_region
        %p161 = scmp.lt.s32.totalorder %s11, 1
        %s162 = scalar_select %p161, %s11, 1
        %s163 = smul.addr %s162, 20
        %s164 = smul.addr %s163, 4
        %s165 = scalar_lea.vmem %s0, %s164
      $region24: #{block_forward.6} parent=19 // pred_fallthru
        _
    $region20: #{block_forward.6} parent=5 // pred_fallthru
      _
    %p166 = scmp.le.s32.totalorder 1, %s11
    %p167 = scmp.lt.s32.totalorder %s11, 3
    %p168 = pnand %p166, %p167
    %p169 = pneg %p168
    // Predicated region
    $region25: #{block_forward.6} parent=5 // pred_check
      _
    $region26: #{block_forward.6} parent=5 // pred_check_branch
      %171 = sbr.rel (%p168) target = $region28
    $region27: #{block_forward.6} parent=5 // pred_region
      %s172 = ssub.s32 %s11, 1
      %p173 = scmp.lt.s32.totalorder %s16, 1
      %s174 = scalar_select %p173, %s16, 1
      %s175 = smul.addr %s174, 20
      %s176 = smul.addr %s175, 4
      %s177 = scalar_lea.vmem %s0, %s176
      %p178 = pneg %p37
      %p179 = pneg %p34
      %p180 = pneg %p58
      %p181 = pneg %p55
      %p182 = pneg %p84
      %p183 = pneg %p81
      %p184 = scmp.lt.s32.totalorder %s16, 1
      %s185 = scalar_select %p184, %s16, 1
      %s186 = smul.addr %s185, 8
      %s187 = smul.addr %s186, 4
      %s188 = scalar_lea.vmem %s2, %s187
      %p189 = pneg %p110
      %p190 = pneg %p107
      %p191 = scmp.lt.s32.totalorder %s16, 1
      %s192 = scalar_select %p191, %s16, 1
      %s193 = scalar_lea.vmem %s3, %s192
      %p194 = pneg %p136
      %p195 = pneg %p133
      %p196 = scmp.lt.s32.totalorder %s16, 1
      %s197 = scalar_select %p196, %s16, 1
      %s198 = scalar_lea.vmem %s4, %s197
      %p199 = scmp.lt.s32.totalorder %s16, 1
      %s200 = scalar_select %p199, %s16, 1
      %s201 = smul.addr %s200, 20
      %s202 = smul.addr %s201, 4
      %s203 = scalar_lea.vmem %s0, %s202
      %p204 = scmp.lt.s32.totalorder %s16, 1
      %s205 = scalar_select %p204, %s16, 1
      %s206 = smul.addr %s205, 8
      %s207 = smul.addr %s206, 4
      %s208 = scalar_lea.vmem %s2, %s207
      %p209 = scmp.lt.s32.totalorder %s16, 1
      %s210 = scalar_select %p209, %s16, 1
      %s211 = scalar_lea.vmem %s3, %s210
      %p212 = scmp.lt.s32.totalorder %s16, 1
      %s213 = scalar_select %p212, %s16, 1
      %s214 = scalar_lea.vmem %s4, %s213
      %v216 = vld [vmem:[%s203] sm:$0xf]
      %v217 = vld [vmem:[%s203 + $0x8] sm:$0xf]
      %v218 = vld [vmem:[%s203 + $0x10] sm:$0xf]
      %v219 = vld [vmem:[%s203 + $0x18] sm:$0xf]
      %v220 = vld [vmem:[%s203 + $0x20] sm:$0xf]
      %v221 = vld [vmem:[%s203 + $0x28] sm:$0xf]
      %v222 = vld [vmem:[%s203 + $0x30] sm:$0xf]
      %v223 = vld [vmem:[%s203 + $0x38] sm:$0xf]
      %v224 = vld [vmem:[%s1] sm:$0xf]
      %v225 = vld [vmem:[%s1 + $0x4] sm:$0xf]
      %v226 = vld [vmem:[%s1 + $0x8] sm:$0xf]
      %v227 = vld [vmem:[%s1 + $0xc] sm:$0xf]
      %v228 = vld [vmem:[%s1 + $0x10] sm:$0xf]
      %v229 = vld [vmem:[%s1 + $0x14] sm:$0xf]
      %v230 = vld [vmem:[%s1 + $0x18] sm:$0xf]
      %v231 = vld [vmem:[%s1 + $0x1c] sm:$0xf]
      %v232 = vld [vmem:[%s1 + $0x20] sm:$0xf]
      %v233 = vld [vmem:[%s1 + $0x24] sm:$0xf]
      %v234 = vld [vmem:[%s1 + $0x28] sm:$0xf]
      %v235 = vld [vmem:[%s1 + $0x2c] sm:$0xf]
      %v236 = vld [vmem:[%s1 + $0x30] sm:$0xf]
      %v237 = vld [vmem:[%s1 + $0x34] sm:$0xf]
      %v238 = vld [vmem:[%s1 + $0x38] sm:$0xf]
      %v239 = vld [vmem:[%s1 + $0x3c] sm:$0xf]
      %v248 = vunpack.c.l.b16 %v216
      %v249 = vunpack.c.l.b16 %v217
      %v250 = vunpack.c.l.b16 %v218
      %v251 = vunpack.c.l.b16 %v219
      %v252 = vunpack.c.l.b16 %v220
      %v253 = vunpack.c.l.b16 %v221
      %v254 = vunpack.c.l.b16 %v222
      %v255 = vunpack.c.l.b16 %v223
      %v256 = vpack.c.b16 %v249, %v248
      %v257 = vpack.c.b16 %v251, %v250
      %v258 = vpack.c.b16 %v253, %v252
      %v259 = vpack.c.b16 %v255, %v254
      %v280 = vunpack.c.l.b16 %v224
      %v281 = vunpack.c.l.b16 %v225
      %v282 = vunpack.c.l.b16 %v226
      %v283 = vunpack.c.l.b16 %v227
      %v284 = vunpack.c.l.b16 %v228
      %v285 = vunpack.c.l.b16 %v229
      %v286 = vunpack.c.l.b16 %v230
      %v287 = vunpack.c.l.b16 %v231
      %v288 = vunpack.c.l.b16 %v232
      %v289 = vunpack.c.l.b16 %v233
      %v290 = vunpack.c.l.b16 %v234
      %v291 = vunpack.c.l.b16 %v235
      %v292 = vunpack.c.l.b16 %v236
      %v293 = vunpack.c.l.b16 %v237
      %v294 = vunpack.c.l.b16 %v238
      %v295 = vunpack.c.l.b16 %v239
      %v296 = vpack.c.b16 %v281, %v280
      %v297 = vpack.c.b16 %v283, %v282
      %v298 = vpack.c.b16 %v285, %v284
      %v299 = vpack.c.b16 %v287, %v286
      %v300 = vpack.c.b16 %v289, %v288
      %v301 = vpack.c.b16 %v291, %v290
      %v302 = vpack.c.b16 %v293, %v292
      %v303 = vpack.c.b16 %v295, %v294
      %312 = vmatprep.subr.bf16.mxu0 0
      %313 = vmatpush1.bf16.msra.mxu0 %v296
      %314 = vmatprep.subr.bf16.mxu0 0
      %315 = vmatpush1.bf16.msra.mxu0 %v297
      %316 = vmatprep.subr.bf16.mxu0 0
      %317 = vmatpush1.bf16.msra.mxu0 %v298
      %318 = vmatprep.subr.bf16.mxu0 0
      %319 = vmatpush1.bf16.msra.mxu0 %v299
      %320 = vmatprep.subr.bf16.mxu0 0
      %321 = vmatpush1.bf16.msra.mxu0 %v300
      %322 = vmatprep.subr.bf16.mxu0 0
      %323 = vmatpush1.bf16.msra.mxu0 %v301
      %324 = vmatprep.subr.bf16.mxu0 0
      %325 = vmatpush1.bf16.msra.mxu0 %v302
      %326 = vmatprep.subr.bf16.mxu0 0
      %327 = vmatpush1.bf16.msra.mxu0 %v303
      %328 = vmatprep.subr.bf16.mxu0 0
      %329 = vmatpush1.bf16.msra.mxu0 0
      %330 = vmatprep.subr.bf16.mxu0 0
      %331 = vmatpush1.bf16.msra.mxu0 0
      %332 = vmatprep.subr.bf16.mxu0 0
      %333 = vmatpush1.bf16.msra.mxu0 0
      %334 = vmatprep.subr.bf16.mxu0 0
      %335 = vmatpush1.bf16.msra.mxu0 0
      %336 = vmatprep.subr.bf16.mxu0 0
      %337 = vmatpush1.bf16.msra.mxu0 0
      %338 = vmatprep.subr.bf16.mxu0 0
      %339 = vmatpush1.bf16.msra.mxu0 0
      %340 = vmatprep.subr.bf16.mxu0 0
      %341 = vmatpush1.bf16.msra.mxu0 0
      %342 = vmatprep.subr.bf16.mxu0 0
      %343 = vmatpush1.bf16.msra.mxu0 0
      %344 = vmatprep.mubr.bf16.mxu0 0
      %345 = vmatmul.mubr.bf16.gmra.mrb[0].mxu0 %v256
      %v346 = vpop.f32.mrb[0].mxu0
      %v347 = vadd.f32 0.0, %v346
      %v348 = vpop.f32.mrb[0].mxu0
      %v349 = vpop.f32.mrb[0].mxu0
      %v350 = vadd.f32 0.0, %v349
      %v351 = vpop.f32.mrb[0].mxu0
      %352 = vmatprep.mubr.bf16.mxu0 0
      %353 = vmatmul.mubr.bf16.gmra.mrb[0].mxu0 %v257
      %v354 = vpop.f32.mrb[0].mxu0
      %v355 = vadd.f32 0.0, %v354
      %v356 = vpop.f32.mrb[0].mxu0
      %v357 = vpop.f32.mrb[0].mxu0
      %v358 = vadd.f32 0.0, %v357
      %v359 = vpop.f32.mrb[0].mxu0
      %360 = vmatprep.mubr.bf16.mxu0 0
      %361 = vmatmul.mubr.bf16.gmra.mrb[0].mxu0 %v258
      %v362 = vpop.f32.mrb[0].mxu0
      %v363 = vadd.f32 0.0, %v362
      %v364 = vpop.f32.mrb[0].mxu0
      %v365 = vpop.f32.mrb[0].mxu0
      %v366 = vadd.f32 0.0, %v365
      %v367 = vpop.f32.mrb[0].mxu0
      %368 = vmatprep.mubr.bf16.mxu0 0
      %369 = vmatmul.mubr.bf16.gmra.mrb[0].mxu0 %v259
      %v370 = vpop.f32.mrb[0].mxu0
      %v371 = vadd.f32 0.0, %v370
      %v372 = vpop.f32.mrb[0].mxu0
      %v373 = vpop.f32.mrb[0].mxu0
      %v374 = vadd.f32 0.0, %v373
      %v375 = vpop.f32.mrb[0].mxu0
      %376 = vdwg.mxu0
      %377 = vst [vmem:[#allocation2] sm:$0xff] %v347
      %378 = vst [vmem:[#allocation2 + $0x8] sm:$0xff] %v350
      %379 = vst [vmem:[#allocation2 + $0x10] sm:$0xff] %v355
      %380 = vst [vmem:[#allocation2 + $0x18] sm:$0xff] %v358
      %381 = vst [vmem:[#allocation2 + $0x20] sm:$0xff] %v363
      %382 = vst [vmem:[#allocation2 + $0x28] sm:$0xff] %v366
      %383 = vst [vmem:[#allocation2 + $0x30] sm:$0xff] %v371
      %384 = vst [vmem:[#allocation2 + $0x38] sm:$0xff] %v374
      %v385 = vld [vmem:[%s203] sm:$0xf]
      %v386 = vld [vmem:[%s203 + $0x4] sm:$0x1]
      %v387 = vld [vmem:[%s203 + $0x8] sm:$0xf]
      %v388 = vld [vmem:[%s203 + $0xc] sm:$0x1]
      %v389 = vld [vmem:[%s203 + $0x10] sm:$0xf]
      %v390 = vld [vmem:[%s203 + $0x14] sm:$0x1]
      %v391 = vld [vmem:[%s203 + $0x18] sm:$0xf]
      %v392 = vld [vmem:[%s203 + $0x1c] sm:$0x1]
      %v393 = vld [vmem:[%s203 + $0x20] sm:$0xf]
      %v394 = vld [vmem:[%s203 + $0x24] sm:$0x1]
      %v395 = vld [vmem:[%s203 + $0x28] sm:$0xf]
      %v396 = vld [vmem:[%s203 + $0x2c] sm:$0x1]
      %v397 = vld [vmem:[%s203 + $0x30] sm:$0xf]
      %v398 = vld [vmem:[%s203 + $0x34] sm:$0x1]
      %v399 = vld [vmem:[%s203 + $0x38] sm:$0xf]
      %v400 = vld [vmem:[%s203 + $0x3c] sm:$0x1]
      %vm401 = vsmask.f32 3328
      %vm402 = vsmask.f32 7440
      %vm403 = vmor %vm401, %vm402
      %v405 = vshrl.u32 %v385, 16
      %v407 = vrot.slane %v405, 4
      %v408 = vshll.u32 %v385, 16
      %v410 = vrot.slane %v408, 5
      %v411 = vor.u32 %v407, %v410
      %v412 = vrot.slane %v411, 4
      %v414 = vshll.u32 %v386, 16
      %v416 = vrot.slane %v414, 5
      %v417 = vsel %vm403, %v412, %v416
      %v419 = vshrl.u32 %v387, 16
      %v421 = vrot.slane %v419, 4
      %v422 = vshll.u32 %v387, 16
      %v424 = vrot.slane %v422, 5
      %v425 = vor.u32 %v421, %v424
      %v426 = vrot.slane %v425, 4
      %v428 = vshll.u32 %v388, 16
      %v430 = vrot.slane %v428, 5
      %v431 = vsel %vm403, %v426, %v430
      %v433 = vshrl.u32 %v389, 16
      %v435 = vrot.slane %v433, 4
      %v436 = vshll.u32 %v389, 16
      %v438 = vrot.slane %v436, 5
      %v439 = vor.u32 %v435, %v438
      %v440 = vrot.slane %v439, 4
      %v442 = vshll.u32 %v390, 16
      %v444 = vrot.slane %v442, 5
      %v445 = vsel %vm403, %v440, %v444
      %v447 = vshrl.u32 %v391, 16
      %v449 = vrot.slane %v447, 4
      %v450 = vshll.u32 %v391, 16
      %v452 = vrot.slane %v450, 5
      %v453 = vor.u32 %v449, %v452
      %v454 = vrot.slane %v453, 4
      %v456 = vshll.u32 %v392, 16
      %v458 = vrot.slane %v456, 5
      %v459 = vsel %vm403, %v454, %v458
      %v461 = vshrl.u32 %v393, 16
      %v463 = vrot.slane %v461, 4
      %v464 = vshll.u32 %v393, 16
      %v466 = vrot.slane %v464, 5
      %v467 = vor.u32 %v463, %v466
      %v468 = vrot.slane %v467, 4
      %v470 = vshll.u32 %v394, 16
      %v472 = vrot.slane %v470, 5
      %v473 = vsel %vm403, %v468, %v472
      %v475 = vshrl.u32 %v395, 16
      %v477 = vrot.slane %v475, 4
      %v478 = vshll.u32 %v395, 16
      %v480 = vrot.slane %v478, 5
      %v481 = vor.u32 %v477, %v480
      %v482 = vrot.slane %v481, 4
      %v484 = vshll.u32 %v396, 16
      %v486 = vrot.slane %v484, 5
      %v487 = vsel %vm403, %v482, %v486
      %v489 = vshrl.u32 %v397, 16
      %v491 = vrot.slane %v489, 4
      %v492 = vshll.u32 %v397, 16
      %v494 = vrot.slane %v492, 5
      %v495 = vor.u32 %v491, %v494
      %v496 = vrot.slane %v495, 4
      %v498 = vshll.u32 %v398, 16
      %v500 = vrot.slane %v498, 5
      %v501 = vsel %vm403, %v496, %v500
      %v503 = vshrl.u32 %v399, 16
      %v505 = vrot.slane %v503, 4
      %v506 = vshll.u32 %v399, 16
      %v508 = vrot.slane %v506, 5
      %v509 = vor.u32 %v505, %v508
      %v510 = vrot.slane %v509, 4
      %v512 = vshll.u32 %v400, 16
      %v514 = vrot.slane %v512, 5
      %v515 = vsel %vm403, %v510, %v514
      %s516 = scalar_lea.vmem %s1, 64
      %v517 = vld [vmem:[%s516] sm:$0xf]
      %v518 = vld [vmem:[%s516 + $0x4] sm:$0xf]
      %v519 = vld [vmem:[%s516 + $0x8] sm:$0xf]
      %v520 = vld [vmem:[%s516 + $0xc] sm:$0xf]
      %v521 = vld [vmem:[%s516 + $0x10] sm:$0xf]
      %v522 = vld [vmem:[%s516 + $0x14] sm:$0xf]
      %v523 = vld [vmem:[%s516 + $0x18] sm:$0xf]
      %v524 = vld [vmem:[%s516 + $0x1c] sm:$0xf]
      %v525 = vld [vmem:[%s516 + $0x20] sm:$0xf]
      %v526 = vld [vmem:[%s516 + $0x24] sm:$0xf]
      %v527 = vld [vmem:[%s516 + $0x28] sm:$0xf]
      %v528 = vld [vmem:[%s516 + $0x2c] sm:$0xf]
      %v529 = vld [vmem:[%s516 + $0x30] sm:$0xf]
      %v530 = vld [vmem:[%s516 + $0x34] sm:$0xf]
      %v531 = vld [vmem:[%s516 + $0x38] sm:$0xf]
      %v532 = vld [vmem:[%s516 + $0x3c] sm:$0xf]
      %v533 = vunpack.c.l.b16 %v417
      %v534 = vunpack.c.l.b16 %v431
      %v535 = vunpack.c.l.b16 %v445
      %v536 = vunpack.c.l.b16 %v459
      %v537 = vunpack.c.l.b16 %v473
      %v538 = vunpack.c.l.b16 %v487
      %v539 = vunpack.c.l.b16 %v501
      %v540 = vunpack.c.l.b16 %v515
      %v541 = vpack.c.b16 %v534, %v533
      %v542 = vpack.c.b16 %v536, %v535
      %v543 = vpack.c.b16 %v538, %v537
      %v544 = vpack.c.b16 %v540, %v539
      %v565 = vunpack.c.l.b16 %v517
      %v566 = vunpack.c.l.b16 %v518
      %v567 = vunpack.c.l.b16 %v519
      %v568 = vunpack.c.l.b16 %v520
      %v569 = vunpack.c.l.b16 %v521
      %v570 = vunpack.c.l.b16 %v522
      %v571 = vunpack.c.l.b16 %v523
      %v572 = vunpack.c.l.b16 %v524
      %v573 = vunpack.c.l.b16 %v525
      %v574 = vunpack.c.l.b16 %v526
      %v575 = vunpack.c.l.b16 %v527
      %v576 = vunpack.c.l.b16 %v528
      %v577 = vunpack.c.l.b16 %v529
      %v578 = vunpack.c.l.b16 %v530
      %v579 = vunpack.c.l.b16 %v531
      %v580 = vunpack.c.l.b16 %v532
      %v581 = vpack.c.b16 %v566, %v565
      %v582 = vpack.c.b16 %v568, %v567
      %v583 = vpack.c.b16 %v570, %v569
      %v584 = vpack.c.b16 %v572, %v571
      %v585 = vpack.c.b16 %v574, %v573
      %v586 = vpack.c.b16 %v576, %v575
      %v587 = vpack.c.b16 %v578, %v577
      %v588 = vpack.c.b16 %v580, %v579
      %597 = vmatprep.subr.bf16.mxu0 0
      %598 = vmatpush1.bf16.msra.mxu0 %v581
      %599 = vmatprep.subr.bf16.mxu0 0
      %600 = vmatpush1.bf16.msra.mxu0 %v582
      %601 = vmatprep.subr.bf16.mxu0 0
      %602 = vmatpush1.bf16.msra.mxu0 %v583
      %603 = vmatprep.subr.bf16.mxu0 0
      %604 = vmatpush1.bf16.msra.mxu0 %v584
      %605 = vmatprep.subr.bf16.mxu0 0
      %606 = vmatpush1.bf16.msra.mxu0 %v585
      %607 = vmatprep.subr.bf16.mxu0 0
      %608 = vmatpush1.bf16.msra.mxu0 %v586
      %609 = vmatprep.subr.bf16.mxu0 0
      %610 = vmatpush1.bf16.msra.mxu0 %v587
      %611 = vmatprep.subr.bf16.mxu0 0
      %612 = vmatpush1.bf16.msra.mxu0 %v588
      %613 = vmatprep.subr.bf16.mxu0 0
      %614 = vmatpush1.bf16.msra.mxu0 0
      %615 = vmatprep.subr.bf16.mxu0 0
      %616 = vmatpush1.bf16.msra.mxu0 0
      %617 = vmatprep.subr.bf16.mxu0 0
      %618 = vmatpush1.bf16.msra.mxu0 0
      %619 = vmatprep.subr.bf16.mxu0 0
      %620 = vmatpush1.bf16.msra.mxu0 0
      %621 = vmatprep.subr.bf16.mxu0 0
      %622 = vmatpush1.bf16.msra.mxu0 0
      %623 = vmatprep.subr.bf16.mxu0 0
      %624 = vmatpush1.bf16.msra.mxu0 0
      %625 = vmatprep.subr.bf16.mxu0 0
      %626 = vmatpush1.bf16.msra.mxu0 0
      %627 = vmatprep.subr.bf16.mxu0 0
      %628 = vmatpush1.bf16.msra.mxu0 0
      %629 = vmatprep.mubr.bf16.mxu0 0
      %630 = vmatmul.mubr.bf16.gmra.mrb[0].mxu0 %v541
      %v631 = vpop.f32.mrb[0].mxu0
      %v632 = vadd.f32 0.0, %v631
      %v633 = vpop.f32.mrb[0].mxu0
      %v634 = vpop.f32.mrb[0].mxu0
      %v635 = vadd.f32 0.0, %v634
      %v636 = vpop.f32.mrb[0].mxu0
      %637 = vmatprep.mubr.bf16.mxu0 0
      %638 = vmatmul.mubr.bf16.gmra.mrb[0].mxu0 %v542
      %v639 = vpop.f32.mrb[0].mxu0
      %v640 = vadd.f32 0.0, %v639
      %v641 = vpop.f32.mrb[0].mxu0
      %v642 = vpop.f32.mrb[0].mxu0
      %v643 = vadd.f32 0.0, %v642
      %v644 = vpop.f32.mrb[0].mxu0
      %645 = vmatprep.mubr.bf16.mxu0 0
      %646 = vmatmul.mubr.bf16.gmra.mrb[0].mxu0 %v543
      %v647 = vpop.f32.mrb[0].mxu0
      %v648 = vadd.f32 0.0, %v647
      %v649 = vpop.f32.mrb[0].mxu0
      %v650 = vpop.f32.mrb[0].mxu0
      %v651 = vadd.f32 0.0, %v650
      %v652 = vpop.f32.mrb[0].mxu0
      %653 = vmatprep.mubr.bf16.mxu0 0
      %654 = vmatmul.mubr.bf16.gmra.mrb[0].mxu0 %v544
      %v655 = vpop.f32.mrb[0].mxu0
      %v656 = vadd.f32 0.0, %v655
      %v657 = vpop.f32.mrb[0].mxu0
      %v658 = vpop.f32.mrb[0].mxu0
      %v659 = vadd.f32 0.0, %v658
      %v660 = vpop.f32.mrb[0].mxu0
      %661 = vdwg.mxu0
      %v662 = vld [vmem:[#allocation2] sm:$0xff]
      %v663 = vld [vmem:[#allocation2 + $0x8] sm:$0xff]
      %v664 = vld [vmem:[#allocation2 + $0x10] sm:$0xff]
      %v665 = vld [vmem:[#allocation2 + $0x18] sm:$0xff]
      %v666 = vld [vmem:[#allocation2 + $0x20] sm:$0xff]
      %v667 = vld [vmem:[#allocation2 + $0x28] sm:$0xff]
      %v668 = vld [vmem:[#allocation2 + $0x30] sm:$0xff]
      %v669 = vld [vmem:[#allocation2 + $0x38] sm:$0xff]
      %v670 = vadd.f32 %v662, %v632
      %v671 = vadd.f32 %v663, %v635
      %v672 = vadd.f32 %v664, %v640
      %v673 = vadd.f32 %v665, %v643
      %v674 = vadd.f32 %v666, %v648
      %v675 = vadd.f32 %v667, %v651
      %v676 = vadd.f32 %v668, %v656
      %v677 = vadd.f32 %v669, %v659
      %678 = vst [vmem:[#allocation2] sm:$0xff] %v670
      %679 = vst [vmem:[#allocation2 + $0x8] sm:$0xff] %v671
      %680 = vst [vmem:[#allocation2 + $0x10] sm:$0xff] %v672
      %681 = vst [vmem:[#allocation2 + $0x18] sm:$0xff] %v673
      %682 = vst [vmem:[#allocation2 + $0x20] sm:$0xff] %v674
      %683 = vst [vmem:[#allocation2 + $0x28] sm:$0xff] %v675
      %684 = vst [vmem:[#allocation2 + $0x30] sm:$0xff] %v676
      %685 = vst [vmem:[#allocation2 + $0x38] sm:$0xff] %v677
      %v686 = vld [vmem:[%s203] sm:$0xe]
      %v687 = vld [vmem:[%s203 + $0x4] sm:$0x1]
      %v688 = vld [vmem:[%s203 + $0x8] sm:$0xe]
      %v689 = vld [vmem:[%s203 + $0xc] sm:$0x1]
      %v690 = vld [vmem:[%s203 + $0x10] sm:$0xe]
      %v691 = vld [vmem:[%s203 + $0x14] sm:$0x1]
      %v692 = vld [vmem:[%s203 + $0x18] sm:$0xe]
      %v693 = vld [vmem:[%s203 + $0x1c] sm:$0x1]
      %v694 = vld [vmem:[%s203 + $0x20] sm:$0xe]
      %v695 = vld [vmem:[%s203 + $0x24] sm:$0x1]
      %v696 = vld [vmem:[%s203 + $0x28] sm:$0xe]
      %v697 = vld [vmem:[%s203 + $0x2c] sm:$0x1]
      %v698 = vld [vmem:[%s203 + $0x30] sm:$0xe]
      %v699 = vld [vmem:[%s203 + $0x34] sm:$0x1]
      %v700 = vld [vmem:[%s203 + $0x38] sm:$0xe]
      %v701 = vld [vmem:[%s203 + $0x3c] sm:$0x1]
      %vm718 = vcmask 1042432
      %vm719 = vcmask 1046532
      %vm720 = vmor %vm718, %vm719
      %v721 = vrot.slane %v686, 5
      %v722 = vrot.slane %v721, 4
      %v723 = vrot.slane %v687, 5
      %v724 = vsel %vm720, %v722, %v723
      %v725 = vrot.slane %v688, 5
      %v726 = vrot.slane %v725, 4
      %v727 = vrot.slane %v689, 5
      %v728 = vsel %vm720, %v726, %v727
      %v729 = vrot.slane %v690, 5
      %v730 = vrot.slane %v729, 4
      %v731 = vrot.slane %v691, 5
      %v732 = vsel %vm720, %v730, %v731
      %v733 = vrot.slane %v692, 5
      %v734 = vrot.slane %v733, 4
      %v735 = vrot.slane %v693, 5
      %v736 = vsel %vm720, %v734, %v735
      %v737 = vrot.slane %v694, 5
      %v738 = vrot.slane %v737, 4
      %v739 = vrot.slane %v695, 5
      %v740 = vsel %vm720, %v738, %v739
      %v741 = vrot.slane %v696, 5
      %v742 = vrot.slane %v741, 4
      %v743 = vrot.slane %v697, 5
      %v744 = vsel %vm720, %v742, %v743
      %v745 = vrot.slane %v698, 5
      %v746 = vrot.slane %v745, 4
      %v747 = vrot.slane %v699, 5
      %v748 = vsel %vm720, %v746, %v747
      %v749 = vrot.slane %v700, 5
      %v750 = vrot.slane %v749, 4
      %v751 = vrot.slane %v701, 5
      %v752 = vsel %vm720, %v750, %v751
      %s753 = scalar_lea.vmem %s1, 128
      %v754 = vld [vmem:[%s753] sm:$0xf]
      %v755 = vld [vmem:[%s753 + $0x4] sm:$0xf]
      %v756 = vld [vmem:[%s753 + $0x8] sm:$0xf]
      %v757 = vld [vmem:[%s753 + $0xc] sm:$0xf]
      %v758 = vld [vmem:[%s753 + $0x10] sm:$0xf]
      %v759 = vld [vmem:[%s753 + $0x14] sm:$0xf]
      %v760 = vld [vmem:[%s753 + $0x18] sm:$0xf]
      %v761 = vld [vmem:[%s753 + $0x1c] sm:$0xf]
      %v762 = vld [vmem:[%s753 + $0x20] sm:$0xf]
      %v763 = vld [vmem:[%s753 + $0x24] sm:$0xf]
      %v764 = vld [vmem:[%s753 + $0x28] sm:$0xf]
      %v765 = vld [vmem:[%s753 + $0x2c] sm:$0xf]
      %v766 = vld [vmem:[%s753 + $0x30] sm:$0xf]
      %v767 = vld [vmem:[%s753 + $0x34] sm:$0xf]
      %v768 = vld [vmem:[%s753 + $0x38] sm:$0xf]
      %v769 = vld [vmem:[%s753 + $0x3c] sm:$0xf]
      %v770 = vunpack.c.l.b16 %v724
      %v771 = vunpack.c.l.b16 %v728
      %v772 = vunpack.c.l.b16 %v732
      %v773 = vunpack.c.l.b16 %v736
      %v774 = vunpack.c.l.b16 %v740
      %v775 = vunpack.c.l.b16 %v744
      %v776 = vunpack.c.l.b16 %v748
      %v777 = vunpack.c.l.b16 %v752
      %v778 = vpack.c.b16 %v771, %v770
      %v779 = vpack.c.b16 %v773, %v772
      %v780 = vpack.c.b16 %v775, %v774
      %v781 = vpack.c.b16 %v777, %v776
      %v802 = vunpack.c.l.b16 %v754
      %v803 = vunpack.c.l.b16 %v755
      %v804 = vunpack.c.l.b16 %v756
      %v805 = vunpack.c.l.b16 %v757
      %v806 = vunpack.c.l.b16 %v758
      %v807 = vunpack.c.l.b16 %v759
      %v808 = vunpack.c.l.b16 %v760
      %v809 = vunpack.c.l.b16 %v761
      %v810 = vunpack.c.l.b16 %v762
      %v811 = vunpack.c.l.b16 %v763
      %v812 = vunpack.c.l.b16 %v764
      %v813 = vunpack.c.l.b16 %v765
      %v814 = vunpack.c.l.b16 %v766
      %v815 = vunpack.c.l.b16 %v767
      %v816 = vunpack.c.l.b16 %v768
      %v817 = vunpack.c.l.b16 %v769
      %v818 = vpack.c.b16 %v803, %v802
      %v819 = vpack.c.b16 %v805, %v804
      %v820 = vpack.c.b16 %v807, %v806
      %v821 = vpack.c.b16 %v809, %v808
      %v822 = vpack.c.b16 %v811, %v810
      %v823 = vpack.c.b16 %v813, %v812
      %v824 = vpack.c.b16 %v815, %v814
      %v825 = vpack.c.b16 %v817, %v816
      %834 = vmatprep.subr.bf16.mxu0 0
      %835 = vmatpush1.bf16.msra.mxu0 %v818
      %836 = vmatprep.subr.bf16.mxu0 0
      %837 = vmatpush1.bf16.msra.mxu0 %v819
      %838 = vmatprep.subr.bf16.mxu0 0
      %839 = vmatpush1.bf16.msra.mxu0 %v820
      %840 = vmatprep.subr.bf16.mxu0 0
      %841 = vmatpush1.bf16.msra.mxu0 %v821
      %842 = vmatprep.subr.bf16.mxu0 0
      %843 = vmatpush1.bf16.msra.mxu0 %v822
      %844 = vmatprep.subr.bf16.mxu0 0
      %845 = vmatpush1.bf16.msra.mxu0 %v823
      %846 = vmatprep.subr.bf16.mxu0 0
      %847 = vmatpush1.bf16.msra.mxu0 %v824
      %848 = vmatprep.subr.bf16.mxu0 0
      %849 = vmatpush1.bf16.msra.mxu0 %v825
      %850 = vmatprep.subr.bf16.mxu0 0
      %851 = vmatpush1.bf16.msra.mxu0 0
      %852 = vmatprep.subr.bf16.mxu0 0
      %853 = vmatpush1.bf16.msra.mxu0 0
      %854 = vmatprep.subr.bf16.mxu0 0
      %855 = vmatpush1.bf16.msra.mxu0 0
      %856 = vmatprep.subr.bf16.mxu0 0
      %857 = vmatpush1.bf16.msra.mxu0 0
      %858 = vmatprep.subr.bf16.mxu0 0
      %859 = vmatpush1.bf16.msra.mxu0 0
      %860 = vmatprep.subr.bf16.mxu0 0
      %861 = vmatpush1.bf16.msra.mxu0 0
      %862 = vmatprep.subr.bf16.mxu0 0
      %863 = vmatpush1.bf16.msra.mxu0 0
      %864 = vmatprep.subr.bf16.mxu0 0
      %865 = vmatpush1.bf16.msra.mxu0 0
      %866 = vmatprep.mubr.bf16.mxu0 0
      %867 = vmatmul.mubr.bf16.gmra.mrb[0].mxu0 %v778
      %v868 = vpop.f32.mrb[0].mxu0
      %v869 = vadd.f32 0.0, %v868
      %v870 = vpop.f32.mrb[0].mxu0
      %v871 = vpop.f32.mrb[0].mxu0
      %v872 = vadd.f32 0.0, %v871
      %v873 = vpop.f32.mrb[0].mxu0
      %874 = vmatprep.mubr.bf16.mxu0 0
      %875 = vmatmul.mubr.bf16.gmra.mrb[0].mxu0 %v779
      %v876 = vpop.f32.mrb[0].mxu0
      %v877 = vadd.f32 0.0, %v876
      %v878 = vpop.f32.mrb[0].mxu0
      %v879 = vpop.f32.mrb[0].mxu0
      %v880 = vadd.f32 0.0, %v879
      %v881 = vpop.f32.mrb[0].mxu0
      %882 = vmatprep.mubr.bf16.mxu0 0
      %883 = vmatmul.mubr.bf16.gmra.mrb[0].mxu0 %v780
      %v884 = vpop.f32.mrb[0].mxu0
      %v885 = vadd.f32 0.0, %v884
      %v886 = vpop.f32.mrb[0].mxu0
      %v887 = vpop.f32.mrb[0].mxu0
      %v888 = vadd.f32 0.0, %v887
      %v889 = vpop.f32.mrb[0].mxu0
      %890 = vmatprep.mubr.bf16.mxu0 0
      %891 = vmatmul.mubr.bf16.gmra.mrb[0].mxu0 %v781
      %v892 = vpop.f32.mrb[0].mxu0
      %v893 = vadd.f32 0.0, %v892
      %v894 = vpop.f32.mrb[0].mxu0
      %v895 = vpop.f32.mrb[0].mxu0
      %v896 = vadd.f32 0.0, %v895
      %v897 = vpop.f32.mrb[0].mxu0
      %898 = vdwg.mxu0
      %v899 = vld [vmem:[#allocation2] sm:$0xff]
      %v900 = vld [vmem:[#allocation2 + $0x8] sm:$0xff]
      %v901 = vld [vmem:[#allocation2 + $0x10] sm:$0xff]
      %v902 = vld [vmem:[#allocation2 + $0x18] sm:$0xff]
      %v903 = vld [vmem:[#allocation2 + $0x20] sm:$0xff]
      %v904 = vld [vmem:[#allocation2 + $0x28] sm:$0xff]
      %v905 = vld [vmem:[#allocation2 + $0x30] sm:$0xff]
      %v906 = vld [vmem:[#allocation2 + $0x38] sm:$0xff]
      %v907 = vadd.f32 %v899, %v869
      %v908 = vadd.f32 %v900, %v872
      %v909 = vadd.f32 %v901, %v877
      %v910 = vadd.f32 %v902, %v880
      %v911 = vadd.f32 %v903, %v885
      %v912 = vadd.f32 %v904, %v888
      %v913 = vadd.f32 %v905, %v893
      %v914 = vadd.f32 %v906, %v896
      %915 = vst [vmem:[#allocation2] sm:$0xff] %v907
      %916 = vst [vmem:[#allocation2 + $0x8] sm:$0xff] %v908
      %917 = vst [vmem:[#allocation2 + $0x10] sm:$0xff] %v909
      %918 = vst [vmem:[#allocation2 + $0x18] sm:$0xff] %v910
      %919 = vst [vmem:[#allocation2 + $0x20] sm:$0xff] %v911
      %920 = vst [vmem:[#allocation2 + $0x28] sm:$0xff] %v912
      %921 = vst [vmem:[#allocation2 + $0x30] sm:$0xff] %v913
      %922 = vst [vmem:[#allocation2 + $0x38] sm:$0xff] %v914
      %s923 = scalar_lea.vmem %s203, 8
      %v924 = vld [vmem:[%s923] sm:$0xf]
      %v925 = vld [vmem:[%s923 + $0x8] sm:$0xf]
      %v926 = vld [vmem:[%s923 + $0x10] sm:$0xf]
      %v927 = vld [vmem:[%s923 + $0x18] sm:$0xf]
      %v928 = vld [vmem:[%s923 + $0x20] sm:$0xf]
      %v929 = vld [vmem:[%s923 + $0x28] sm:$0xf]
      %v930 = vld [vmem:[%s923 + $0x30] sm:$0xf]
      %v931 = vld [vmem:[%s923 + $0x38] sm:$0xf]
      %s932 = scalar_lea.vmem %s1, 192
      %v933 = vld [vmem:[%s932] sm:$0xf]
      %v934 = vld [vmem:[%s932 + $0x4] sm:$0xf]
      %v935 = vld [vmem:[%s932 + $0x8] sm:$0xf]
      %v936 = vld [vmem:[%s932 + $0xc] sm:$0xf]
      %v937 = vld [vmem:[%s932 + $0x10] sm:$0xf]
      %v938 = vld [vmem:[%s932 + $0x14] sm:$0xf]
      %v939 = vld [vmem:[%s932 + $0x18] sm:$0xf]
      %v940 = vld [vmem:[%s932 + $0x1c] sm:$0xf]
      %v941 = vld [vmem:[%s932 + $0x20] sm:$0xf]
      %v942 = vld [vmem:[%s932 + $0x24] sm:$0xf]
      %v943 = vld [vmem:[%s932 + $0x28] sm:$0xf]
      %v944 = vld [vmem:[%s932 + $0x2c] sm:$0xf]
      %v945 = vld [vmem:[%s932 + $0x30] sm:$0xf]
      %v946 = vld [vmem:[%s932 + $0x34] sm:$0xf]
      %v947 = vld [vmem:[%s932 + $0x38] sm:$0xf]
      %v948 = vld [vmem:[%s932 + $0x3c] sm:$0xf]
      %v957 = vunpack.c.l.b16 %v924
      %v958 = vunpack.c.l.b16 %v925
      %v959 = vunpack.c.l.b16 %v926
      %v960 = vunpack.c.l.b16 %v927
      %v961 = vunpack.c.l.b16 %v928
      %v962 = vunpack.c.l.b16 %v929
      %v963 = vunpack.c.l.b16 %v930
      %v964 = vunpack.c.l.b16 %v931
      %v965 = vpack.c.b16 %v958, %v957
      %v966 = vpack.c.b16 %v960, %v959
      %v967 = vpack.c.b16 %v962, %v961
      %v968 = vpack.c.b16 %v964, %v963
      %v989 = vunpack.c.l.b16 %v933
      %v990 = vunpack.c.l.b16 %v934
      %v991 = vunpack.c.l.b16 %v935
      %v992 = vunpack.c.l.b16 %v936
      %v993 = vunpack.c.l.b16 %v937
      %v994 = vunpack.c.l.b16 %v938
      %v995 = vunpack.c.l.b16 %v939
      %v996 = vunpack.c.l.b16 %v940
      %v997 = vunpack.c.l.b16 %v941
      %v998 = vunpack.c.l.b16 %v942
      %v999 = vunpack.c.l.b16 %v943
      %v1000 = vunpack.c.l.b16 %v944
      %v1001 = vunpack.c.l.b16 %v945
      %v1002 = vunpack.c.l.b16 %v946
      %v1003 = vunpack.c.l.b16 %v947
      %v1004 = vunpack.c.l.b16 %v948
      %v1005 = vpack.c.b16 %v990, %v989
      %v1006 = vpack.c.b16 %v992, %v991
      %v1007 = vpack.c.b16 %v994, %v993
      %v1008 = vpack.c.b16 %v996, %v995
      %v1009 = vpack.c.b16 %v998, %v997
      %v1010 = vpack.c.b16 %v1000, %v999
      %v1011 = vpack.c.b16 %v1002, %v1001
      %v1012 = vpack.c.b16 %v1004, %v1003
      %1021 = vmatprep.subr.bf16.mxu0 0
      %1022 = vmatpush1.bf16.msra.mxu0 %v1005
      %1023 = vmatprep.subr.bf16.mxu0 0
      %1024 = vmatpush1.bf16.msra.mxu0 %v1006
      %1025 = vmatprep.subr.bf16.mxu0 0
      %1026 = vmatpush1.bf16.msra.mxu0 %v1007
      %1027 = vmatprep.subr.bf16.mxu0 0
      %1028 = vmatpush1.bf16.msra.mxu0 %v1008
      %1029 = vmatprep.subr.bf16.mxu0 0
      %1030 = vmatpush1.bf16.msra.mxu0 %v1009
      %1031 = vmatprep.subr.bf16.mxu0 0
      %1032 = vmatpush1.bf16.msra.mxu0 %v1010
      %1033 = vmatprep.subr.bf16.mxu0 0
      %1034 = vmatpush1.bf16.msra.mxu0 %v1011
      %1035 = vmatprep.subr.bf16.mxu0 0
      %1036 = vmatpush1.bf16.msra.mxu0 %v1012
      %1037 = vmatprep.subr.bf16.mxu0 0
      %1038 = vmatpush1.bf16.msra.mxu0 0
      %1039 = vmatprep.subr.bf16.mxu0 0
      %1040 = vmatpush1.bf16.msra.mxu0 0
      %1041 = vmatprep.subr.bf16.mxu0 0
      %1042 = vmatpush1.bf16.msra.mxu0 0
      %1043 = vmatprep.subr.bf16.mxu0 0
      %1044 = vmatpush1.bf16.msra.mxu0 0
      %1045 = vmatprep.subr.bf16.mxu0 0
      %1046 = vmatpush1.bf16.msra.mxu0 0
      %1047 = vmatprep.subr.bf16.mxu0 0
      %1048 = vmatpush1.bf16.msra.mxu0 0
      %1049 = vmatprep.subr.bf16.mxu0 0
      %1050 = vmatpush1.bf16.msra.mxu0 0
      %1051 = vmatprep.subr.bf16.mxu0 0
      %1052 = vmatpush1.bf16.msra.mxu0 0
      %1053 = vmatprep.mubr.bf16.mxu0 0
      %1054 = vmatmul.mubr.bf16.gmra.mrb[0].mxu0 %v965
      %v1055 = vpop.f32.mrb[0].mxu0
      %v1056 = vadd.f32 0.0, %v1055
      %v1057 = vpop.f32.mrb[0].mxu0
      %v1058 = vpop.f32.mrb[0].mxu0
      %v1059 = vadd.f32 0.0, %v1058
      %v1060 = vpop.f32.mrb[0].mxu0
      %1061 = vmatprep.mubr.bf16.mxu0 0
      %1062 = vmatmul.mubr.bf16.gmra.mrb[0].mxu0 %v966
      %v1063 = vpop.f32.mrb[0].mxu0
      %v1064 = vadd.f32 0.0, %v1063
      %v1065 = vpop.f32.mrb[0].mxu0
      %v1066 = vpop.f32.mrb[0].mxu0
      %v1067 = vadd.f32 0.0, %v1066
      %v1068 = vpop.f32.mrb[0].mxu0
      %1069 = vmatprep.mubr.bf16.mxu0 0
      %1070 = vmatmul.mubr.bf16.gmra.mrb[0].mxu0 %v967
      %v1071 = vpop.f32.mrb[0].mxu0
      %v1072 = vadd.f32 0.0, %v1071
      %v1073 = vpop.f32.mrb[0].mxu0
      %v1074 = vpop.f32.mrb[0].mxu0
      %v1075 = vadd.f32 0.0, %v1074
      %v1076 = vpop.f32.mrb[0].mxu0
      %1077 = vmatprep.mubr.bf16.mxu0 0
      %1078 = vmatmul.mubr.bf16.gmra.mrb[0].mxu0 %v968
      %v1079 = vpop.f32.mrb[0].mxu0
      %v1080 = vadd.f32 0.0, %v1079
      %v1081 = vpop.f32.mrb[0].mxu0
      %v1082 = vpop.f32.mrb[0].mxu0
      %v1083 = vadd.f32 0.0, %v1082
      %v1084 = vpop.f32.mrb[0].mxu0
      %1085 = vdwg.mxu0
      %v1086 = vld [vmem:[#allocation2] sm:$0xff]
      %v1087 = vld [vmem:[#allocation2 + $0x8] sm:$0xff]
      %v1088 = vld [vmem:[#allocation2 + $0x10] sm:$0xff]
      %v1089 = vld [vmem:[#allocation2 + $0x18] sm:$0xff]
      %v1090 = vld [vmem:[#allocation2 + $0x20] sm:$0xff]
      %v1091 = vld [vmem:[#allocation2 + $0x28] sm:$0xff]
      %v1092 = vld [vmem:[#allocation2 + $0x30] sm:$0xff]
      %v1093 = vld [vmem:[#allocation2 + $0x38] sm:$0xff]
      %v1094 = vadd.f32 %v1086, %v1056
      %v1095 = vadd.f32 %v1087, %v1059
      %v1096 = vadd.f32 %v1088, %v1064
      %v1097 = vadd.f32 %v1089, %v1067
      %v1098 = vadd.f32 %v1090, %v1072
      %v1099 = vadd.f32 %v1091, %v1075
      %v1100 = vadd.f32 %v1092, %v1080
      %v1101 = vadd.f32 %v1093, %v1083
      %1102 = vst [vmem:[#allocation2] sm:$0xff] %v1094
      %1103 = vst [vmem:[#allocation2 + $0x8] sm:$0xff] %v1095
      %1104 = vst [vmem:[#allocation2 + $0x10] sm:$0xff] %v1096
      %1105 = vst [vmem:[#allocation2 + $0x18] sm:$0xff] %v1097
      %1106 = vst [vmem:[#allocation2 + $0x20] sm:$0xff] %v1098
      %1107 = vst [vmem:[#allocation2 + $0x28] sm:$0xff] %v1099
      %1108 = vst [vmem:[#allocation2 + $0x30] sm:$0xff] %v1100
      %1109 = vst [vmem:[#allocation2 + $0x38] sm:$0xff] %v1101
      %v1110 = vld [vmem:[%s923] sm:$0xf]
      %v1111 = vld [vmem:[%s923 + $0x4] sm:$0x1]
      %v1112 = vld [vmem:[%s923 + $0x8] sm:$0xf]
      %v1113 = vld [vmem:[%s923 + $0xc] sm:$0x1]
      %v1114 = vld [vmem:[%s923 + $0x10] sm:$0xf]
      %v1115 = vld [vmem:[%s923 + $0x14] sm:$0x1]
      %v1116 = vld [vmem:[%s923 + $0x18] sm:$0xf]
      %v1117 = vld [vmem:[%s923 + $0x1c] sm:$0x1]
      %v1118 = vld [vmem:[%s923 + $0x20] sm:$0xf]
      %v1119 = vld [vmem:[%s923 + $0x24] sm:$0x1]
      %v1120 = vld [vmem:[%s923 + $0x28] sm:$0xf]
      %v1121 = vld [vmem:[%s923 + $0x2c] sm:$0x1]
      %v1122 = vld [vmem:[%s923 + $0x30] sm:$0xf]
      %v1123 = vld [vmem:[%s923 + $0x34] sm:$0x1]
      %v1124 = vld [vmem:[%s923 + $0x38] sm:$0xf]
      %v1125 = vld [vmem:[%s923 + $0x3c] sm:$0x1]
      %v1127 = vshrl.u32 %v1110, 16
      %v1129 = vrot.slane %v1127, 4
      %v1130 = vshll.u32 %v1110, 16
      %v1132 = vrot.slane %v1130, 5
      %v1133 = vor.u32 %v1129, %v1132
      %v1134 = vrot.slane %v1133, 4
      %v1136 = vshll.u32 %v1111, 16
      %v1138 = vrot.slane %v1136, 5
      %v1139 = vsel %vm403, %v1134, %v1138
      %v1141 = vshrl.u32 %v1112, 16
      %v1143 = vrot.slane %v1141, 4
      %v1144 = vshll.u32 %v1112, 16
      %v1146 = vrot.slane %v1144, 5
      %v1147 = vor.u32 %v1143, %v1146
      %v1148 = vrot.slane %v1147, 4
      %v1150 = vshll.u32 %v1113, 16
      %v1152 = vrot.slane %v1150, 5
      %v1153 = vsel %vm403, %v1148, %v1152
      %v1155 = vshrl.u32 %v1114, 16
      %v1157 = vrot.slane %v1155, 4
      %v1158 = vshll.u32 %v1114, 16
      %v1160 = vrot.slane %v1158, 5
      %v1161 = vor.u32 %v1157, %v1160
      %v1162 = vrot.slane %v1161, 4
      %v1164 = vshll.u32 %v1115, 16
      %v1166 = vrot.slane %v1164, 5
      %v1167 = vsel %vm403, %v1162, %v1166
      %v1169 = vshrl.u32 %v1116, 16
      %v1171 = vrot.slane %v1169, 4
      %v1172 = vshll.u32 %v1116, 16
      %v1174 = vrot.slane %v1172, 5
      %v1175 = vor.u32 %v1171, %v1174
      %v1176 = vrot.slane %v1175, 4
      %v1178 = vshll.u32 %v1117, 16
      %v1180 = vrot.slane %v1178, 5
      %v1181 = vsel %vm403, %v1176, %v1180
      %v1183 = vshrl.u32 %v1118, 16
      %v1185 = vrot.slane %v1183, 4
      %v1186 = vshll.u32 %v1118, 16
      %v1188 = vrot.slane %v1186, 5
      %v1189 = vor.u32 %v1185, %v1188
      %v1190 = vrot.slane %v1189, 4
      %v1192 = vshll.u32 %v1119, 16
      %v1194 = vrot.slane %v1192, 5
      %v1195 = vsel %vm403, %v1190, %v1194
      %v1197 = vshrl.u32 %v1120, 16
      %v1199 = vrot.slane %v1197, 4
      %v1200 = vshll.u32 %v1120, 16
      %v1202 = vrot.slane %v1200, 5
      %v1203 = vor.u32 %v1199, %v1202
      %v1204 = vrot.slane %v1203, 4
      %v1206 = vshll.u32 %v1121, 16
      %v1208 = vrot.slane %v1206, 5
      %v1209 = vsel %vm403, %v1204, %v1208
      %v1211 = vshrl.u32 %v1122, 16
      %v1213 = vrot.slane %v1211, 4
      %v1214 = vshll.u32 %v1122, 16
      %v1216 = vrot.slane %v1214, 5
      %v1217 = vor.u32 %v1213, %v1216
      %v1218 = vrot.slane %v1217, 4
      %v1220 = vshll.u32 %v1123, 16
      %v1222 = vrot.slane %v1220, 5
      %v1223 = vsel %vm403, %v1218, %v1222
      %v1225 = vshrl.u32 %v1124, 16
      %v1227 = vrot.slane %v1225, 4
      %v1228 = vshll.u32 %v1124, 16
      %v1230 = vrot.slane %v1228, 5
      %v1231 = vor.u32 %v1227, %v1230
      %v1232 = vrot.slane %v1231, 4
      %v1234 = vshll.u32 %v1125, 16
      %v1236 = vrot.slane %v1234, 5
      %v1237 = vsel %vm403, %v1232, %v1236
      %s1238 = scalar_lea.vmem %s1, 256
      %v1239 = vld [vmem:[%s1238] sm:$0xf]
      %v1240 = vld [vmem:[%s1238 + $0x4] sm:$0xf]
      %v1241 = vld [vmem:[%s1238 + $0x8] sm:$0xf]
      %v1242 = vld [vmem:[%s1238 + $0xc] sm:$0xf]
      %v1243 = vld [vmem:[%s1238 + $0x10] sm:$0xf]
      %v1244 = vld [vmem:[%s1238 + $0x14] sm:$0xf]
      %v1245 = vld [vmem:[%s1238 + $0x18] sm:$0xf]
      %v1246 = vld [vmem:[%s1238 + $0x1c] sm:$0xf]
      %v1247 = vld [vmem:[%s1238 + $0x20] sm:$0xf]
      %v1248 = vld [vmem:[%s1238 + $0x24] sm:$0xf]
      %v1249 = vld [vmem:[%s1238 + $0x28] sm:$0xf]
      %v1250 = vld [vmem:[%s1238 + $0x2c] sm:$0xf]
      %v1251 = vld [vmem:[%s1238 + $0x30] sm:$0xf]
      %v1252 = vld [vmem:[%s1238 + $0x34] sm:$0xf]
      %v1253 = vld [vmem:[%s1238 + $0x38] sm:$0xf]
      %v1254 = vld [vmem:[%s1238 + $0x3c] sm:$0xf]
      %v1255 = vunpack.c.l.b16 %v1139
      %v1256 = vunpack.c.l.b16 %v1153
      %v1257 = vunpack.c.l.b16 %v1167
      %v1258 = vunpack.c.l.b16 %v1181
      %v1259 = vunpack.c.l.b16 %v1195
      %v1260 = vunpack.c.l.b16 %v1209
      %v1261 = vunpack.c.l.b16 %v1223
      %v1262 = vunpack.c.l.b16 %v1237
      %v1263 = vpack.c.b16 %v1256, %v1255
      %v1264 = vpack.c.b16 %v1258, %v1257
      %v1265 = vpack.c.b16 %v1260, %v1259
      %v1266 = vpack.c.b16 %v1262, %v1261
      %v1287 = vunpack.c.l.b16 %v1239
      %v1288 = vunpack.c.l.b16 %v1240
      %v1289 = vunpack.c.l.b16 %v1241
      %v1290 = vunpack.c.l.b16 %v1242
      %v1291 = vunpack.c.l.b16 %v1243
      %v1292 = vunpack.c.l.b16 %v1244
      %v1293 = vunpack.c.l.b16 %v1245
      %v1294 = vunpack.c.l.b16 %v1246
      %v1295 = vunpack.c.l.b16 %v1247
      %v1296 = vunpack.c.l.b16 %v1248
      %v1297 = vunpack.c.l.b16 %v1249
      %v1298 = vunpack.c.l.b16 %v1250
      %v1299 = vunpack.c.l.b16 %v1251
      %v1300 = vunpack.c.l.b16 %v1252
      %v1301 = vunpack.c.l.b16 %v1253
      %v1302 = vunpack.c.l.b16 %v1254
      %v1303 = vpack.c.b16 %v1288, %v1287
      %v1304 = vpack.c.b16 %v1290, %v1289
      %v1305 = vpack.c.b16 %v1292, %v1291
      %v1306 = vpack.c.b16 %v1294, %v1293
      %v1307 = vpack.c.b16 %v1296, %v1295
      %v1308 = vpack.c.b16 %v1298, %v1297
      %v1309 = vpack.c.b16 %v1300, %v1299
      %v1310 = vpack.c.b16 %v1302, %v1301
      %1319 = vmatprep.subr.bf16.mxu0 0
      %1320 = vmatpush1.bf16.msra.mxu0 %v1303
      %1321 = vmatprep.subr.bf16.mxu0 0
      %1322 = vmatpush1.bf16.msra.mxu0 %v1304
      %1323 = vmatprep.subr.bf16.mxu0 0
      %1324 = vmatpush1.bf16.msra.mxu0 %v1305
      %1325 = vmatprep.subr.bf16.mxu0 0
      %1326 = vmatpush1.bf16.msra.mxu0 %v1306
      %1327 = vmatprep.subr.bf16.mxu0 0
      %1328 = vmatpush1.bf16.msra.mxu0 %v1307
      %1329 = vmatprep.subr.bf16.mxu0 0
      %1330 = vmatpush1.bf16.msra.mxu0 %v1308
      %1331 = vmatprep.subr.bf16.mxu0 0
      %1332 = vmatpush1.bf16.msra.mxu0 %v1309
      %1333 = vmatprep.subr.bf16.mxu0 0
      %1334 = vmatpush1.bf16.msra.mxu0 %v1310
      %1335 = vmatprep.subr.bf16.mxu0 0
      %1336 = vmatpush1.bf16.msra.mxu0 0
      %1337 = vmatprep.subr.bf16.mxu0 0
      %1338 = vmatpush1.bf16.msra.mxu0 0
      %1339 = vmatprep.subr.bf16.mxu0 0
      %1340 = vmatpush1.bf16.msra.mxu0 0
      %1341 = vmatprep.subr.bf16.mxu0 0
      %1342 = vmatpush1.bf16.msra.mxu0 0
      %1343 = vmatprep.subr.bf16.mxu0 0
      %1344 = vmatpush1.bf16.msra.mxu0 0
      %1345 = vmatprep.subr.bf16.mxu0 0
      %1346 = vmatpush1.bf16.msra.mxu0 0
      %1347 = vmatprep.subr.bf16.mxu0 0
      %1348 = vmatpush1.bf16.msra.mxu0 0
      %1349 = vmatprep.subr.bf16.mxu0 0
      %1350 = vmatpush1.bf16.msra.mxu0 0
      %1351 = vmatprep.mubr.bf16.mxu0 0
      %1352 = vmatmul.mubr.bf16.gmra.mrb[0].mxu0 %v1263
      %v1353 = vpop.f32.mrb[0].mxu0
      %v1354 = vadd.f32 0.0, %v1353
      %v1355 = vpop.f32.mrb[0].mxu0
      %v1356 = vpop.f32.mrb[0].mxu0
      %v1357 = vadd.f32 0.0, %v1356
      %v1358 = vpop.f32.mrb[0].mxu0
      %1359 = vmatprep.mubr.bf16.mxu0 0
      %1360 = vmatmul.mubr.bf16.gmra.mrb[0].mxu0 %v1264
      %v1361 = vpop.f32.mrb[0].mxu0
      %v1362 = vadd.f32 0.0, %v1361
      %v1363 = vpop.f32.mrb[0].mxu0
      %v1364 = vpop.f32.mrb[0].mxu0
      %v1365 = vadd.f32 0.0, %v1364
      %v1366 = vpop.f32.mrb[0].mxu0
      %1367 = vmatprep.mubr.bf16.mxu0 0
      %1368 = vmatmul.mubr.bf16.gmra.mrb[0].mxu0 %v1265
      %v1369 = vpop.f32.mrb[0].mxu0
      %v1370 = vadd.f32 0.0, %v1369
      %v1371 = vpop.f32.mrb[0].mxu0
      %v1372 = vpop.f32.mrb[0].mxu0
      %v1373 = vadd.f32 0.0, %v1372
      %v1374 = vpop.f32.mrb[0].mxu0
      %1375 = vmatprep.mubr.bf16.mxu0 0
      %1376 = vmatmul.mubr.bf16.gmra.mrb[0].mxu0 %v1266
      %v1377 = vpop.f32.mrb[0].mxu0
      %v1378 = vadd.f32 0.0, %v1377
      %v1379 = vpop.f32.mrb[0].mxu0
      %v1380 = vpop.f32.mrb[0].mxu0
      %v1381 = vadd.f32 0.0, %v1380
      %v1382 = vpop.f32.mrb[0].mxu0
      %1383 = vdwg.mxu0
      %v1384 = vld [vmem:[#allocation2] sm:$0xff]
      %v1385 = vld [vmem:[#allocation2 + $0x8] sm:$0xff]
      %v1386 = vld [vmem:[#allocation2 + $0x10] sm:$0xff]
      %v1387 = vld [vmem:[#allocation2 + $0x18] sm:$0xff]
      %v1388 = vld [vmem:[#allocation2 + $0x20] sm:$0xff]
      %v1389 = vld [vmem:[#allocation2 + $0x28] sm:$0xff]
      %v1390 = vld [vmem:[#allocation2 + $0x30] sm:$0xff]
      %v1391 = vld [vmem:[#allocation2 + $0x38] sm:$0xff]
      %v1392 = vadd.f32 %v1384, %v1354
      %v1393 = vadd.f32 %v1385, %v1357
      %v1394 = vadd.f32 %v1386, %v1362
      %v1395 = vadd.f32 %v1387, %v1365
      %v1396 = vadd.f32 %v1388, %v1370
      %v1397 = vadd.f32 %v1389, %v1373
      %v1398 = vadd.f32 %v1390, %v1378
      %v1399 = vadd.f32 %v1391, %v1381
      %1400 = vst [vmem:[#allocation2] sm:$0xff] %v1392
      %1401 = vst [vmem:[#allocation2 + $0x8] sm:$0xff] %v1393
      %1402 = vst [vmem:[#allocation2 + $0x10] sm:$0xff] %v1394
      %1403 = vst [vmem:[#allocation2 + $0x18] sm:$0xff] %v1395
      %1404 = vst [vmem:[#allocation2 + $0x20] sm:$0xff] %v1396
      %1405 = vst [vmem:[#allocation2 + $0x28] sm:$0xff] %v1397
      %1406 = vst [vmem:[#allocation2 + $0x30] sm:$0xff] %v1398
      %1407 = vst [vmem:[#allocation2 + $0x38] sm:$0xff] %v1399
      %v1408 = vld [vmem:[%s923] sm:$0xe]
      %v1409 = vld [vmem:[%s923 + $0x4] sm:$0x1]
      %v1410 = vld [vmem:[%s923 + $0x8] sm:$0xe]
      %v1411 = vld [vmem:[%s923 + $0xc] sm:$0x1]
      %v1412 = vld [vmem:[%s923 + $0x10] sm:$0xe]
      %v1413 = vld [vmem:[%s923 + $0x14] sm:$0x1]
      %v1414 = vld [vmem:[%s923 + $0x18] sm:$0xe]
      %v1415 = vld [vmem:[%s923 + $0x1c] sm:$0x1]
      %v1416 = vld [vmem:[%s923 + $0x20] sm:$0xe]
      %v1417 = vld [vmem:[%s923 + $0x24] sm:$0x1]
      %v1418 = vld [vmem:[%s923 + $0x28] sm:$0xe]
      %v1419 = vld [vmem:[%s923 + $0x2c] sm:$0x1]
      %v1420 = vld [vmem:[%s923 + $0x30] sm:$0xe]
      %v1421 = vld [vmem:[%s923 + $0x34] sm:$0x1]
      %v1422 = vld [vmem:[%s923 + $0x38] sm:$0xe]
      %v1423 = vld [vmem:[%s923 + $0x3c] sm:$0x1]
      %v1440 = vrot.slane %v1408, 5
      %v1441 = vrot.slane %v1440, 4
      %v1442 = vrot.slane %v1409, 5
      %v1443 = vsel %vm720, %v1441, %v1442
      %v1444 = vrot.slane %v1410, 5
      %v1445 = vrot.slane %v1444, 4
      %v1446 = vrot.slane %v1411, 5
      %v1447 = vsel %vm720, %v1445, %v1446
      %v1448 = vrot.slane %v1412, 5
      %v1449 = vrot.slane %v1448, 4
      %v1450 = vrot.slane %v1413, 5
      %v1451 = vsel %vm720, %v1449, %v1450
      %v1452 = vrot.slane %v1414, 5
      %v1453 = vrot.slane %v1452, 4
      %v1454 = vrot.slane %v1415, 5
      %v1455 = vsel %vm720, %v1453, %v1454
      %v1456 = vrot.slane %v1416, 5
      %v1457 = vrot.slane %v1456, 4
      %v1458 = vrot.slane %v1417, 5
      %v1459 = vsel %vm720, %v1457, %v1458
      %v1460 = vrot.slane %v1418, 5
      %v1461 = vrot.slane %v1460, 4
      %v1462 = vrot.slane %v1419, 5
      %v1463 = vsel %vm720, %v1461, %v1462
      %v1464 = vrot.slane %v1420, 5
      %v1465 = vrot.slane %v1464, 4
      %v1466 = vrot.slane %v1421, 5
      %v1467 = vsel %vm720, %v1465, %v1466
      %v1468 = vrot.slane %v1422, 5
      %v1469 = vrot.slane %v1468, 4
      %v1470 = vrot.slane %v1423, 5
      %v1471 = vsel %vm720, %v1469, %v1470
      %s1472 = scalar_lea.vmem %s1, 320
      %v1473 = vld [vmem:[%s1472] sm:$0xf]
      %v1474 = vld [vmem:[%s1472 + $0x4] sm:$0xf]
      %v1475 = vld [vmem:[%s1472 + $0x8] sm:$0xf]
      %v1476 = vld [vmem:[%s1472 + $0xc] sm:$0xf]
      %v1477 = vld [vmem:[%s1472 + $0x10] sm:$0xf]
      %v1478 = vld [vmem:[%s1472 + $0x14] sm:$0xf]
      %v1479 = vld [vmem:[%s1472 + $0x18] sm:$0xf]
      %v1480 = vld [vmem:[%s1472 + $0x1c] sm:$0xf]
      %v1481 = vld [vmem:[%s1472 + $0x20] sm:$0xf]
      %v1482 = vld [vmem:[%s1472 + $0x24] sm:$0xf]
      %v1483 = vld [vmem:[%s1472 + $0x28] sm:$0xf]
      %v1484 = vld [vmem:[%s1472 + $0x2c] sm:$0xf]
      %v1485 = vld [vmem:[%s1472 + $0x30] sm:$0xf]
      %v1486 = vld [vmem:[%s1472 + $0x34] sm:$0xf]
      %v1487 = vld [vmem:[%s1472 + $0x38] sm:$0xf]
      %v1488 = vld [vmem:[%s1472 + $0x3c] sm:$0xf]
      %v1489 = vunpack.c.l.b16 %v1443
      %v1490 = vunpack.c.l.b16 %v1447
      %v1491 = vunpack.c.l.b16 %v1451
      %v1492 = vunpack.c.l.b16 %v1455
      %v1493 = vunpack.c.l.b16 %v1459
      %v1494 = vunpack.c.l.b16 %v1463
      %v1495 = vunpack.c.l.b16 %v1467
      %v1496 = vunpack.c.l.b16 %v1471
      %v1497 = vpack.c.b16 %v1490, %v1489
      %v1498 = vpack.c.b16 %v1492, %v1491
      %v1499 = vpack.c.b16 %v1494, %v1493
      %v1500 = vpack.c.b16 %v1496, %v1495
      %v1521 = vunpack.c.l.b16 %v1473
      %v1522 = vunpack.c.l.b16 %v1474
      %v1523 = vunpack.c.l.b16 %v1475
      %v1524 = vunpack.c.l.b16 %v1476
      %v1525 = vunpack.c.l.b16 %v1477
      %v1526 = vunpack.c.l.b16 %v1478
      %v1527 = vunpack.c.l.b16 %v1479
      %v1528 = vunpack.c.l.b16 %v1480
      %v1529 = vunpack.c.l.b16 %v1481
      %v1530 = vunpack.c.l.b16 %v1482
      %v1531 = vunpack.c.l.b16 %v1483
      %v1532 = vunpack.c.l.b16 %v1484
      %v1533 = vunpack.c.l.b16 %v1485
      %v1534 = vunpack.c.l.b16 %v1486
      %v1535 = vunpack.c.l.b16 %v1487
      %v1536 = vunpack.c.l.b16 %v1488
      %v1537 = vpack.c.b16 %v1522, %v1521
      %v1538 = vpack.c.b16 %v1524, %v1523
      %v1539 = vpack.c.b16 %v1526, %v1525
      %v1540 = vpack.c.b16 %v1528, %v1527
      %v1541 = vpack.c.b16 %v1530, %v1529
      %v1542 = vpack.c.b16 %v1532, %v1531
      %v1543 = vpack.c.b16 %v1534, %v1533
      %v1544 = vpack.c.b16 %v1536, %v1535
      %1553 = vmatprep.subr.bf16.mxu0 0
      %1554 = vmatpush1.bf16.msra.mxu0 %v1537
      %1555 = vmatprep.subr.bf16.mxu0 0
      %1556 = vmatpush1.bf16.msra.mxu0 %v1538
      %1557 = vmatprep.subr.bf16.mxu0 0
      %1558 = vmatpush1.bf16.msra.mxu0 %v1539
      %1559 = vmatprep.subr.bf16.mxu0 0
      %1560 = vmatpush1.bf16.msra.mxu0 %v1540
      %1561 = vmatprep.subr.bf16.mxu0 0
      %1562 = vmatpush1.bf16.msra.mxu0 %v1541
      %1563 = vmatprep.subr.bf16.mxu0 0
      %1564 = vmatpush1.bf16.msra.mxu0 %v1542
      %1565 = vmatprep.subr.bf16.mxu0 0
      %1566 = vmatpush1.bf16.msra.mxu0 %v1543
      %1567 = vmatprep.subr.bf16.mxu0 0
      %1568 = vmatpush1.bf16.msra.mxu0 %v1544
      %1569 = vmatprep.subr.bf16.mxu0 0
      %1570 = vmatpush1.bf16.msra.mxu0 0
      %1571 = vmatprep.subr.bf16.mxu0 0
      %1572 = vmatpush1.bf16.msra.mxu0 0
      %1573 = vmatprep.subr.bf16.mxu0 0
      %1574 = vmatpush1.bf16.msra.mxu0 0
      %1575 = vmatprep.subr.bf16.mxu0 0
      %1576 = vmatpush1.bf16.msra.mxu0 0
      %1577 = vmatprep.subr.bf16.mxu0 0
      %1578 = vmatpush1.bf16.msra.mxu0 0
      %1579 = vmatprep.subr.bf16.mxu0 0
      %1580 = vmatpush1.bf16.msra.mxu0 0
      %1581 = vmatprep.subr.bf16.mxu0 0
      %1582 = vmatpush1.bf16.msra.mxu0 0
      %1583 = vmatprep.subr.bf16.mxu0 0
      %1584 = vmatpush1.bf16.msra.mxu0 0
      %1585 = vmatprep.mubr.bf16.mxu0 0
      %1586 = vmatmul.mubr.bf16.gmra.mrb[0].mxu0 %v1497
      %v1587 = vpop.f32.mrb[0].mxu0
      %v1588 = vadd.f32 0.0, %v1587
      %v1589 = vpop.f32.mrb[0].mxu0
      %v1590 = vpop.f32.mrb[0].mxu0
      %v1591 = vadd.f32 0.0, %v1590
      %v1592 = vpop.f32.mrb[0].mxu0
      %1593 = vmatprep.mubr.bf16.mxu0 0
      %1594 = vmatmul.mubr.bf16.gmra.mrb[0].mxu0 %v1498
      %v1595 = vpop.f32.mrb[0].mxu0
      %v1596 = vadd.f32 0.0, %v1595
      %v1597 = vpop.f32.mrb[0].mxu0
      %v1598 = vpop.f32.mrb[0].mxu0
      %v1599 = vadd.f32 0.0, %v1598
      %v1600 = vpop.f32.mrb[0].mxu0
      %1601 = vmatprep.mubr.bf16.mxu0 0
      %1602 = vmatmul.mubr.bf16.gmra.mrb[0].mxu0 %v1499
      %v1603 = vpop.f32.mrb[0].mxu0
      %v1604 = vadd.f32 0.0, %v1603
      %v1605 = vpop.f32.mrb[0].mxu0
      %v1606 = vpop.f32.mrb[0].mxu0
      %v1607 = vadd.f32 0.0, %v1606
      %v1608 = vpop.f32.mrb[0].mxu0
      %1609 = vmatprep.mubr.bf16.mxu0 0
      %1610 = vmatmul.mubr.bf16.gmra.mrb[0].mxu0 %v1500
      %v1611 = vpop.f32.mrb[0].mxu0
      %v1612 = vadd.f32 0.0, %v1611
      %v1613 = vpop.f32.mrb[0].mxu0
      %v1614 = vpop.f32.mrb[0].mxu0
      %v1615 = vadd.f32 0.0, %v1614
      %v1616 = vpop.f32.mrb[0].mxu0
      %1617 = vdwg.mxu0
      %v1618 = vld [vmem:[#allocation2] sm:$0xff]
      %v1619 = vld [vmem:[#allocation2 + $0x8] sm:$0xff]
      %v1620 = vld [vmem:[#allocation2 + $0x10] sm:$0xff]
      %v1621 = vld [vmem:[#allocation2 + $0x18] sm:$0xff]
      %v1622 = vld [vmem:[#allocation2 + $0x20] sm:$0xff]
      %v1623 = vld [vmem:[#allocation2 + $0x28] sm:$0xff]
      %v1624 = vld [vmem:[#allocation2 + $0x30] sm:$0xff]
      %v1625 = vld [vmem:[#allocation2 + $0x38] sm:$0xff]
      %v1626 = vadd.f32 %v1618, %v1588
      %v1627 = vadd.f32 %v1619, %v1591
      %v1628 = vadd.f32 %v1620, %v1596
      %v1629 = vadd.f32 %v1621, %v1599
      %v1630 = vadd.f32 %v1622, %v1604
      %v1631 = vadd.f32 %v1623, %v1607
      %v1632 = vadd.f32 %v1624, %v1612
      %v1633 = vadd.f32 %v1625, %v1615
      %1634 = vst [vmem:[#allocation2] sm:$0xff] %v1626
      %1635 = vst [vmem:[#allocation2 + $0x8] sm:$0xff] %v1627
      %1636 = vst [vmem:[#allocation2 + $0x10] sm:$0xff] %v1628
      %1637 = vst [vmem:[#allocation2 + $0x18] sm:$0xff] %v1629
      %1638 = vst [vmem:[#allocation2 + $0x20] sm:$0xff] %v1630
      %1639 = vst [vmem:[#allocation2 + $0x28] sm:$0xff] %v1631
      %1640 = vst [vmem:[#allocation2 + $0x30] sm:$0xff] %v1632
      %1641 = vst [vmem:[#allocation2 + $0x38] sm:$0xff] %v1633
      %s1642 = scalar_lea.vmem %s203, 16
      %v1643 = vld [vmem:[%s1642] sm:$0xf]
      %v1644 = vld [vmem:[%s1642 + $0x8] sm:$0xf]
      %v1645 = vld [vmem:[%s1642 + $0x10] sm:$0xf]
      %v1646 = vld [vmem:[%s1642 + $0x18] sm:$0xf]
      %v1647 = vld [vmem:[%s1642 + $0x20] sm:$0xf]
      %v1648 = vld [vmem:[%s1642 + $0x28] sm:$0xf]
      %v1649 = vld [vmem:[%s1642 + $0x30] sm:$0xf]
      %v1650 = vld [vmem:[%s1642 + $0x38] sm:$0xf]
      %s1651 = scalar_lea.vmem %s1, 384
      %v1652 = vld [vmem:[%s1651] sm:$0xf]
      %v1653 = vld [vmem:[%s1651 + $0x4] sm:$0xf]
      %v1654 = vld [vmem:[%s1651 + $0x8] sm:$0xf]
      %v1655 = vld [vmem:[%s1651 + $0xc] sm:$0xf]
      %v1656 = vld [vmem:[%s1651 + $0x10] sm:$0xf]
      %v1657 = vld [vmem:[%s1651 + $0x14] sm:$0xf]
      %v1658 = vld [vmem:[%s1651 + $0x18] sm:$0xf]
      %v1659 = vld [vmem:[%s1651 + $0x1c] sm:$0xf]
      %v1660 = vld [vmem:[%s1651 + $0x20] sm:$0xf]
      %v1661 = vld [vmem:[%s1651 + $0x24] sm:$0xf]
      %v1662 = vld [vmem:[%s1651 + $0x28] sm:$0xf]
      %v1663 = vld [vmem:[%s1651 + $0x2c] sm:$0xf]
      %v1664 = vld [vmem:[%s1651 + $0x30] sm:$0xf]
      %v1665 = vld [vmem:[%s1651 + $0x34] sm:$0xf]
      %v1666 = vld [vmem:[%s1651 + $0x38] sm:$0xf]
      %v1667 = vld [vmem:[%s1651 + $0x3c] sm:$0xf]
      %v1676 = vunpack.c.l.b16 %v1643
      %v1677 = vunpack.c.l.b16 %v1644
      %v1678 = vunpack.c.l.b16 %v1645
      %v1679 = vunpack.c.l.b16 %v1646
      %v1680 = vunpack.c.l.b16 %v1647
      %v1681 = vunpack.c.l.b16 %v1648
      %v1682 = vunpack.c.l.b16 %v1649
      %v1683 = vunpack.c.l.b16 %v1650
      %v1684 = vpack.c.b16 %v1677, %v1676
      %v1685 = vpack.c.b16 %v1679, %v1678
      %v1686 = vpack.c.b16 %v1681, %v1680
      %v1687 = vpack.c.b16 %v1683, %v1682
      %v1708 = vunpack.c.l.b16 %v1652
      %v1709 = vunpack.c.l.b16 %v1653
      %v1710 = vunpack.c.l.b16 %v1654
      %v1711 = vunpack.c.l.b16 %v1655
      %v1712 = vunpack.c.l.b16 %v1656
      %v1713 = vunpack.c.l.b16 %v1657
      %v1714 = vunpack.c.l.b16 %v1658
      %v1715 = vunpack.c.l.b16 %v1659
      %v1716 = vunpack.c.l.b16 %v1660
      %v1717 = vunpack.c.l.b16 %v1661
      %v1718 = vunpack.c.l.b16 %v1662
      %v1719 = vunpack.c.l.b16 %v1663
      %v1720 = vunpack.c.l.b16 %v1664
      %v1721 = vunpack.c.l.b16 %v1665
      %v1722 = vunpack.c.l.b16 %v1666
      %v1723 = vunpack.c.l.b16 %v1667
      %v1724 = vpack.c.b16 %v1709, %v1708
      %v1725 = vpack.c.b16 %v1711, %v1710
      %v1726 = vpack.c.b16 %v1713, %v1712
      %v1727 = vpack.c.b16 %v1715, %v1714
      %v1728 = vpack.c.b16 %v1717, %v1716
      %v1729 = vpack.c.b16 %v1719, %v1718
      %v1730 = vpack.c.b16 %v1721, %v1720
      %v1731 = vpack.c.b16 %v1723, %v1722
      %1740 = vmatprep.subr.bf16.mxu0 0
      %1741 = vmatpush1.bf16.msra.mxu0 %v1724
      %1742 = vmatprep.subr.bf16.mxu0 0
      %1743 = vmatpush1.bf16.msra.mxu0 %v1725
      %1744 = vmatprep.subr.bf16.mxu0 0
      %1745 = vmatpush1.bf16.msra.mxu0 %v1726
      %1746 = vmatprep.subr.bf16.mxu0 0
      %1747 = vmatpush1.bf16.msra.mxu0 %v1727
      %1748 = vmatprep.subr.bf16.mxu0 0
      %1749 = vmatpush1.bf16.msra.mxu0 %v1728
      %1750 = vmatprep.subr.bf16.mxu0 0
      %1751 = vmatpush1.bf16.msra.mxu0 %v1729
      %1752 = vmatprep.subr.bf16.mxu0 0
      %1753 = vmatpush1.bf16.msra.mxu0 %v1730
      %1754 = vmatprep.subr.bf16.mxu0 0
      %1755 = vmatpush1.bf16.msra.mxu0 %v1731
      %1756 = vmatprep.subr.bf16.mxu0 0
      %1757 = vmatpush1.bf16.msra.mxu0 0
      %1758 = vmatprep.subr.bf16.mxu0 0
      %1759 = vmatpush1.bf16.msra.mxu0 0
      %1760 = vmatprep.subr.bf16.mxu0 0
      %1761 = vmatpush1.bf16.msra.mxu0 0
      %1762 = vmatprep.subr.bf16.mxu0 0
      %1763 = vmatpush1.bf16.msra.mxu0 0
      %1764 = vmatprep.subr.bf16.mxu0 0
      %1765 = vmatpush1.bf16.msra.mxu0 0
      %1766 = vmatprep.subr.bf16.mxu0 0
      %1767 = vmatpush1.bf16.msra.mxu0 0
      %1768 = vmatprep.subr.bf16.mxu0 0
      %1769 = vmatpush1.bf16.msra.mxu0 0
      %1770 = vmatprep.subr.bf16.mxu0 0
      %1771 = vmatpush1.bf16.msra.mxu0 0
      %1772 = vmatprep.mubr.bf16.mxu0 0
      %1773 = vmatmul.mubr.bf16.gmra.mrb[0].mxu0 %v1684
      %v1774 = vpop.f32.mrb[0].mxu0
      %v1775 = vadd.f32 0.0, %v1774
      %v1776 = vpop.f32.mrb[0].mxu0
      %v1777 = vpop.f32.mrb[0].mxu0
      %v1778 = vadd.f32 0.0, %v1777
      %v1779 = vpop.f32.mrb[0].mxu0
      %1780 = vmatprep.mubr.bf16.mxu0 0
      %1781 = vmatmul.mubr.bf16.gmra.mrb[0].mxu0 %v1685
      %v1782 = vpop.f32.mrb[0].mxu0
      %v1783 = vadd.f32 0.0, %v1782
      %v1784 = vpop.f32.mrb[0].mxu0
      %v1785 = vpop.f32.mrb[0].mxu0
      %v1786 = vadd.f32 0.0, %v1785
      %v1787 = vpop.f32.mrb[0].mxu0
      %1788 = vmatprep.mubr.bf16.mxu0 0
      %1789 = vmatmul.mubr.bf16.gmra.mrb[0].mxu0 %v1686
      %v1790 = vpop.f32.mrb[0].mxu0
      %v1791 = vadd.f32 0.0, %v1790
      %v1792 = vpop.f32.mrb[0].mxu0
      %v1793 = vpop.f32.mrb[0].mxu0
      %v1794 = vadd.f32 0.0, %v1793
      %v1795 = vpop.f32.mrb[0].mxu0
      %1796 = vmatprep.mubr.bf16.mxu0 0
      %1797 = vmatmul.mubr.bf16.gmra.mrb[0].mxu0 %v1687
      %v1798 = vpop.f32.mrb[0].mxu0
      %v1799 = vadd.f32 0.0, %v1798
      %v1800 = vpop.f32.mrb[0].mxu0
      %v1801 = vpop.f32.mrb[0].mxu0
      %v1802 = vadd.f32 0.0, %v1801
      %v1803 = vpop.f32.mrb[0].mxu0
      %1804 = vdwg.mxu0
      %v1805 = vld [vmem:[#allocation2] sm:$0xff]
      %v1806 = vld [vmem:[#allocation2 + $0x8] sm:$0xff]
      %v1807 = vld [vmem:[#allocation2 + $0x10] sm:$0xff]
      %v1808 = vld [vmem:[#allocation2 + $0x18] sm:$0xff]
      %v1809 = vld [vmem:[#allocation2 + $0x20] sm:$0xff]
      %v1810 = vld [vmem:[#allocation2 + $0x28] sm:$0xff]
      %v1811 = vld [vmem:[#allocation2 + $0x30] sm:$0xff]
      %v1812 = vld [vmem:[#allocation2 + $0x38] sm:$0xff]
      %v1813 = vadd.f32 %v1805, %v1775
      %v1814 = vadd.f32 %v1806, %v1778
      %v1815 = vadd.f32 %v1807, %v1783
      %v1816 = vadd.f32 %v1808, %v1786
      %v1817 = vadd.f32 %v1809, %v1791
      %v1818 = vadd.f32 %v1810, %v1794
      %v1819 = vadd.f32 %v1811, %v1799
      %v1820 = vadd.f32 %v1812, %v1802
      %1821 = vst [vmem:[#allocation2] sm:$0xff] %v1813
      %1822 = vst [vmem:[#allocation2 + $0x8] sm:$0xff] %v1814
      %1823 = vst [vmem:[#allocation2 + $0x10] sm:$0xff] %v1815
      %1824 = vst [vmem:[#allocation2 + $0x18] sm:$0xff] %v1816
      %1825 = vst [vmem:[#allocation2 + $0x20] sm:$0xff] %v1817
      %1826 = vst [vmem:[#allocation2 + $0x28] sm:$0xff] %v1818
      %1827 = vst [vmem:[#allocation2 + $0x30] sm:$0xff] %v1819
      %1828 = vst [vmem:[#allocation2 + $0x38] sm:$0xff] %v1820
      %v1829 = vld [vmem:[%s1642] sm:$0xf]
      %v1830 = vld [vmem:[%s1642 + $0x4] sm:$0x1]
      %v1831 = vld [vmem:[%s1642 + $0x8] sm:$0xf]
      %v1832 = vld [vmem:[%s1642 + $0xc] sm:$0x1]
      %v1833 = vld [vmem:[%s1642 + $0x10] sm:$0xf]
      %v1834 = vld [vmem:[%s1642 + $0x14] sm:$0x1]
      %v1835 = vld [vmem:[%s1642 + $0x18] sm:$0xf]
      %v1836 = vld [vmem:[%s1642 + $0x1c] sm:$0x1]
      %v1837 = vld [vmem:[%s1642 + $0x20] sm:$0xf]
      %v1838 = vld [vmem:[%s1642 + $0x24] sm:$0x1]
      %v1839 = vld [vmem:[%s1642 + $0x28] sm:$0xf]
      %v1840 = vld [vmem:[%s1642 + $0x2c] sm:$0x1]
      %v1841 = vld [vmem:[%s1642 + $0x30] sm:$0xf]
      %v1842 = vld [vmem:[%s1642 + $0x34] sm:$0x1]
      %v1843 = vld [vmem:[%s1642 + $0x38] sm:$0xf]
      %v1844 = vld [vmem:[%s1642 + $0x3c] sm:$0x1]
      %v1846 = vshrl.u32 %v1829, 16
      %v1848 = vrot.slane %v1846, 4
      %v1849 = vshll.u32 %v1829, 16
      %v1851 = vrot.slane %v1849, 5
      %v1852 = vor.u32 %v1848, %v1851
      %v1853 = vrot.slane %v1852, 4
      %v1855 = vshll.u32 %v1830, 16
      %v1857 = vrot.slane %v1855, 5
      %v1858 = vsel %vm403, %v1853, %v1857
      %v1860 = vshrl.u32 %v1831, 16
      %v1862 = vrot.slane %v1860, 4
      %v1863 = vshll.u32 %v1831, 16
      %v1865 = vrot.slane %v1863, 5
      %v1866 = vor.u32 %v1862, %v1865
      %v1867 = vrot.slane %v1866, 4
      %v1869 = vshll.u32 %v1832, 16
      %v1871 = vrot.slane %v1869, 5
      %v1872 = vsel %vm403, %v1867, %v1871
      %v1874 = vshrl.u32 %v1833, 16
      %v1876 = vrot.slane %v1874, 4
      %v1877 = vshll.u32 %v1833, 16
      %v1879 = vrot.slane %v1877, 5
      %v1880 = vor.u32 %v1876, %v1879
      %v1881 = vrot.slane %v1880, 4
      %v1883 = vshll.u32 %v1834, 16
      %v1885 = vrot.slane %v1883, 5
      %v1886 = vsel %vm403, %v1881, %v1885
      %v1888 = vshrl.u32 %v1835, 16
      %v1890 = vrot.slane %v1888, 4
      %v1891 = vshll.u32 %v1835, 16
      %v1893 = vrot.slane %v1891, 5
      %v1894 = vor.u32 %v1890, %v1893
      %v1895 = vrot.slane %v1894, 4
      %v1897 = vshll.u32 %v1836, 16
      %v1899 = vrot.slane %v1897, 5
      %v1900 = vsel %vm403, %v1895, %v1899
      %v1902 = vshrl.u32 %v1837, 16
      %v1904 = vrot.slane %v1902, 4
      %v1905 = vshll.u32 %v1837, 16
      %v1907 = vrot.slane %v1905, 5
      %v1908 = vor.u32 %v1904, %v1907
      %v1909 = vrot.slane %v1908, 4
      %v1911 = vshll.u32 %v1838, 16
      %v1913 = vrot.slane %v1911, 5
      %v1914 = vsel %vm403, %v1909, %v1913
      %v1916 = vshrl.u32 %v1839, 16
      %v1918 = vrot.slane %v1916, 4
      %v1919 = vshll.u32 %v1839, 16
      %v1921 = vrot.slane %v1919, 5
      %v1922 = vor.u32 %v1918, %v1921
      %v1923 = vrot.slane %v1922, 4
      %v1925 = vshll.u32 %v1840, 16
      %v1927 = vrot.slane %v1925, 5
      %v1928 = vsel %vm403, %v1923, %v1927
      %v1930 = vshrl.u32 %v1841, 16
      %v1932 = vrot.slane %v1930, 4
      %v1933 = vshll.u32 %v1841, 16
      %v1935 = vrot.slane %v1933, 5
      %v1936 = vor.u32 %v1932, %v1935
      %v1937 = vrot.slane %v1936, 4
      %v1939 = vshll.u32 %v1842, 16
      %v1941 = vrot.slane %v1939, 5
      %v1942 = vsel %vm403, %v1937, %v1941
      %v1944 = vshrl.u32 %v1843, 16
      %v1946 = vrot.slane %v1944, 4
      %v1947 = vshll.u32 %v1843, 16
      %v1949 = vrot.slane %v1947, 5
      %v1950 = vor.u32 %v1946, %v1949
      %v1951 = vrot.slane %v1950, 4
      %v1953 = vshll.u32 %v1844, 16
      %v1955 = vrot.slane %v1953, 5
      %v1956 = vsel %vm403, %v1951, %v1955
      %s1957 = scalar_lea.vmem %s1, 448
      %v1958 = vld [vmem:[%s1957] sm:$0xf]
      %v1959 = vld [vmem:[%s1957 + $0x4] sm:$0xf]
      %v1960 = vld [vmem:[%s1957 + $0x8] sm:$0xf]
      %v1961 = vld [vmem:[%s1957 + $0xc] sm:$0xf]
      %v1962 = vld [vmem:[%s1957 + $0x10] sm:$0xf]
      %v1963 = vld [vmem:[%s1957 + $0x14] sm:$0xf]
      %v1964 = vld [vmem:[%s1957 + $0x18] sm:$0xf]
      %v1965 = vld [vmem:[%s1957 + $0x1c] sm:$0xf]
      %v1966 = vld [vmem:[%s1957 + $0x20] sm:$0xf]
      %v1967 = vld [vmem:[%s1957 + $0x24] sm:$0xf]
      %v1968 = vld [vmem:[%s1957 + $0x28] sm:$0xf]
      %v1969 = vld [vmem:[%s1957 + $0x2c] sm:$0xf]
      %v1970 = vld [vmem:[%s1957 + $0x30] sm:$0xf]
      %v1971 = vld [vmem:[%s1957 + $0x34] sm:$0xf]
      %v1972 = vld [vmem:[%s1957 + $0x38] sm:$0xf]
      %v1973 = vld [vmem:[%s1957 + $0x3c] sm:$0xf]
      %v1974 = vunpack.c.l.b16 %v1858
      %v1975 = vunpack.c.l.b16 %v1872
      %v1976 = vunpack.c.l.b16 %v1886
      %v1977 = vunpack.c.l.b16 %v1900
      %v1978 = vunpack.c.l.b16 %v1914
      %v1979 = vunpack.c.l.b16 %v1928
      %v1980 = vunpack.c.l.b16 %v1942
      %v1981 = vunpack.c.l.b16 %v1956
      %v1982 = vpack.c.b16 %v1975, %v1974
      %v1983 = vpack.c.b16 %v1977, %v1976
      %v1984 = vpack.c.b16 %v1979, %v1978
      %v1985 = vpack.c.b16 %v1981, %v1980
      %v2006 = vunpack.c.l.b16 %v1958
      %v2007 = vunpack.c.l.b16 %v1959
      %v2008 = vunpack.c.l.b16 %v1960
      %v2009 = vunpack.c.l.b16 %v1961
      %v2010 = vunpack.c.l.b16 %v1962
      %v2011 = vunpack.c.l.b16 %v1963
      %v2012 = vunpack.c.l.b16 %v1964
      %v2013 = vunpack.c.l.b16 %v1965
      %v2014 = vunpack.c.l.b16 %v1966
      %v2015 = vunpack.c.l.b16 %v1967
      %v2016 = vunpack.c.l.b16 %v1968
      %v2017 = vunpack.c.l.b16 %v1969
      %v2018 = vunpack.c.l.b16 %v1970
      %v2019 = vunpack.c.l.b16 %v1971
      %v2020 = vunpack.c.l.b16 %v1972
      %v2021 = vunpack.c.l.b16 %v1973
      %v2022 = vpack.c.b16 %v2007, %v2006
      %v2023 = vpack.c.b16 %v2009, %v2008
      %v2024 = vpack.c.b16 %v2011, %v2010
      %v2025 = vpack.c.b16 %v2013, %v2012
      %v2026 = vpack.c.b16 %v2015, %v2014
      %v2027 = vpack.c.b16 %v2017, %v2016
      %v2028 = vpack.c.b16 %v2019, %v2018
      %v2029 = vpack.c.b16 %v2021, %v2020
      %2038 = vmatprep.subr.bf16.mxu0 0
      %2039 = vmatpush1.bf16.msra.mxu0 %v2022
      %2040 = vmatprep.subr.bf16.mxu0 0
      %2041 = vmatpush1.bf16.msra.mxu0 %v2023
      %2042 = vmatprep.subr.bf16.mxu0 0
      %2043 = vmatpush1.bf16.msra.mxu0 %v2024
      %2044 = vmatprep.subr.bf16.mxu0 0
      %2045 = vmatpush1.bf16.msra.mxu0 %v2025
      %2046 = vmatprep.subr.bf16.mxu0 0
      %2047 = vmatpush1.bf16.msra.mxu0 %v2026
      %2048 = vmatprep.subr.bf16.mxu0 0
      %2049 = vmatpush1.bf16.msra.mxu0 %v2027
      %2050 = vmatprep.subr.bf16.mxu0 0
      %2051 = vmatpush1.bf16.msra.mxu0 %v2028
      %2052 = vmatprep.subr.bf16.mxu0 0
      %2053 = vmatpush1.bf16.msra.mxu0 %v2029
      %2054 = vmatprep.subr.bf16.mxu0 0
      %2055 = vmatpush1.bf16.msra.mxu0 0
      %2056 = vmatprep.subr.bf16.mxu0 0
      %2057 = vmatpush1.bf16.msra.mxu0 0
      %2058 = vmatprep.subr.bf16.mxu0 0
      %2059 = vmatpush1.bf16.msra.mxu0 0
      %2060 = vmatprep.subr.bf16.mxu0 0
      %2061 = vmatpush1.bf16.msra.mxu0 0
      %2062 = vmatprep.subr.bf16.mxu0 0
      %2063 = vmatpush1.bf16.msra.mxu0 0
      %2064 = vmatprep.subr.bf16.mxu0 0
      %2065 = vmatpush1.bf16.msra.mxu0 0
      %2066 = vmatprep.subr.bf16.mxu0 0
      %2067 = vmatpush1.bf16.msra.mxu0 0
      %2068 = vmatprep.subr.bf16.mxu0 0
      %2069 = vmatpush1.bf16.msra.mxu0 0
      %2070 = vmatprep.mubr.bf16.mxu0 0
      %2071 = vmatmul.mubr.bf16.gmra.mrb[0].mxu0 %v1982
      %v2072 = vpop.f32.mrb[0].mxu0
      %v2073 = vadd.f32 0.0, %v2072
      %v2074 = vpop.f32.mrb[0].mxu0
      %v2075 = vpop.f32.mrb[0].mxu0
      %v2076 = vadd.f32 0.0, %v2075
      %v2077 = vpop.f32.mrb[0].mxu0
      %2078 = vmatprep.mubr.bf16.mxu0 0
      %2079 = vmatmul.mubr.bf16.gmra.mrb[0].mxu0 %v1983
      %v2080 = vpop.f32.mrb[0].mxu0
      %v2081 = vadd.f32 0.0, %v2080
      %v2082 = vpop.f32.mrb[0].mxu0
      %v2083 = vpop.f32.mrb[0].mxu0
      %v2084 = vadd.f32 0.0, %v2083
      %v2085 = vpop.f32.mrb[0].mxu0
      %2086 = vmatprep.mubr.bf16.mxu0 0
      %2087 = vmatmul.mubr.bf16.gmra.mrb[0].mxu0 %v1984
      %v2088 = vpop.f32.mrb[0].mxu0
      %v2089 = vadd.f32 0.0, %v2088
      %v2090 = vpop.f32.mrb[0].mxu0
      %v2091 = vpop.f32.mrb[0].mxu0
      %v2092 = vadd.f32 0.0, %v2091
      %v2093 = vpop.f32.mrb[0].mxu0
      %2094 = vmatprep.mubr.bf16.mxu0 0
      %2095 = vmatmul.mubr.bf16.gmra.mrb[0].mxu0 %v1985
      %v2096 = vpop.f32.mrb[0].mxu0
      %v2097 = vadd.f32 0.0, %v2096
      %v2098 = vpop.f32.mrb[0].mxu0
      %v2099 = vpop.f32.mrb[0].mxu0
      %v2100 = vadd.f32 0.0, %v2099
      %v2101 = vpop.f32.mrb[0].mxu0
      %2102 = vdwg.mxu0
      %v2103 = vld [vmem:[#allocation2] sm:$0xff]
      %v2104 = vld [vmem:[#allocation2 + $0x8] sm:$0xff]
      %v2105 = vld [vmem:[#allocation2 + $0x10] sm:$0xff]
      %v2106 = vld [vmem:[#allocation2 + $0x18] sm:$0xff]
      %v2107 = vld [vmem:[#allocation2 + $0x20] sm:$0xff]
      %v2108 = vld [vmem:[#allocation2 + $0x28] sm:$0xff]
      %v2109 = vld [vmem:[#allocation2 + $0x30] sm:$0xff]
      %v2110 = vld [vmem:[#allocation2 + $0x38] sm:$0xff]
      %v2111 = vadd.f32 %v2103, %v2073
      %v2112 = vadd.f32 %v2104, %v2076
      %v2113 = vadd.f32 %v2105, %v2081
      %v2114 = vadd.f32 %v2106, %v2084
      %v2115 = vadd.f32 %v2107, %v2089
      %v2116 = vadd.f32 %v2108, %v2092
      %v2117 = vadd.f32 %v2109, %v2097
      %v2118 = vadd.f32 %v2110, %v2100
      %2119 = vst [vmem:[#allocation2] sm:$0xff] %v2111
      %2120 = vst [vmem:[#allocation2 + $0x8] sm:$0xff] %v2112
      %2121 = vst [vmem:[#allocation2 + $0x10] sm:$0xff] %v2113
      %2122 = vst [vmem:[#allocation2 + $0x18] sm:$0xff] %v2114
      %2123 = vst [vmem:[#allocation2 + $0x20] sm:$0xff] %v2115
      %2124 = vst [vmem:[#allocation2 + $0x28] sm:$0xff] %v2116
      %2125 = vst [vmem:[#allocation2 + $0x30] sm:$0xff] %v2117
      %2126 = vst [vmem:[#allocation2 + $0x38] sm:$0xff] %v2118
      %v2127 = vld [vmem:[%s1642] sm:$0xe]
      %v2128 = vld [vmem:[%s1642 + $0x4] sm:$0x1]
      %v2129 = vld [vmem:[%s1642 + $0x8] sm:$0xe]
      %v2130 = vld [vmem:[%s1642 + $0xc] sm:$0x1]
      %v2131 = vld [vmem:[%s1642 + $0x10] sm:$0xe]
      %v2132 = vld [vmem:[%s1642 + $0x14] sm:$0x1]
      %v2133 = vld [vmem:[%s1642 + $0x18] sm:$0xe]
      %v2134 = vld [vmem:[%s1642 + $0x1c] sm:$0x1]
      %v2135 = vld [vmem:[%s1642 + $0x20] sm:$0xe]
      %v2136 = vld [vmem:[%s1642 + $0x24] sm:$0x1]
      %v2137 = vld [vmem:[%s1642 + $0x28] sm:$0xe]
      %v2138 = vld [vmem:[%s1642 + $0x2c] sm:$0x1]
      %v2139 = vld [vmem:[%s1642 + $0x30] sm:$0xe]
      %v2140 = vld [vmem:[%s1642 + $0x34] sm:$0x1]
      %v2141 = vld [vmem:[%s1642 + $0x38] sm:$0xe]
      %v2142 = vld [vmem:[%s1642 + $0x3c] sm:$0x1]
      %v2159 = vrot.slane %v2127, 5
      %v2160 = vrot.slane %v2159, 4
      %v2161 = vrot.slane %v2128, 5
      %v2162 = vsel %vm720, %v2160, %v2161
      %v2163 = vrot.slane %v2129, 5
      %v2164 = vrot.slane %v2163, 4
      %v2165 = vrot.slane %v2130, 5
      %v2166 = vsel %vm720, %v2164, %v2165
      %v2167 = vrot.slane %v2131, 5
      %v2168 = vrot.slane %v2167, 4
      %v2169 = vrot.slane %v2132, 5
      %v2170 = vsel %vm720, %v2168, %v2169
      %v2171 = vrot.slane %v2133, 5
      %v2172 = vrot.slane %v2171, 4
      %v2173 = vrot.slane %v2134, 5
      %v2174 = vsel %vm720, %v2172, %v2173
      %v2175 = vrot.slane %v2135, 5
      %v2176 = vrot.slane %v2175, 4
      %v2177 = vrot.slane %v2136, 5
      %v2178 = vsel %vm720, %v2176, %v2177
      %v2179 = vrot.slane %v2137, 5
      %v2180 = vrot.slane %v2179, 4
      %v2181 = vrot.slane %v2138, 5
      %v2182 = vsel %vm720, %v2180, %v2181
      %v2183 = vrot.slane %v2139, 5
      %v2184 = vrot.slane %v2183, 4
      %v2185 = vrot.slane %v2140, 5
      %v2186 = vsel %vm720, %v2184, %v2185
      %v2187 = vrot.slane %v2141, 5
      %v2188 = vrot.slane %v2187, 4
      %v2189 = vrot.slane %v2142, 5
      %v2190 = vsel %vm720, %v2188, %v2189
      %s2191 = scalar_lea.vmem %s1, 512
      %v2192 = vld [vmem:[%s2191] sm:$0xf]
      %v2193 = vld [vmem:[%s2191 + $0x4] sm:$0xf]
      %v2194 = vld [vmem:[%s2191 + $0x8] sm:$0xf]
      %v2195 = vld [vmem:[%s2191 + $0xc] sm:$0xf]
      %v2196 = vld [vmem:[%s2191 + $0x10] sm:$0xf]
      %v2197 = vld [vmem:[%s2191 + $0x14] sm:$0xf]
      %v2198 = vld [vmem:[%s2191 + $0x18] sm:$0xf]
      %v2199 = vld [vmem:[%s2191 + $0x1c] sm:$0xf]
      %v2200 = vld [vmem:[%s2191 + $0x20] sm:$0xf]
      %v2201 = vld [vmem:[%s2191 + $0x24] sm:$0xf]
      %v2202 = vld [vmem:[%s2191 + $0x28] sm:$0xf]
      %v2203 = vld [vmem:[%s2191 + $0x2c] sm:$0xf]
      %v2204 = vld [vmem:[%s2191 + $0x30] sm:$0xf]
      %v2205 = vld [vmem:[%s2191 + $0x34] sm:$0xf]
      %v2206 = vld [vmem:[%s2191 + $0x38] sm:$0xf]
      %v2207 = vld [vmem:[%s2191 + $0x3c] sm:$0xf]
      %v2208 = vunpack.c.l.b16 %v2162
      %v2209 = vunpack.c.l.b16 %v2166
      %v2210 = vunpack.c.l.b16 %v2170
      %v2211 = vunpack.c.l.b16 %v2174
      %v2212 = vunpack.c.l.b16 %v2178
      %v2213 = vunpack.c.l.b16 %v2182
      %v2214 = vunpack.c.l.b16 %v2186
      %v2215 = vunpack.c.l.b16 %v2190
      %v2216 = vpack.c.b16 %v2209, %v2208
      %v2217 = vpack.c.b16 %v2211, %v2210
      %v2218 = vpack.c.b16 %v2213, %v2212
      %v2219 = vpack.c.b16 %v2215, %v2214
      %v2240 = vunpack.c.l.b16 %v2192
      %v2241 = vunpack.c.l.b16 %v2193
      %v2242 = vunpack.c.l.b16 %v2194
      %v2243 = vunpack.c.l.b16 %v2195
      %v2244 = vunpack.c.l.b16 %v2196
      %v2245 = vunpack.c.l.b16 %v2197
      %v2246 = vunpack.c.l.b16 %v2198
      %v2247 = vunpack.c.l.b16 %v2199
      %v2248 = vunpack.c.l.b16 %v2200
      %v2249 = vunpack.c.l.b16 %v2201
      %v2250 = vunpack.c.l.b16 %v2202
      %v2251 = vunpack.c.l.b16 %v2203
      %v2252 = vunpack.c.l.b16 %v2204
      %v2253 = vunpack.c.l.b16 %v2205
      %v2254 = vunpack.c.l.b16 %v2206
      %v2255 = vunpack.c.l.b16 %v2207
      %v2256 = vpack.c.b16 %v2241, %v2240
      %v2257 = vpack.c.b16 %v2243, %v2242
      %v2258 = vpack.c.b16 %v2245, %v2244
      %v2259 = vpack.c.b16 %v2247, %v2246
      %v2260 = vpack.c.b16 %v2249, %v2248
      %v2261 = vpack.c.b16 %v2251, %v2250
      %v2262 = vpack.c.b16 %v2253, %v2252
      %v2263 = vpack.c.b16 %v2255, %v2254
      %2272 = vmatprep.subr.bf16.mxu0 0
      %2273 = vmatpush1.bf16.msra.mxu0 %v2256
      %2274 = vmatprep.subr.bf16.mxu0 0
      %2275 = vmatpush1.bf16.msra.mxu0 %v2257
      %2276 = vmatprep.subr.bf16.mxu0 0
      %2277 = vmatpush1.bf16.msra.mxu0 %v2258
      %2278 = vmatprep.subr.bf16.mxu0 0
      %2279 = vmatpush1.bf16.msra.mxu0 %v2259
      %2280 = vmatprep.subr.bf16.mxu0 0
      %2281 = vmatpush1.bf16.msra.mxu0 %v2260
      %2282 = vmatprep.subr.bf16.mxu0 0
      %2283 = vmatpush1.bf16.msra.mxu0 %v2261
      %2284 = vmatprep.subr.bf16.mxu0 0
      %2285 = vmatpush1.bf16.msra.mxu0 %v2262
      %2286 = vmatprep.subr.bf16.mxu0 0
      %2287 = vmatpush1.bf16.msra.mxu0 %v2263
      %2288 = vmatprep.subr.bf16.mxu0 0
      %2289 = vmatpush1.bf16.msra.mxu0 0
      %2290 = vmatprep.subr.bf16.mxu0 0
      %2291 = vmatpush1.bf16.msra.mxu0 0
      %2292 = vmatprep.subr.bf16.mxu0 0
      %2293 = vmatpush1.bf16.msra.mxu0 0
      %2294 = vmatprep.subr.bf16.mxu0 0
      %2295 = vmatpush1.bf16.msra.mxu0 0
      %2296 = vmatprep.subr.bf16.mxu0 0
      %2297 = vmatpush1.bf16.msra.mxu0 0
      %2298 = vmatprep.subr.bf16.mxu0 0
      %2299 = vmatpush1.bf16.msra.mxu0 0
      %2300 = vmatprep.subr.bf16.mxu0 0
      %2301 = vmatpush1.bf16.msra.mxu0 0
      %2302 = vmatprep.subr.bf16.mxu0 0
      %2303 = vmatpush1.bf16.msra.mxu0 0
      %2304 = vmatprep.mubr.bf16.mxu0 0
      %2305 = vmatmul.mubr.bf16.gmra.mrb[0].mxu0 %v2216
      %v2306 = vpop.f32.mrb[0].mxu0
      %v2307 = vadd.f32 0.0, %v2306
      %v2308 = vpop.f32.mrb[0].mxu0
      %v2309 = vpop.f32.mrb[0].mxu0
      %v2310 = vadd.f32 0.0, %v2309
      %v2311 = vpop.f32.mrb[0].mxu0
      %2312 = vmatprep.mubr.bf16.mxu0 0
      %2313 = vmatmul.mubr.bf16.gmra.mrb[0].mxu0 %v2217
      %v2314 = vpop.f32.mrb[0].mxu0
      %v2315 = vadd.f32 0.0, %v2314
      %v2316 = vpop.f32.mrb[0].mxu0
      %v2317 = vpop.f32.mrb[0].mxu0
      %v2318 = vadd.f32 0.0, %v2317
      %v2319 = vpop.f32.mrb[0].mxu0
      %2320 = vmatprep.mubr.bf16.mxu0 0
      %2321 = vmatmul.mubr.bf16.gmra.mrb[0].mxu0 %v2218
      %v2322 = vpop.f32.mrb[0].mxu0
      %v2323 = vadd.f32 0.0, %v2322
      %v2324 = vpop.f32.mrb[0].mxu0
      %v2325 = vpop.f32.mrb[0].mxu0
      %v2326 = vadd.f32 0.0, %v2325
      %v2327 = vpop.f32.mrb[0].mxu0
      %2328 = vmatprep.mubr.bf16.mxu0 0
      %2329 = vmatmul.mubr.bf16.gmra.mrb[0].mxu0 %v2219
      %v2330 = vpop.f32.mrb[0].mxu0
      %v2331 = vadd.f32 0.0, %v2330
      %v2332 = vpop.f32.mrb[0].mxu0
      %v2333 = vpop.f32.mrb[0].mxu0
      %v2334 = vadd.f32 0.0, %v2333
      %v2335 = vpop.f32.mrb[0].mxu0
      %2336 = vdwg.mxu0
      %v2337 = vld [vmem:[#allocation2] sm:$0xff]
      %v2338 = vld [vmem:[#allocation2 + $0x8] sm:$0xff]
      %v2339 = vld [vmem:[#allocation2 + $0x10] sm:$0xff]
      %v2340 = vld [vmem:[#allocation2 + $0x18] sm:$0xff]
      %v2341 = vld [vmem:[#allocation2 + $0x20] sm:$0xff]
      %v2342 = vld [vmem:[#allocation2 + $0x28] sm:$0xff]
      %v2343 = vld [vmem:[#allocation2 + $0x30] sm:$0xff]
      %v2344 = vld [vmem:[#allocation2 + $0x38] sm:$0xff]
      %v2345 = vadd.f32 %v2337, %v2307
      %v2346 = vadd.f32 %v2338, %v2310
      %v2347 = vadd.f32 %v2339, %v2315
      %v2348 = vadd.f32 %v2340, %v2318
      %v2349 = vadd.f32 %v2341, %v2323
      %v2350 = vadd.f32 %v2342, %v2326
      %v2351 = vadd.f32 %v2343, %v2331
      %v2352 = vadd.f32 %v2344, %v2334
      %2353 = vst [vmem:[#allocation2] sm:$0xff] %v2345
      %2354 = vst [vmem:[#allocation2 + $0x8] sm:$0xff] %v2346
      %2355 = vst [vmem:[#allocation2 + $0x10] sm:$0xff] %v2347
      %2356 = vst [vmem:[#allocation2 + $0x18] sm:$0xff] %v2348
      %2357 = vst [vmem:[#allocation2 + $0x20] sm:$0xff] %v2349
      %2358 = vst [vmem:[#allocation2 + $0x28] sm:$0xff] %v2350
      %2359 = vst [vmem:[#allocation2 + $0x30] sm:$0xff] %v2351
      %2360 = vst [vmem:[#allocation2 + $0x38] sm:$0xff] %v2352
      %v2361 = vld [vmem:[#allocation2] sm:$0xff]
      %v2362 = vld [vmem:[#allocation2 + $0x8] sm:$0xff]
      %v2363 = vld [vmem:[#allocation2 + $0x10] sm:$0xff]
      %v2364 = vld [vmem:[#allocation2 + $0x18] sm:$0xff]
      %v2365 = vld [vmem:[#allocation2 + $0x20] sm:$0xff]
      %v2366 = vld [vmem:[#allocation2 + $0x28] sm:$0xff]
      %v2367 = vld [vmem:[#allocation2 + $0x30] sm:$0xff]
      %v2368 = vld [vmem:[#allocation2 + $0x38] sm:$0xff]
      %v2369 = vpack.c.bf16 %v2361, %v2361
      %v2370 = vpack.c.bf16 %v2362, %v2362
      %v2371 = vpack.c.bf16 %v2363, %v2363
      %v2372 = vpack.c.bf16 %v2364, %v2364
      %v2373 = vpack.c.bf16 %v2365, %v2365
      %v2374 = vpack.c.bf16 %v2366, %v2366
      %v2375 = vpack.c.bf16 %v2367, %v2367
      %v2376 = vpack.c.bf16 %v2368, %v2368
      %2377 = vst [vmem:[%s208] sm:$0xf] %v2369
      %2378 = vst [vmem:[%s208 + $0x4] sm:$0xf] %v2370
      %2379 = vst [vmem:[%s208 + $0x8] sm:$0xf] %v2371
      %2380 = vst [vmem:[%s208 + $0xc] sm:$0xf] %v2372
      %2381 = vst [vmem:[%s208 + $0x10] sm:$0xf] %v2373
      %2382 = vst [vmem:[%s208 + $0x14] sm:$0xf] %v2374
      %2383 = vst [vmem:[%s208 + $0x18] sm:$0xf] %v2375
      %2384 = vst [vmem:[%s208 + $0x1c] sm:$0xf] %v2376
      %v2385 = vadd.f32 %v2361, %v2362
      %v2386 = vadd.f32 %v2385, %v2363
      %v2387 = vadd.f32 %v2386, %v2364
      %v2388 = vadd.f32 %v2387, %v2365
      %v2389 = vadd.f32 %v2388, %v2366
      %v2390 = vadd.f32 %v2389, %v2367
      %v2391 = vadd.f32 %v2390, %v2368
      %v2392 = vrot.slane %v2391, 4
      %v2393 = vadd.f32 %v2391, %v2392
      %v2394 = vrot.slane %v2393, 2
      %v2395 = vadd.f32 %v2393, %v2394
      %v2396 = vrot.slane %v2395, 1
      %v2397 = vadd.f32 %v2395, %v2396
      %2398 = vst [vmem:[%s211] sm:$0x1] %v2397
      %v2399 = vmul.f32 %v2361, %v2361
      %v2400 = vmul.f32 %v2362, %v2362
      %v2401 = vmul.f32 %v2363, %v2363
      %v2402 = vmul.f32 %v2364, %v2364
      %v2403 = vmul.f32 %v2365, %v2365
      %v2404 = vmul.f32 %v2366, %v2366
      %v2405 = vmul.f32 %v2367, %v2367
      %v2406 = vmul.f32 %v2368, %v2368
      %v2407 = vadd.f32 %v2399, %v2400
      %v2408 = vadd.f32 %v2407, %v2401
      %v2409 = vadd.f32 %v2408, %v2402
      %v2410 = vadd.f32 %v2409, %v2403
      %v2411 = vadd.f32 %v2410, %v2404
      %v2412 = vadd.f32 %v2411, %v2405
      %v2413 = vadd.f32 %v2412, %v2406
      %v2414 = vrot.slane %v2413, 4
      %v2415 = vadd.f32 %v2413, %v2414
      %v2416 = vrot.slane %v2415, 2
      %v2417 = vadd.f32 %v2415, %v2416
      %v2418 = vrot.slane %v2417, 1
      %v2419 = vadd.f32 %v2417, %v2418
      %2420 = vst [vmem:[%s214] sm:$0x1] %v2419
      %p2421 = scmp.lt.s32.totalorder %s16, 1
      %s2422 = scalar_select %p2421, %s16, 1
      %s2423 = smul.addr %s2422, 8
      %s2424 = smul.addr %s2423, 4
      %s2425 = scalar_lea.vmem %s2, %s2424
      %p2426 = scmp.lt.s32.totalorder %s16, 1
      %s2427 = scalar_select %p2426, %s16, 1
      %s2428 = scalar_lea.vmem %s3, %s2427
      %p2429 = scmp.lt.s32.totalorder %s16, 1
      %s2430 = scalar_select %p2429, %s16, 1
      %s2431 = scalar_lea.vmem %s4, %s2430
      // Predicated region
      $region29: #{block_forward.6} parent=27 // pred_check
        %p2432 = pneg %p81
      $region30: #{block_forward.6} parent=27 // pred_check_branch
        %2434 = sbr.rel (%p2432) target = $region32
      $region31: #{block_forward.6} parent=27 // pred_region
        _
      $region32: #{block_forward.6} parent=27 // pred_fallthru
        _
      // Predicated region
      $region33: #{block_forward.6} parent=27 // pred_check
        %p2435 = pneg %p107
      $region34: #{block_forward.6} parent=27 // pred_check_branch
        %2437 = sbr.rel (%p2435) target = $region36
      $region35: #{block_forward.6} parent=27 // pred_region
        _
      $region36: #{block_forward.6} parent=27 // pred_fallthru
        _
      // Predicated region
      $region37: #{block_forward.6} parent=27 // pred_check
        %p2438 = pneg %p133
      $region38: #{block_forward.6} parent=27 // pred_check_branch
        %2440 = sbr.rel (%p2438) target = $region40
      $region39: #{block_forward.6} parent=27 // pred_region
        _
      $region40: #{block_forward.6} parent=27 // pred_fallthru
        _
    $region28: #{block_forward.6} parent=5 // pred_fallthru
      _
    %p2441 = scmp.le.s32.totalorder 2, %s11
    // Predicated region
    $region41: #{block_forward.6} parent=5 // pred_check
      %p2442 = pneg %p2441
    $region42: #{block_forward.6} parent=5 // pred_check_branch
      %2444 = sbr.rel (%p2442) target = $region44
    $region43: #{block_forward.6} parent=5 // pred_region
      %s2445 = ssub.s32 %s11, 2
      // Predicated region
      $region45: #{block_forward.6} parent=43 // pred_check
        %p2446 = pneg %p87
      $region46: #{block_forward.6} parent=43 // pred_check_branch
        %2448 = sbr.rel (%p2446) target = $region48
      $region47: #{block_forward.6} parent=43 // pred_region
        %p2449 = scmp.lt.s32.totalorder %s17, 1
        %s2450 = scalar_select %p2449, %s17, 1
        %s2451 = smul.addr %s2450, 8
        %s2452 = smul.addr %s2451, 4
        %s2453 = scalar_lea.vmem %s2, %s2452
      $region48: #{block_forward.6} parent=43 // pred_fallthru
        _
      // Predicated region
      $region49: #{block_forward.6} parent=43 // pred_check
        %p2454 = pneg %p113
      $region50: #{block_forward.6} parent=43 // pred_check_branch
        %2456 = sbr.rel (%p2454) target = $region52
      $region51: #{block_forward.6} parent=43 // pred_region
        %p2457 = scmp.lt.s32.totalorder %s17, 1
        %s2458 = scalar_select %p2457, %s17, 1
        %s2459 = scalar_lea.vmem %s3, %s2458
      $region52: #{block_forward.6} parent=43 // pred_fallthru
        _
      // Predicated region
      $region53: #{block_forward.6} parent=43 // pred_check
        %p2460 = pneg %p139
      $region54: #{block_forward.6} parent=43 // pred_check_branch
        %2462 = sbr.rel (%p2460) target = $region56
      $region55: #{block_forward.6} parent=43 // pred_region
        %p2463 = scmp.lt.s32.totalorder %s17, 1
        %s2464 = scalar_select %p2463, %s17, 1
        %s2465 = scalar_lea.vmem %s4, %s2464
      $region56: #{block_forward.6} parent=43 // pred_fallthru
        _
    $region44: #{block_forward.6} parent=5 // pred_fallthru
      _
  $region6: #{block_forward.6} parent=0 // loop_footer
    %s15 = sadd.s32 1, %s11
  $region7: #{block_forward.6} parent=0 // loop_footer_branch
    %10 = sbr.rel target = $region3
  $region8: #{block_forward.6} parent=0 // loop_exit
    _

</llo_original>
